<compile_context>
chip_gen: v6e
topology: v6e:2x2x1
jax: 0.10.0
libtpu: 0.0.40
codegen_flags: <defaults>
</compile_context>

<pallas_src>
import jax
import jax.numpy as jnp
from jax import lax
from jax.experimental import pallas as pl
from jax.experimental.pallas import tpu as pltpu


def _round_up(x: int, m: int) -> int:
    return ((x + m - 1) // m) * m


def _cdiv(a: int, b: int) -> int:
    return -(-a // b)


def _num_tensorcores() -> int:
    """Best-effort TensorCore-per-device count (v7x/megacore have 2). Defensive."""
    try:
        info = pltpu.get_tpu_info()
        for attr in ("num_tensorcores", "tensorcore_count", "num_cores", "core_count"):
            v = getattr(info, attr, None)
            if v:
                return max(1, int(v))
    except Exception:
        pass
    try:
        d = jax.devices()[0]
        for attr in ("num_cores", "core_count"):
            v = getattr(d, attr, None)
            if v:
                return max(1, int(v))
    except Exception:
        pass
    return 1


# PyTorch gate order is (i, f, g, o); we pack columns as (i, f, o, g) so the three
# sigmoid gates form one contiguous 3*Hp lane slice.
_GATE_ORDER = (0, 1, 3, 2)


def make_lstm_kernel(*, num_layers: int, seq_len: int, chunk_steps: int, b_tile: int,
                     h_pad: int, compute_dtype, unroll: int):
    """Pallas kernel: full LSTM stack + FC head for one batch tile."""
    L, T, Tc, Bt, Hp = num_layers, seq_len, chunk_steps, b_tile, h_pad
    n_chunks = _cdiv(T, Tc)
    n_w = 3 * L

    def kernel(*refs):
        # refs: x, [w_ih, w_hh, b] * L, fc_w, fc_b, out, proj, seq, h, c
        x_ref = refs[0]
        layer_refs = refs[1:1 + n_w]
        fc_w_ref = refs[1 + n_w]
        fc_b_ref = refs[2 + n_w]
        out_ref = refs[3 + n_w]
        proj_ref, seq_ref, h_ref, c_ref = refs[4 + n_w:8 + n_w]

        for l in range(L):                       # static unroll over layers
            w_ih_ref = layer_refs[3 * l]         # (in_pad, 4*Hp) compute_dtype
            w_hh_ref = layer_refs[3 * l + 1]     # (Hp, 4*Hp)     compute_dtype
            b_ref = layer_refs[3 * l + 2]        # (1, 4*Hp)      f32
            is_last_layer = (l == L - 1)
            src_ref = x_ref if l == 0 else seq_ref

            # h_0 = c_0 = 0  (matches torch.zeros in forward())
            h_ref[...] = jnp.zeros_like(h_ref)
            c_ref[...] = jnp.zeros_like(c_ref)

            for ck in range(n_chunks):           # static; 1 chunk for small T
                t0 = ck * Tc
                steps = min(Tc, T - t0)
                rows = steps * Bt

                # Batched input projection for this time chunk (bias folded),
                # f32 accumulation, stored in compute_dtype. Off the per-step path.
                proj_ref[pl.ds(0, rows), :] = (
                    jnp.dot(src_ref[pl.ds(t0 * Bt, rows), :], w_ih_ref[...],
                            preferred_element_type=jnp.float32)
                    + b_ref[...]).astype(proj_ref.dtype)

                def step(t, carry, t0=t0):
                    row = pl.multiple_of(t * Bt, Bt)
                    # Only the recurrent matmul lives on the serial critical path.
                    gates = proj_ref[pl.ds(row, Bt), :].astype(jnp.float32) + jnp.dot(
                        h_ref[...], w_hh_ref[...],
                        preferred_element_type=jnp.float32)
                    # Packed gate order (i, f, o, g): one fused sigmoid + one tanh.
                    sig = jax.nn.sigmoid(gates[:, :3 * Hp])
                    i_g = sig[:, 0 * Hp:1 * Hp]
                    f_g = sig[:, 1 * Hp:2 * Hp]
                    o_g = sig[:, 2 * Hp:3 * Hp]
                    g_g = jnp.tanh(gates[:, 3 * Hp:4 * Hp])
                    c_new = f_g * c_ref[...] + i_g * g_g
                    h_new = o_g * jnp.tanh(c_new)
                    c_ref[...] = c_new
                    h_ref[...] = h_new.astype(h_ref.dtype)
                    if not is_last_layer:
                        # Sequence output feeds the next layer's chunked projection.
                        seq_ref[pl.ds(t0 * Bt + row, Bt), :] = h_new.astype(seq_ref.dtype)
                    return carry

                lax.fori_loop(0, steps, step, 0, unroll=min(unroll, steps))

        # out = fc(h_T of last layer); lane-dense (Bt, O_pad) store.
        out_ref[...] = (
            jnp.dot(h_ref[...].astype(jnp.float32), fc_w_ref[...],
                    preferred_element_type=jnp.float32)
            + fc_b_ref[...])

    return kernel


def _pack_lstm_weights(w_ih, w_hh, b_ih, b_hh, H, Hp, in_pad, compute_dtype):
    """Transpose to (in, 4H), zero-pad, repack gates onto 128-lane tiles as (i,f,o,g)."""
    w_ih_t = jnp.asarray(w_ih, jnp.float32).T      # (in_l, 4H)
    w_hh_t = jnp.asarray(w_hh, jnp.float32).T      # (H, 4H)
    bias = jnp.asarray(b_ih, jnp.float32) + jnp.asarray(b_hh, jnp.float32)  # (4H,)
    in_l = w_ih_t.shape[0]
    w_ih_t = jnp.pad(w_ih_t, ((0, in_pad - in_l), (0, 0)))
    w_hh_t = jnp.pad(w_hh_t, ((0, Hp - H), (0, 0)))

    def pack_cols(m):
        return jnp.concatenate(
            [jnp.pad(m[:, g * H:(g + 1) * H], ((0, 0), (0, Hp - H)))
             for g in _GATE_ORDER], axis=1)                       # (rows, 4*Hp)

    def pack_bias(v):
        return jnp.concatenate(
            [jnp.pad(v[g * H:(g + 1) * H], (0, Hp - H))
             for g in _GATE_ORDER])[None, :]                      # (1, 4*Hp)

    return (pack_cols(w_ih_t).astype(compute_dtype),
            pack_cols(w_hh_t).astype(compute_dtype),
            pack_bias(bias).astype(jnp.float32))


def lstm_model_forward(x, params, *, num_layers, hidden_size, output_size,
                       compute_dtype=jnp.bfloat16):
    """Wrapper: padding / repacking glue + pallas_call. Matches the PyTorch module.

    x: (B, T, input_size) float32 (batch_first). 2-D input is unsqueezed to batch=1.
    """
    if x.ndim == 2:
        x = x[None]                                    # x.unsqueeze(0)
    B, T, I = x.shape
    H = hidden_size
    Hp = _round_up(H, 128)                             # lane tile (gate alignment)
    Ip = _round_up(I, 128)                             # lane-aligned K for layer 0
    Op = _round_up(output_size, 128)                   # lane-dense output store

    # One batch tile per TensorCore when the batch is big enough (v7x has 2 TCs);
    # otherwise a single tile so single-core chips see no extra serial passes.
    n_cores = _num_tensorcores()
    n_tiles = max(1, min(n_cores, B // 8))
    Bt = _round_up(_cdiv(B, n_tiles), 8)               # sublane tile per grid point
    Bp = n_tiles * Bt

    cdt = jnp.dtype(compute_dtype).itemsize
    # Chunk the projection scratch over time (bounds VMEM; ~4 MiB cap per chunk).
    Tc = max(1, min(T, (4 * 1024 * 1024) // max(1, Bt * 4 * Hp * cdt)))
    Tc = max(Tc, min(T, 8))

    # Time-major, padded, one (T*Bt, Ip) slab per batch tile, rows ordered (t, b).
    x_tm = jnp.transpose(x, (1, 0, 2)).astype(jnp.float32)          # (T, B, I)
    x_tm = jnp.pad(x_tm, ((0, 0), (0, Bp - B), (0, Ip - I)))        # (T, Bp, Ip)
    x_tiles = jnp.transpose(x_tm.reshape(T, n_tiles, Bt, Ip), (1, 0, 2, 3))
    x_flat = x_tiles.reshape(n_tiles * T * Bt, Ip).astype(compute_dtype)

    flat = []
    for l, (w_ih, w_hh, b_ih, b_hh) in enumerate(params["lstm"]):
        in_pad = Ip if l == 0 else Hp
        flat.extend(_pack_lstm_weights(w_ih, w_hh, b_ih, b_hh, H, Hp, in_pad,
                                       compute_dtype))
    fc_w, fc_b = params["fc"]
    flat.append(jnp.pad(jnp.asarray(fc_w, jnp.float32).T,
                        ((0, Hp - H), (0, Op - output_size))))       # (Hp, Op) f32
    flat.append(jnp.pad(jnp.asarray(fc_b, jnp.float32),
                        (0, Op - output_size))[None, :])             # (1, Op) f32

    unroll = min(8, T)                                  # capped: multiplies with L
    kernel = make_lstm_kernel(num_layers=num_layers, seq_len=T, chunk_steps=Tc,
                              b_tile=Bt, h_pad=Hp, compute_dtype=compute_dtype,
                              unroll=unroll)

    # Specs: x and out are blocked over batch tiles; weights are untiled VMEM
    # residents (no per-tile re-fetch, no double-buffer duplication).
    in_specs = [pl.BlockSpec((T * Bt, Ip), lambda b: (b, 0))]
    in_specs += [pl.BlockSpec(memory_space=pltpu.MemorySpace.VMEM)] * len(flat)
    out_spec = pl.BlockSpec((Bt, Op), lambda b: (b, 0))

    seq_rows = T * Bt if num_layers > 1 else 8          # seq unused for 1-layer
    scratch_shapes = [
        pltpu.VMEM((Tc * Bt, 4 * Hp), compute_dtype),   # chunked input projection
        pltpu.VMEM((seq_rows, Hp), compute_dtype),      # layer output sequence
        pltpu.VMEM((Bt, Hp), compute_dtype),            # h state (compute dtype)
        pltpu.VMEM((Bt, Hp), jnp.float32),              # c state (f32)
    ]

    # Cost estimate (advisory).
    flops = n_tiles * 2 * Bt * Hp * Op
    for l in range(num_layers):
        in_l = Ip if l == 0 else Hp
        flops += n_tiles * 2 * T * Bt * in_l * 4 * Hp   # chunked input projection
        flops += n_tiles * 2 * T * Bt * Hp * 4 * Hp     # recurrent matmul
    transcendentals = 5 * num_layers * T * Bp * Hp      # 3 sigmoid + 2 tanh / elem
    w_bytes = sum(int(a.size) * a.dtype.itemsize for a in flat)
    bytes_accessed = int(x_flat.size) * x_flat.dtype.itemsize + w_bytes + Bp * Op * 4

    # VMEM budget: actual need + fixed headroom, clamped to the physical per-core
    # capacity (v7x: 64 MiB) minus headroom for surrounding fusions.
    scratch_bytes = (Tc * Bt * 4 * Hp * cdt + seq_rows * Hp * cdt
                     + Bt * Hp * cdt + Bt * Hp * 4)
    need = (2 * T * Bt * Ip * cdt            # x block (double-buffered)
            + w_bytes                        # untiled weights, single copy
            + 2 * Bt * Op * 4                # out block (double-buffered)
            + scratch_bytes)
    phys_vmem = 64 * 1024 * 1024
    try:
        phys_vmem = int(getattr(pltpu.get_tpu_info(), "vmem_capacity_bytes",
                                phys_vmem))
    except Exception:
        pass
    vmem_limit = min(phys_vmem - 8 * 1024 * 1024, need + 32 * 1024 * 1024)
    vmem_limit = int(min(max(vmem_limit, 16 * 1024 * 1024),
                         phys_vmem - 4 * 1024 * 1024))

    out = pl.pallas_call(
        kernel,
        grid=(n_tiles,),
        out_shape=jax.ShapeDtypeStruct((Bp, Op), jnp.float32),
        in_specs=in_specs,
        out_specs=out_spec,
        scratch_shapes=scratch_shapes,
        compiler_params=pltpu.CompilerParams(
            dimension_semantics=("parallel",),
            vmem_limit_bytes=vmem_limit),
        cost_estimate=pl.CostEstimate(flops=int(flops),
                                      transcendentals=int(transcendentals),
                                      bytes_accessed=int(bytes_accessed)),
    )(x_flat, *flat)

    return out[:B, :output_size]


def reference_forward(x, params, *, num_layers, hidden_size):
    """Pure-JAX reference (lax.scan) mirroring torch.nn.LSTM semantics (f32)."""
    if x.ndim == 2:
        x = x[None]
    B = x.shape[0]
    H = hidden_size
    layer_in = x
    for l in range(num_layers):
        w_ih, w_hh, b_ih, b_hh = params["lstm"][l]

        def cell(carry, x_t, w_ih=w_ih, w_hh=w_hh, b_ih=b_ih, b_hh=b_hh):
            h, c = carry
            g = x_t @ w_ih.T + h @ w_hh.T + b_ih + b_hh
            i = jax.nn.sigmoid(g[:, 0:H])
            f = jax.nn.sigmoid(g[:, H:2 * H])
            gg = jnp.tanh(g[:, 2 * H:3 * H])
            o = jax.nn.sigmoid(g[:, 3 * H:4 * H])
            c = f * c + i * gg
            h = o * jnp.tanh(c)
            return (h, c), h

        init = (jnp.zeros((B, H), jnp.float32), jnp.zeros((B, H), jnp.float32))
        _, hs = lax.scan(cell, init, jnp.transpose(layer_in, (1, 0, 2)))
        layer_in = jnp.transpose(hs, (1, 0, 2))
    fc_w, fc_b = params["fc"]
    return layer_in[:, -1, :] @ fc_w.T + fc_b


def init_params(key, input_size, hidden_size, num_layers, output_size):
    """Deterministic init matching PyTorch parameter shapes (uniform +-1/sqrt(H))."""
    k = 1.0 / jnp.sqrt(hidden_size)
    lstm = []
    for l in range(num_layers):
        in_l = input_size if l == 0 else hidden_size
        key, k1, k2, k3, k4 = jax.random.split(key, 5)
        w_ih = jax.random.uniform(k1, (4 * hidden_size, in_l), jnp.float32, -k, k)
        w_hh = jax.random.uniform(k2, (4 * hidden_size, hidden_size), jnp.float32, -k, k)
        b_ih = jax.random.uniform(k3, (4 * hidden_size,), jnp.float32, -k, k)
        b_hh = jax.random.uniform(k4, (4 * hidden_size,), jnp.float32, -k, k)
        lstm.append((w_ih, w_hh, b_ih, b_hh))
    key, k5, k6 = jax.random.split(key, 3)
    fc_w = jax.random.uniform(k5, (output_size, hidden_size), jnp.float32, -k, k)
    fc_b = jax.random.uniform(k6, (output_size,), jnp.float32, -k, k)
    return {"lstm": lstm, "fc": (fc_w, fc_b)}


if __name__ == "__main__":
    # Small shapes consistent with the module's forward():
    B, T, INPUT, HIDDEN, LAYERS, OUT = 2, 8, 16, 32, 2, 4

    key = jax.random.PRNGKey(0)
    key, kx = jax.random.split(key)
    x = jax.random.normal(kx, (B, T, INPUT), jnp.float32)
    params = init_params(key, INPUT, HIDDEN, LAYERS, OUT)

    ref = reference_forward(x, params, num_layers=LAYERS, hidden_size=HIDDEN)

    # Strict correctness check with f32 storage.
    out_f32 = lstm_model_forward(x, params, num_layers=LAYERS, hidden_size=HIDDEN,
                                 output_size=OUT, compute_dtype=jnp.float32)
    out_f32 = jax.block_until_ready(out_f32)
    assert out_f32.shape == (B, OUT), out_f32.shape
    assert jnp.allclose(out_f32, ref, atol=1e-4, rtol=1e-4), (out_f32, ref)

    # bf16 weight/activation/proj storage (f32 accumulation, f32 c state).
    out_bf16 = lstm_model_forward(x, params, num_layers=LAYERS, hidden_size=HIDDEN,
                                  output_size=OUT, compute_dtype=jnp.bfloat16)
    out_bf16 = jax.block_until_ready(out_bf16)
    assert out_bf16.shape == (B, OUT), out_bf16.shape
    assert jnp.allclose(out_bf16, ref, atol=5e-2, rtol=5e-2), (out_bf16, ref)

    print("KERNEL_OK")
</pallas_src>

<mosaic_0001>
module attributes {stable_mosaic.version = 11 : i64} {
  func.func @kernel(%arg0: i32, %arg1: memref<64x128xf32, #tpu.memory_space<vmem>>, %arg2: memref<128x512xf32, #tpu.memory_space<vmem>>, %arg3: memref<128x512xf32, #tpu.memory_space<vmem>>, %arg4: memref<1x512xf32, #tpu.memory_space<vmem>>, %arg5: memref<128x512xf32, #tpu.memory_space<vmem>>, %arg6: memref<128x512xf32, #tpu.memory_space<vmem>>, %arg7: memref<1x512xf32, #tpu.memory_space<vmem>>, %arg8: memref<128x128xf32, #tpu.memory_space<vmem>>, %arg9: memref<1x128xf32, #tpu.memory_space<vmem>>, %arg10: memref<8x128xf32, #tpu.memory_space<vmem>>, %arg11: memref<64x512xf32, #tpu.memory_space<vmem>>, %arg12: memref<64x128xf32, #tpu.memory_space<vmem>>, %arg13: memref<8x128xf32, #tpu.memory_space<vmem>>, %arg14: memref<8x128xf32, #tpu.memory_space<vmem>>) attributes {dimension_semantics = [#tpu.dimension_semantics<parallel>], iteration_bounds = array<i64: 1>, scalar_prefetch = 0 : i64, scratch_operands = 4 : i64, tpu.core_type = #tpu.core_type<tc>, window_params = [{transform_indices = @transform_0, window_bounds = array<i64: 64, 128>}, {pipeline_mode = #tpu.pipeline_mode<synchronous>, transform_indices = @transform_1, window_bounds = array<i64: 128, 512>}, {pipeline_mode = #tpu.pipeline_mode<synchronous>, transform_indices = @transform_2, window_bounds = array<i64: 128, 512>}, {pipeline_mode = #tpu.pipeline_mode<synchronous>, transform_indices = @transform_3, window_bounds = array<i64: 1, 512>}, {pipeline_mode = #tpu.pipeline_mode<synchronous>, transform_indices = @transform_4, window_bounds = array<i64: 128, 512>}, {pipeline_mode = #tpu.pipeline_mode<synchronous>, transform_indices = @transform_5, window_bounds = array<i64: 128, 512>}, {pipeline_mode = #tpu.pipeline_mode<synchronous>, transform_indices = @transform_6, window_bounds = array<i64: 1, 512>}, {pipeline_mode = #tpu.pipeline_mode<synchronous>, transform_indices = @transform_7, window_bounds = array<i64: 128, 128>}, {pipeline_mode = #tpu.pipeline_mode<synchronous>, transform_indices = @transform_8, window_bounds = array<i64: 1, 128>}, {transform_indices = @transform_9, window_bounds = array<i64: 8, 128>}]} {
    %cst = arith.constant 0.000000e+00 : f32
    %0 = vector.broadcast %cst : f32 to vector<8x128xf32>
    %c0 = arith.constant 0 : index
    %c0_0 = arith.constant 0 : index
    %1 = vector.load %arg13[%c0, %c0_0] : memref<8x128xf32, #tpu.memory_space<vmem>>, vector<8x128xf32>
    tpu.vector_store %arg13[%c0, %c0_0], %0 {strides = array<i32>} : memref<8x128xf32, #tpu.memory_space<vmem>>, vector<8x128xf32>,
    %cst_1 = arith.constant 0.000000e+00 : f32
    %2 = vector.broadcast %cst_1 : f32 to vector<8x128xf32>
    %c0_2 = arith.constant 0 : index
    %c0_3 = arith.constant 0 : index
    %3 = vector.load %arg14[%c0_2, %c0_3] : memref<8x128xf32, #tpu.memory_space<vmem>>, vector<8x128xf32>
    tpu.vector_store %arg14[%c0_2, %c0_3], %2 {strides = array<i32>} : memref<8x128xf32, #tpu.memory_space<vmem>>, vector<8x128xf32>,
    %c0_4 = arith.constant 0 : index
    %c0_5 = arith.constant 0 : index
    %4 = vector.load %arg1[%c0_4, %c0_5] : memref<64x128xf32, #tpu.memory_space<vmem>>, vector<64x128xf32>
    %c0_6 = arith.constant 0 : index
    %c0_7 = arith.constant 0 : index
    %5 = vector.load %arg2[%c0_6, %c0_7] : memref<128x512xf32, #tpu.memory_space<vmem>>, vector<128x512xf32>
    %cst_8 = arith.constant dense<0.000000e+00> : vector<64x512xf32>
    %6 = tpu.matmul %4, %5, %cst_8 {dimension_numbers = #tpu.dot_dimension_numbers<[1], [0], [0], [1], [0, 0, 1, 1], [], []>} : vector<64x128xf32>, vector<128x512xf32>, vector<64x512xf32> -> vector<64x512xf32>
    %c0_9 = arith.constant 0 : index
    %c0_10 = arith.constant 0 : index
    %7 = vector.load %arg4[%c0_9, %c0_10] : memref<1x512xf32, #tpu.memory_space<vmem>>, vector<1x512xf32>
    %8 = vector.broadcast %7 : vector<1x512xf32> to vector<64x512xf32>
    %9 = arith.addf %6, %8 : vector<64x512xf32>
    %c0_11 = arith.constant 0 : index
    %c0_12 = arith.constant 0 : index
    %10 = vector.load %arg11[%c0_11, %c0_12] : memref<64x512xf32, #tpu.memory_space<vmem>>, vector<64x512xf32>
    tpu.vector_store %arg11[%c0_11, %c0_12], %9 {strides = array<i32>} : memref<64x512xf32, #tpu.memory_space<vmem>>, vector<64x512xf32>,
    %c0_i32 = arith.constant 0 : i32
    %c8_i32 = arith.constant 8 : i32
    %11 = arith.muli %c0_i32, %c8_i32 : i32
    %12 = tpu.assume_multiple %11, 8 : i32
    %13 = arith.index_cast %12 : i32 to index
    %c0_13 = arith.constant 0 : index
    %14 = vector.load %arg11[%13, %c0_13] : memref<64x512xf32, #tpu.memory_space<vmem>>, vector<8x512xf32>
    %c0_14 = arith.constant 0 : index
    %c0_15 = arith.constant 0 : index
    %15 = vector.load %arg13[%c0_14, %c0_15] : memref<8x128xf32, #tpu.memory_space<vmem>>, vector<8x128xf32>
    %c0_16 = arith.constant 0 : index
    %c0_17 = arith.constant 0 : index
    %16 = vector.load %arg3[%c0_16, %c0_17] : memref<128x512xf32, #tpu.memory_space<vmem>>, vector<128x512xf32>
    %cst_18 = arith.constant dense<0.000000e+00> : vector<8x512xf32>
    %17 = tpu.matmul %15, %16, %cst_18 {dimension_numbers = #tpu.dot_dimension_numbers<[1], [0], [0], [1], [0, 0, 1, 1], [], []>} : vector<8x128xf32>, vector<128x512xf32>, vector<8x512xf32> -> vector<8x512xf32>
    %18 = arith.addf %14, %17 : vector<8x512xf32>
    %19 = vector.extract_strided_slice %18 {offsets = [0, 0], sizes = [8, 384], strides = [1, 1]} : vector<8x512xf32> to vector<8x384xf32>
    %20 = arith.negf %19 : vector<8x384xf32>
    %21 = math.exp %20 : vector<8x384xf32>
    %cst_19 = arith.constant 1.000000e+00 : f32
    %22 = vector.broadcast %cst_19 : f32 to vector<8x384xf32>
    %23 = arith.addf %22, %21 : vector<8x384xf32>
    %24 = arith.divf %22, %23 : vector<8x384xf32>
    %25 = vector.extract_strided_slice %24 {offsets = [0, 0], sizes = [8, 128], strides = [1, 1]} : vector<8x384xf32> to vector<8x128xf32>
    %26 = vector.extract_strided_slice %24 {offsets = [0, 128], sizes = [8, 128], strides = [1, 1]} : vector<8x384xf32> to vector<8x128xf32>
    %27 = vector.extract_strided_slice %24 {offsets = [0, 256], sizes = [8, 128], strides = [1, 1]} : vector<8x384xf32> to vector<8x128xf32>
    %28 = vector.extract_strided_slice %18 {offsets = [0, 384], sizes = [8, 128], strides = [1, 1]} : vector<8x512xf32> to vector<8x128xf32>
    %29 = math.tanh %28 : vector<8x128xf32>
    %c0_20 = arith.constant 0 : index
    %c0_21 = arith.constant 0 : index
    %30 = vector.load %arg14[%c0_20, %c0_21] : memref<8x128xf32, #tpu.memory_space<vmem>>, vector<8x128xf32>
    %31 = arith.mulf %26, %30 : vector<8x128xf32>
    %32 = arith.mulf %25, %29 : vector<8x128xf32>
    %33 = arith.addf %31, %32 : vector<8x128xf32>
    %34 = math.tanh %33 : vector<8x128xf32>
    %35 = arith.mulf %27, %34 : vector<8x128xf32>
    %c0_22 = arith.constant 0 : index
    %c0_23 = arith.constant 0 : index
    %36 = vector.load %arg14[%c0_22, %c0_23] : memref<8x128xf32, #tpu.memory_space<vmem>>, vector<8x128xf32>
    tpu.vector_store %arg14[%c0_22, %c0_23], %33 {strides = array<i32>} : memref<8x128xf32, #tpu.memory_space<vmem>>, vector<8x128xf32>,
    %c0_24 = arith.constant 0 : index
    %c0_25 = arith.constant 0 : index
    %37 = vector.load %arg13[%c0_24, %c0_25] : memref<8x128xf32, #tpu.memory_space<vmem>>, vector<8x128xf32>
    tpu.vector_store %arg13[%c0_24, %c0_25], %35 {strides = array<i32>} : memref<8x128xf32, #tpu.memory_space<vmem>>, vector<8x128xf32>,
    %c0_i32_26 = arith.constant 0 : i32
    %38 = arith.addi %c0_i32_26, %12 : i32
    %39 = arith.index_cast %38 : i32 to index
    %c0_27 = arith.constant 0 : index
    %40 = vector.load %arg12[%39, %c0_27] : memref<64x128xf32, #tpu.memory_space<vmem>>, vector<8x128xf32>
    tpu.vector_store %arg12[%39, %c0_27], %35 {strides = array<i32>} : memref<64x128xf32, #tpu.memory_space<vmem>>, vector<8x128xf32>,
    %c1_i32 = arith.constant 1 : i32
    %c8_i32_28 = arith.constant 8 : i32
    %41 = arith.muli %c1_i32, %c8_i32_28 : i32
    %42 = tpu.assume_multiple %41, 8 : i32
    %43 = arith.index_cast %42 : i32 to index
    %c0_29 = arith.constant 0 : index
    %44 = vector.load %arg11[%43, %c0_29] : memref<64x512xf32, #tpu.memory_space<vmem>>, vector<8x512xf32>
    %c0_30 = arith.constant 0 : index
    %c0_31 = arith.constant 0 : index
    %45 = vector.load %arg13[%c0_30, %c0_31] : memref<8x128xf32, #tpu.memory_space<vmem>>, vector<8x128xf32>
    %c0_32 = arith.constant 0 : index
    %c0_33 = arith.constant 0 : index
    %46 = vector.load %arg3[%c0_32, %c0_33] : memref<128x512xf32, #tpu.memory_space<vmem>>, vector<128x512xf32>
    %cst_34 = arith.constant dense<0.000000e+00> : vector<8x512xf32>
    %47 = tpu.matmul %45, %46, %cst_34 {dimension_numbers = #tpu.dot_dimension_numbers<[1], [0], [0], [1], [0, 0, 1, 1], [], []>} : vector<8x128xf32>, vector<128x512xf32>, vector<8x512xf32> -> vector<8x512xf32>
    %48 = arith.addf %44, %47 : vector<8x512xf32>
    %49 = vector.extract_strided_slice %48 {offsets = [0, 0], sizes = [8, 384], strides = [1, 1]} : vector<8x512xf32> to vector<8x384xf32>
    %50 = arith.negf %49 : vector<8x384xf32>
    %51 = math.exp %50 : vector<8x384xf32>
    %cst_35 = arith.constant 1.000000e+00 : f32
    %52 = vector.broadcast %cst_35 : f32 to vector<8x384xf32>
    %53 = arith.addf %52, %51 : vector<8x384xf32>
    %54 = arith.divf %52, %53 : vector<8x384xf32>
    %55 = vector.extract_strided_slice %54 {offsets = [0, 0], sizes = [8, 128], strides = [1, 1]} : vector<8x384xf32> to vector<8x128xf32>
    %56 = vector.extract_strided_slice %54 {offsets = [0, 128], sizes = [8, 128], strides = [1, 1]} : vector<8x384xf32> to vector<8x128xf32>
    %57 = vector.extract_strided_slice %54 {offsets = [0, 256], sizes = [8, 128], strides = [1, 1]} : vector<8x384xf32> to vector<8x128xf32>
    %58 = vector.extract_strided_slice %48 {offsets = [0, 384], sizes = [8, 128], strides = [1, 1]} : vector<8x512xf32> to vector<8x128xf32>
    %59 = math.tanh %58 : vector<8x128xf32>
    %c0_36 = arith.constant 0 : index
    %c0_37 = arith.constant 0 : index
    %60 = vector.load %arg14[%c0_36, %c0_37] : memref<8x128xf32, #tpu.memory_space<vmem>>, vector<8x128xf32>
    %61 = arith.mulf %56, %60 : vector<8x128xf32>
    %62 = arith.mulf %55, %59 : vector<8x128xf32>
    %63 = arith.addf %61, %62 : vector<8x128xf32>
    %64 = math.tanh %63 : vector<8x128xf32>
    %65 = arith.mulf %57, %64 : vector<8x128xf32>
    %c0_38 = arith.constant 0 : index
    %c0_39 = arith.constant 0 : index
    %66 = vector.load %arg14[%c0_38, %c0_39] : memref<8x128xf32, #tpu.memory_space<vmem>>, vector<8x128xf32>
    tpu.vector_store %arg14[%c0_38, %c0_39], %63 {strides = array<i32>} : memref<8x128xf32, #tpu.memory_space<vmem>>, vector<8x128xf32>,
    %c0_40 = arith.constant 0 : index
    %c0_41 = arith.constant 0 : index
    %67 = vector.load %arg13[%c0_40, %c0_41] : memref<8x128xf32, #tpu.memory_space<vmem>>, vector<8x128xf32>
    tpu.vector_store %arg13[%c0_40, %c0_41], %65 {strides = array<i32>} : memref<8x128xf32, #tpu.memory_space<vmem>>, vector<8x128xf32>,
    %c0_i32_42 = arith.constant 0 : i32
    %68 = arith.addi %c0_i32_42, %42 : i32
    %69 = arith.index_cast %68 : i32 to index
    %c0_43 = arith.constant 0 : index
    %70 = vector.load %arg12[%69, %c0_43] : memref<64x128xf32, #tpu.memory_space<vmem>>, vector<8x128xf32>
    tpu.vector_store %arg12[%69, %c0_43], %65 {strides = array<i32>} : memref<64x128xf32, #tpu.memory_space<vmem>>, vector<8x128xf32>,
    %c2_i32 = arith.constant 2 : i32
    %c8_i32_44 = arith.constant 8 : i32
    %71 = arith.muli %c2_i32, %c8_i32_44 : i32
    %72 = tpu.assume_multiple %71, 8 : i32
    %73 = arith.index_cast %72 : i32 to index
    %c0_45 = arith.constant 0 : index
    %74 = vector.load %arg11[%73, %c0_45] : memref<64x512xf32, #tpu.memory_space<vmem>>, vector<8x512xf32>
    %c0_46 = arith.constant 0 : index
    %c0_47 = arith.constant 0 : index
    %75 = vector.load %arg13[%c0_46, %c0_47] : memref<8x128xf32, #tpu.memory_space<vmem>>, vector<8x128xf32>
    %c0_48 = arith.constant 0 : index
    %c0_49 = arith.constant 0 : index
    %76 = vector.load %arg3[%c0_48, %c0_49] : memref<128x512xf32, #tpu.memory_space<vmem>>, vector<128x512xf32>
    %cst_50 = arith.constant dense<0.000000e+00> : vector<8x512xf32>
    %77 = tpu.matmul %75, %76, %cst_50 {dimension_numbers = #tpu.dot_dimension_numbers<[1], [0], [0], [1], [0, 0, 1, 1], [], []>} : vector<8x128xf32>, vector<128x512xf32>, vector<8x512xf32> -> vector<8x512xf32>
    %78 = arith.addf %74, %77 : vector<8x512xf32>
    %79 = vector.extract_strided_slice %78 {offsets = [0, 0], sizes = [8, 384], strides = [1, 1]} : vector<8x512xf32> to vector<8x384xf32>
    %80 = arith.negf %79 : vector<8x384xf32>
    %81 = math.exp %80 : vector<8x384xf32>
    %cst_51 = arith.constant 1.000000e+00 : f32
    %82 = vector.broadcast %cst_51 : f32 to vector<8x384xf32>
    %83 = arith.addf %82, %81 : vector<8x384xf32>
    %84 = arith.divf %82, %83 : vector<8x384xf32>
    %85 = vector.extract_strided_slice %84 {offsets = [0, 0], sizes = [8, 128], strides = [1, 1]} : vector<8x384xf32> to vector<8x128xf32>
    %86 = vector.extract_strided_slice %84 {offsets = [0, 128], sizes = [8, 128], strides = [1, 1]} : vector<8x384xf32> to vector<8x128xf32>
    %87 = vector.extract_strided_slice %84 {offsets = [0, 256], sizes = [8, 128], strides = [1, 1]} : vector<8x384xf32> to vector<8x128xf32>
    %88 = vector.extract_strided_slice %78 {offsets = [0, 384], sizes = [8, 128], strides = [1, 1]} : vector<8x512xf32> to vector<8x128xf32>
    %89 = math.tanh %88 : vector<8x128xf32>
    %c0_52 = arith.constant 0 : index
    %c0_53 = arith.constant 0 : index
    %90 = vector.load %arg14[%c0_52, %c0_53] : memref<8x128xf32, #tpu.memory_space<vmem>>, vector<8x128xf32>
    %91 = arith.mulf %86, %90 : vector<8x128xf32>
    %92 = arith.mulf %85, %89 : vector<8x128xf32>
    %93 = arith.addf %91, %92 : vector<8x128xf32>
    %94 = math.tanh %93 : vector<8x128xf32>
    %95 = arith.mulf %87, %94 : vector<8x128xf32>
    %c0_54 = arith.constant 0 : index
    %c0_55 = arith.constant 0 : index
    %96 = vector.load %arg14[%c0_54, %c0_55] : memref<8x128xf32, #tpu.memory_space<vmem>>, vector<8x128xf32>
    tpu.vector_store %arg14[%c0_54, %c0_55], %93 {strides = array<i32>} : memref<8x128xf32, #tpu.memory_space<vmem>>, vector<8x128xf32>,
    %c0_56 = arith.constant 0 : index
    %c0_57 = arith.constant 0 : index
    %97 = vector.load %arg13[%c0_56, %c0_57] : memref<8x128xf32, #tpu.memory_space<vmem>>, vector<8x128xf32>
    tpu.vector_store %arg13[%c0_56, %c0_57], %95 {strides = array<i32>} : memref<8x128xf32, #tpu.memory_space<vmem>>, vector<8x128xf32>,
    %c0_i32_58 = arith.constant 0 : i32
    %98 = arith.addi %c0_i32_58, %72 : i32
    %99 = arith.index_cast %98 : i32 to index
    %c0_59 = arith.constant 0 : index
    %100 = vector.load %arg12[%99, %c0_59] : memref<64x128xf32, #tpu.memory_space<vmem>>, vector<8x128xf32>
    tpu.vector_store %arg12[%99, %c0_59], %95 {strides = array<i32>} : memref<64x128xf32, #tpu.memory_space<vmem>>, vector<8x128xf32>,
    %c3_i32 = arith.constant 3 : i32
    %c8_i32_60 = arith.constant 8 : i32
    %101 = arith.muli %c3_i32, %c8_i32_60 : i32
    %102 = tpu.assume_multiple %101, 8 : i32
    %103 = arith.index_cast %102 : i32 to index
    %c0_61 = arith.constant 0 : index
    %104 = vector.load %arg11[%103, %c0_61] : memref<64x512xf32, #tpu.memory_space<vmem>>, vector<8x512xf32>
    %c0_62 = arith.constant 0 : index
    %c0_63 = arith.constant 0 : index
    %105 = vector.load %arg13[%c0_62, %c0_63] : memref<8x128xf32, #tpu.memory_space<vmem>>, vector<8x128xf32>
    %c0_64 = arith.constant 0 : index
    %c0_65 = arith.constant 0 : index
    %106 = vector.load %arg3[%c0_64, %c0_65] : memref<128x512xf32, #tpu.memory_space<vmem>>, vector<128x512xf32>
    %cst_66 = arith.constant dense<0.000000e+00> : vector<8x512xf32>
    %107 = tpu.matmul %105, %106, %cst_66 {dimension_numbers = #tpu.dot_dimension_numbers<[1], [0], [0], [1], [0, 0, 1, 1], [], []>} : vector<8x128xf32>, vector<128x512xf32>, vector<8x512xf32> -> vector<8x512xf32>
    %108 = arith.addf %104, %107 : vector<8x512xf32>
    %109 = vector.extract_strided_slice %108 {offsets = [0, 0], sizes = [8, 384], strides = [1, 1]} : vector<8x512xf32> to vector<8x384xf32>
    %110 = arith.negf %109 : vector<8x384xf32>
    %111 = math.exp %110 : vector<8x384xf32>
    %cst_67 = arith.constant 1.000000e+00 : f32
    %112 = vector.broadcast %cst_67 : f32 to vector<8x384xf32>
    %113 = arith.addf %112, %111 : vector<8x384xf32>
    %114 = arith.divf %112, %113 : vector<8x384xf32>
    %115 = vector.extract_strided_slice %114 {offsets = [0, 0], sizes = [8, 128], strides = [1, 1]} : vector<8x384xf32> to vector<8x128xf32>
    %116 = vector.extract_strided_slice %114 {offsets = [0, 128], sizes = [8, 128], strides = [1, 1]} : vector<8x384xf32> to vector<8x128xf32>
    %117 = vector.extract_strided_slice %114 {offsets = [0, 256], sizes = [8, 128], strides = [1, 1]} : vector<8x384xf32> to vector<8x128xf32>
    %118 = vector.extract_strided_slice %108 {offsets = [0, 384], sizes = [8, 128], strides = [1, 1]} : vector<8x512xf32> to vector<8x128xf32>
    %119 = math.tanh %118 : vector<8x128xf32>
    %c0_68 = arith.constant 0 : index
    %c0_69 = arith.constant 0 : index
    %120 = vector.load %arg14[%c0_68, %c0_69] : memref<8x128xf32, #tpu.memory_space<vmem>>, vector<8x128xf32>
    %121 = arith.mulf %116, %120 : vector<8x128xf32>
    %122 = arith.mulf %115, %119 : vector<8x128xf32>
    %123 = arith.addf %121, %122 : vector<8x128xf32>
    %124 = math.tanh %123 : vector<8x128xf32>
    %125 = arith.mulf %117, %124 : vector<8x128xf32>
    %c0_70 = arith.constant 0 : index
    %c0_71 = arith.constant 0 : index
    %126 = vector.load %arg14[%c0_70, %c0_71] : memref<8x128xf32, #tpu.memory_space<vmem>>, vector<8x128xf32>
    tpu.vector_store %arg14[%c0_70, %c0_71], %123 {strides = array<i32>} : memref<8x128xf32, #tpu.memory_space<vmem>>, vector<8x128xf32>,
    %c0_72 = arith.constant 0 : index
    %c0_73 = arith.constant 0 : index
    %127 = vector.load %arg13[%c0_72, %c0_73] : memref<8x128xf32, #tpu.memory_space<vmem>>, vector<8x128xf32>
    tpu.vector_store %arg13[%c0_72, %c0_73], %125 {strides = array<i32>} : memref<8x128xf32, #tpu.memory_space<vmem>>, vector<8x128xf32>,
    %c0_i32_74 = arith.constant 0 : i32
    %128 = arith.addi %c0_i32_74, %102 : i32
    %129 = arith.index_cast %128 : i32 to index
    %c0_75 = arith.constant 0 : index
    %130 = vector.load %arg12[%129, %c0_75] : memref<64x128xf32, #tpu.memory_space<vmem>>, vector<8x128xf32>
    tpu.vector_store %arg12[%129, %c0_75], %125 {strides = array<i32>} : memref<64x128xf32, #tpu.memory_space<vmem>>, vector<8x128xf32>,
    %c4_i32 = arith.constant 4 : i32
    %c8_i32_76 = arith.constant 8 : i32
    %131 = arith.muli %c4_i32, %c8_i32_76 : i32
    %132 = tpu.assume_multiple %131, 8 : i32
    %133 = arith.index_cast %132 : i32 to index
    %c0_77 = arith.constant 0 : index
    %134 = vector.load %arg11[%133, %c0_77] : memref<64x512xf32, #tpu.memory_space<vmem>>, vector<8x512xf32>
    %c0_78 = arith.constant 0 : index
    %c0_79 = arith.constant 0 : index
    %135 = vector.load %arg13[%c0_78, %c0_79] : memref<8x128xf32, #tpu.memory_space<vmem>>, vector<8x128xf32>
    %c0_80 = arith.constant 0 : index
    %c0_81 = arith.constant 0 : index
    %136 = vector.load %arg3[%c0_80, %c0_81] : memref<128x512xf32, #tpu.memory_space<vmem>>, vector<128x512xf32>
    %cst_82 = arith.constant dense<0.000000e+00> : vector<8x512xf32>
    %137 = tpu.matmul %135, %136, %cst_82 {dimension_numbers = #tpu.dot_dimension_numbers<[1], [0], [0], [1], [0, 0, 1, 1], [], []>} : vector<8x128xf32>, vector<128x512xf32>, vector<8x512xf32> -> vector<8x512xf32>
    %138 = arith.addf %134, %137 : vector<8x512xf32>
    %139 = vector.extract_strided_slice %138 {offsets = [0, 0], sizes = [8, 384], strides = [1, 1]} : vector<8x512xf32> to vector<8x384xf32>
    %140 = arith.negf %139 : vector<8x384xf32>
    %141 = math.exp %140 : vector<8x384xf32>
    %cst_83 = arith.constant 1.000000e+00 : f32
    %142 = vector.broadcast %cst_83 : f32 to vector<8x384xf32>
    %143 = arith.addf %142, %141 : vector<8x384xf32>
    %144 = arith.divf %142, %143 : vector<8x384xf32>
    %145 = vector.extract_strided_slice %144 {offsets = [0, 0], sizes = [8, 128], strides = [1, 1]} : vector<8x384xf32> to vector<8x128xf32>
    %146 = vector.extract_strided_slice %144 {offsets = [0, 128], sizes = [8, 128], strides = [1, 1]} : vector<8x384xf32> to vector<8x128xf32>
    %147 = vector.extract_strided_slice %144 {offsets = [0, 256], sizes = [8, 128], strides = [1, 1]} : vector<8x384xf32> to vector<8x128xf32>
    %148 = vector.extract_strided_slice %138 {offsets = [0, 384], sizes = [8, 128], strides = [1, 1]} : vector<8x512xf32> to vector<8x128xf32>
    %149 = math.tanh %148 : vector<8x128xf32>
    %c0_84 = arith.constant 0 : index
    %c0_85 = arith.constant 0 : index
    %150 = vector.load %arg14[%c0_84, %c0_85] : memref<8x128xf32, #tpu.memory_space<vmem>>, vector<8x128xf32>
    %151 = arith.mulf %146, %150 : vector<8x128xf32>
    %152 = arith.mulf %145, %149 : vector<8x128xf32>
    %153 = arith.addf %151, %152 : vector<8x128xf32>
    %154 = math.tanh %153 : vector<8x128xf32>
    %155 = arith.mulf %147, %154 : vector<8x128xf32>
    %c0_86 = arith.constant 0 : index
    %c0_87 = arith.constant 0 : index
    %156 = vector.load %arg14[%c0_86, %c0_87] : memref<8x128xf32, #tpu.memory_space<vmem>>, vector<8x128xf32>
    tpu.vector_store %arg14[%c0_86, %c0_87], %153 {strides = array<i32>} : memref<8x128xf32, #tpu.memory_space<vmem>>, vector<8x128xf32>,
    %c0_88 = arith.constant 0 : index
    %c0_89 = arith.constant 0 : index
    %157 = vector.load %arg13[%c0_88, %c0_89] : memref<8x128xf32, #tpu.memory_space<vmem>>, vector<8x128xf32>
    tpu.vector_store %arg13[%c0_88, %c0_89], %155 {strides = array<i32>} : memref<8x128xf32, #tpu.memory_space<vmem>>, vector<8x128xf32>,
    %c0_i32_90 = arith.constant 0 : i32
    %158 = arith.addi %c0_i32_90, %132 : i32
    %159 = arith.index_cast %158 : i32 to index
    %c0_91 = arith.constant 0 : index
    %160 = vector.load %arg12[%159, %c0_91] : memref<64x128xf32, #tpu.memory_space<vmem>>, vector<8x128xf32>
    tpu.vector_store %arg12[%159, %c0_91], %155 {strides = array<i32>} : memref<64x128xf32, #tpu.memory_space<vmem>>, vector<8x128xf32>,
    %c5_i32 = arith.constant 5 : i32
    %c8_i32_92 = arith.constant 8 : i32
    %161 = arith.muli %c5_i32, %c8_i32_92 : i32
    %162 = tpu.assume_multiple %161, 8 : i32
    %163 = arith.index_cast %162 : i32 to index
    %c0_93 = arith.constant 0 : index
    %164 = vector.load %arg11[%163, %c0_93] : memref<64x512xf32, #tpu.memory_space<vmem>>, vector<8x512xf32>
    %c0_94 = arith.constant 0 : index
    %c0_95 = arith.constant 0 : index
    %165 = vector.load %arg13[%c0_94, %c0_95] : memref<8x128xf32, #tpu.memory_space<vmem>>, vector<8x128xf32>
    %c0_96 = arith.constant 0 : index
    %c0_97 = arith.constant 0 : index
    %166 = vector.load %arg3[%c0_96, %c0_97] : memref<128x512xf32, #tpu.memory_space<vmem>>, vector<128x512xf32>
    %cst_98 = arith.constant dense<0.000000e+00> : vector<8x512xf32>
    %167 = tpu.matmul %165, %166, %cst_98 {dimension_numbers = #tpu.dot_dimension_numbers<[1], [0], [0], [1], [0, 0, 1, 1], [], []>} : vector<8x128xf32>, vector<128x512xf32>, vector<8x512xf32> -> vector<8x512xf32>
    %168 = arith.addf %164, %167 : vector<8x512xf32>
    %169 = vector.extract_strided_slice %168 {offsets = [0, 0], sizes = [8, 384], strides = [1, 1]} : vector<8x512xf32> to vector<8x384xf32>
    %170 = arith.negf %169 : vector<8x384xf32>
    %171 = math.exp %170 : vector<8x384xf32>
    %cst_99 = arith.constant 1.000000e+00 : f32
    %172 = vector.broadcast %cst_99 : f32 to vector<8x384xf32>
    %173 = arith.addf %172, %171 : vector<8x384xf32>
    %174 = arith.divf %172, %173 : vector<8x384xf32>
    %175 = vector.extract_strided_slice %174 {offsets = [0, 0], sizes = [8, 128], strides = [1, 1]} : vector<8x384xf32> to vector<8x128xf32>
    %176 = vector.extract_strided_slice %174 {offsets = [0, 128], sizes = [8, 128], strides = [1, 1]} : vector<8x384xf32> to vector<8x128xf32>
    %177 = vector.extract_strided_slice %174 {offsets = [0, 256], sizes = [8, 128], strides = [1, 1]} : vector<8x384xf32> to vector<8x128xf32>
    %178 = vector.extract_strided_slice %168 {offsets = [0, 384], sizes = [8, 128], strides = [1, 1]} : vector<8x512xf32> to vector<8x128xf32>
    %179 = math.tanh %178 : vector<8x128xf32>
    %c0_100 = arith.constant 0 : index
    %c0_101 = arith.constant 0 : index
    %180 = vector.load %arg14[%c0_100, %c0_101] : memref<8x128xf32, #tpu.memory_space<vmem>>, vector<8x128xf32>
    %181 = arith.mulf %176, %180 : vector<8x128xf32>
    %182 = arith.mulf %175, %179 : vector<8x128xf32>
    %183 = arith.addf %181, %182 : vector<8x128xf32>
    %184 = math.tanh %183 : vector<8x128xf32>
    %185 = arith.mulf %177, %184 : vector<8x128xf32>
    %c0_102 = arith.constant 0 : index
    %c0_103 = arith.constant 0 : index
    %186 = vector.load %arg14[%c0_102, %c0_103] : memref<8x128xf32, #tpu.memory_space<vmem>>, vector<8x128xf32>
    tpu.vector_store %arg14[%c0_102, %c0_103], %183 {strides = array<i32>} : memref<8x128xf32, #tpu.memory_space<vmem>>, vector<8x128xf32>,
    %c0_104 = arith.constant 0 : index
    %c0_105 = arith.constant 0 : index
    %187 = vector.load %arg13[%c0_104, %c0_105] : memref<8x128xf32, #tpu.memory_space<vmem>>, vector<8x128xf32>
    tpu.vector_store %arg13[%c0_104, %c0_105], %185 {strides = array<i32>} : memref<8x128xf32, #tpu.memory_space<vmem>>, vector<8x128xf32>,
    %c0_i32_106 = arith.constant 0 : i32
    %188 = arith.addi %c0_i32_106, %162 : i32
    %189 = arith.index_cast %188 : i32 to index
    %c0_107 = arith.constant 0 : index
    %190 = vector.load %arg12[%189, %c0_107] : memref<64x128xf32, #tpu.memory_space<vmem>>, vector<8x128xf32>
    tpu.vector_store %arg12[%189, %c0_107], %185 {strides = array<i32>} : memref<64x128xf32, #tpu.memory_space<vmem>>, vector<8x128xf32>,
    %c6_i32 = arith.constant 6 : i32
    %c8_i32_108 = arith.constant 8 : i32
    %191 = arith.muli %c6_i32, %c8_i32_108 : i32
    %192 = tpu.assume_multiple %191, 8 : i32
    %193 = arith.index_cast %192 : i32 to index
    %c0_109 = arith.constant 0 : index
    %194 = vector.load %arg11[%193, %c0_109] : memref<64x512xf32, #tpu.memory_space<vmem>>, vector<8x512xf32>
    %c0_110 = arith.constant 0 : index
    %c0_111 = arith.constant 0 : index
    %195 = vector.load %arg13[%c0_110, %c0_111] : memref<8x128xf32, #tpu.memory_space<vmem>>, vector<8x128xf32>
    %c0_112 = arith.constant 0 : index
    %c0_113 = arith.constant 0 : index
    %196 = vector.load %arg3[%c0_112, %c0_113] : memref<128x512xf32, #tpu.memory_space<vmem>>, vector<128x512xf32>
    %cst_114 = arith.constant dense<0.000000e+00> : vector<8x512xf32>
    %197 = tpu.matmul %195, %196, %cst_114 {dimension_numbers = #tpu.dot_dimension_numbers<[1], [0], [0], [1], [0, 0, 1, 1], [], []>} : vector<8x128xf32>, vector<128x512xf32>, vector<8x512xf32> -> vector<8x512xf32>
    %198 = arith.addf %194, %197 : vector<8x512xf32>
    %199 = vector.extract_strided_slice %198 {offsets = [0, 0], sizes = [8, 384], strides = [1, 1]} : vector<8x512xf32> to vector<8x384xf32>
    %200 = arith.negf %199 : vector<8x384xf32>
    %201 = math.exp %200 : vector<8x384xf32>
    %cst_115 = arith.constant 1.000000e+00 : f32
    %202 = vector.broadcast %cst_115 : f32 to vector<8x384xf32>
    %203 = arith.addf %202, %201 : vector<8x384xf32>
    %204 = arith.divf %202, %203 : vector<8x384xf32>
    %205 = vector.extract_strided_slice %204 {offsets = [0, 0], sizes = [8, 128], strides = [1, 1]} : vector<8x384xf32> to vector<8x128xf32>
    %206 = vector.extract_strided_slice %204 {offsets = [0, 128], sizes = [8, 128], strides = [1, 1]} : vector<8x384xf32> to vector<8x128xf32>
    %207 = vector.extract_strided_slice %204 {offsets = [0, 256], sizes = [8, 128], strides = [1, 1]} : vector<8x384xf32> to vector<8x128xf32>
    %208 = vector.extract_strided_slice %198 {offsets = [0, 384], sizes = [8, 128], strides = [1, 1]} : vector<8x512xf32> to vector<8x128xf32>
    %209 = math.tanh %208 : vector<8x128xf32>
    %c0_116 = arith.constant 0 : index
    %c0_117 = arith.constant 0 : index
    %210 = vector.load %arg14[%c0_116, %c0_117] : memref<8x128xf32, #tpu.memory_space<vmem>>, vector<8x128xf32>
    %211 = arith.mulf %206, %210 : vector<8x128xf32>
    %212 = arith.mulf %205, %209 : vector<8x128xf32>
    %213 = arith.addf %211, %212 : vector<8x128xf32>
    %214 = math.tanh %213 : vector<8x128xf32>
    %215 = arith.mulf %207, %214 : vector<8x128xf32>
    %c0_118 = arith.constant 0 : index
    %c0_119 = arith.constant 0 : index
    %216 = vector.load %arg14[%c0_118, %c0_119] : memref<8x128xf32, #tpu.memory_space<vmem>>, vector<8x128xf32>
    tpu.vector_store %arg14[%c0_118, %c0_119], %213 {strides = array<i32>} : memref<8x128xf32, #tpu.memory_space<vmem>>, vector<8x128xf32>,
    %c0_120 = arith.constant 0 : index
    %c0_121 = arith.constant 0 : index
    %217 = vector.load %arg13[%c0_120, %c0_121] : memref<8x128xf32, #tpu.memory_space<vmem>>, vector<8x128xf32>
    tpu.vector_store %arg13[%c0_120, %c0_121], %215 {strides = array<i32>} : memref<8x128xf32, #tpu.memory_space<vmem>>, vector<8x128xf32>,
    %c0_i32_122 = arith.constant 0 : i32
    %218 = arith.addi %c0_i32_122, %192 : i32
    %219 = arith.index_cast %218 : i32 to index
    %c0_123 = arith.constant 0 : index
    %220 = vector.load %arg12[%219, %c0_123] : memref<64x128xf32, #tpu.memory_space<vmem>>, vector<8x128xf32>
    tpu.vector_store %arg12[%219, %c0_123], %215 {strides = array<i32>} : memref<64x128xf32, #tpu.memory_space<vmem>>, vector<8x128xf32>,
    %c7_i32 = arith.constant 7 : i32
    %c8_i32_124 = arith.constant 8 : i32
    %221 = arith.muli %c7_i32, %c8_i32_124 : i32
    %222 = tpu.assume_multiple %221, 8 : i32
    %223 = arith.index_cast %222 : i32 to index
    %c0_125 = arith.constant 0 : index
    %224 = vector.load %arg11[%223, %c0_125] : memref<64x512xf32, #tpu.memory_space<vmem>>, vector<8x512xf32>
    %c0_126 = arith.constant 0 : index
    %c0_127 = arith.constant 0 : index
    %225 = vector.load %arg13[%c0_126, %c0_127] : memref<8x128xf32, #tpu.memory_space<vmem>>, vector<8x128xf32>
    %c0_128 = arith.constant 0 : index
    %c0_129 = arith.constant 0 : index
    %226 = vector.load %arg3[%c0_128, %c0_129] : memref<128x512xf32, #tpu.memory_space<vmem>>, vector<128x512xf32>
    %cst_130 = arith.constant dense<0.000000e+00> : vector<8x512xf32>
    %227 = tpu.matmul %225, %226, %cst_130 {dimension_numbers = #tpu.dot_dimension_numbers<[1], [0], [0], [1], [0, 0, 1, 1], [], []>} : vector<8x128xf32>, vector<128x512xf32>, vector<8x512xf32> -> vector<8x512xf32>
    %228 = arith.addf %224, %227 : vector<8x512xf32>
    %229 = vector.extract_strided_slice %228 {offsets = [0, 0], sizes = [8, 384], strides = [1, 1]} : vector<8x512xf32> to vector<8x384xf32>
    %230 = arith.negf %229 : vector<8x384xf32>
    %231 = math.exp %230 : vector<8x384xf32>
    %cst_131 = arith.constant 1.000000e+00 : f32
    %232 = vector.broadcast %cst_131 : f32 to vector<8x384xf32>
    %233 = arith.addf %232, %231 : vector<8x384xf32>
    %234 = arith.divf %232, %233 : vector<8x384xf32>
    %235 = vector.extract_strided_slice %234 {offsets = [0, 0], sizes = [8, 128], strides = [1, 1]} : vector<8x384xf32> to vector<8x128xf32>
    %236 = vector.extract_strided_slice %234 {offsets = [0, 128], sizes = [8, 128], strides = [1, 1]} : vector<8x384xf32> to vector<8x128xf32>
    %237 = vector.extract_strided_slice %234 {offsets = [0, 256], sizes = [8, 128], strides = [1, 1]} : vector<8x384xf32> to vector<8x128xf32>
    %238 = vector.extract_strided_slice %228 {offsets = [0, 384], sizes = [8, 128], strides = [1, 1]} : vector<8x512xf32> to vector<8x128xf32>
    %239 = math.tanh %238 : vector<8x128xf32>
    %c0_132 = arith.constant 0 : index
    %c0_133 = arith.constant 0 : index
    %240 = vector.load %arg14[%c0_132, %c0_133] : memref<8x128xf32, #tpu.memory_space<vmem>>, vector<8x128xf32>
    %241 = arith.mulf %236, %240 : vector<8x128xf32>
    %242 = arith.mulf %235, %239 : vector<8x128xf32>
    %243 = arith.addf %241, %242 : vector<8x128xf32>
    %244 = math.tanh %243 : vector<8x128xf32>
    %245 = arith.mulf %237, %244 : vector<8x128xf32>
    %c0_134 = arith.constant 0 : index
    %c0_135 = arith.constant 0 : index
    %246 = vector.load %arg14[%c0_134, %c0_135] : memref<8x128xf32, #tpu.memory_space<vmem>>, vector<8x128xf32>
    tpu.vector_store %arg14[%c0_134, %c0_135], %243 {strides = array<i32>} : memref<8x128xf32, #tpu.memory_space<vmem>>, vector<8x128xf32>,
    %c0_136 = arith.constant 0 : index
    %c0_137 = arith.constant 0 : index
    %247 = vector.load %arg13[%c0_136, %c0_137] : memref<8x128xf32, #tpu.memory_space<vmem>>, vector<8x128xf32>
    tpu.vector_store %arg13[%c0_136, %c0_137], %245 {strides = array<i32>} : memref<8x128xf32, #tpu.memory_space<vmem>>, vector<8x128xf32>,
    %c0_i32_138 = arith.constant 0 : i32
    %248 = arith.addi %c0_i32_138, %222 : i32
    %249 = arith.index_cast %248 : i32 to index
    %c0_139 = arith.constant 0 : index
    %250 = vector.load %arg12[%249, %c0_139] : memref<64x128xf32, #tpu.memory_space<vmem>>, vector<8x128xf32>
    tpu.vector_store %arg12[%249, %c0_139], %245 {strides = array<i32>} : memref<64x128xf32, #tpu.memory_space<vmem>>, vector<8x128xf32>,
    %c8_i32_140 = arith.constant 8 : i32
    %cst_141 = arith.constant 0.000000e+00 : f32
    %251 = vector.broadcast %cst_141 : f32 to vector<8x128xf32>
    %c0_142 = arith.constant 0 : index
    %c0_143 = arith.constant 0 : index
    %252 = vector.load %arg13[%c0_142, %c0_143] : memref<8x128xf32, #tpu.memory_space<vmem>>, vector<8x128xf32>
    tpu.vector_store %arg13[%c0_142, %c0_143], %251 {strides = array<i32>} : memref<8x128xf32, #tpu.memory_space<vmem>>, vector<8x128xf32>,
    %cst_144 = arith.constant 0.000000e+00 : f32
    %253 = vector.broadcast %cst_144 : f32 to vector<8x128xf32>
    %c0_145 = arith.constant 0 : index
    %c0_146 = arith.constant 0 : index
    %254 = vector.load %arg14[%c0_145, %c0_146] : memref<8x128xf32, #tpu.memory_space<vmem>>, vector<8x128xf32>
    tpu.vector_store %arg14[%c0_145, %c0_146], %253 {strides = array<i32>} : memref<8x128xf32, #tpu.memory_space<vmem>>, vector<8x128xf32>,
    %c0_147 = arith.constant 0 : index
    %c0_148 = arith.constant 0 : index
    %255 = vector.load %arg12[%c0_147, %c0_148] : memref<64x128xf32, #tpu.memory_space<vmem>>, vector<64x128xf32>
    %c0_149 = arith.constant 0 : index
    %c0_150 = arith.constant 0 : index
    %256 = vector.load %arg5[%c0_149, %c0_150] : memref<128x512xf32, #tpu.memory_space<vmem>>, vector<128x512xf32>
    %cst_151 = arith.constant dense<0.000000e+00> : vector<64x512xf32>
    %257 = tpu.matmul %255, %256, %cst_151 {dimension_numbers = #tpu.dot_dimension_numbers<[1], [0], [0], [1], [0, 0, 1, 1], [], []>} : vector<64x128xf32>, vector<128x512xf32>, vector<64x512xf32> -> vector<64x512xf32>
    %c0_152 = arith.constant 0 : index
    %c0_153 = arith.constant 0 : index
    %258 = vector.load %arg7[%c0_152, %c0_153] : memref<1x512xf32, #tpu.memory_space<vmem>>, vector<1x512xf32>
    %259 = vector.broadcast %258 : vector<1x512xf32> to vector<64x512xf32>
    %260 = arith.addf %257, %259 : vector<64x512xf32>
    %c0_154 = arith.constant 0 : index
    %c0_155 = arith.constant 0 : index
    %261 = vector.load %arg11[%c0_154, %c0_155] : memref<64x512xf32, #tpu.memory_space<vmem>>, vector<64x512xf32>
    tpu.vector_store %arg11[%c0_154, %c0_155], %260 {strides = array<i32>} : memref<64x512xf32, #tpu.memory_space<vmem>>, vector<64x512xf32>,
    %c0_i32_156 = arith.constant 0 : i32
    %c8_i32_157 = arith.constant 8 : i32
    %262 = arith.muli %c0_i32_156, %c8_i32_157 : i32
    %263 = tpu.assume_multiple %262, 8 : i32
    %264 = arith.index_cast %263 : i32 to index
    %c0_158 = arith.constant 0 : index
    %265 = vector.load %arg11[%264, %c0_158] : memref<64x512xf32, #tpu.memory_space<vmem>>, vector<8x512xf32>
    %c0_159 = arith.constant 0 : index
    %c0_160 = arith.constant 0 : index
    %266 = vector.load %arg13[%c0_159, %c0_160] : memref<8x128xf32, #tpu.memory_space<vmem>>, vector<8x128xf32>
    %c0_161 = arith.constant 0 : index
    %c0_162 = arith.constant 0 : index
    %267 = vector.load %arg6[%c0_161, %c0_162] : memref<128x512xf32, #tpu.memory_space<vmem>>, vector<128x512xf32>
    %cst_163 = arith.constant dense<0.000000e+00> : vector<8x512xf32>
    %268 = tpu.matmul %266, %267, %cst_163 {dimension_numbers = #tpu.dot_dimension_numbers<[1], [0], [0], [1], [0, 0, 1, 1], [], []>} : vector<8x128xf32>, vector<128x512xf32>, vector<8x512xf32> -> vector<8x512xf32>
    %269 = arith.addf %265, %268 : vector<8x512xf32>
    %270 = vector.extract_strided_slice %269 {offsets = [0, 0], sizes = [8, 384], strides = [1, 1]} : vector<8x512xf32> to vector<8x384xf32>
    %271 = arith.negf %270 : vector<8x384xf32>
    %272 = math.exp %271 : vector<8x384xf32>
    %cst_164 = arith.constant 1.000000e+00 : f32
    %273 = vector.broadcast %cst_164 : f32 to vector<8x384xf32>
    %274 = arith.addf %273, %272 : vector<8x384xf32>
    %275 = arith.divf %273, %274 : vector<8x384xf32>
    %276 = vector.extract_strided_slice %275 {offsets = [0, 0], sizes = [8, 128], strides = [1, 1]} : vector<8x384xf32> to vector<8x128xf32>
    %277 = vector.extract_strided_slice %275 {offsets = [0, 128], sizes = [8, 128], strides = [1, 1]} : vector<8x384xf32> to vector<8x128xf32>
    %278 = vector.extract_strided_slice %275 {offsets = [0, 256], sizes = [8, 128], strides = [1, 1]} : vector<8x384xf32> to vector<8x128xf32>
    %279 = vector.extract_strided_slice %269 {offsets = [0, 384], sizes = [8, 128], strides = [1, 1]} : vector<8x512xf32> to vector<8x128xf32>
    %280 = math.tanh %279 : vector<8x128xf32>
    %c0_165 = arith.constant 0 : index
    %c0_166 = arith.constant 0 : index
    %281 = vector.load %arg14[%c0_165, %c0_166] : memref<8x128xf32, #tpu.memory_space<vmem>>, vector<8x128xf32>
    %282 = arith.mulf %277, %281 : vector<8x128xf32>
    %283 = arith.mulf %276, %280 : vector<8x128xf32>
    %284 = arith.addf %282, %283 : vector<8x128xf32>
    %285 = math.tanh %284 : vector<8x128xf32>
    %286 = arith.mulf %278, %285 : vector<8x128xf32>
    %c0_167 = arith.constant 0 : index
    %c0_168 = arith.constant 0 : index
    %287 = vector.load %arg14[%c0_167, %c0_168] : memref<8x128xf32, #tpu.memory_space<vmem>>, vector<8x128xf32>
    tpu.vector_store %arg14[%c0_167, %c0_168], %284 {strides = array<i32>} : memref<8x128xf32, #tpu.memory_space<vmem>>, vector<8x128xf32>,
    %c0_169 = arith.constant 0 : index
    %c0_170 = arith.constant 0 : index
    %288 = vector.load %arg13[%c0_169, %c0_170] : memref<8x128xf32, #tpu.memory_space<vmem>>, vector<8x128xf32>
    tpu.vector_store %arg13[%c0_169, %c0_170], %286 {strides = array<i32>} : memref<8x128xf32, #tpu.memory_space<vmem>>, vector<8x128xf32>,
    %c1_i32_171 = arith.constant 1 : i32
    %c8_i32_172 = arith.constant 8 : i32
    %289 = arith.muli %c1_i32_171, %c8_i32_172 : i32
    %290 = tpu.assume_multiple %289, 8 : i32
    %291 = arith.index_cast %290 : i32 to index
    %c0_173 = arith.constant 0 : index
    %292 = vector.load %arg11[%291, %c0_173] : memref<64x512xf32, #tpu.memory_space<vmem>>, vector<8x512xf32>
    %c0_174 = arith.constant 0 : index
    %c0_175 = arith.constant 0 : index
    %293 = vector.load %arg13[%c0_174, %c0_175] : memref<8x128xf32, #tpu.memory_space<vmem>>, vector<8x128xf32>
    %c0_176 = arith.constant 0 : index
    %c0_177 = arith.constant 0 : index
    %294 = vector.load %arg6[%c0_176, %c0_177] : memref<128x512xf32, #tpu.memory_space<vmem>>, vector<128x512xf32>
    %cst_178 = arith.constant dense<0.000000e+00> : vector<8x512xf32>
    %295 = tpu.matmul %293, %294, %cst_178 {dimension_numbers = #tpu.dot_dimension_numbers<[1], [0], [0], [1], [0, 0, 1, 1], [], []>} : vector<8x128xf32>, vector<128x512xf32>, vector<8x512xf32> -> vector<8x512xf32>
    %296 = arith.addf %292, %295 : vector<8x512xf32>
    %297 = vector.extract_strided_slice %296 {offsets = [0, 0], sizes = [8, 384], strides = [1, 1]} : vector<8x512xf32> to vector<8x384xf32>
    %298 = arith.negf %297 : vector<8x384xf32>
    %299 = math.exp %298 : vector<8x384xf32>
    %cst_179 = arith.constant 1.000000e+00 : f32
    %300 = vector.broadcast %cst_179 : f32 to vector<8x384xf32>
    %301 = arith.addf %300, %299 : vector<8x384xf32>
    %302 = arith.divf %300, %301 : vector<8x384xf32>
    %303 = vector.extract_strided_slice %302 {offsets = [0, 0], sizes = [8, 128], strides = [1, 1]} : vector<8x384xf32> to vector<8x128xf32>
    %304 = vector.extract_strided_slice %302 {offsets = [0, 128], sizes = [8, 128], strides = [1, 1]} : vector<8x384xf32> to vector<8x128xf32>
    %305 = vector.extract_strided_slice %302 {offsets = [0, 256], sizes = [8, 128], strides = [1, 1]} : vector<8x384xf32> to vector<8x128xf32>
    %306 = vector.extract_strided_slice %296 {offsets = [0, 384], sizes = [8, 128], strides = [1, 1]} : vector<8x512xf32> to vector<8x128xf32>
    %307 = math.tanh %306 : vector<8x128xf32>
    %c0_180 = arith.constant 0 : index
    %c0_181 = arith.constant 0 : index
    %308 = vector.load %arg14[%c0_180, %c0_181] : memref<8x128xf32, #tpu.memory_space<vmem>>, vector<8x128xf32>
    %309 = arith.mulf %304, %308 : vector<8x128xf32>
    %310 = arith.mulf %303, %307 : vector<8x128xf32>
    %311 = arith.addf %309, %310 : vector<8x128xf32>
    %312 = math.tanh %311 : vector<8x128xf32>
    %313 = arith.mulf %305, %312 : vector<8x128xf32>
    %c0_182 = arith.constant 0 : index
    %c0_183 = arith.constant 0 : index
    %314 = vector.load %arg14[%c0_182, %c0_183] : memref<8x128xf32, #tpu.memory_space<vmem>>, vector<8x128xf32>
    tpu.vector_store %arg14[%c0_182, %c0_183], %311 {strides = array<i32>} : memref<8x128xf32, #tpu.memory_space<vmem>>, vector<8x128xf32>,
    %c0_184 = arith.constant 0 : index
    %c0_185 = arith.constant 0 : index
    %315 = vector.load %arg13[%c0_184, %c0_185] : memref<8x128xf32, #tpu.memory_space<vmem>>, vector<8x128xf32>
    tpu.vector_store %arg13[%c0_184, %c0_185], %313 {strides = array<i32>} : memref<8x128xf32, #tpu.memory_space<vmem>>, vector<8x128xf32>,
    %c2_i32_186 = arith.constant 2 : i32
    %c8_i32_187 = arith.constant 8 : i32
    %316 = arith.muli %c2_i32_186, %c8_i32_187 : i32
    %317 = tpu.assume_multiple %316, 8 : i32
    %318 = arith.index_cast %317 : i32 to index
    %c0_188 = arith.constant 0 : index
    %319 = vector.load %arg11[%318, %c0_188] : memref<64x512xf32, #tpu.memory_space<vmem>>, vector<8x512xf32>
    %c0_189 = arith.constant 0 : index
    %c0_190 = arith.constant 0 : index
    %320 = vector.load %arg13[%c0_189, %c0_190] : memref<8x128xf32, #tpu.memory_space<vmem>>, vector<8x128xf32>
    %c0_191 = arith.constant 0 : index
    %c0_192 = arith.constant 0 : index
    %321 = vector.load %arg6[%c0_191, %c0_192] : memref<128x512xf32, #tpu.memory_space<vmem>>, vector<128x512xf32>
    %cst_193 = arith.constant dense<0.000000e+00> : vector<8x512xf32>
    %322 = tpu.matmul %320, %321, %cst_193 {dimension_numbers = #tpu.dot_dimension_numbers<[1], [0], [0], [1], [0, 0, 1, 1], [], []>} : vector<8x128xf32>, vector<128x512xf32>, vector<8x512xf32> -> vector<8x512xf32>
    %323 = arith.addf %319, %322 : vector<8x512xf32>
    %324 = vector.extract_strided_slice %323 {offsets = [0, 0], sizes = [8, 384], strides = [1, 1]} : vector<8x512xf32> to vector<8x384xf32>
    %325 = arith.negf %324 : vector<8x384xf32>
    %326 = math.exp %325 : vector<8x384xf32>
    %cst_194 = arith.constant 1.000000e+00 : f32
    %327 = vector.broadcast %cst_194 : f32 to vector<8x384xf32>
    %328 = arith.addf %327, %326 : vector<8x384xf32>
    %329 = arith.divf %327, %328 : vector<8x384xf32>
    %330 = vector.extract_strided_slice %329 {offsets = [0, 0], sizes = [8, 128], strides = [1, 1]} : vector<8x384xf32> to vector<8x128xf32>
    %331 = vector.extract_strided_slice %329 {offsets = [0, 128], sizes = [8, 128], strides = [1, 1]} : vector<8x384xf32> to vector<8x128xf32>
    %332 = vector.extract_strided_slice %329 {offsets = [0, 256], sizes = [8, 128], strides = [1, 1]} : vector<8x384xf32> to vector<8x128xf32>
    %333 = vector.extract_strided_slice %323 {offsets = [0, 384], sizes = [8, 128], strides = [1, 1]} : vector<8x512xf32> to vector<8x128xf32>
    %334 = math.tanh %333 : vector<8x128xf32>
    %c0_195 = arith.constant 0 : index
    %c0_196 = arith.constant 0 : index
    %335 = vector.load %arg14[%c0_195, %c0_196] : memref<8x128xf32, #tpu.memory_space<vmem>>, vector<8x128xf32>
    %336 = arith.mulf %331, %335 : vector<8x128xf32>
    %337 = arith.mulf %330, %334 : vector<8x128xf32>
    %338 = arith.addf %336, %337 : vector<8x128xf32>
    %339 = math.tanh %338 : vector<8x128xf32>
    %340 = arith.mulf %332, %339 : vector<8x128xf32>
    %c0_197 = arith.constant 0 : index
    %c0_198 = arith.constant 0 : index
    %341 = vector.load %arg14[%c0_197, %c0_198] : memref<8x128xf32, #tpu.memory_space<vmem>>, vector<8x128xf32>
    tpu.vector_store %arg14[%c0_197, %c0_198], %338 {strides = array<i32>} : memref<8x128xf32, #tpu.memory_space<vmem>>, vector<8x128xf32>,
    %c0_199 = arith.constant 0 : index
    %c0_200 = arith.constant 0 : index
    %342 = vector.load %arg13[%c0_199, %c0_200] : memref<8x128xf32, #tpu.memory_space<vmem>>, vector<8x128xf32>
    tpu.vector_store %arg13[%c0_199, %c0_200], %340 {strides = array<i32>} : memref<8x128xf32, #tpu.memory_space<vmem>>, vector<8x128xf32>,
    %c3_i32_201 = arith.constant 3 : i32
    %c8_i32_202 = arith.constant 8 : i32
    %343 = arith.muli %c3_i32_201, %c8_i32_202 : i32
    %344 = tpu.assume_multiple %343, 8 : i32
    %345 = arith.index_cast %344 : i32 to index
    %c0_203 = arith.constant 0 : index
    %346 = vector.load %arg11[%345, %c0_203] : memref<64x512xf32, #tpu.memory_space<vmem>>, vector<8x512xf32>
    %c0_204 = arith.constant 0 : index
    %c0_205 = arith.constant 0 : index
    %347 = vector.load %arg13[%c0_204, %c0_205] : memref<8x128xf32, #tpu.memory_space<vmem>>, vector<8x128xf32>
    %c0_206 = arith.constant 0 : index
    %c0_207 = arith.constant 0 : index
    %348 = vector.load %arg6[%c0_206, %c0_207] : memref<128x512xf32, #tpu.memory_space<vmem>>, vector<128x512xf32>
    %cst_208 = arith.constant dense<0.000000e+00> : vector<8x512xf32>
    %349 = tpu.matmul %347, %348, %cst_208 {dimension_numbers = #tpu.dot_dimension_numbers<[1], [0], [0], [1], [0, 0, 1, 1], [], []>} : vector<8x128xf32>, vector<128x512xf32>, vector<8x512xf32> -> vector<8x512xf32>
    %350 = arith.addf %346, %349 : vector<8x512xf32>
    %351 = vector.extract_strided_slice %350 {offsets = [0, 0], sizes = [8, 384], strides = [1, 1]} : vector<8x512xf32> to vector<8x384xf32>
    %352 = arith.negf %351 : vector<8x384xf32>
    %353 = math.exp %352 : vector<8x384xf32>
    %cst_209 = arith.constant 1.000000e+00 : f32
    %354 = vector.broadcast %cst_209 : f32 to vector<8x384xf32>
    %355 = arith.addf %354, %353 : vector<8x384xf32>
    %356 = arith.divf %354, %355 : vector<8x384xf32>
    %357 = vector.extract_strided_slice %356 {offsets = [0, 0], sizes = [8, 128], strides = [1, 1]} : vector<8x384xf32> to vector<8x128xf32>
    %358 = vector.extract_strided_slice %356 {offsets = [0, 128], sizes = [8, 128], strides = [1, 1]} : vector<8x384xf32> to vector<8x128xf32>
    %359 = vector.extract_strided_slice %356 {offsets = [0, 256], sizes = [8, 128], strides = [1, 1]} : vector<8x384xf32> to vector<8x128xf32>
    %360 = vector.extract_strided_slice %350 {offsets = [0, 384], sizes = [8, 128], strides = [1, 1]} : vector<8x512xf32> to vector<8x128xf32>
    %361 = math.tanh %360 : vector<8x128xf32>
    %c0_210 = arith.constant 0 : index
    %c0_211 = arith.constant 0 : index
    %362 = vector.load %arg14[%c0_210, %c0_211] : memref<8x128xf32, #tpu.memory_space<vmem>>, vector<8x128xf32>
    %363 = arith.mulf %358, %362 : vector<8x128xf32>
    %364 = arith.mulf %357, %361 : vector<8x128xf32>
    %365 = arith.addf %363, %364 : vector<8x128xf32>
    %366 = math.tanh %365 : vector<8x128xf32>
    %367 = arith.mulf %359, %366 : vector<8x128xf32>
    %c0_212 = arith.constant 0 : index
    %c0_213 = arith.constant 0 : index
    %368 = vector.load %arg14[%c0_212, %c0_213] : memref<8x128xf32, #tpu.memory_space<vmem>>, vector<8x128xf32>
    tpu.vector_store %arg14[%c0_212, %c0_213], %365 {strides = array<i32>} : memref<8x128xf32, #tpu.memory_space<vmem>>, vector<8x128xf32>,
    %c0_214 = arith.constant 0 : index
    %c0_215 = arith.constant 0 : index
    %369 = vector.load %arg13[%c0_214, %c0_215] : memref<8x128xf32, #tpu.memory_space<vmem>>, vector<8x128xf32>
    tpu.vector_store %arg13[%c0_214, %c0_215], %367 {strides = array<i32>} : memref<8x128xf32, #tpu.memory_space<vmem>>, vector<8x128xf32>,
    %c4_i32_216 = arith.constant 4 : i32
    %c8_i32_217 = arith.constant 8 : i32
    %370 = arith.muli %c4_i32_216, %c8_i32_217 : i32
    %371 = tpu.assume_multiple %370, 8 : i32
    %372 = arith.index_cast %371 : i32 to index
    %c0_218 = arith.constant 0 : index
    %373 = vector.load %arg11[%372, %c0_218] : memref<64x512xf32, #tpu.memory_space<vmem>>, vector<8x512xf32>
    %c0_219 = arith.constant 0 : index
    %c0_220 = arith.constant 0 : index
    %374 = vector.load %arg13[%c0_219, %c0_220] : memref<8x128xf32, #tpu.memory_space<vmem>>, vector<8x128xf32>
    %c0_221 = arith.constant 0 : index
    %c0_222 = arith.constant 0 : index
    %375 = vector.load %arg6[%c0_221, %c0_222] : memref<128x512xf32, #tpu.memory_space<vmem>>, vector<128x512xf32>
    %cst_223 = arith.constant dense<0.000000e+00> : vector<8x512xf32>
    %376 = tpu.matmul %374, %375, %cst_223 {dimension_numbers = #tpu.dot_dimension_numbers<[1], [0], [0], [1], [0, 0, 1, 1], [], []>} : vector<8x128xf32>, vector<128x512xf32>, vector<8x512xf32> -> vector<8x512xf32>
    %377 = arith.addf %373, %376 : vector<8x512xf32>
    %378 = vector.extract_strided_slice %377 {offsets = [0, 0], sizes = [8, 384], strides = [1, 1]} : vector<8x512xf32> to vector<8x384xf32>
    %379 = arith.negf %378 : vector<8x384xf32>
    %380 = math.exp %379 : vector<8x384xf32>
    %cst_224 = arith.constant 1.000000e+00 : f32
    %381 = vector.broadcast %cst_224 : f32 to vector<8x384xf32>
    %382 = arith.addf %381, %380 : vector<8x384xf32>
    %383 = arith.divf %381, %382 : vector<8x384xf32>
    %384 = vector.extract_strided_slice %383 {offsets = [0, 0], sizes = [8, 128], strides = [1, 1]} : vector<8x384xf32> to vector<8x128xf32>
    %385 = vector.extract_strided_slice %383 {offsets = [0, 128], sizes = [8, 128], strides = [1, 1]} : vector<8x384xf32> to vector<8x128xf32>
    %386 = vector.extract_strided_slice %383 {offsets = [0, 256], sizes = [8, 128], strides = [1, 1]} : vector<8x384xf32> to vector<8x128xf32>
    %387 = vector.extract_strided_slice %377 {offsets = [0, 384], sizes = [8, 128], strides = [1, 1]} : vector<8x512xf32> to vector<8x128xf32>
    %388 = math.tanh %387 : vector<8x128xf32>
    %c0_225 = arith.constant 0 : index
    %c0_226 = arith.constant 0 : index
    %389 = vector.load %arg14[%c0_225, %c0_226] : memref<8x128xf32, #tpu.memory_space<vmem>>, vector<8x128xf32>
    %390 = arith.mulf %385, %389 : vector<8x128xf32>
    %391 = arith.mulf %384, %388 : vector<8x128xf32>
    %392 = arith.addf %390, %391 : vector<8x128xf32>
    %393 = math.tanh %392 : vector<8x128xf32>
    %394 = arith.mulf %386, %393 : vector<8x128xf32>
    %c0_227 = arith.constant 0 : index
    %c0_228 = arith.constant 0 : index
    %395 = vector.load %arg14[%c0_227, %c0_228] : memref<8x128xf32, #tpu.memory_space<vmem>>, vector<8x128xf32>
    tpu.vector_store %arg14[%c0_227, %c0_228], %392 {strides = array<i32>} : memref<8x128xf32, #tpu.memory_space<vmem>>, vector<8x128xf32>,
    %c0_229 = arith.constant 0 : index
    %c0_230 = arith.constant 0 : index
    %396 = vector.load %arg13[%c0_229, %c0_230] : memref<8x128xf32, #tpu.memory_space<vmem>>, vector<8x128xf32>
    tpu.vector_store %arg13[%c0_229, %c0_230], %394 {strides = array<i32>} : memref<8x128xf32, #tpu.memory_space<vmem>>, vector<8x128xf32>,
    %c5_i32_231 = arith.constant 5 : i32
    %c8_i32_232 = arith.constant 8 : i32
    %397 = arith.muli %c5_i32_231, %c8_i32_232 : i32
    %398 = tpu.assume_multiple %397, 8 : i32
    %399 = arith.index_cast %398 : i32 to index
    %c0_233 = arith.constant 0 : index
    %400 = vector.load %arg11[%399, %c0_233] : memref<64x512xf32, #tpu.memory_space<vmem>>, vector<8x512xf32>
    %c0_234 = arith.constant 0 : index
    %c0_235 = arith.constant 0 : index
    %401 = vector.load %arg13[%c0_234, %c0_235] : memref<8x128xf32, #tpu.memory_space<vmem>>, vector<8x128xf32>
    %c0_236 = arith.constant 0 : index
    %c0_237 = arith.constant 0 : index
    %402 = vector.load %arg6[%c0_236, %c0_237] : memref<128x512xf32, #tpu.memory_space<vmem>>, vector<128x512xf32>
    %cst_238 = arith.constant dense<0.000000e+00> : vector<8x512xf32>
    %403 = tpu.matmul %401, %402, %cst_238 {dimension_numbers = #tpu.dot_dimension_numbers<[1], [0], [0], [1], [0, 0, 1, 1], [], []>} : vector<8x128xf32>, vector<128x512xf32>, vector<8x512xf32> -> vector<8x512xf32>
    %404 = arith.addf %400, %403 : vector<8x512xf32>
    %405 = vector.extract_strided_slice %404 {offsets = [0, 0], sizes = [8, 384], strides = [1, 1]} : vector<8x512xf32> to vector<8x384xf32>
    %406 = arith.negf %405 : vector<8x384xf32>
    %407 = math.exp %406 : vector<8x384xf32>
    %cst_239 = arith.constant 1.000000e+00 : f32
    %408 = vector.broadcast %cst_239 : f32 to vector<8x384xf32>
    %409 = arith.addf %408, %407 : vector<8x384xf32>
    %410 = arith.divf %408, %409 : vector<8x384xf32>
    %411 = vector.extract_strided_slice %410 {offsets = [0, 0], sizes = [8, 128], strides = [1, 1]} : vector<8x384xf32> to vector<8x128xf32>
    %412 = vector.extract_strided_slice %410 {offsets = [0, 128], sizes = [8, 128], strides = [1, 1]} : vector<8x384xf32> to vector<8x128xf32>
    %413 = vector.extract_strided_slice %410 {offsets = [0, 256], sizes = [8, 128], strides = [1, 1]} : vector<8x384xf32> to vector<8x128xf32>
    %414 = vector.extract_strided_slice %404 {offsets = [0, 384], sizes = [8, 128], strides = [1, 1]} : vector<8x512xf32> to vector<8x128xf32>
    %415 = math.tanh %414 : vector<8x128xf32>
    %c0_240 = arith.constant 0 : index
    %c0_241 = arith.constant 0 : index
    %416 = vector.load %arg14[%c0_240, %c0_241] : memref<8x128xf32, #tpu.memory_space<vmem>>, vector<8x128xf32>
    %417 = arith.mulf %412, %416 : vector<8x128xf32>
    %418 = arith.mulf %411, %415 : vector<8x128xf32>
    %419 = arith.addf %417, %418 : vector<8x128xf32>
    %420 = math.tanh %419 : vector<8x128xf32>
    %421 = arith.mulf %413, %420 : vector<8x128xf32>
    %c0_242 = arith.constant 0 : index
    %c0_243 = arith.constant 0 : index
    %422 = vector.load %arg14[%c0_242, %c0_243] : memref<8x128xf32, #tpu.memory_space<vmem>>, vector<8x128xf32>
    tpu.vector_store %arg14[%c0_242, %c0_243], %419 {strides = array<i32>} : memref<8x128xf32, #tpu.memory_space<vmem>>, vector<8x128xf32>,
    %c0_244 = arith.constant 0 : index
    %c0_245 = arith.constant 0 : index
    %423 = vector.load %arg13[%c0_244, %c0_245] : memref<8x128xf32, #tpu.memory_space<vmem>>, vector<8x128xf32>
    tpu.vector_store %arg13[%c0_244, %c0_245], %421 {strides = array<i32>} : memref<8x128xf32, #tpu.memory_space<vmem>>, vector<8x128xf32>,
    %c6_i32_246 = arith.constant 6 : i32
    %c8_i32_247 = arith.constant 8 : i32
    %424 = arith.muli %c6_i32_246, %c8_i32_247 : i32
    %425 = tpu.assume_multiple %424, 8 : i32
    %426 = arith.index_cast %425 : i32 to index
    %c0_248 = arith.constant 0 : index
    %427 = vector.load %arg11[%426, %c0_248] : memref<64x512xf32, #tpu.memory_space<vmem>>, vector<8x512xf32>
    %c0_249 = arith.constant 0 : index
    %c0_250 = arith.constant 0 : index
    %428 = vector.load %arg13[%c0_249, %c0_250] : memref<8x128xf32, #tpu.memory_space<vmem>>, vector<8x128xf32>
    %c0_251 = arith.constant 0 : index
    %c0_252 = arith.constant 0 : index
    %429 = vector.load %arg6[%c0_251, %c0_252] : memref<128x512xf32, #tpu.memory_space<vmem>>, vector<128x512xf32>
    %cst_253 = arith.constant dense<0.000000e+00> : vector<8x512xf32>
    %430 = tpu.matmul %428, %429, %cst_253 {dimension_numbers = #tpu.dot_dimension_numbers<[1], [0], [0], [1], [0, 0, 1, 1], [], []>} : vector<8x128xf32>, vector<128x512xf32>, vector<8x512xf32> -> vector<8x512xf32>
    %431 = arith.addf %427, %430 : vector<8x512xf32>
    %432 = vector.extract_strided_slice %431 {offsets = [0, 0], sizes = [8, 384], strides = [1, 1]} : vector<8x512xf32> to vector<8x384xf32>
    %433 = arith.negf %432 : vector<8x384xf32>
    %434 = math.exp %433 : vector<8x384xf32>
    %cst_254 = arith.constant 1.000000e+00 : f32
    %435 = vector.broadcast %cst_254 : f32 to vector<8x384xf32>
    %436 = arith.addf %435, %434 : vector<8x384xf32>
    %437 = arith.divf %435, %436 : vector<8x384xf32>
    %438 = vector.extract_strided_slice %437 {offsets = [0, 0], sizes = [8, 128], strides = [1, 1]} : vector<8x384xf32> to vector<8x128xf32>
    %439 = vector.extract_strided_slice %437 {offsets = [0, 128], sizes = [8, 128], strides = [1, 1]} : vector<8x384xf32> to vector<8x128xf32>
    %440 = vector.extract_strided_slice %437 {offsets = [0, 256], sizes = [8, 128], strides = [1, 1]} : vector<8x384xf32> to vector<8x128xf32>
    %441 = vector.extract_strided_slice %431 {offsets = [0, 384], sizes = [8, 128], strides = [1, 1]} : vector<8x512xf32> to vector<8x128xf32>
    %442 = math.tanh %441 : vector<8x128xf32>
    %c0_255 = arith.constant 0 : index
    %c0_256 = arith.constant 0 : index
    %443 = vector.load %arg14[%c0_255, %c0_256] : memref<8x128xf32, #tpu.memory_space<vmem>>, vector<8x128xf32>
    %444 = arith.mulf %439, %443 : vector<8x128xf32>
    %445 = arith.mulf %438, %442 : vector<8x128xf32>
    %446 = arith.addf %444, %445 : vector<8x128xf32>
    %447 = math.tanh %446 : vector<8x128xf32>
    %448 = arith.mulf %440, %447 : vector<8x128xf32>
    %c0_257 = arith.constant 0 : index
    %c0_258 = arith.constant 0 : index
    %449 = vector.load %arg14[%c0_257, %c0_258] : memref<8x128xf32, #tpu.memory_space<vmem>>, vector<8x128xf32>
    tpu.vector_store %arg14[%c0_257, %c0_258], %446 {strides = array<i32>} : memref<8x128xf32, #tpu.memory_space<vmem>>, vector<8x128xf32>,
    %c0_259 = arith.constant 0 : index
    %c0_260 = arith.constant 0 : index
    %450 = vector.load %arg13[%c0_259, %c0_260] : memref<8x128xf32, #tpu.memory_space<vmem>>, vector<8x128xf32>
    tpu.vector_store %arg13[%c0_259, %c0_260], %448 {strides = array<i32>} : memref<8x128xf32, #tpu.memory_space<vmem>>, vector<8x128xf32>,
    %c7_i32_261 = arith.constant 7 : i32
    %c8_i32_262 = arith.constant 8 : i32
    %451 = arith.muli %c7_i32_261, %c8_i32_262 : i32
    %452 = tpu.assume_multiple %451, 8 : i32
    %453 = arith.index_cast %452 : i32 to index
    %c0_263 = arith.constant 0 : index
    %454 = vector.load %arg11[%453, %c0_263] : memref<64x512xf32, #tpu.memory_space<vmem>>, vector<8x512xf32>
    %c0_264 = arith.constant 0 : index
    %c0_265 = arith.constant 0 : index
    %455 = vector.load %arg13[%c0_264, %c0_265] : memref<8x128xf32, #tpu.memory_space<vmem>>, vector<8x128xf32>
    %c0_266 = arith.constant 0 : index
    %c0_267 = arith.constant 0 : index
    %456 = vector.load %arg6[%c0_266, %c0_267] : memref<128x512xf32, #tpu.memory_space<vmem>>, vector<128x512xf32>
    %cst_268 = arith.constant dense<0.000000e+00> : vector<8x512xf32>
    %457 = tpu.matmul %455, %456, %cst_268 {dimension_numbers = #tpu.dot_dimension_numbers<[1], [0], [0], [1], [0, 0, 1, 1], [], []>} : vector<8x128xf32>, vector<128x512xf32>, vector<8x512xf32> -> vector<8x512xf32>
    %458 = arith.addf %454, %457 : vector<8x512xf32>
    %459 = vector.extract_strided_slice %458 {offsets = [0, 0], sizes = [8, 384], strides = [1, 1]} : vector<8x512xf32> to vector<8x384xf32>
    %460 = arith.negf %459 : vector<8x384xf32>
    %461 = math.exp %460 : vector<8x384xf32>
    %cst_269 = arith.constant 1.000000e+00 : f32
    %462 = vector.broadcast %cst_269 : f32 to vector<8x384xf32>
    %463 = arith.addf %462, %461 : vector<8x384xf32>
    %464 = arith.divf %462, %463 : vector<8x384xf32>
    %465 = vector.extract_strided_slice %464 {offsets = [0, 0], sizes = [8, 128], strides = [1, 1]} : vector<8x384xf32> to vector<8x128xf32>
    %466 = vector.extract_strided_slice %464 {offsets = [0, 128], sizes = [8, 128], strides = [1, 1]} : vector<8x384xf32> to vector<8x128xf32>
    %467 = vector.extract_strided_slice %464 {offsets = [0, 256], sizes = [8, 128], strides = [1, 1]} : vector<8x384xf32> to vector<8x128xf32>
    %468 = vector.extract_strided_slice %458 {offsets = [0, 384], sizes = [8, 128], strides = [1, 1]} : vector<8x512xf32> to vector<8x128xf32>
    %469 = math.tanh %468 : vector<8x128xf32>
    %c0_270 = arith.constant 0 : index
    %c0_271 = arith.constant 0 : index
    %470 = vector.load %arg14[%c0_270, %c0_271] : memref<8x128xf32, #tpu.memory_space<vmem>>, vector<8x128xf32>
    %471 = arith.mulf %466, %470 : vector<8x128xf32>
    %472 = arith.mulf %465, %469 : vector<8x128xf32>
    %473 = arith.addf %471, %472 : vector<8x128xf32>
    %474 = math.tanh %473 : vector<8x128xf32>
    %475 = arith.mulf %467, %474 : vector<8x128xf32>
    %c0_272 = arith.constant 0 : index
    %c0_273 = arith.constant 0 : index
    %476 = vector.load %arg14[%c0_272, %c0_273] : memref<8x128xf32, #tpu.memory_space<vmem>>, vector<8x128xf32>
    tpu.vector_store %arg14[%c0_272, %c0_273], %473 {strides = array<i32>} : memref<8x128xf32, #tpu.memory_space<vmem>>, vector<8x128xf32>,
    %c0_274 = arith.constant 0 : index
    %c0_275 = arith.constant 0 : index
    %477 = vector.load %arg13[%c0_274, %c0_275] : memref<8x128xf32, #tpu.memory_space<vmem>>, vector<8x128xf32>
    tpu.vector_store %arg13[%c0_274, %c0_275], %475 {strides = array<i32>} : memref<8x128xf32, #tpu.memory_space<vmem>>, vector<8x128xf32>,
    %c8_i32_276 = arith.constant 8 : i32
    %c0_277 = arith.constant 0 : index
    %c0_278 = arith.constant 0 : index
    %478 = vector.load %arg13[%c0_277, %c0_278] : memref<8x128xf32, #tpu.memory_space<vmem>>, vector<8x128xf32>
    %c0_279 = arith.constant 0 : index
    %c0_280 = arith.constant 0 : index
    %479 = vector.load %arg8[%c0_279, %c0_280] : memref<128x128xf32, #tpu.memory_space<vmem>>, vector<128x128xf32>
    %cst_281 = arith.constant dense<0.000000e+00> : vector<8x128xf32>
    %480 = tpu.matmul %478, %479, %cst_281 {dimension_numbers = #tpu.dot_dimension_numbers<[1], [0], [0], [1], [0, 0, 1, 1], [], []>} : vector<8x128xf32>, vector<128x128xf32>, vector<8x128xf32> -> vector<8x128xf32>
    %c0_282 = arith.constant 0 : index
    %c0_283 = arith.constant 0 : index
    %481 = vector.load %arg9[%c0_282, %c0_283] : memref<1x128xf32, #tpu.memory_space<vmem>>, vector<1x128xf32>
    %482 = vector.broadcast %481 : vector<1x128xf32> to vector<8x128xf32>
    %483 = arith.addf %480, %482 : vector<8x128xf32>
    %c0_284 = arith.constant 0 : index
    %c0_285 = arith.constant 0 : index
    %484 = vector.load %arg10[%c0_284, %c0_285] : memref<8x128xf32, #tpu.memory_space<vmem>>, vector<8x128xf32>
    tpu.vector_store %arg10[%c0_284, %c0_285], %483 {strides = array<i32>} : memref<8x128xf32, #tpu.memory_space<vmem>>, vector<8x128xf32>,
    return
  }
  func.func @transform_0(%arg0: i32) -> (i32, i32) {
    %c0_i32 = arith.constant 0 : i32
    %c0_i32_0 = arith.constant 0 : i32
    return %arg0, %c0_i32 : i32, i32
  }
  func.func @transform_1(%arg0: i32) -> (i32, i32) {
    %c0_i32 = arith.constant 0 : i32
    %c0_i32_0 = arith.constant 0 : i32
    %c0_i32_1 = arith.constant 0 : i32
    return %c0_i32, %c0_i32_0 : i32, i32
  }
  func.func @transform_2(%arg0: i32) -> (i32, i32) {
    %c0_i32 = arith.constant 0 : i32
    %c0_i32_0 = arith.constant 0 : i32
    %c0_i32_1 = arith.constant 0 : i32
    return %c0_i32, %c0_i32_0 : i32, i32
  }
  func.func @transform_3(%arg0: i32) -> (i32, i32) {
    %c0_i32 = arith.constant 0 : i32
    %c0_i32_0 = arith.constant 0 : i32
    %c0_i32_1 = arith.constant 0 : i32
    return %c0_i32, %c0_i32_0 : i32, i32
  }
  func.func @transform_4(%arg0: i32) -> (i32, i32) {
    %c0_i32 = arith.constant 0 : i32
    %c0_i32_0 = arith.constant 0 : i32
    %c0_i32_1 = arith.constant 0 : i32
    return %c0_i32, %c0_i32_0 : i32, i32
  }
  func.func @transform_5(%arg0: i32) -> (i32, i32) {
    %c0_i32 = arith.constant 0 : i32
    %c0_i32_0 = arith.constant 0 : i32
    %c0_i32_1 = arith.constant 0 : i32
    return %c0_i32, %c0_i32_0 : i32, i32
  }
  func.func @transform_6(%arg0: i32) -> (i32, i32) {
    %c0_i32 = arith.constant 0 : i32
    %c0_i32_0 = arith.constant 0 : i32
    %c0_i32_1 = arith.constant 0 : i32
    return %c0_i32, %c0_i32_0 : i32, i32
  }
  func.func @transform_7(%arg0: i32) -> (i32, i32) {
    %c0_i32 = arith.constant 0 : i32
    %c0_i32_0 = arith.constant 0 : i32
    %c0_i32_1 = arith.constant 0 : i32
    return %c0_i32, %c0_i32_0 : i32, i32
  }
  func.func @transform_8(%arg0: i32) -> (i32, i32) {
    %c0_i32 = arith.constant 0 : i32
    %c0_i32_0 = arith.constant 0 : i32
    %c0_i32_1 = arith.constant 0 : i32
    return %c0_i32, %c0_i32_0 : i32, i32
  }
  func.func @transform_9(%arg0: i32) -> (i32, i32) {
    %c0_i32 = arith.constant 0 : i32
    %c0_i32_0 = arith.constant 0 : i32
    return %arg0, %c0_i32 : i32, i32
  }
}

</mosaic_0001>

<llo_original>
// kernel: tpu_custom_call.1
$region0: #{tpu_custom_call.1}
  #allocation0 [shape = 'u32[]', space=smem, size = 0x4, offset = 0x4, fixed_abs, tag = 'smem constant byte address 0x4 - core index']
  #allocation1 [shape = 'u32[144,128]{1,0:T(1,128)}', space=vmem, size = 0x12000, scoped, tag = 'internal scratch']
  #allocation2 [shape = 'f32[64,512]{1,0:T(8,128)}', space=vmem, size = 0x20000, scoped, tag = 'scratch operand']
  #allocation3 [shape = 'f32[64,128]{1,0:T(8,128)}', space=vmem, size = 0x8000, scoped, tag = 'scratch operand']
  #allocation4 [shape = 'f32[8,128]{1,0:T(8,128)}', space=vmem, size = 0x1000, scoped, tag = 'scratch operand']
  #allocation5 [shape = 'f32[8,128]{1,0:T(8,128)}', space=vmem, size = 0x1000, scoped, tag = 'scratch operand']
  %s0 = inlined_call_operand.hbm [shape: f32[64,128], index: 0, kind: input, shape index: {}]
  %s1 = inlined_call_operand.hbm [shape: f32[128,512], index: 1, kind: input, shape index: {}]
  %s2 = inlined_call_operand.hbm [shape: f32[128,512], index: 2, kind: input, shape index: {}]
  %s3 = inlined_call_operand.vmem [shape: f32[1,512], index: 3, kind: input, shape index: {}]
  %s4 = inlined_call_operand.hbm [shape: f32[128,512], index: 4, kind: input, shape index: {}]
  %s5 = inlined_call_operand.hbm [shape: f32[128,512], index: 5, kind: input, shape index: {}]
  %s6 = inlined_call_operand.vmem [shape: f32[1,512], index: 6, kind: input, shape index: {}]
  %s7 = inlined_call_operand.hbm [shape: f32[128,128], index: 7, kind: input, shape index: {}]
  %s8 = inlined_call_operand.vmem [shape: f32[1,128], index: 8, kind: input, shape index: {}]
  %s9 = inlined_call_operand.hbm [shape: f32[8,128], index: 9, kind: output, shape index: {}]
  %s10 = sld [smem:[#allocation0]]
  $region70: #{tpu_custom_call.1} parent=0
    _
  %s12 = ssub.s32 1, %s10
  %s13 = scalar_select 0, %s12, %s10
  $region1: #{tpu_custom_call.1} parent=0
    #allocation6 [shape = 'u8[32768]{0}', space=vmem, size = 0x8000, scoped, tag = 'input window, operand 0, single buffered']
    #allocation7 [shape = 's32[1]{0}', space=sflag, size = 0x4, scoped, tag = 'scoped memory for tpu_custom_call.1']
    #allocation8 [shape = 's32[1]{0}', space=sflag, size = 0x4, scoped, tag = 'scoped memory for tpu_custom_call.1']
    #allocation9 [shape = 'u8[262144]{0}', space=vmem, size = 0x40000, scoped, tag = 'input window, operand 1, single buffered']
    #allocation10 [shape = 's32[1]{0}', space=sflag, size = 0x4, scoped, tag = 'scoped memory for tpu_custom_call.1']
    #allocation11 [shape = 'u8[262144]{0}', space=vmem, size = 0x40000, scoped, tag = 'input window, operand 2, single buffered']
    #allocation12 [shape = 'u8[262144]{0}', space=vmem, size = 0x40000, scoped, tag = 'input window, operand 4, single buffered']
    #allocation13 [shape = 's32[1]{0}', space=sflag, size = 0x4, scoped, tag = 'scoped memory for tpu_custom_call.1']
    #allocation14 [shape = 'u8[262144]{0}', space=vmem, size = 0x40000, scoped, tag = 'input window, operand 5, single buffered']
    #allocation15 [shape = 'u8[65536]{0}', space=vmem, size = 0x10000, scoped, tag = 'input window, operand 7, single buffered']
    #allocation16 [shape = 's32[1]{0}', space=sflag, size = 0x4, scoped, tag = 'scoped memory for tpu_custom_call.1']
    #allocation17 [shape = 'u8[4096]{0}', space=vmem, size = 0x1000, scoped, tag = 'output window, operand 0, single buffered']
    %14 = vsyncpa [#allocation7], 0
    %15 = vsyncpa [#allocation10], 0
    %16 = vsyncpa [#allocation13], 0
    %17 = vsyncpa [#allocation16], 0
    %18 = vsyncpa [#allocation8], 0
    // Predicated region
    $region2: #{tpu_custom_call.1} parent=1 // pred_check
      _
    $region3: #{tpu_custom_call.1} parent=1 // pred_check_branch
      %20 = sbr.rel (0) target = $region5
    $region4: #{tpu_custom_call.1} parent=1 // pred_region
      %s22 = ssub.s32 1024, 1024
      %23 = vsyncadd [#allocation7], %s22
      %s24 = sshll.u32 [#allocation6], 4
      %s25 = int_to_ptr.vmem [resolvable:$true] %s24
      %30 = dma.hbm_to_vmem [thread:$0]  %s0, 1024, %s25, [#allocation7], 128, 128, 8
    $region5: #{tpu_custom_call.1} parent=1 // pred_fallthru
      _
    // Predicated region
    $region6: #{tpu_custom_call.1} parent=1 // pred_check
      _
    $region7: #{tpu_custom_call.1} parent=1 // pred_check_branch
      %32 = sbr.rel (0) target = $region9
    $region8: #{tpu_custom_call.1} parent=1 // pred_region
      %s34 = ssub.s32 8192, 8192
      %35 = vsyncadd [#allocation10], %s34
      %s36 = sshll.u32 [#allocation9], 4
      %s37 = int_to_ptr.vmem [resolvable:$true] %s36
      %42 = dma.hbm_to_vmem [thread:$0]  %s1, 8192, %s37, [#allocation10], 512, 512, 32
    $region9: #{tpu_custom_call.1} parent=1 // pred_fallthru
      _
    // Predicated region
    $region10: #{tpu_custom_call.1} parent=1 // pred_check
      _
    $region11: #{tpu_custom_call.1} parent=1 // pred_check_branch
      %44 = sbr.rel (0) target = $region13
    $region12: #{tpu_custom_call.1} parent=1 // pred_region
      %s46 = ssub.s32 8192, 8192
      %47 = vsyncadd [#allocation10], %s46
      %s48 = sshll.u32 [#allocation11], 4
      %s49 = int_to_ptr.vmem [resolvable:$true] %s48
      %54 = dma.hbm_to_vmem [thread:$0]  %s2, 8192, %s49, [#allocation10], 512, 512, 32
    $region13: #{tpu_custom_call.1} parent=1 // pred_fallthru
      _
    // Predicated region
    $region14: #{tpu_custom_call.1} parent=1 // pred_check
      _
    $region15: #{tpu_custom_call.1} parent=1 // pred_check_branch
      %56 = sbr.rel (0) target = $region17
    $region16: #{tpu_custom_call.1} parent=1 // pred_region
      _
    $region17: #{tpu_custom_call.1} parent=1 // pred_fallthru
      _
    // Predicated region
    $region18: #{tpu_custom_call.1} parent=1 // pred_check
      _
    $region19: #{tpu_custom_call.1} parent=1 // pred_check_branch
      %58 = sbr.rel (0) target = $region21
    $region20: #{tpu_custom_call.1} parent=1 // pred_region
      %s60 = ssub.s32 8192, 8192
      %61 = vsyncadd [#allocation13], %s60
      %s62 = sshll.u32 [#allocation12], 4
      %s63 = int_to_ptr.vmem [resolvable:$true] %s62
      %68 = dma.hbm_to_vmem [thread:$0]  %s4, 8192, %s63, [#allocation13], 512, 512, 32
    $region21: #{tpu_custom_call.1} parent=1 // pred_fallthru
      _
    // Predicated region
    $region22: #{tpu_custom_call.1} parent=1 // pred_check
      _
    $region23: #{tpu_custom_call.1} parent=1 // pred_check_branch
      %70 = sbr.rel (0) target = $region25
    $region24: #{tpu_custom_call.1} parent=1 // pred_region
      %s72 = ssub.s32 8192, 8192
      %73 = vsyncadd [#allocation13], %s72
      %s74 = sshll.u32 [#allocation14], 4
      %s75 = int_to_ptr.vmem [resolvable:$true] %s74
      %80 = dma.hbm_to_vmem [thread:$0]  %s5, 8192, %s75, [#allocation13], 512, 512, 32
    $region25: #{tpu_custom_call.1} parent=1 // pred_fallthru
      _
    // Predicated region
    $region26: #{tpu_custom_call.1} parent=1 // pred_check
      _
    $region27: #{tpu_custom_call.1} parent=1 // pred_check_branch
      %82 = sbr.rel (0) target = $region29
    $region28: #{tpu_custom_call.1} parent=1 // pred_region
      _
    $region29: #{tpu_custom_call.1} parent=1 // pred_fallthru
      _
    // Predicated region
    $region30: #{tpu_custom_call.1} parent=1 // pred_check
      _
    $region31: #{tpu_custom_call.1} parent=1 // pred_check_branch
      %84 = sbr.rel (0) target = $region33
    $region32: #{tpu_custom_call.1} parent=1 // pred_region
      %s86 = ssub.s32 2048, 2048
      %87 = vsyncadd [#allocation16], %s86
      %s88 = sshll.u32 [#allocation15], 4
      %s89 = int_to_ptr.vmem [resolvable:$true] %s88
      %94 = dma.hbm_to_vmem [thread:$0]  %s7, 2048, %s89, [#allocation16], 128, 128, 8
    $region33: #{tpu_custom_call.1} parent=1 // pred_fallthru
      _
    // Predicated region
    $region34: #{tpu_custom_call.1} parent=1 // pred_check
      _
    $region35: #{tpu_custom_call.1} parent=1 // pred_check_branch
      %96 = sbr.rel (0) target = $region37
    $region36: #{tpu_custom_call.1} parent=1 // pred_region
      _
    $region37: #{tpu_custom_call.1} parent=1 // pred_fallthru
      _
    // Predicated region
    $region38: #{tpu_custom_call.1} parent=1 // pred_check
      _
    $region39: #{tpu_custom_call.1} parent=1 // pred_check_branch
      %98 = sbr.rel (0) target = $region41
    $region40: #{tpu_custom_call.1} parent=1 // pred_region
      %99 = dma.done [#allocation7], 1024
    $region41: #{tpu_custom_call.1} parent=1 // pred_fallthru
      _
    // Predicated region
    $region42: #{tpu_custom_call.1} parent=1 // pred_check
      _
    $region43: #{tpu_custom_call.1} parent=1 // pred_check_branch
      %101 = sbr.rel (0) target = $region45
    $region44: #{tpu_custom_call.1} parent=1 // pred_region
      %102 = dma.done [#allocation10], 8192
    $region45: #{tpu_custom_call.1} parent=1 // pred_fallthru
      _
    // Predicated region
    $region46: #{tpu_custom_call.1} parent=1 // pred_check
      _
    $region47: #{tpu_custom_call.1} parent=1 // pred_check_branch
      %104 = sbr.rel (0) target = $region49
    $region48: #{tpu_custom_call.1} parent=1 // pred_region
      %105 = dma.done [#allocation10], 8192
    $region49: #{tpu_custom_call.1} parent=1 // pred_fallthru
      _
    // Predicated region
    $region50: #{tpu_custom_call.1} parent=1 // pred_check
      _
    $region51: #{tpu_custom_call.1} parent=1 // pred_check_branch
      %107 = sbr.rel (0) target = $region53
    $region52: #{tpu_custom_call.1} parent=1 // pred_region
      %108 = dma.done [#allocation13], 8192
    $region53: #{tpu_custom_call.1} parent=1 // pred_fallthru
      _
    // Predicated region
    $region54: #{tpu_custom_call.1} parent=1 // pred_check
      _
    $region55: #{tpu_custom_call.1} parent=1 // pred_check_branch
      %110 = sbr.rel (0) target = $region57
    $region56: #{tpu_custom_call.1} parent=1 // pred_region
      %111 = dma.done [#allocation13], 8192
    $region57: #{tpu_custom_call.1} parent=1 // pred_fallthru
      _
    // Predicated region
    $region58: #{tpu_custom_call.1} parent=1 // pred_check
      _
    $region59: #{tpu_custom_call.1} parent=1 // pred_check_branch
      %113 = sbr.rel (0) target = $region61
    $region60: #{tpu_custom_call.1} parent=1 // pred_region
      %114 = dma.done [#allocation16], 2048
    $region61: #{tpu_custom_call.1} parent=1 // pred_fallthru
      _
    %115 = vst [vmem:[#allocation4] sm:$0xff] 0.0
    %116 = vst [vmem:[#allocation5] sm:$0xff] 0.0
    %v117 = vld [vmem:[#allocation6] sm:$0xff]
    %v118 = vld [vmem:[#allocation6 + $0x8] sm:$0xff]
    %v119 = vld [vmem:[#allocation6 + $0x10] sm:$0xff]
    %v120 = vld [vmem:[#allocation6 + $0x18] sm:$0xff]
    %v121 = vld [vmem:[#allocation6 + $0x20] sm:$0xff]
    %v122 = vld [vmem:[#allocation6 + $0x28] sm:$0xff]
    %v123 = vld [vmem:[#allocation6 + $0x30] sm:$0xff]
    %v124 = vld [vmem:[#allocation6 + $0x38] sm:$0xff]
    %v125 = vld [vmem:[#allocation9] sm:$0xff]
    %v126 = vld [vmem:[#allocation9 + $0x8] sm:$0xff]
    %v127 = vld [vmem:[#allocation9 + $0x10] sm:$0xff]
    %v128 = vld [vmem:[#allocation9 + $0x18] sm:$0xff]
    %v129 = vld [vmem:[#allocation9 + $0x20] sm:$0xff]
    %v130 = vld [vmem:[#allocation9 + $0x28] sm:$0xff]
    %v131 = vld [vmem:[#allocation9 + $0x30] sm:$0xff]
    %v132 = vld [vmem:[#allocation9 + $0x38] sm:$0xff]
    %v133 = vld [vmem:[#allocation9 + $0x40] sm:$0xff]
    %v134 = vld [vmem:[#allocation9 + $0x48] sm:$0xff]
    %v135 = vld [vmem:[#allocation9 + $0x50] sm:$0xff]
    %v136 = vld [vmem:[#allocation9 + $0x58] sm:$0xff]
    %v137 = vld [vmem:[#allocation9 + $0x60] sm:$0xff]
    %v138 = vld [vmem:[#allocation9 + $0x68] sm:$0xff]
    %v139 = vld [vmem:[#allocation9 + $0x70] sm:$0xff]
    %v140 = vld [vmem:[#allocation9 + $0x78] sm:$0xff]
    %v141 = vld [vmem:[#allocation9 + $0x80] sm:$0xff]
    %v142 = vld [vmem:[#allocation9 + $0x88] sm:$0xff]
    %v143 = vld [vmem:[#allocation9 + $0x90] sm:$0xff]
    %v144 = vld [vmem:[#allocation9 + $0x98] sm:$0xff]
    %v145 = vld [vmem:[#allocation9 + $0xa0] sm:$0xff]
    %v146 = vld [vmem:[#allocation9 + $0xa8] sm:$0xff]
    %v147 = vld [vmem:[#allocation9 + $0xb0] sm:$0xff]
    %v148 = vld [vmem:[#allocation9 + $0xb8] sm:$0xff]
    %v149 = vld [vmem:[#allocation9 + $0xc0] sm:$0xff]
    %v150 = vld [vmem:[#allocation9 + $0xc8] sm:$0xff]
    %v151 = vld [vmem:[#allocation9 + $0xd0] sm:$0xff]
    %v152 = vld [vmem:[#allocation9 + $0xd8] sm:$0xff]
    %v153 = vld [vmem:[#allocation9 + $0xe0] sm:$0xff]
    %v154 = vld [vmem:[#allocation9 + $0xe8] sm:$0xff]
    %v155 = vld [vmem:[#allocation9 + $0xf0] sm:$0xff]
    %v156 = vld [vmem:[#allocation9 + $0xf8] sm:$0xff]
    %v157 = vld [vmem:[#allocation9 + $0x100] sm:$0xff]
    %v158 = vld [vmem:[#allocation9 + $0x108] sm:$0xff]
    %v159 = vld [vmem:[#allocation9 + $0x110] sm:$0xff]
    %v160 = vld [vmem:[#allocation9 + $0x118] sm:$0xff]
    %v161 = vld [vmem:[#allocation9 + $0x120] sm:$0xff]
    %v162 = vld [vmem:[#allocation9 + $0x128] sm:$0xff]
    %v163 = vld [vmem:[#allocation9 + $0x130] sm:$0xff]
    %v164 = vld [vmem:[#allocation9 + $0x138] sm:$0xff]
    %v165 = vld [vmem:[#allocation9 + $0x140] sm:$0xff]
    %v166 = vld [vmem:[#allocation9 + $0x148] sm:$0xff]
    %v167 = vld [vmem:[#allocation9 + $0x150] sm:$0xff]
    %v168 = vld [vmem:[#allocation9 + $0x158] sm:$0xff]
    %v169 = vld [vmem:[#allocation9 + $0x160] sm:$0xff]
    %v170 = vld [vmem:[#allocation9 + $0x168] sm:$0xff]
    %v171 = vld [vmem:[#allocation9 + $0x170] sm:$0xff]
    %v172 = vld [vmem:[#allocation9 + $0x178] sm:$0xff]
    %v173 = vld [vmem:[#allocation9 + $0x180] sm:$0xff]
    %v174 = vld [vmem:[#allocation9 + $0x188] sm:$0xff]
    %v175 = vld [vmem:[#allocation9 + $0x190] sm:$0xff]
    %v176 = vld [vmem:[#allocation9 + $0x198] sm:$0xff]
    %v177 = vld [vmem:[#allocation9 + $0x1a0] sm:$0xff]
    %v178 = vld [vmem:[#allocation9 + $0x1a8] sm:$0xff]
    %v179 = vld [vmem:[#allocation9 + $0x1b0] sm:$0xff]
    %v180 = vld [vmem:[#allocation9 + $0x1b8] sm:$0xff]
    %v181 = vld [vmem:[#allocation9 + $0x1c0] sm:$0xff]
    %v182 = vld [vmem:[#allocation9 + $0x1c8] sm:$0xff]
    %v183 = vld [vmem:[#allocation9 + $0x1d0] sm:$0xff]
    %v184 = vld [vmem:[#allocation9 + $0x1d8] sm:$0xff]
    %v185 = vld [vmem:[#allocation9 + $0x1e0] sm:$0xff]
    %v186 = vld [vmem:[#allocation9 + $0x1e8] sm:$0xff]
    %v187 = vld [vmem:[#allocation9 + $0x1f0] sm:$0xff]
    %v188 = vld [vmem:[#allocation9 + $0x1f8] sm:$0xff]
    %v189 = vld [vmem:[%s3] sm:$0xf]
    %v191 = vlaneseq
    %v192 = vshrl.u32 %v191, 7
    %v193 = vsub.s32 0, %v192
    %v194 = vrot.slane %v189, %v193
    %v195 = vlaneseq
    %v196 = vshrl.u32 %v195, 7
    %v197 = vsub.s32 1, %v196
    %v198 = vrot.slane %v189, %v197
    %v199 = vlaneseq
    %v200 = vshrl.u32 %v199, 7
    %v201 = vsub.s32 2, %v200
    %v202 = vrot.slane %v189, %v201
    %v203 = vlaneseq
    %v204 = vshrl.u32 %v203, 7
    %v205 = vsub.s32 3, %v204
    %v206 = vrot.slane %v189, %v205
    %211 = vmatprep.subr.mxu0 %v186
    %212 = vmatpush1.msra.mxu0 %v185
    %213 = vmatprep.subr.mxu0 %v182
    %214 = vmatpush1.msra.mxu0 %v181
    %215 = vmatprep.subr.mxu0 %v178
    %216 = vmatpush1.msra.mxu0 %v177
    %217 = vmatprep.subr.mxu0 %v174
    %218 = vmatpush1.msra.mxu0 %v173
    %219 = vmatprep.subr.mxu0 %v170
    %220 = vmatpush1.msra.mxu0 %v169
    %221 = vmatprep.subr.mxu0 %v166
    %222 = vmatpush1.msra.mxu0 %v165
    %223 = vmatprep.subr.mxu0 %v162
    %224 = vmatpush1.msra.mxu0 %v161
    %225 = vmatprep.subr.mxu0 %v158
    %226 = vmatpush1.msra.mxu0 %v157
    %227 = vmatprep.subr.mxu0 %v154
    %228 = vmatpush1.msra.mxu0 %v153
    %229 = vmatprep.subr.mxu0 %v150
    %230 = vmatpush1.msra.mxu0 %v149
    %231 = vmatprep.subr.mxu0 %v146
    %232 = vmatpush1.msra.mxu0 %v145
    %233 = vmatprep.subr.mxu0 %v142
    %234 = vmatpush1.msra.mxu0 %v141
    %235 = vmatprep.subr.mxu0 %v138
    %236 = vmatpush1.msra.mxu0 %v137
    %237 = vmatprep.subr.mxu0 %v134
    %238 = vmatpush1.msra.mxu0 %v133
    %239 = vmatprep.subr.mxu0 %v130
    %240 = vmatpush1.msra.mxu0 %v129
    %241 = vmatprep.subr.mxu0 %v126
    %242 = vmatpush1.msra.mxu0 %v125
    %243 = vmatprep.subr.mxu0 0.0
    %244 = vmatpush2.msra.mxu0 0.0
    %245 = vmatprep.subr.mxu0 0.0
    %246 = vmatpush2.msra.mxu0 0.0
    %247 = vmatprep.subr.mxu0 0.0
    %248 = vmatpush2.msra.mxu0 0.0
    %249 = vmatprep.subr.mxu0 0.0
    %250 = vmatpush2.msra.mxu0 0.0
    %251 = vmatprep.subr.mxu0 0.0
    %252 = vmatpush2.msra.mxu0 0.0
    %253 = vmatprep.subr.mxu0 0.0
    %254 = vmatpush2.msra.mxu0 0.0
    %255 = vmatprep.subr.mxu0 0.0
    %256 = vmatpush2.msra.mxu0 0.0
    %257 = vmatprep.subr.mxu0 0.0
    %258 = vmatpush2.msra.mxu0 0.0
    %259 = vmatprep.subr.mxu0 0.0
    %260 = vmatpush2.msra.mxu0 0.0
    %261 = vmatprep.subr.mxu0 0.0
    %262 = vmatpush2.msra.mxu0 0.0
    %263 = vmatprep.subr.mxu0 0.0
    %264 = vmatpush2.msra.mxu0 0.0
    %265 = vmatprep.subr.mxu0 0.0
    %266 = vmatpush2.msra.mxu0 0.0
    %267 = vmatprep.subr.mxu0 0.0
    %268 = vmatpush2.msra.mxu0 0.0
    %269 = vmatprep.subr.mxu0 0.0
    %270 = vmatpush2.msra.mxu0 0.0
    %271 = vmatprep.subr.mxu0 0.0
    %272 = vmatpush2.msra.mxu0 0.0
    %273 = vmatprep.subr.mxu0 0.0
    %274 = vmatpush2.msra.mxu0 0.0
    %275 = vmatprep.mubr.f32.mxu0 0.0
    %276 = vmatmul.mubr.f32.gmra.mxu0 %v117
    %v277 = vpop.f32.mrf.mxu0
    %v278 = vadd.f32 %v194, %v277
    %v279 = vpop.f32.mrf.mxu0
    %v280 = vadd.f32 %v198, %v279
    %281 = vmatprep.mubr.f32.mxu0 0.0
    %282 = vmatmul.mubr.f32.gmra.mxu0 %v118
    %v283 = vpop.f32.mrf.mxu0
    %v284 = vadd.f32 %v194, %v283
    %v285 = vpop.f32.mrf.mxu0
    %v286 = vadd.f32 %v198, %v285
    %287 = vmatprep.mubr.f32.mxu0 0.0
    %288 = vmatmul.mubr.f32.gmra.mxu0 %v119
    %v289 = vpop.f32.mrf.mxu0
    %v290 = vadd.f32 %v194, %v289
    %v291 = vpop.f32.mrf.mxu0
    %v292 = vadd.f32 %v198, %v291
    %293 = vmatprep.mubr.f32.mxu0 0.0
    %294 = vmatmul.mubr.f32.gmra.mxu0 %v120
    %v295 = vpop.f32.mrf.mxu0
    %v296 = vadd.f32 %v194, %v295
    %v297 = vpop.f32.mrf.mxu0
    %v298 = vadd.f32 %v198, %v297
    %299 = vmatprep.mubr.f32.mxu0 0.0
    %300 = vmatmul.mubr.f32.gmra.mxu0 %v121
    %v301 = vpop.f32.mrf.mxu0
    %v302 = vadd.f32 %v194, %v301
    %v303 = vpop.f32.mrf.mxu0
    %v304 = vadd.f32 %v198, %v303
    %305 = vmatprep.mubr.f32.mxu0 0.0
    %306 = vmatmul.mubr.f32.gmra.mxu0 %v122
    %v307 = vpop.f32.mrf.mxu0
    %v308 = vadd.f32 %v194, %v307
    %v309 = vpop.f32.mrf.mxu0
    %v310 = vadd.f32 %v198, %v309
    %311 = vmatprep.mubr.f32.mxu0 0.0
    %312 = vmatmul.mubr.f32.gmra.mxu0 %v123
    %v313 = vpop.f32.mrf.mxu0
    %v314 = vadd.f32 %v194, %v313
    %v315 = vpop.f32.mrf.mxu0
    %v316 = vadd.f32 %v198, %v315
    %317 = vmatprep.mubr.f32.mxu0 0.0
    %318 = vmatmul.mubr.f32.gmra.mxu0 %v124
    %v319 = vpop.f32.mrf.mxu0
    %v320 = vadd.f32 %v194, %v319
    %v321 = vpop.f32.mrf.mxu0
    %v322 = vadd.f32 %v198, %v321
    %323 = vdwg.mxu0
    %324 = vmatprep.subr.mxu0 %v188
    %325 = vmatpush1.msra.mxu0 %v187
    %326 = vmatprep.subr.mxu0 %v184
    %327 = vmatpush1.msra.mxu0 %v183
    %328 = vmatprep.subr.mxu0 %v180
    %329 = vmatpush1.msra.mxu0 %v179
    %330 = vmatprep.subr.mxu0 %v176
    %331 = vmatpush1.msra.mxu0 %v175
    %332 = vmatprep.subr.mxu0 %v172
    %333 = vmatpush1.msra.mxu0 %v171
    %334 = vmatprep.subr.mxu0 %v168
    %335 = vmatpush1.msra.mxu0 %v167
    %336 = vmatprep.subr.mxu0 %v164
    %337 = vmatpush1.msra.mxu0 %v163
    %338 = vmatprep.subr.mxu0 %v160
    %339 = vmatpush1.msra.mxu0 %v159
    %340 = vmatprep.subr.mxu0 %v156
    %341 = vmatpush1.msra.mxu0 %v155
    %342 = vmatprep.subr.mxu0 %v152
    %343 = vmatpush1.msra.mxu0 %v151
    %344 = vmatprep.subr.mxu0 %v148
    %345 = vmatpush1.msra.mxu0 %v147
    %346 = vmatprep.subr.mxu0 %v144
    %347 = vmatpush1.msra.mxu0 %v143
    %348 = vmatprep.subr.mxu0 %v140
    %349 = vmatpush1.msra.mxu0 %v139
    %350 = vmatprep.subr.mxu0 %v136
    %351 = vmatpush1.msra.mxu0 %v135
    %352 = vmatprep.subr.mxu0 %v132
    %353 = vmatpush1.msra.mxu0 %v131
    %354 = vmatprep.subr.mxu0 %v128
    %355 = vmatpush1.msra.mxu0 %v127
    %356 = vmatprep.subr.mxu0 0.0
    %357 = vmatpush2.msra.mxu0 0.0
    %358 = vmatprep.subr.mxu0 0.0
    %359 = vmatpush2.msra.mxu0 0.0
    %360 = vmatprep.subr.mxu0 0.0
    %361 = vmatpush2.msra.mxu0 0.0
    %362 = vmatprep.subr.mxu0 0.0
    %363 = vmatpush2.msra.mxu0 0.0
    %364 = vmatprep.subr.mxu0 0.0
    %365 = vmatpush2.msra.mxu0 0.0
    %366 = vmatprep.subr.mxu0 0.0
    %367 = vmatpush2.msra.mxu0 0.0
    %368 = vmatprep.subr.mxu0 0.0
    %369 = vmatpush2.msra.mxu0 0.0
    %370 = vmatprep.subr.mxu0 0.0
    %371 = vmatpush2.msra.mxu0 0.0
    %372 = vmatprep.subr.mxu0 0.0
    %373 = vmatpush2.msra.mxu0 0.0
    %374 = vmatprep.subr.mxu0 0.0
    %375 = vmatpush2.msra.mxu0 0.0
    %376 = vmatprep.subr.mxu0 0.0
    %377 = vmatpush2.msra.mxu0 0.0
    %378 = vmatprep.subr.mxu0 0.0
    %379 = vmatpush2.msra.mxu0 0.0
    %380 = vmatprep.subr.mxu0 0.0
    %381 = vmatpush2.msra.mxu0 0.0
    %382 = vmatprep.subr.mxu0 0.0
    %383 = vmatpush2.msra.mxu0 0.0
    %384 = vmatprep.subr.mxu0 0.0
    %385 = vmatpush2.msra.mxu0 0.0
    %386 = vmatprep.subr.mxu0 0.0
    %387 = vmatpush2.msra.mxu0 0.0
    %388 = vmatprep.mubr.f32.mxu0 0.0
    %389 = vmatmul.mubr.f32.gmra.mxu0 %v117
    %v390 = vpop.f32.mrf.mxu0
    %v391 = vadd.f32 %v202, %v390
    %v392 = vpop.f32.mrf.mxu0
    %v393 = vadd.f32 %v206, %v392
    %394 = vmatprep.mubr.f32.mxu0 0.0
    %395 = vmatmul.mubr.f32.gmra.mxu0 %v118
    %v396 = vpop.f32.mrf.mxu0
    %v397 = vadd.f32 %v202, %v396
    %v398 = vpop.f32.mrf.mxu0
    %v399 = vadd.f32 %v206, %v398
    %400 = vmatprep.mubr.f32.mxu0 0.0
    %401 = vmatmul.mubr.f32.gmra.mxu0 %v119
    %v402 = vpop.f32.mrf.mxu0
    %v403 = vadd.f32 %v202, %v402
    %v404 = vpop.f32.mrf.mxu0
    %v405 = vadd.f32 %v206, %v404
    %406 = vmatprep.mubr.f32.mxu0 0.0
    %407 = vmatmul.mubr.f32.gmra.mxu0 %v120
    %v408 = vpop.f32.mrf.mxu0
    %v409 = vadd.f32 %v202, %v408
    %v410 = vpop.f32.mrf.mxu0
    %v411 = vadd.f32 %v206, %v410
    %412 = vmatprep.mubr.f32.mxu0 0.0
    %413 = vmatmul.mubr.f32.gmra.mxu0 %v121
    %v414 = vpop.f32.mrf.mxu0
    %v415 = vadd.f32 %v202, %v414
    %v416 = vpop.f32.mrf.mxu0
    %v417 = vadd.f32 %v206, %v416
    %418 = vmatprep.mubr.f32.mxu0 0.0
    %419 = vmatmul.mubr.f32.gmra.mxu0 %v122
    %v420 = vpop.f32.mrf.mxu0
    %v421 = vadd.f32 %v202, %v420
    %v422 = vpop.f32.mrf.mxu0
    %v423 = vadd.f32 %v206, %v422
    %424 = vmatprep.mubr.f32.mxu0 0.0
    %425 = vmatmul.mubr.f32.gmra.mxu0 %v123
    %v426 = vpop.f32.mrf.mxu0
    %v427 = vadd.f32 %v202, %v426
    %v428 = vpop.f32.mrf.mxu0
    %v429 = vadd.f32 %v206, %v428
    %430 = vmatprep.mubr.f32.mxu0 0.0
    %431 = vmatmul.mubr.f32.gmra.mxu0 %v124
    %v432 = vpop.f32.mrf.mxu0
    %v433 = vadd.f32 %v202, %v432
    %v434 = vpop.f32.mrf.mxu0
    %v435 = vadd.f32 %v206, %v434
    %436 = vdwg.mxu0
    %437 = vst [vmem:[#allocation2] sm:$0xff] %v278
    %438 = vst [vmem:[#allocation2 + $0x8] sm:$0xff] %v280
    %439 = vst [vmem:[#allocation2 + $0x10] sm:$0xff] %v391
    %440 = vst [vmem:[#allocation2 + $0x18] sm:$0xff] %v393
    %441 = vst [vmem:[#allocation2 + $0x20] sm:$0xff] %v284
    %442 = vst [vmem:[#allocation2 + $0x28] sm:$0xff] %v286
    %443 = vst [vmem:[#allocation2 + $0x30] sm:$0xff] %v397
    %444 = vst [vmem:[#allocation2 + $0x38] sm:$0xff] %v399
    %445 = vst [vmem:[#allocation2 + $0x40] sm:$0xff] %v290
    %446 = vst [vmem:[#allocation2 + $0x48] sm:$0xff] %v292
    %447 = vst [vmem:[#allocation2 + $0x50] sm:$0xff] %v403
    %448 = vst [vmem:[#allocation2 + $0x58] sm:$0xff] %v405
    %449 = vst [vmem:[#allocation2 + $0x60] sm:$0xff] %v296
    %450 = vst [vmem:[#allocation2 + $0x68] sm:$0xff] %v298
    %451 = vst [vmem:[#allocation2 + $0x70] sm:$0xff] %v409
    %452 = vst [vmem:[#allocation2 + $0x78] sm:$0xff] %v411
    %453 = vst [vmem:[#allocation2 + $0x80] sm:$0xff] %v302
    %454 = vst [vmem:[#allocation2 + $0x88] sm:$0xff] %v304
    %455 = vst [vmem:[#allocation2 + $0x90] sm:$0xff] %v415
    %456 = vst [vmem:[#allocation2 + $0x98] sm:$0xff] %v417
    %457 = vst [vmem:[#allocation2 + $0xa0] sm:$0xff] %v308
    %458 = vst [vmem:[#allocation2 + $0xa8] sm:$0xff] %v310
    %459 = vst [vmem:[#allocation2 + $0xb0] sm:$0xff] %v421
    %460 = vst [vmem:[#allocation2 + $0xb8] sm:$0xff] %v423
    %461 = vst [vmem:[#allocation2 + $0xc0] sm:$0xff] %v314
    %462 = vst [vmem:[#allocation2 + $0xc8] sm:$0xff] %v316
    %463 = vst [vmem:[#allocation2 + $0xd0] sm:$0xff] %v427
    %464 = vst [vmem:[#allocation2 + $0xd8] sm:$0xff] %v429
    %465 = vst [vmem:[#allocation2 + $0xe0] sm:$0xff] %v320
    %466 = vst [vmem:[#allocation2 + $0xe8] sm:$0xff] %v322
    %467 = vst [vmem:[#allocation2 + $0xf0] sm:$0xff] %v433
    %468 = vst [vmem:[#allocation2 + $0xf8] sm:$0xff] %v435
    %s469 = smul.u32 0, 4
    %s470 = smul.addr %s469, 8
    %s471 = scalar_lea.vmem [#allocation2], %s470
    %v472 = vld [vmem:[%s471] sm:$0xff]
    %v473 = vld [vmem:[%s471 + $0x8] sm:$0xff]
    %v474 = vld [vmem:[%s471 + $0x10] sm:$0xff]
    %v475 = vld [vmem:[%s471 + $0x18] sm:$0xff]
    %v476 = vld [vmem:[#allocation4] sm:$0xff]
    %v477 = vld [vmem:[#allocation11] sm:$0xff]
    %v478 = vld [vmem:[#allocation11 + $0x8] sm:$0xff]
    %v479 = vld [vmem:[#allocation11 + $0x10] sm:$0xff]
    %v480 = vld [vmem:[#allocation11 + $0x18] sm:$0xff]
    %v481 = vld [vmem:[#allocation11 + $0x20] sm:$0xff]
    %v482 = vld [vmem:[#allocation11 + $0x28] sm:$0xff]
    %v483 = vld [vmem:[#allocation11 + $0x30] sm:$0xff]
    %v484 = vld [vmem:[#allocation11 + $0x38] sm:$0xff]
    %v485 = vld [vmem:[#allocation11 + $0x40] sm:$0xff]
    %v486 = vld [vmem:[#allocation11 + $0x48] sm:$0xff]
    %v487 = vld [vmem:[#allocation11 + $0x50] sm:$0xff]
    %v488 = vld [vmem:[#allocation11 + $0x58] sm:$0xff]
    %v489 = vld [vmem:[#allocation11 + $0x60] sm:$0xff]
    %v490 = vld [vmem:[#allocation11 + $0x68] sm:$0xff]
    %v491 = vld [vmem:[#allocation11 + $0x70] sm:$0xff]
    %v492 = vld [vmem:[#allocation11 + $0x78] sm:$0xff]
    %v493 = vld [vmem:[#allocation11 + $0x80] sm:$0xff]
    %v494 = vld [vmem:[#allocation11 + $0x88] sm:$0xff]
    %v495 = vld [vmem:[#allocation11 + $0x90] sm:$0xff]
    %v496 = vld [vmem:[#allocation11 + $0x98] sm:$0xff]
    %v497 = vld [vmem:[#allocation11 + $0xa0] sm:$0xff]
    %v498 = vld [vmem:[#allocation11 + $0xa8] sm:$0xff]
    %v499 = vld [vmem:[#allocation11 + $0xb0] sm:$0xff]
    %v500 = vld [vmem:[#allocation11 + $0xb8] sm:$0xff]
    %v501 = vld [vmem:[#allocation11 + $0xc0] sm:$0xff]
    %v502 = vld [vmem:[#allocation11 + $0xc8] sm:$0xff]
    %v503 = vld [vmem:[#allocation11 + $0xd0] sm:$0xff]
    %v504 = vld [vmem:[#allocation11 + $0xd8] sm:$0xff]
    %v505 = vld [vmem:[#allocation11 + $0xe0] sm:$0xff]
    %v506 = vld [vmem:[#allocation11 + $0xe8] sm:$0xff]
    %v507 = vld [vmem:[#allocation11 + $0xf0] sm:$0xff]
    %v508 = vld [vmem:[#allocation11 + $0xf8] sm:$0xff]
    %v509 = vld [vmem:[#allocation11 + $0x100] sm:$0xff]
    %v510 = vld [vmem:[#allocation11 + $0x108] sm:$0xff]
    %v511 = vld [vmem:[#allocation11 + $0x110] sm:$0xff]
    %v512 = vld [vmem:[#allocation11 + $0x118] sm:$0xff]
    %v513 = vld [vmem:[#allocation11 + $0x120] sm:$0xff]
    %v514 = vld [vmem:[#allocation11 + $0x128] sm:$0xff]
    %v515 = vld [vmem:[#allocation11 + $0x130] sm:$0xff]
    %v516 = vld [vmem:[#allocation11 + $0x138] sm:$0xff]
    %v517 = vld [vmem:[#allocation11 + $0x140] sm:$0xff]
    %v518 = vld [vmem:[#allocation11 + $0x148] sm:$0xff]
    %v519 = vld [vmem:[#allocation11 + $0x150] sm:$0xff]
    %v520 = vld [vmem:[#allocation11 + $0x158] sm:$0xff]
    %v521 = vld [vmem:[#allocation11 + $0x160] sm:$0xff]
    %v522 = vld [vmem:[#allocation11 + $0x168] sm:$0xff]
    %v523 = vld [vmem:[#allocation11 + $0x170] sm:$0xff]
    %v524 = vld [vmem:[#allocation11 + $0x178] sm:$0xff]
    %v525 = vld [vmem:[#allocation11 + $0x180] sm:$0xff]
    %v526 = vld [vmem:[#allocation11 + $0x188] sm:$0xff]
    %v527 = vld [vmem:[#allocation11 + $0x190] sm:$0xff]
    %v528 = vld [vmem:[#allocation11 + $0x198] sm:$0xff]
    %v529 = vld [vmem:[#allocation11 + $0x1a0] sm:$0xff]
    %v530 = vld [vmem:[#allocation11 + $0x1a8] sm:$0xff]
    %v531 = vld [vmem:[#allocation11 + $0x1b0] sm:$0xff]
    %v532 = vld [vmem:[#allocation11 + $0x1b8] sm:$0xff]
    %v533 = vld [vmem:[#allocation11 + $0x1c0] sm:$0xff]
    %v534 = vld [vmem:[#allocation11 + $0x1c8] sm:$0xff]
    %v535 = vld [vmem:[#allocation11 + $0x1d0] sm:$0xff]
    %v536 = vld [vmem:[#allocation11 + $0x1d8] sm:$0xff]
    %v537 = vld [vmem:[#allocation11 + $0x1e0] sm:$0xff]
    %v538 = vld [vmem:[#allocation11 + $0x1e8] sm:$0xff]
    %v539 = vld [vmem:[#allocation11 + $0x1f0] sm:$0xff]
    %v540 = vld [vmem:[#allocation11 + $0x1f8] sm:$0xff]
    %541 = vmatprep.subr.mxu0 %v538
    %542 = vmatpush1.msra.mxu0 %v537
    %543 = vmatprep.subr.mxu0 %v534
    %544 = vmatpush1.msra.mxu0 %v533
    %545 = vmatprep.subr.mxu0 %v530
    %546 = vmatpush1.msra.mxu0 %v529
    %547 = vmatprep.subr.mxu0 %v526
    %548 = vmatpush1.msra.mxu0 %v525
    %549 = vmatprep.subr.mxu0 %v522
    %550 = vmatpush1.msra.mxu0 %v521
    %551 = vmatprep.subr.mxu0 %v518
    %552 = vmatpush1.msra.mxu0 %v517
    %553 = vmatprep.subr.mxu0 %v514
    %554 = vmatpush1.msra.mxu0 %v513
    %555 = vmatprep.subr.mxu0 %v510
    %556 = vmatpush1.msra.mxu0 %v509
    %557 = vmatprep.subr.mxu0 %v506
    %558 = vmatpush1.msra.mxu0 %v505
    %559 = vmatprep.subr.mxu0 %v502
    %560 = vmatpush1.msra.mxu0 %v501
    %561 = vmatprep.subr.mxu0 %v498
    %562 = vmatpush1.msra.mxu0 %v497
    %563 = vmatprep.subr.mxu0 %v494
    %564 = vmatpush1.msra.mxu0 %v493
    %565 = vmatprep.subr.mxu0 %v490
    %566 = vmatpush1.msra.mxu0 %v489
    %567 = vmatprep.subr.mxu0 %v486
    %568 = vmatpush1.msra.mxu0 %v485
    %569 = vmatprep.subr.mxu0 %v482
    %570 = vmatpush1.msra.mxu0 %v481
    %571 = vmatprep.subr.mxu0 %v478
    %572 = vmatpush1.msra.mxu0 %v477
    %573 = vmatprep.subr.mxu0 0.0
    %574 = vmatpush2.msra.mxu0 0.0
    %575 = vmatprep.subr.mxu0 0.0
    %576 = vmatpush2.msra.mxu0 0.0
    %577 = vmatprep.subr.mxu0 0.0
    %578 = vmatpush2.msra.mxu0 0.0
    %579 = vmatprep.subr.mxu0 0.0
    %580 = vmatpush2.msra.mxu0 0.0
    %581 = vmatprep.subr.mxu0 0.0
    %582 = vmatpush2.msra.mxu0 0.0
    %583 = vmatprep.subr.mxu0 0.0
    %584 = vmatpush2.msra.mxu0 0.0
    %585 = vmatprep.subr.mxu0 0.0
    %586 = vmatpush2.msra.mxu0 0.0
    %587 = vmatprep.subr.mxu0 0.0
    %588 = vmatpush2.msra.mxu0 0.0
    %589 = vmatprep.subr.mxu0 0.0
    %590 = vmatpush2.msra.mxu0 0.0
    %591 = vmatprep.subr.mxu0 0.0
    %592 = vmatpush2.msra.mxu0 0.0
    %593 = vmatprep.subr.mxu0 0.0
    %594 = vmatpush2.msra.mxu0 0.0
    %595 = vmatprep.subr.mxu0 0.0
    %596 = vmatpush2.msra.mxu0 0.0
    %597 = vmatprep.subr.mxu0 0.0
    %598 = vmatpush2.msra.mxu0 0.0
    %599 = vmatprep.subr.mxu0 0.0
    %600 = vmatpush2.msra.mxu0 0.0
    %601 = vmatprep.subr.mxu0 0.0
    %602 = vmatpush2.msra.mxu0 0.0
    %603 = vmatprep.subr.mxu0 0.0
    %604 = vmatpush2.msra.mxu0 0.0
    %605 = vmatprep.mubr.f32.mxu0 0.0
    %606 = vmatmul.mubr.f32.gmra.mxu0 %v476
    %v607 = vpop.f32.mrf.mxu0
    %v608 = vadd.f32 0.0, %v607
    %v609 = vpop.f32.mrf.mxu0
    %v610 = vadd.f32 0.0, %v609
    %611 = vdwg.mxu0
    %612 = vmatprep.subr.mxu0 %v540
    %613 = vmatpush1.msra.mxu0 %v539
    %614 = vmatprep.subr.mxu0 %v536
    %615 = vmatpush1.msra.mxu0 %v535
    %616 = vmatprep.subr.mxu0 %v532
    %617 = vmatpush1.msra.mxu0 %v531
    %618 = vmatprep.subr.mxu0 %v528
    %619 = vmatpush1.msra.mxu0 %v527
    %620 = vmatprep.subr.mxu0 %v524
    %621 = vmatpush1.msra.mxu0 %v523
    %622 = vmatprep.subr.mxu0 %v520
    %623 = vmatpush1.msra.mxu0 %v519
    %624 = vmatprep.subr.mxu0 %v516
    %625 = vmatpush1.msra.mxu0 %v515
    %626 = vmatprep.subr.mxu0 %v512
    %627 = vmatpush1.msra.mxu0 %v511
    %628 = vmatprep.subr.mxu0 %v508
    %629 = vmatpush1.msra.mxu0 %v507
    %630 = vmatprep.subr.mxu0 %v504
    %631 = vmatpush1.msra.mxu0 %v503
    %632 = vmatprep.subr.mxu0 %v500
    %633 = vmatpush1.msra.mxu0 %v499
    %634 = vmatprep.subr.mxu0 %v496
    %635 = vmatpush1.msra.mxu0 %v495
    %636 = vmatprep.subr.mxu0 %v492
    %637 = vmatpush1.msra.mxu0 %v491
    %638 = vmatprep.subr.mxu0 %v488
    %639 = vmatpush1.msra.mxu0 %v487
    %640 = vmatprep.subr.mxu0 %v484
    %641 = vmatpush1.msra.mxu0 %v483
    %642 = vmatprep.subr.mxu0 %v480
    %643 = vmatpush1.msra.mxu0 %v479
    %644 = vmatprep.subr.mxu0 0.0
    %645 = vmatpush2.msra.mxu0 0.0
    %646 = vmatprep.subr.mxu0 0.0
    %647 = vmatpush2.msra.mxu0 0.0
    %648 = vmatprep.subr.mxu0 0.0
    %649 = vmatpush2.msra.mxu0 0.0
    %650 = vmatprep.subr.mxu0 0.0
    %651 = vmatpush2.msra.mxu0 0.0
    %652 = vmatprep.subr.mxu0 0.0
    %653 = vmatpush2.msra.mxu0 0.0
    %654 = vmatprep.subr.mxu0 0.0
    %655 = vmatpush2.msra.mxu0 0.0
    %656 = vmatprep.subr.mxu0 0.0
    %657 = vmatpush2.msra.mxu0 0.0
    %658 = vmatprep.subr.mxu0 0.0
    %659 = vmatpush2.msra.mxu0 0.0
    %660 = vmatprep.subr.mxu0 0.0
    %661 = vmatpush2.msra.mxu0 0.0
    %662 = vmatprep.subr.mxu0 0.0
    %663 = vmatpush2.msra.mxu0 0.0
    %664 = vmatprep.subr.mxu0 0.0
    %665 = vmatpush2.msra.mxu0 0.0
    %666 = vmatprep.subr.mxu0 0.0
    %667 = vmatpush2.msra.mxu0 0.0
    %668 = vmatprep.subr.mxu0 0.0
    %669 = vmatpush2.msra.mxu0 0.0
    %670 = vmatprep.subr.mxu0 0.0
    %671 = vmatpush2.msra.mxu0 0.0
    %672 = vmatprep.subr.mxu0 0.0
    %673 = vmatpush2.msra.mxu0 0.0
    %674 = vmatprep.subr.mxu0 0.0
    %675 = vmatpush2.msra.mxu0 0.0
    %676 = vmatprep.mubr.f32.mxu0 0.0
    %677 = vmatmul.mubr.f32.gmra.mxu0 %v476
    %v678 = vpop.f32.mrf.mxu0
    %v679 = vadd.f32 0.0, %v678
    %v680 = vpop.f32.mrf.mxu0
    %v681 = vadd.f32 0.0, %v680
    %682 = vdwg.mxu0
    %v683 = vadd.f32 %v472, %v608
    %v684 = vadd.f32 %v473, %v610
    %v685 = vadd.f32 %v474, %v679
    %v686 = vadd.f32 %v475, %v681
    %v687 = vxor.u32 %v683, 2147483648
    %v688 = vxor.u32 %v684, 2147483648
    %v689 = vxor.u32 %v685, 2147483648
    %v690 = vmul.f32 %v687, 1.442695
    %v691 = vpow.pop %v690
    %v692 = vmul.f32 %v688, 1.442695
    %v693 = vpow.pop %v692
    %v694 = vmul.f32 %v689, 1.442695
    %v695 = vpow.pop %v694
    %v696 = vadd.f32 %v691, 1.0
    %v697 = vadd.f32 %v693, 1.0
    %v698 = vadd.f32 %v695, 1.0
    %v699 = vrcp.pop %v696
    %v700 = vmul.f32 1.0, %v699
    %v701 = vrcp.pop %v697
    %v702 = vmul.f32 1.0, %v701
    %v703 = vrcp.pop %v698
    %v704 = vmul.f32 1.0, %v703
    %v705 = vtanh.pop %v686
    %v706 = vld [vmem:[#allocation5] sm:$0xff]
    %v707 = vmul.f32 %v702, %v706
    %v708 = vmul.f32 %v700, %v705
    %v709 = vadd.f32 %v707, %v708
    %v710 = vtanh.pop %v709
    %v711 = vmul.f32 %v704, %v710
    %712 = vst [vmem:[#allocation5] sm:$0xff] %v709
    %713 = vst [vmem:[#allocation4] sm:$0xff] %v711
    %714 = vst [vmem:[#allocation3] sm:$0xff] %v711
    %s715 = smul.u32 1, 4
    %s716 = smul.addr %s715, 8
    %s717 = scalar_lea.vmem [#allocation2], %s716
    %v718 = vld [vmem:[%s717] sm:$0xff]
    %v719 = vld [vmem:[%s717 + $0x8] sm:$0xff]
    %v720 = vld [vmem:[%s717 + $0x10] sm:$0xff]
    %v721 = vld [vmem:[%s717 + $0x18] sm:$0xff]
    %v722 = vld [vmem:[#allocation4] sm:$0xff]
    %v723 = vld [vmem:[#allocation11] sm:$0xff]
    %v724 = vld [vmem:[#allocation11 + $0x8] sm:$0xff]
    %v725 = vld [vmem:[#allocation11 + $0x10] sm:$0xff]
    %v726 = vld [vmem:[#allocation11 + $0x18] sm:$0xff]
    %v727 = vld [vmem:[#allocation11 + $0x20] sm:$0xff]
    %v728 = vld [vmem:[#allocation11 + $0x28] sm:$0xff]
    %v729 = vld [vmem:[#allocation11 + $0x30] sm:$0xff]
    %v730 = vld [vmem:[#allocation11 + $0x38] sm:$0xff]
    %v731 = vld [vmem:[#allocation11 + $0x40] sm:$0xff]
    %v732 = vld [vmem:[#allocation11 + $0x48] sm:$0xff]
    %v733 = vld [vmem:[#allocation11 + $0x50] sm:$0xff]
    %v734 = vld [vmem:[#allocation11 + $0x58] sm:$0xff]
    %v735 = vld [vmem:[#allocation11 + $0x60] sm:$0xff]
    %v736 = vld [vmem:[#allocation11 + $0x68] sm:$0xff]
    %v737 = vld [vmem:[#allocation11 + $0x70] sm:$0xff]
    %v738 = vld [vmem:[#allocation11 + $0x78] sm:$0xff]
    %v739 = vld [vmem:[#allocation11 + $0x80] sm:$0xff]
    %v740 = vld [vmem:[#allocation11 + $0x88] sm:$0xff]
    %v741 = vld [vmem:[#allocation11 + $0x90] sm:$0xff]
    %v742 = vld [vmem:[#allocation11 + $0x98] sm:$0xff]
    %v743 = vld [vmem:[#allocation11 + $0xa0] sm:$0xff]
    %v744 = vld [vmem:[#allocation11 + $0xa8] sm:$0xff]
    %v745 = vld [vmem:[#allocation11 + $0xb0] sm:$0xff]
    %v746 = vld [vmem:[#allocation11 + $0xb8] sm:$0xff]
    %v747 = vld [vmem:[#allocation11 + $0xc0] sm:$0xff]
    %v748 = vld [vmem:[#allocation11 + $0xc8] sm:$0xff]
    %v749 = vld [vmem:[#allocation11 + $0xd0] sm:$0xff]
    %v750 = vld [vmem:[#allocation11 + $0xd8] sm:$0xff]
    %v751 = vld [vmem:[#allocation11 + $0xe0] sm:$0xff]
    %v752 = vld [vmem:[#allocation11 + $0xe8] sm:$0xff]
    %v753 = vld [vmem:[#allocation11 + $0xf0] sm:$0xff]
    %v754 = vld [vmem:[#allocation11 + $0xf8] sm:$0xff]
    %v755 = vld [vmem:[#allocation11 + $0x100] sm:$0xff]
    %v756 = vld [vmem:[#allocation11 + $0x108] sm:$0xff]
    %v757 = vld [vmem:[#allocation11 + $0x110] sm:$0xff]
    %v758 = vld [vmem:[#allocation11 + $0x118] sm:$0xff]
    %v759 = vld [vmem:[#allocation11 + $0x120] sm:$0xff]
    %v760 = vld [vmem:[#allocation11 + $0x128] sm:$0xff]
    %v761 = vld [vmem:[#allocation11 + $0x130] sm:$0xff]
    %v762 = vld [vmem:[#allocation11 + $0x138] sm:$0xff]
    %v763 = vld [vmem:[#allocation11 + $0x140] sm:$0xff]
    %v764 = vld [vmem:[#allocation11 + $0x148] sm:$0xff]
    %v765 = vld [vmem:[#allocation11 + $0x150] sm:$0xff]
    %v766 = vld [vmem:[#allocation11 + $0x158] sm:$0xff]
    %v767 = vld [vmem:[#allocation11 + $0x160] sm:$0xff]
    %v768 = vld [vmem:[#allocation11 + $0x168] sm:$0xff]
    %v769 = vld [vmem:[#allocation11 + $0x170] sm:$0xff]
    %v770 = vld [vmem:[#allocation11 + $0x178] sm:$0xff]
    %v771 = vld [vmem:[#allocation11 + $0x180] sm:$0xff]
    %v772 = vld [vmem:[#allocation11 + $0x188] sm:$0xff]
    %v773 = vld [vmem:[#allocation11 + $0x190] sm:$0xff]
    %v774 = vld [vmem:[#allocation11 + $0x198] sm:$0xff]
    %v775 = vld [vmem:[#allocation11 + $0x1a0] sm:$0xff]
    %v776 = vld [vmem:[#allocation11 + $0x1a8] sm:$0xff]
    %v777 = vld [vmem:[#allocation11 + $0x1b0] sm:$0xff]
    %v778 = vld [vmem:[#allocation11 + $0x1b8] sm:$0xff]
    %v779 = vld [vmem:[#allocation11 + $0x1c0] sm:$0xff]
    %v780 = vld [vmem:[#allocation11 + $0x1c8] sm:$0xff]
    %v781 = vld [vmem:[#allocation11 + $0x1d0] sm:$0xff]
    %v782 = vld [vmem:[#allocation11 + $0x1d8] sm:$0xff]
    %v783 = vld [vmem:[#allocation11 + $0x1e0] sm:$0xff]
    %v784 = vld [vmem:[#allocation11 + $0x1e8] sm:$0xff]
    %v785 = vld [vmem:[#allocation11 + $0x1f0] sm:$0xff]
    %v786 = vld [vmem:[#allocation11 + $0x1f8] sm:$0xff]
    %787 = vmatprep.subr.mxu0 %v784
    %788 = vmatpush1.msra.mxu0 %v783
    %789 = vmatprep.subr.mxu0 %v780
    %790 = vmatpush1.msra.mxu0 %v779
    %791 = vmatprep.subr.mxu0 %v776
    %792 = vmatpush1.msra.mxu0 %v775
    %793 = vmatprep.subr.mxu0 %v772
    %794 = vmatpush1.msra.mxu0 %v771
    %795 = vmatprep.subr.mxu0 %v768
    %796 = vmatpush1.msra.mxu0 %v767
    %797 = vmatprep.subr.mxu0 %v764
    %798 = vmatpush1.msra.mxu0 %v763
    %799 = vmatprep.subr.mxu0 %v760
    %800 = vmatpush1.msra.mxu0 %v759
    %801 = vmatprep.subr.mxu0 %v756
    %802 = vmatpush1.msra.mxu0 %v755
    %803 = vmatprep.subr.mxu0 %v752
    %804 = vmatpush1.msra.mxu0 %v751
    %805 = vmatprep.subr.mxu0 %v748
    %806 = vmatpush1.msra.mxu0 %v747
    %807 = vmatprep.subr.mxu0 %v744
    %808 = vmatpush1.msra.mxu0 %v743
    %809 = vmatprep.subr.mxu0 %v740
    %810 = vmatpush1.msra.mxu0 %v739
    %811 = vmatprep.subr.mxu0 %v736
    %812 = vmatpush1.msra.mxu0 %v735
    %813 = vmatprep.subr.mxu0 %v732
    %814 = vmatpush1.msra.mxu0 %v731
    %815 = vmatprep.subr.mxu0 %v728
    %816 = vmatpush1.msra.mxu0 %v727
    %817 = vmatprep.subr.mxu0 %v724
    %818 = vmatpush1.msra.mxu0 %v723
    %819 = vmatprep.subr.mxu0 0.0
    %820 = vmatpush2.msra.mxu0 0.0
    %821 = vmatprep.subr.mxu0 0.0
    %822 = vmatpush2.msra.mxu0 0.0
    %823 = vmatprep.subr.mxu0 0.0
    %824 = vmatpush2.msra.mxu0 0.0
    %825 = vmatprep.subr.mxu0 0.0
    %826 = vmatpush2.msra.mxu0 0.0
    %827 = vmatprep.subr.mxu0 0.0
    %828 = vmatpush2.msra.mxu0 0.0
    %829 = vmatprep.subr.mxu0 0.0
    %830 = vmatpush2.msra.mxu0 0.0
    %831 = vmatprep.subr.mxu0 0.0
    %832 = vmatpush2.msra.mxu0 0.0
    %833 = vmatprep.subr.mxu0 0.0
    %834 = vmatpush2.msra.mxu0 0.0
    %835 = vmatprep.subr.mxu0 0.0
    %836 = vmatpush2.msra.mxu0 0.0
    %837 = vmatprep.subr.mxu0 0.0
    %838 = vmatpush2.msra.mxu0 0.0
    %839 = vmatprep.subr.mxu0 0.0
    %840 = vmatpush2.msra.mxu0 0.0
    %841 = vmatprep.subr.mxu0 0.0
    %842 = vmatpush2.msra.mxu0 0.0
    %843 = vmatprep.subr.mxu0 0.0
    %844 = vmatpush2.msra.mxu0 0.0
    %845 = vmatprep.subr.mxu0 0.0
    %846 = vmatpush2.msra.mxu0 0.0
    %847 = vmatprep.subr.mxu0 0.0
    %848 = vmatpush2.msra.mxu0 0.0
    %849 = vmatprep.subr.mxu0 0.0
    %850 = vmatpush2.msra.mxu0 0.0
    %851 = vmatprep.mubr.f32.mxu0 0.0
    %852 = vmatmul.mubr.f32.gmra.mxu0 %v722
    %v853 = vpop.f32.mrf.mxu0
    %v854 = vadd.f32 0.0, %v853
    %v855 = vpop.f32.mrf.mxu0
    %v856 = vadd.f32 0.0, %v855
    %857 = vdwg.mxu0
    %858 = vmatprep.subr.mxu0 %v786
    %859 = vmatpush1.msra.mxu0 %v785
    %860 = vmatprep.subr.mxu0 %v782
    %861 = vmatpush1.msra.mxu0 %v781
    %862 = vmatprep.subr.mxu0 %v778
    %863 = vmatpush1.msra.mxu0 %v777
    %864 = vmatprep.subr.mxu0 %v774
    %865 = vmatpush1.msra.mxu0 %v773
    %866 = vmatprep.subr.mxu0 %v770
    %867 = vmatpush1.msra.mxu0 %v769
    %868 = vmatprep.subr.mxu0 %v766
    %869 = vmatpush1.msra.mxu0 %v765
    %870 = vmatprep.subr.mxu0 %v762
    %871 = vmatpush1.msra.mxu0 %v761
    %872 = vmatprep.subr.mxu0 %v758
    %873 = vmatpush1.msra.mxu0 %v757
    %874 = vmatprep.subr.mxu0 %v754
    %875 = vmatpush1.msra.mxu0 %v753
    %876 = vmatprep.subr.mxu0 %v750
    %877 = vmatpush1.msra.mxu0 %v749
    %878 = vmatprep.subr.mxu0 %v746
    %879 = vmatpush1.msra.mxu0 %v745
    %880 = vmatprep.subr.mxu0 %v742
    %881 = vmatpush1.msra.mxu0 %v741
    %882 = vmatprep.subr.mxu0 %v738
    %883 = vmatpush1.msra.mxu0 %v737
    %884 = vmatprep.subr.mxu0 %v734
    %885 = vmatpush1.msra.mxu0 %v733
    %886 = vmatprep.subr.mxu0 %v730
    %887 = vmatpush1.msra.mxu0 %v729
    %888 = vmatprep.subr.mxu0 %v726
    %889 = vmatpush1.msra.mxu0 %v725
    %890 = vmatprep.subr.mxu0 0.0
    %891 = vmatpush2.msra.mxu0 0.0
    %892 = vmatprep.subr.mxu0 0.0
    %893 = vmatpush2.msra.mxu0 0.0
    %894 = vmatprep.subr.mxu0 0.0
    %895 = vmatpush2.msra.mxu0 0.0
    %896 = vmatprep.subr.mxu0 0.0
    %897 = vmatpush2.msra.mxu0 0.0
    %898 = vmatprep.subr.mxu0 0.0
    %899 = vmatpush2.msra.mxu0 0.0
    %900 = vmatprep.subr.mxu0 0.0
    %901 = vmatpush2.msra.mxu0 0.0
    %902 = vmatprep.subr.mxu0 0.0
    %903 = vmatpush2.msra.mxu0 0.0
    %904 = vmatprep.subr.mxu0 0.0
    %905 = vmatpush2.msra.mxu0 0.0
    %906 = vmatprep.subr.mxu0 0.0
    %907 = vmatpush2.msra.mxu0 0.0
    %908 = vmatprep.subr.mxu0 0.0
    %909 = vmatpush2.msra.mxu0 0.0
    %910 = vmatprep.subr.mxu0 0.0
    %911 = vmatpush2.msra.mxu0 0.0
    %912 = vmatprep.subr.mxu0 0.0
    %913 = vmatpush2.msra.mxu0 0.0
    %914 = vmatprep.subr.mxu0 0.0
    %915 = vmatpush2.msra.mxu0 0.0
    %916 = vmatprep.subr.mxu0 0.0
    %917 = vmatpush2.msra.mxu0 0.0
    %918 = vmatprep.subr.mxu0 0.0
    %919 = vmatpush2.msra.mxu0 0.0
    %920 = vmatprep.subr.mxu0 0.0
    %921 = vmatpush2.msra.mxu0 0.0
    %922 = vmatprep.mubr.f32.mxu0 0.0
    %923 = vmatmul.mubr.f32.gmra.mxu0 %v722
    %v924 = vpop.f32.mrf.mxu0
    %v925 = vadd.f32 0.0, %v924
    %v926 = vpop.f32.mrf.mxu0
    %v927 = vadd.f32 0.0, %v926
    %928 = vdwg.mxu0
    %v929 = vadd.f32 %v718, %v854
    %v930 = vadd.f32 %v719, %v856
    %v931 = vadd.f32 %v720, %v925
    %v932 = vadd.f32 %v721, %v927
    %v933 = vxor.u32 %v929, 2147483648
    %v934 = vxor.u32 %v930, 2147483648
    %v935 = vxor.u32 %v931, 2147483648
    %v936 = vmul.f32 %v933, 1.442695
    %v937 = vpow.pop %v936
    %v938 = vmul.f32 %v934, 1.442695
    %v939 = vpow.pop %v938
    %v940 = vmul.f32 %v935, 1.442695
    %v941 = vpow.pop %v940
    %v942 = vadd.f32 %v937, 1.0
    %v943 = vadd.f32 %v939, 1.0
    %v944 = vadd.f32 %v941, 1.0
    %v945 = vrcp.pop %v942
    %v946 = vmul.f32 1.0, %v945
    %v947 = vrcp.pop %v943
    %v948 = vmul.f32 1.0, %v947
    %v949 = vrcp.pop %v944
    %v950 = vmul.f32 1.0, %v949
    %v951 = vtanh.pop %v932
    %v952 = vld [vmem:[#allocation5] sm:$0xff]
    %v953 = vmul.f32 %v948, %v952
    %v954 = vmul.f32 %v946, %v951
    %v955 = vadd.f32 %v953, %v954
    %v956 = vtanh.pop %v955
    %v957 = vmul.f32 %v950, %v956
    %958 = vst [vmem:[#allocation5] sm:$0xff] %v955
    %959 = vst [vmem:[#allocation4] sm:$0xff] %v957
    %s960 = scalar_lea.vmem [#allocation3], 8
    %961 = vst [vmem:[%s960] sm:$0xff] %v957
    %s962 = smul.u32 2, 4
    %s963 = smul.addr %s962, 8
    %s964 = scalar_lea.vmem [#allocation2], %s963
    %v965 = vld [vmem:[%s964] sm:$0xff]
    %v966 = vld [vmem:[%s964 + $0x8] sm:$0xff]
    %v967 = vld [vmem:[%s964 + $0x10] sm:$0xff]
    %v968 = vld [vmem:[%s964 + $0x18] sm:$0xff]
    %v969 = vld [vmem:[#allocation4] sm:$0xff]
    %v970 = vld [vmem:[#allocation11] sm:$0xff]
    %v971 = vld [vmem:[#allocation11 + $0x8] sm:$0xff]
    %v972 = vld [vmem:[#allocation11 + $0x10] sm:$0xff]
    %v973 = vld [vmem:[#allocation11 + $0x18] sm:$0xff]
    %v974 = vld [vmem:[#allocation11 + $0x20] sm:$0xff]
    %v975 = vld [vmem:[#allocation11 + $0x28] sm:$0xff]
    %v976 = vld [vmem:[#allocation11 + $0x30] sm:$0xff]
    %v977 = vld [vmem:[#allocation11 + $0x38] sm:$0xff]
    %v978 = vld [vmem:[#allocation11 + $0x40] sm:$0xff]
    %v979 = vld [vmem:[#allocation11 + $0x48] sm:$0xff]
    %v980 = vld [vmem:[#allocation11 + $0x50] sm:$0xff]
    %v981 = vld [vmem:[#allocation11 + $0x58] sm:$0xff]
    %v982 = vld [vmem:[#allocation11 + $0x60] sm:$0xff]
    %v983 = vld [vmem:[#allocation11 + $0x68] sm:$0xff]
    %v984 = vld [vmem:[#allocation11 + $0x70] sm:$0xff]
    %v985 = vld [vmem:[#allocation11 + $0x78] sm:$0xff]
    %v986 = vld [vmem:[#allocation11 + $0x80] sm:$0xff]
    %v987 = vld [vmem:[#allocation11 + $0x88] sm:$0xff]
    %v988 = vld [vmem:[#allocation11 + $0x90] sm:$0xff]
    %v989 = vld [vmem:[#allocation11 + $0x98] sm:$0xff]
    %v990 = vld [vmem:[#allocation11 + $0xa0] sm:$0xff]
    %v991 = vld [vmem:[#allocation11 + $0xa8] sm:$0xff]
    %v992 = vld [vmem:[#allocation11 + $0xb0] sm:$0xff]
    %v993 = vld [vmem:[#allocation11 + $0xb8] sm:$0xff]
    %v994 = vld [vmem:[#allocation11 + $0xc0] sm:$0xff]
    %v995 = vld [vmem:[#allocation11 + $0xc8] sm:$0xff]
    %v996 = vld [vmem:[#allocation11 + $0xd0] sm:$0xff]
    %v997 = vld [vmem:[#allocation11 + $0xd8] sm:$0xff]
    %v998 = vld [vmem:[#allocation11 + $0xe0] sm:$0xff]
    %v999 = vld [vmem:[#allocation11 + $0xe8] sm:$0xff]
    %v1000 = vld [vmem:[#allocation11 + $0xf0] sm:$0xff]
    %v1001 = vld [vmem:[#allocation11 + $0xf8] sm:$0xff]
    %v1002 = vld [vmem:[#allocation11 + $0x100] sm:$0xff]
    %v1003 = vld [vmem:[#allocation11 + $0x108] sm:$0xff]
    %v1004 = vld [vmem:[#allocation11 + $0x110] sm:$0xff]
    %v1005 = vld [vmem:[#allocation11 + $0x118] sm:$0xff]
    %v1006 = vld [vmem:[#allocation11 + $0x120] sm:$0xff]
    %v1007 = vld [vmem:[#allocation11 + $0x128] sm:$0xff]
    %v1008 = vld [vmem:[#allocation11 + $0x130] sm:$0xff]
    %v1009 = vld [vmem:[#allocation11 + $0x138] sm:$0xff]
    %v1010 = vld [vmem:[#allocation11 + $0x140] sm:$0xff]
    %v1011 = vld [vmem:[#allocation11 + $0x148] sm:$0xff]
    %v1012 = vld [vmem:[#allocation11 + $0x150] sm:$0xff]
    %v1013 = vld [vmem:[#allocation11 + $0x158] sm:$0xff]
    %v1014 = vld [vmem:[#allocation11 + $0x160] sm:$0xff]
    %v1015 = vld [vmem:[#allocation11 + $0x168] sm:$0xff]
    %v1016 = vld [vmem:[#allocation11 + $0x170] sm:$0xff]
    %v1017 = vld [vmem:[#allocation11 + $0x178] sm:$0xff]
    %v1018 = vld [vmem:[#allocation11 + $0x180] sm:$0xff]
    %v1019 = vld [vmem:[#allocation11 + $0x188] sm:$0xff]
    %v1020 = vld [vmem:[#allocation11 + $0x190] sm:$0xff]
    %v1021 = vld [vmem:[#allocation11 + $0x198] sm:$0xff]
    %v1022 = vld [vmem:[#allocation11 + $0x1a0] sm:$0xff]
    %v1023 = vld [vmem:[#allocation11 + $0x1a8] sm:$0xff]
    %v1024 = vld [vmem:[#allocation11 + $0x1b0] sm:$0xff]
    %v1025 = vld [vmem:[#allocation11 + $0x1b8] sm:$0xff]
    %v1026 = vld [vmem:[#allocation11 + $0x1c0] sm:$0xff]
    %v1027 = vld [vmem:[#allocation11 + $0x1c8] sm:$0xff]
    %v1028 = vld [vmem:[#allocation11 + $0x1d0] sm:$0xff]
    %v1029 = vld [vmem:[#allocation11 + $0x1d8] sm:$0xff]
    %v1030 = vld [vmem:[#allocation11 + $0x1e0] sm:$0xff]
    %v1031 = vld [vmem:[#allocation11 + $0x1e8] sm:$0xff]
    %v1032 = vld [vmem:[#allocation11 + $0x1f0] sm:$0xff]
    %v1033 = vld [vmem:[#allocation11 + $0x1f8] sm:$0xff]
    %1034 = vmatprep.subr.mxu0 %v1031
    %1035 = vmatpush1.msra.mxu0 %v1030
    %1036 = vmatprep.subr.mxu0 %v1027
    %1037 = vmatpush1.msra.mxu0 %v1026
    %1038 = vmatprep.subr.mxu0 %v1023
    %1039 = vmatpush1.msra.mxu0 %v1022
    %1040 = vmatprep.subr.mxu0 %v1019
    %1041 = vmatpush1.msra.mxu0 %v1018
    %1042 = vmatprep.subr.mxu0 %v1015
    %1043 = vmatpush1.msra.mxu0 %v1014
    %1044 = vmatprep.subr.mxu0 %v1011
    %1045 = vmatpush1.msra.mxu0 %v1010
    %1046 = vmatprep.subr.mxu0 %v1007
    %1047 = vmatpush1.msra.mxu0 %v1006
    %1048 = vmatprep.subr.mxu0 %v1003
    %1049 = vmatpush1.msra.mxu0 %v1002
    %1050 = vmatprep.subr.mxu0 %v999
    %1051 = vmatpush1.msra.mxu0 %v998
    %1052 = vmatprep.subr.mxu0 %v995
    %1053 = vmatpush1.msra.mxu0 %v994
    %1054 = vmatprep.subr.mxu0 %v991
    %1055 = vmatpush1.msra.mxu0 %v990
    %1056 = vmatprep.subr.mxu0 %v987
    %1057 = vmatpush1.msra.mxu0 %v986
    %1058 = vmatprep.subr.mxu0 %v983
    %1059 = vmatpush1.msra.mxu0 %v982
    %1060 = vmatprep.subr.mxu0 %v979
    %1061 = vmatpush1.msra.mxu0 %v978
    %1062 = vmatprep.subr.mxu0 %v975
    %1063 = vmatpush1.msra.mxu0 %v974
    %1064 = vmatprep.subr.mxu0 %v971
    %1065 = vmatpush1.msra.mxu0 %v970
    %1066 = vmatprep.subr.mxu0 0.0
    %1067 = vmatpush2.msra.mxu0 0.0
    %1068 = vmatprep.subr.mxu0 0.0
    %1069 = vmatpush2.msra.mxu0 0.0
    %1070 = vmatprep.subr.mxu0 0.0
    %1071 = vmatpush2.msra.mxu0 0.0
    %1072 = vmatprep.subr.mxu0 0.0
    %1073 = vmatpush2.msra.mxu0 0.0
    %1074 = vmatprep.subr.mxu0 0.0
    %1075 = vmatpush2.msra.mxu0 0.0
    %1076 = vmatprep.subr.mxu0 0.0
    %1077 = vmatpush2.msra.mxu0 0.0
    %1078 = vmatprep.subr.mxu0 0.0
    %1079 = vmatpush2.msra.mxu0 0.0
    %1080 = vmatprep.subr.mxu0 0.0
    %1081 = vmatpush2.msra.mxu0 0.0
    %1082 = vmatprep.subr.mxu0 0.0
    %1083 = vmatpush2.msra.mxu0 0.0
    %1084 = vmatprep.subr.mxu0 0.0
    %1085 = vmatpush2.msra.mxu0 0.0
    %1086 = vmatprep.subr.mxu0 0.0
    %1087 = vmatpush2.msra.mxu0 0.0
    %1088 = vmatprep.subr.mxu0 0.0
    %1089 = vmatpush2.msra.mxu0 0.0
    %1090 = vmatprep.subr.mxu0 0.0
    %1091 = vmatpush2.msra.mxu0 0.0
    %1092 = vmatprep.subr.mxu0 0.0
    %1093 = vmatpush2.msra.mxu0 0.0
    %1094 = vmatprep.subr.mxu0 0.0
    %1095 = vmatpush2.msra.mxu0 0.0
    %1096 = vmatprep.subr.mxu0 0.0
    %1097 = vmatpush2.msra.mxu0 0.0
    %1098 = vmatprep.mubr.f32.mxu0 0.0
    %1099 = vmatmul.mubr.f32.gmra.mxu0 %v969
    %v1100 = vpop.f32.mrf.mxu0
    %v1101 = vadd.f32 0.0, %v1100
    %v1102 = vpop.f32.mrf.mxu0
    %v1103 = vadd.f32 0.0, %v1102
    %1104 = vdwg.mxu0
    %1105 = vmatprep.subr.mxu0 %v1033
    %1106 = vmatpush1.msra.mxu0 %v1032
    %1107 = vmatprep.subr.mxu0 %v1029
    %1108 = vmatpush1.msra.mxu0 %v1028
    %1109 = vmatprep.subr.mxu0 %v1025
    %1110 = vmatpush1.msra.mxu0 %v1024
    %1111 = vmatprep.subr.mxu0 %v1021
    %1112 = vmatpush1.msra.mxu0 %v1020
    %1113 = vmatprep.subr.mxu0 %v1017
    %1114 = vmatpush1.msra.mxu0 %v1016
    %1115 = vmatprep.subr.mxu0 %v1013
    %1116 = vmatpush1.msra.mxu0 %v1012
    %1117 = vmatprep.subr.mxu0 %v1009
    %1118 = vmatpush1.msra.mxu0 %v1008
    %1119 = vmatprep.subr.mxu0 %v1005
    %1120 = vmatpush1.msra.mxu0 %v1004
    %1121 = vmatprep.subr.mxu0 %v1001
    %1122 = vmatpush1.msra.mxu0 %v1000
    %1123 = vmatprep.subr.mxu0 %v997
    %1124 = vmatpush1.msra.mxu0 %v996
    %1125 = vmatprep.subr.mxu0 %v993
    %1126 = vmatpush1.msra.mxu0 %v992
    %1127 = vmatprep.subr.mxu0 %v989
    %1128 = vmatpush1.msra.mxu0 %v988
    %1129 = vmatprep.subr.mxu0 %v985
    %1130 = vmatpush1.msra.mxu0 %v984
    %1131 = vmatprep.subr.mxu0 %v981
    %1132 = vmatpush1.msra.mxu0 %v980
    %1133 = vmatprep.subr.mxu0 %v977
    %1134 = vmatpush1.msra.mxu0 %v976
    %1135 = vmatprep.subr.mxu0 %v973
    %1136 = vmatpush1.msra.mxu0 %v972
    %1137 = vmatprep.subr.mxu0 0.0
    %1138 = vmatpush2.msra.mxu0 0.0
    %1139 = vmatprep.subr.mxu0 0.0
    %1140 = vmatpush2.msra.mxu0 0.0
    %1141 = vmatprep.subr.mxu0 0.0
    %1142 = vmatpush2.msra.mxu0 0.0
    %1143 = vmatprep.subr.mxu0 0.0
    %1144 = vmatpush2.msra.mxu0 0.0
    %1145 = vmatprep.subr.mxu0 0.0
    %1146 = vmatpush2.msra.mxu0 0.0
    %1147 = vmatprep.subr.mxu0 0.0
    %1148 = vmatpush2.msra.mxu0 0.0
    %1149 = vmatprep.subr.mxu0 0.0
    %1150 = vmatpush2.msra.mxu0 0.0
    %1151 = vmatprep.subr.mxu0 0.0
    %1152 = vmatpush2.msra.mxu0 0.0
    %1153 = vmatprep.subr.mxu0 0.0
    %1154 = vmatpush2.msra.mxu0 0.0
    %1155 = vmatprep.subr.mxu0 0.0
    %1156 = vmatpush2.msra.mxu0 0.0
    %1157 = vmatprep.subr.mxu0 0.0
    %1158 = vmatpush2.msra.mxu0 0.0
    %1159 = vmatprep.subr.mxu0 0.0
    %1160 = vmatpush2.msra.mxu0 0.0
    %1161 = vmatprep.subr.mxu0 0.0
    %1162 = vmatpush2.msra.mxu0 0.0
    %1163 = vmatprep.subr.mxu0 0.0
    %1164 = vmatpush2.msra.mxu0 0.0
    %1165 = vmatprep.subr.mxu0 0.0
    %1166 = vmatpush2.msra.mxu0 0.0
    %1167 = vmatprep.subr.mxu0 0.0
    %1168 = vmatpush2.msra.mxu0 0.0
    %1169 = vmatprep.mubr.f32.mxu0 0.0
    %1170 = vmatmul.mubr.f32.gmra.mxu0 %v969
    %v1171 = vpop.f32.mrf.mxu0
    %v1172 = vadd.f32 0.0, %v1171
    %v1173 = vpop.f32.mrf.mxu0
    %v1174 = vadd.f32 0.0, %v1173
    %1175 = vdwg.mxu0
    %v1176 = vadd.f32 %v965, %v1101
    %v1177 = vadd.f32 %v966, %v1103
    %v1178 = vadd.f32 %v967, %v1172
    %v1179 = vadd.f32 %v968, %v1174
    %v1180 = vxor.u32 %v1176, 2147483648
    %v1181 = vxor.u32 %v1177, 2147483648
    %v1182 = vxor.u32 %v1178, 2147483648
    %v1183 = vmul.f32 %v1180, 1.442695
    %v1184 = vpow.pop %v1183
    %v1185 = vmul.f32 %v1181, 1.442695
    %v1186 = vpow.pop %v1185
    %v1187 = vmul.f32 %v1182, 1.442695
    %v1188 = vpow.pop %v1187
    %v1189 = vadd.f32 %v1184, 1.0
    %v1190 = vadd.f32 %v1186, 1.0
    %v1191 = vadd.f32 %v1188, 1.0
    %v1192 = vrcp.pop %v1189
    %v1193 = vmul.f32 1.0, %v1192
    %v1194 = vrcp.pop %v1190
    %v1195 = vmul.f32 1.0, %v1194
    %v1196 = vrcp.pop %v1191
    %v1197 = vmul.f32 1.0, %v1196
    %v1198 = vtanh.pop %v1179
    %v1199 = vld [vmem:[#allocation5] sm:$0xff]
    %v1200 = vmul.f32 %v1195, %v1199
    %v1201 = vmul.f32 %v1193, %v1198
    %v1202 = vadd.f32 %v1200, %v1201
    %v1203 = vtanh.pop %v1202
    %v1204 = vmul.f32 %v1197, %v1203
    %1205 = vst [vmem:[#allocation5] sm:$0xff] %v1202
    %1206 = vst [vmem:[#allocation4] sm:$0xff] %v1204
    %s1207 = scalar_lea.vmem [#allocation3], 16
    %1208 = vst [vmem:[%s1207] sm:$0xff] %v1204
    %s1209 = smul.u32 3, 4
    %s1210 = smul.addr %s1209, 8
    %s1211 = scalar_lea.vmem [#allocation2], %s1210
    %v1212 = vld [vmem:[%s1211] sm:$0xff]
    %v1213 = vld [vmem:[%s1211 + $0x8] sm:$0xff]
    %v1214 = vld [vmem:[%s1211 + $0x10] sm:$0xff]
    %v1215 = vld [vmem:[%s1211 + $0x18] sm:$0xff]
    %v1216 = vld [vmem:[#allocation4] sm:$0xff]
    %v1217 = vld [vmem:[#allocation11] sm:$0xff]
    %v1218 = vld [vmem:[#allocation11 + $0x8] sm:$0xff]
    %v1219 = vld [vmem:[#allocation11 + $0x10] sm:$0xff]
    %v1220 = vld [vmem:[#allocation11 + $0x18] sm:$0xff]
    %v1221 = vld [vmem:[#allocation11 + $0x20] sm:$0xff]
    %v1222 = vld [vmem:[#allocation11 + $0x28] sm:$0xff]
    %v1223 = vld [vmem:[#allocation11 + $0x30] sm:$0xff]
    %v1224 = vld [vmem:[#allocation11 + $0x38] sm:$0xff]
    %v1225 = vld [vmem:[#allocation11 + $0x40] sm:$0xff]
    %v1226 = vld [vmem:[#allocation11 + $0x48] sm:$0xff]
    %v1227 = vld [vmem:[#allocation11 + $0x50] sm:$0xff]
    %v1228 = vld [vmem:[#allocation11 + $0x58] sm:$0xff]
    %v1229 = vld [vmem:[#allocation11 + $0x60] sm:$0xff]
    %v1230 = vld [vmem:[#allocation11 + $0x68] sm:$0xff]
    %v1231 = vld [vmem:[#allocation11 + $0x70] sm:$0xff]
    %v1232 = vld [vmem:[#allocation11 + $0x78] sm:$0xff]
    %v1233 = vld [vmem:[#allocation11 + $0x80] sm:$0xff]
    %v1234 = vld [vmem:[#allocation11 + $0x88] sm:$0xff]
    %v1235 = vld [vmem:[#allocation11 + $0x90] sm:$0xff]
    %v1236 = vld [vmem:[#allocation11 + $0x98] sm:$0xff]
    %v1237 = vld [vmem:[#allocation11 + $0xa0] sm:$0xff]
    %v1238 = vld [vmem:[#allocation11 + $0xa8] sm:$0xff]
    %v1239 = vld [vmem:[#allocation11 + $0xb0] sm:$0xff]
    %v1240 = vld [vmem:[#allocation11 + $0xb8] sm:$0xff]
    %v1241 = vld [vmem:[#allocation11 + $0xc0] sm:$0xff]
    %v1242 = vld [vmem:[#allocation11 + $0xc8] sm:$0xff]
    %v1243 = vld [vmem:[#allocation11 + $0xd0] sm:$0xff]
    %v1244 = vld [vmem:[#allocation11 + $0xd8] sm:$0xff]
    %v1245 = vld [vmem:[#allocation11 + $0xe0] sm:$0xff]
    %v1246 = vld [vmem:[#allocation11 + $0xe8] sm:$0xff]
    %v1247 = vld [vmem:[#allocation11 + $0xf0] sm:$0xff]
    %v1248 = vld [vmem:[#allocation11 + $0xf8] sm:$0xff]
    %v1249 = vld [vmem:[#allocation11 + $0x100] sm:$0xff]
    %v1250 = vld [vmem:[#allocation11 + $0x108] sm:$0xff]
    %v1251 = vld [vmem:[#allocation11 + $0x110] sm:$0xff]
    %v1252 = vld [vmem:[#allocation11 + $0x118] sm:$0xff]
    %v1253 = vld [vmem:[#allocation11 + $0x120] sm:$0xff]
    %v1254 = vld [vmem:[#allocation11 + $0x128] sm:$0xff]
    %v1255 = vld [vmem:[#allocation11 + $0x130] sm:$0xff]
    %v1256 = vld [vmem:[#allocation11 + $0x138] sm:$0xff]
    %v1257 = vld [vmem:[#allocation11 + $0x140] sm:$0xff]
    %v1258 = vld [vmem:[#allocation11 + $0x148] sm:$0xff]
    %v1259 = vld [vmem:[#allocation11 + $0x150] sm:$0xff]
    %v1260 = vld [vmem:[#allocation11 + $0x158] sm:$0xff]
    %v1261 = vld [vmem:[#allocation11 + $0x160] sm:$0xff]
    %v1262 = vld [vmem:[#allocation11 + $0x168] sm:$0xff]
    %v1263 = vld [vmem:[#allocation11 + $0x170] sm:$0xff]
    %v1264 = vld [vmem:[#allocation11 + $0x178] sm:$0xff]
    %v1265 = vld [vmem:[#allocation11 + $0x180] sm:$0xff]
    %v1266 = vld [vmem:[#allocation11 + $0x188] sm:$0xff]
    %v1267 = vld [vmem:[#allocation11 + $0x190] sm:$0xff]
    %v1268 = vld [vmem:[#allocation11 + $0x198] sm:$0xff]
    %v1269 = vld [vmem:[#allocation11 + $0x1a0] sm:$0xff]
    %v1270 = vld [vmem:[#allocation11 + $0x1a8] sm:$0xff]
    %v1271 = vld [vmem:[#allocation11 + $0x1b0] sm:$0xff]
    %v1272 = vld [vmem:[#allocation11 + $0x1b8] sm:$0xff]
    %v1273 = vld [vmem:[#allocation11 + $0x1c0] sm:$0xff]
    %v1274 = vld [vmem:[#allocation11 + $0x1c8] sm:$0xff]
    %v1275 = vld [vmem:[#allocation11 + $0x1d0] sm:$0xff]
    %v1276 = vld [vmem:[#allocation11 + $0x1d8] sm:$0xff]
    %v1277 = vld [vmem:[#allocation11 + $0x1e0] sm:$0xff]
    %v1278 = vld [vmem:[#allocation11 + $0x1e8] sm:$0xff]
    %v1279 = vld [vmem:[#allocation11 + $0x1f0] sm:$0xff]
    %v1280 = vld [vmem:[#allocation11 + $0x1f8] sm:$0xff]
    %1281 = vmatprep.subr.mxu0 %v1278
    %1282 = vmatpush1.msra.mxu0 %v1277
    %1283 = vmatprep.subr.mxu0 %v1274
    %1284 = vmatpush1.msra.mxu0 %v1273
    %1285 = vmatprep.subr.mxu0 %v1270
    %1286 = vmatpush1.msra.mxu0 %v1269
    %1287 = vmatprep.subr.mxu0 %v1266
    %1288 = vmatpush1.msra.mxu0 %v1265
    %1289 = vmatprep.subr.mxu0 %v1262
    %1290 = vmatpush1.msra.mxu0 %v1261
    %1291 = vmatprep.subr.mxu0 %v1258
    %1292 = vmatpush1.msra.mxu0 %v1257
    %1293 = vmatprep.subr.mxu0 %v1254
    %1294 = vmatpush1.msra.mxu0 %v1253
    %1295 = vmatprep.subr.mxu0 %v1250
    %1296 = vmatpush1.msra.mxu0 %v1249
    %1297 = vmatprep.subr.mxu0 %v1246
    %1298 = vmatpush1.msra.mxu0 %v1245
    %1299 = vmatprep.subr.mxu0 %v1242
    %1300 = vmatpush1.msra.mxu0 %v1241
    %1301 = vmatprep.subr.mxu0 %v1238
    %1302 = vmatpush1.msra.mxu0 %v1237
    %1303 = vmatprep.subr.mxu0 %v1234
    %1304 = vmatpush1.msra.mxu0 %v1233
    %1305 = vmatprep.subr.mxu0 %v1230
    %1306 = vmatpush1.msra.mxu0 %v1229
    %1307 = vmatprep.subr.mxu0 %v1226
    %1308 = vmatpush1.msra.mxu0 %v1225
    %1309 = vmatprep.subr.mxu0 %v1222
    %1310 = vmatpush1.msra.mxu0 %v1221
    %1311 = vmatprep.subr.mxu0 %v1218
    %1312 = vmatpush1.msra.mxu0 %v1217
    %1313 = vmatprep.subr.mxu0 0.0
    %1314 = vmatpush2.msra.mxu0 0.0
    %1315 = vmatprep.subr.mxu0 0.0
    %1316 = vmatpush2.msra.mxu0 0.0
    %1317 = vmatprep.subr.mxu0 0.0
    %1318 = vmatpush2.msra.mxu0 0.0
    %1319 = vmatprep.subr.mxu0 0.0
    %1320 = vmatpush2.msra.mxu0 0.0
    %1321 = vmatprep.subr.mxu0 0.0
    %1322 = vmatpush2.msra.mxu0 0.0
    %1323 = vmatprep.subr.mxu0 0.0
    %1324 = vmatpush2.msra.mxu0 0.0
    %1325 = vmatprep.subr.mxu0 0.0
    %1326 = vmatpush2.msra.mxu0 0.0
    %1327 = vmatprep.subr.mxu0 0.0
    %1328 = vmatpush2.msra.mxu0 0.0
    %1329 = vmatprep.subr.mxu0 0.0
    %1330 = vmatpush2.msra.mxu0 0.0
    %1331 = vmatprep.subr.mxu0 0.0
    %1332 = vmatpush2.msra.mxu0 0.0
    %1333 = vmatprep.subr.mxu0 0.0
    %1334 = vmatpush2.msra.mxu0 0.0
    %1335 = vmatprep.subr.mxu0 0.0
    %1336 = vmatpush2.msra.mxu0 0.0
    %1337 = vmatprep.subr.mxu0 0.0
    %1338 = vmatpush2.msra.mxu0 0.0
    %1339 = vmatprep.subr.mxu0 0.0
    %1340 = vmatpush2.msra.mxu0 0.0
    %1341 = vmatprep.subr.mxu0 0.0
    %1342 = vmatpush2.msra.mxu0 0.0
    %1343 = vmatprep.subr.mxu0 0.0
    %1344 = vmatpush2.msra.mxu0 0.0
    %1345 = vmatprep.mubr.f32.mxu0 0.0
    %1346 = vmatmul.mubr.f32.gmra.mxu0 %v1216
    %v1347 = vpop.f32.mrf.mxu0
    %v1348 = vadd.f32 0.0, %v1347
    %v1349 = vpop.f32.mrf.mxu0
    %v1350 = vadd.f32 0.0, %v1349
    %1351 = vdwg.mxu0
    %1352 = vmatprep.subr.mxu0 %v1280
    %1353 = vmatpush1.msra.mxu0 %v1279
    %1354 = vmatprep.subr.mxu0 %v1276
    %1355 = vmatpush1.msra.mxu0 %v1275
    %1356 = vmatprep.subr.mxu0 %v1272
    %1357 = vmatpush1.msra.mxu0 %v1271
    %1358 = vmatprep.subr.mxu0 %v1268
    %1359 = vmatpush1.msra.mxu0 %v1267
    %1360 = vmatprep.subr.mxu0 %v1264
    %1361 = vmatpush1.msra.mxu0 %v1263
    %1362 = vmatprep.subr.mxu0 %v1260
    %1363 = vmatpush1.msra.mxu0 %v1259
    %1364 = vmatprep.subr.mxu0 %v1256
    %1365 = vmatpush1.msra.mxu0 %v1255
    %1366 = vmatprep.subr.mxu0 %v1252
    %1367 = vmatpush1.msra.mxu0 %v1251
    %1368 = vmatprep.subr.mxu0 %v1248
    %1369 = vmatpush1.msra.mxu0 %v1247
    %1370 = vmatprep.subr.mxu0 %v1244
    %1371 = vmatpush1.msra.mxu0 %v1243
    %1372 = vmatprep.subr.mxu0 %v1240
    %1373 = vmatpush1.msra.mxu0 %v1239
    %1374 = vmatprep.subr.mxu0 %v1236
    %1375 = vmatpush1.msra.mxu0 %v1235
    %1376 = vmatprep.subr.mxu0 %v1232
    %1377 = vmatpush1.msra.mxu0 %v1231
    %1378 = vmatprep.subr.mxu0 %v1228
    %1379 = vmatpush1.msra.mxu0 %v1227
    %1380 = vmatprep.subr.mxu0 %v1224
    %1381 = vmatpush1.msra.mxu0 %v1223
    %1382 = vmatprep.subr.mxu0 %v1220
    %1383 = vmatpush1.msra.mxu0 %v1219
    %1384 = vmatprep.subr.mxu0 0.0
    %1385 = vmatpush2.msra.mxu0 0.0
    %1386 = vmatprep.subr.mxu0 0.0
    %1387 = vmatpush2.msra.mxu0 0.0
    %1388 = vmatprep.subr.mxu0 0.0
    %1389 = vmatpush2.msra.mxu0 0.0
    %1390 = vmatprep.subr.mxu0 0.0
    %1391 = vmatpush2.msra.mxu0 0.0
    %1392 = vmatprep.subr.mxu0 0.0
    %1393 = vmatpush2.msra.mxu0 0.0
    %1394 = vmatprep.subr.mxu0 0.0
    %1395 = vmatpush2.msra.mxu0 0.0
    %1396 = vmatprep.subr.mxu0 0.0
    %1397 = vmatpush2.msra.mxu0 0.0
    %1398 = vmatprep.subr.mxu0 0.0
    %1399 = vmatpush2.msra.mxu0 0.0
    %1400 = vmatprep.subr.mxu0 0.0
    %1401 = vmatpush2.msra.mxu0 0.0
    %1402 = vmatprep.subr.mxu0 0.0
    %1403 = vmatpush2.msra.mxu0 0.0
    %1404 = vmatprep.subr.mxu0 0.0
    %1405 = vmatpush2.msra.mxu0 0.0
    %1406 = vmatprep.subr.mxu0 0.0
    %1407 = vmatpush2.msra.mxu0 0.0
    %1408 = vmatprep.subr.mxu0 0.0
    %1409 = vmatpush2.msra.mxu0 0.0
    %1410 = vmatprep.subr.mxu0 0.0
    %1411 = vmatpush2.msra.mxu0 0.0
    %1412 = vmatprep.subr.mxu0 0.0
    %1413 = vmatpush2.msra.mxu0 0.0
    %1414 = vmatprep.subr.mxu0 0.0
    %1415 = vmatpush2.msra.mxu0 0.0
    %1416 = vmatprep.mubr.f32.mxu0 0.0
    %1417 = vmatmul.mubr.f32.gmra.mxu0 %v1216
    %v1418 = vpop.f32.mrf.mxu0
    %v1419 = vadd.f32 0.0, %v1418
    %v1420 = vpop.f32.mrf.mxu0
    %v1421 = vadd.f32 0.0, %v1420
    %1422 = vdwg.mxu0
    %v1423 = vadd.f32 %v1212, %v1348
    %v1424 = vadd.f32 %v1213, %v1350
    %v1425 = vadd.f32 %v1214, %v1419
    %v1426 = vadd.f32 %v1215, %v1421
    %v1427 = vxor.u32 %v1423, 2147483648
    %v1428 = vxor.u32 %v1424, 2147483648
    %v1429 = vxor.u32 %v1425, 2147483648
    %v1430 = vmul.f32 %v1427, 1.442695
    %v1431 = vpow.pop %v1430
    %v1432 = vmul.f32 %v1428, 1.442695
    %v1433 = vpow.pop %v1432
    %v1434 = vmul.f32 %v1429, 1.442695
    %v1435 = vpow.pop %v1434
    %v1436 = vadd.f32 %v1431, 1.0
    %v1437 = vadd.f32 %v1433, 1.0
    %v1438 = vadd.f32 %v1435, 1.0
    %v1439 = vrcp.pop %v1436
    %v1440 = vmul.f32 1.0, %v1439
    %v1441 = vrcp.pop %v1437
    %v1442 = vmul.f32 1.0, %v1441
    %v1443 = vrcp.pop %v1438
    %v1444 = vmul.f32 1.0, %v1443
    %v1445 = vtanh.pop %v1426
    %v1446 = vld [vmem:[#allocation5] sm:$0xff]
    %v1447 = vmul.f32 %v1442, %v1446
    %v1448 = vmul.f32 %v1440, %v1445
    %v1449 = vadd.f32 %v1447, %v1448
    %v1450 = vtanh.pop %v1449
    %v1451 = vmul.f32 %v1444, %v1450
    %1452 = vst [vmem:[#allocation5] sm:$0xff] %v1449
    %1453 = vst [vmem:[#allocation4] sm:$0xff] %v1451
    %s1454 = scalar_lea.vmem [#allocation3], 24
    %1455 = vst [vmem:[%s1454] sm:$0xff] %v1451
    %s1456 = smul.u32 4, 4
    %s1457 = smul.addr %s1456, 8
    %s1458 = scalar_lea.vmem [#allocation2], %s1457
    %v1459 = vld [vmem:[%s1458] sm:$0xff]
    %v1460 = vld [vmem:[%s1458 + $0x8] sm:$0xff]
    %v1461 = vld [vmem:[%s1458 + $0x10] sm:$0xff]
    %v1462 = vld [vmem:[%s1458 + $0x18] sm:$0xff]
    %v1463 = vld [vmem:[#allocation4] sm:$0xff]
    %v1464 = vld [vmem:[#allocation11] sm:$0xff]
    %v1465 = vld [vmem:[#allocation11 + $0x8] sm:$0xff]
    %v1466 = vld [vmem:[#allocation11 + $0x10] sm:$0xff]
    %v1467 = vld [vmem:[#allocation11 + $0x18] sm:$0xff]
    %v1468 = vld [vmem:[#allocation11 + $0x20] sm:$0xff]
    %v1469 = vld [vmem:[#allocation11 + $0x28] sm:$0xff]
    %v1470 = vld [vmem:[#allocation11 + $0x30] sm:$0xff]
    %v1471 = vld [vmem:[#allocation11 + $0x38] sm:$0xff]
    %v1472 = vld [vmem:[#allocation11 + $0x40] sm:$0xff]
    %v1473 = vld [vmem:[#allocation11 + $0x48] sm:$0xff]
    %v1474 = vld [vmem:[#allocation11 + $0x50] sm:$0xff]
    %v1475 = vld [vmem:[#allocation11 + $0x58] sm:$0xff]
    %v1476 = vld [vmem:[#allocation11 + $0x60] sm:$0xff]
    %v1477 = vld [vmem:[#allocation11 + $0x68] sm:$0xff]
    %v1478 = vld [vmem:[#allocation11 + $0x70] sm:$0xff]
    %v1479 = vld [vmem:[#allocation11 + $0x78] sm:$0xff]
    %v1480 = vld [vmem:[#allocation11 + $0x80] sm:$0xff]
    %v1481 = vld [vmem:[#allocation11 + $0x88] sm:$0xff]
    %v1482 = vld [vmem:[#allocation11 + $0x90] sm:$0xff]
    %v1483 = vld [vmem:[#allocation11 + $0x98] sm:$0xff]
    %v1484 = vld [vmem:[#allocation11 + $0xa0] sm:$0xff]
    %v1485 = vld [vmem:[#allocation11 + $0xa8] sm:$0xff]
    %v1486 = vld [vmem:[#allocation11 + $0xb0] sm:$0xff]
    %v1487 = vld [vmem:[#allocation11 + $0xb8] sm:$0xff]
    %v1488 = vld [vmem:[#allocation11 + $0xc0] sm:$0xff]
    %v1489 = vld [vmem:[#allocation11 + $0xc8] sm:$0xff]
    %v1490 = vld [vmem:[#allocation11 + $0xd0] sm:$0xff]
    %v1491 = vld [vmem:[#allocation11 + $0xd8] sm:$0xff]
    %v1492 = vld [vmem:[#allocation11 + $0xe0] sm:$0xff]
    %v1493 = vld [vmem:[#allocation11 + $0xe8] sm:$0xff]
    %v1494 = vld [vmem:[#allocation11 + $0xf0] sm:$0xff]
    %v1495 = vld [vmem:[#allocation11 + $0xf8] sm:$0xff]
    %v1496 = vld [vmem:[#allocation11 + $0x100] sm:$0xff]
    %v1497 = vld [vmem:[#allocation11 + $0x108] sm:$0xff]
    %v1498 = vld [vmem:[#allocation11 + $0x110] sm:$0xff]
    %v1499 = vld [vmem:[#allocation11 + $0x118] sm:$0xff]
    %v1500 = vld [vmem:[#allocation11 + $0x120] sm:$0xff]
    %v1501 = vld [vmem:[#allocation11 + $0x128] sm:$0xff]
    %v1502 = vld [vmem:[#allocation11 + $0x130] sm:$0xff]
    %v1503 = vld [vmem:[#allocation11 + $0x138] sm:$0xff]
    %v1504 = vld [vmem:[#allocation11 + $0x140] sm:$0xff]
    %v1505 = vld [vmem:[#allocation11 + $0x148] sm:$0xff]
    %v1506 = vld [vmem:[#allocation11 + $0x150] sm:$0xff]
    %v1507 = vld [vmem:[#allocation11 + $0x158] sm:$0xff]
    %v1508 = vld [vmem:[#allocation11 + $0x160] sm:$0xff]
    %v1509 = vld [vmem:[#allocation11 + $0x168] sm:$0xff]
    %v1510 = vld [vmem:[#allocation11 + $0x170] sm:$0xff]
    %v1511 = vld [vmem:[#allocation11 + $0x178] sm:$0xff]
    %v1512 = vld [vmem:[#allocation11 + $0x180] sm:$0xff]
    %v1513 = vld [vmem:[#allocation11 + $0x188] sm:$0xff]
    %v1514 = vld [vmem:[#allocation11 + $0x190] sm:$0xff]
    %v1515 = vld [vmem:[#allocation11 + $0x198] sm:$0xff]
    %v1516 = vld [vmem:[#allocation11 + $0x1a0] sm:$0xff]
    %v1517 = vld [vmem:[#allocation11 + $0x1a8] sm:$0xff]
    %v1518 = vld [vmem:[#allocation11 + $0x1b0] sm:$0xff]
    %v1519 = vld [vmem:[#allocation11 + $0x1b8] sm:$0xff]
    %v1520 = vld [vmem:[#allocation11 + $0x1c0] sm:$0xff]
    %v1521 = vld [vmem:[#allocation11 + $0x1c8] sm:$0xff]
    %v1522 = vld [vmem:[#allocation11 + $0x1d0] sm:$0xff]
    %v1523 = vld [vmem:[#allocation11 + $0x1d8] sm:$0xff]
    %v1524 = vld [vmem:[#allocation11 + $0x1e0] sm:$0xff]
    %v1525 = vld [vmem:[#allocation11 + $0x1e8] sm:$0xff]
    %v1526 = vld [vmem:[#allocation11 + $0x1f0] sm:$0xff]
    %v1527 = vld [vmem:[#allocation11 + $0x1f8] sm:$0xff]
    %1528 = vmatprep.subr.mxu0 %v1525
    %1529 = vmatpush1.msra.mxu0 %v1524
    %1530 = vmatprep.subr.mxu0 %v1521
    %1531 = vmatpush1.msra.mxu0 %v1520
    %1532 = vmatprep.subr.mxu0 %v1517
    %1533 = vmatpush1.msra.mxu0 %v1516
    %1534 = vmatprep.subr.mxu0 %v1513
    %1535 = vmatpush1.msra.mxu0 %v1512
    %1536 = vmatprep.subr.mxu0 %v1509
    %1537 = vmatpush1.msra.mxu0 %v1508
    %1538 = vmatprep.subr.mxu0 %v1505
    %1539 = vmatpush1.msra.mxu0 %v1504
    %1540 = vmatprep.subr.mxu0 %v1501
    %1541 = vmatpush1.msra.mxu0 %v1500
    %1542 = vmatprep.subr.mxu0 %v1497
    %1543 = vmatpush1.msra.mxu0 %v1496
    %1544 = vmatprep.subr.mxu0 %v1493
    %1545 = vmatpush1.msra.mxu0 %v1492
    %1546 = vmatprep.subr.mxu0 %v1489
    %1547 = vmatpush1.msra.mxu0 %v1488
    %1548 = vmatprep.subr.mxu0 %v1485
    %1549 = vmatpush1.msra.mxu0 %v1484
    %1550 = vmatprep.subr.mxu0 %v1481
    %1551 = vmatpush1.msra.mxu0 %v1480
    %1552 = vmatprep.subr.mxu0 %v1477
    %1553 = vmatpush1.msra.mxu0 %v1476
    %1554 = vmatprep.subr.mxu0 %v1473
    %1555 = vmatpush1.msra.mxu0 %v1472
    %1556 = vmatprep.subr.mxu0 %v1469
    %1557 = vmatpush1.msra.mxu0 %v1468
    %1558 = vmatprep.subr.mxu0 %v1465
    %1559 = vmatpush1.msra.mxu0 %v1464
    %1560 = vmatprep.subr.mxu0 0.0
    %1561 = vmatpush2.msra.mxu0 0.0
    %1562 = vmatprep.subr.mxu0 0.0
    %1563 = vmatpush2.msra.mxu0 0.0
    %1564 = vmatprep.subr.mxu0 0.0
    %1565 = vmatpush2.msra.mxu0 0.0
    %1566 = vmatprep.subr.mxu0 0.0
    %1567 = vmatpush2.msra.mxu0 0.0
    %1568 = vmatprep.subr.mxu0 0.0
    %1569 = vmatpush2.msra.mxu0 0.0
    %1570 = vmatprep.subr.mxu0 0.0
    %1571 = vmatpush2.msra.mxu0 0.0
    %1572 = vmatprep.subr.mxu0 0.0
    %1573 = vmatpush2.msra.mxu0 0.0
    %1574 = vmatprep.subr.mxu0 0.0
    %1575 = vmatpush2.msra.mxu0 0.0
    %1576 = vmatprep.subr.mxu0 0.0
    %1577 = vmatpush2.msra.mxu0 0.0
    %1578 = vmatprep.subr.mxu0 0.0
    %1579 = vmatpush2.msra.mxu0 0.0
    %1580 = vmatprep.subr.mxu0 0.0
    %1581 = vmatpush2.msra.mxu0 0.0
    %1582 = vmatprep.subr.mxu0 0.0
    %1583 = vmatpush2.msra.mxu0 0.0
    %1584 = vmatprep.subr.mxu0 0.0
    %1585 = vmatpush2.msra.mxu0 0.0
    %1586 = vmatprep.subr.mxu0 0.0
    %1587 = vmatpush2.msra.mxu0 0.0
    %1588 = vmatprep.subr.mxu0 0.0
    %1589 = vmatpush2.msra.mxu0 0.0
    %1590 = vmatprep.subr.mxu0 0.0
    %1591 = vmatpush2.msra.mxu0 0.0
    %1592 = vmatprep.mubr.f32.mxu0 0.0
    %1593 = vmatmul.mubr.f32.gmra.mxu0 %v1463
    %v1594 = vpop.f32.mrf.mxu0
    %v1595 = vadd.f32 0.0, %v1594
    %v1596 = vpop.f32.mrf.mxu0
    %v1597 = vadd.f32 0.0, %v1596
    %1598 = vdwg.mxu0
    %1599 = vmatprep.subr.mxu0 %v1527
    %1600 = vmatpush1.msra.mxu0 %v1526
    %1601 = vmatprep.subr.mxu0 %v1523
    %1602 = vmatpush1.msra.mxu0 %v1522
    %1603 = vmatprep.subr.mxu0 %v1519
    %1604 = vmatpush1.msra.mxu0 %v1518
    %1605 = vmatprep.subr.mxu0 %v1515
    %1606 = vmatpush1.msra.mxu0 %v1514
    %1607 = vmatprep.subr.mxu0 %v1511
    %1608 = vmatpush1.msra.mxu0 %v1510
    %1609 = vmatprep.subr.mxu0 %v1507
    %1610 = vmatpush1.msra.mxu0 %v1506
    %1611 = vmatprep.subr.mxu0 %v1503
    %1612 = vmatpush1.msra.mxu0 %v1502
    %1613 = vmatprep.subr.mxu0 %v1499
    %1614 = vmatpush1.msra.mxu0 %v1498
    %1615 = vmatprep.subr.mxu0 %v1495
    %1616 = vmatpush1.msra.mxu0 %v1494
    %1617 = vmatprep.subr.mxu0 %v1491
    %1618 = vmatpush1.msra.mxu0 %v1490
    %1619 = vmatprep.subr.mxu0 %v1487
    %1620 = vmatpush1.msra.mxu0 %v1486
    %1621 = vmatprep.subr.mxu0 %v1483
    %1622 = vmatpush1.msra.mxu0 %v1482
    %1623 = vmatprep.subr.mxu0 %v1479
    %1624 = vmatpush1.msra.mxu0 %v1478
    %1625 = vmatprep.subr.mxu0 %v1475
    %1626 = vmatpush1.msra.mxu0 %v1474
    %1627 = vmatprep.subr.mxu0 %v1471
    %1628 = vmatpush1.msra.mxu0 %v1470
    %1629 = vmatprep.subr.mxu0 %v1467
    %1630 = vmatpush1.msra.mxu0 %v1466
    %1631 = vmatprep.subr.mxu0 0.0
    %1632 = vmatpush2.msra.mxu0 0.0
    %1633 = vmatprep.subr.mxu0 0.0
    %1634 = vmatpush2.msra.mxu0 0.0
    %1635 = vmatprep.subr.mxu0 0.0
    %1636 = vmatpush2.msra.mxu0 0.0
    %1637 = vmatprep.subr.mxu0 0.0
    %1638 = vmatpush2.msra.mxu0 0.0
    %1639 = vmatprep.subr.mxu0 0.0
    %1640 = vmatpush2.msra.mxu0 0.0
    %1641 = vmatprep.subr.mxu0 0.0
    %1642 = vmatpush2.msra.mxu0 0.0
    %1643 = vmatprep.subr.mxu0 0.0
    %1644 = vmatpush2.msra.mxu0 0.0
    %1645 = vmatprep.subr.mxu0 0.0
    %1646 = vmatpush2.msra.mxu0 0.0
    %1647 = vmatprep.subr.mxu0 0.0
    %1648 = vmatpush2.msra.mxu0 0.0
    %1649 = vmatprep.subr.mxu0 0.0
    %1650 = vmatpush2.msra.mxu0 0.0
    %1651 = vmatprep.subr.mxu0 0.0
    %1652 = vmatpush2.msra.mxu0 0.0
    %1653 = vmatprep.subr.mxu0 0.0
    %1654 = vmatpush2.msra.mxu0 0.0
    %1655 = vmatprep.subr.mxu0 0.0
    %1656 = vmatpush2.msra.mxu0 0.0
    %1657 = vmatprep.subr.mxu0 0.0
    %1658 = vmatpush2.msra.mxu0 0.0
    %1659 = vmatprep.subr.mxu0 0.0
    %1660 = vmatpush2.msra.mxu0 0.0
    %1661 = vmatprep.subr.mxu0 0.0
    %1662 = vmatpush2.msra.mxu0 0.0
    %1663 = vmatprep.mubr.f32.mxu0 0.0
    %1664 = vmatmul.mubr.f32.gmra.mxu0 %v1463
    %v1665 = vpop.f32.mrf.mxu0
    %v1666 = vadd.f32 0.0, %v1665
    %v1667 = vpop.f32.mrf.mxu0
    %v1668 = vadd.f32 0.0, %v1667
    %1669 = vdwg.mxu0
    %v1670 = vadd.f32 %v1459, %v1595
    %v1671 = vadd.f32 %v1460, %v1597
    %v1672 = vadd.f32 %v1461, %v1666
    %v1673 = vadd.f32 %v1462, %v1668
    %v1674 = vxor.u32 %v1670, 2147483648
    %v1675 = vxor.u32 %v1671, 2147483648
    %v1676 = vxor.u32 %v1672, 2147483648
    %v1677 = vmul.f32 %v1674, 1.442695
    %v1678 = vpow.pop %v1677
    %v1679 = vmul.f32 %v1675, 1.442695
    %v1680 = vpow.pop %v1679
    %v1681 = vmul.f32 %v1676, 1.442695
    %v1682 = vpow.pop %v1681
    %v1683 = vadd.f32 %v1678, 1.0
    %v1684 = vadd.f32 %v1680, 1.0
    %v1685 = vadd.f32 %v1682, 1.0
    %v1686 = vrcp.pop %v1683
    %v1687 = vmul.f32 1.0, %v1686
    %v1688 = vrcp.pop %v1684
    %v1689 = vmul.f32 1.0, %v1688
    %v1690 = vrcp.pop %v1685
    %v1691 = vmul.f32 1.0, %v1690
    %v1692 = vtanh.pop %v1673
    %v1693 = vld [vmem:[#allocation5] sm:$0xff]
    %v1694 = vmul.f32 %v1689, %v1693
    %v1695 = vmul.f32 %v1687, %v1692
    %v1696 = vadd.f32 %v1694, %v1695
    %v1697 = vtanh.pop %v1696
    %v1698 = vmul.f32 %v1691, %v1697
    %1699 = vst [vmem:[#allocation5] sm:$0xff] %v1696
    %1700 = vst [vmem:[#allocation4] sm:$0xff] %v1698
    %s1701 = scalar_lea.vmem [#allocation3], 32
    %1702 = vst [vmem:[%s1701] sm:$0xff] %v1698
    %s1703 = smul.u32 5, 4
    %s1704 = smul.addr %s1703, 8
    %s1705 = scalar_lea.vmem [#allocation2], %s1704
    %v1706 = vld [vmem:[%s1705] sm:$0xff]
    %v1707 = vld [vmem:[%s1705 + $0x8] sm:$0xff]
    %v1708 = vld [vmem:[%s1705 + $0x10] sm:$0xff]
    %v1709 = vld [vmem:[%s1705 + $0x18] sm:$0xff]
    %v1710 = vld [vmem:[#allocation4] sm:$0xff]
    %v1711 = vld [vmem:[#allocation11] sm:$0xff]
    %v1712 = vld [vmem:[#allocation11 + $0x8] sm:$0xff]
    %v1713 = vld [vmem:[#allocation11 + $0x10] sm:$0xff]
    %v1714 = vld [vmem:[#allocation11 + $0x18] sm:$0xff]
    %v1715 = vld [vmem:[#allocation11 + $0x20] sm:$0xff]
    %v1716 = vld [vmem:[#allocation11 + $0x28] sm:$0xff]
    %v1717 = vld [vmem:[#allocation11 + $0x30] sm:$0xff]
    %v1718 = vld [vmem:[#allocation11 + $0x38] sm:$0xff]
    %v1719 = vld [vmem:[#allocation11 + $0x40] sm:$0xff]
    %v1720 = vld [vmem:[#allocation11 + $0x48] sm:$0xff]
    %v1721 = vld [vmem:[#allocation11 + $0x50] sm:$0xff]
    %v1722 = vld [vmem:[#allocation11 + $0x58] sm:$0xff]
    %v1723 = vld [vmem:[#allocation11 + $0x60] sm:$0xff]
    %v1724 = vld [vmem:[#allocation11 + $0x68] sm:$0xff]
    %v1725 = vld [vmem:[#allocation11 + $0x70] sm:$0xff]
    %v1726 = vld [vmem:[#allocation11 + $0x78] sm:$0xff]
    %v1727 = vld [vmem:[#allocation11 + $0x80] sm:$0xff]
    %v1728 = vld [vmem:[#allocation11 + $0x88] sm:$0xff]
    %v1729 = vld [vmem:[#allocation11 + $0x90] sm:$0xff]
    %v1730 = vld [vmem:[#allocation11 + $0x98] sm:$0xff]
    %v1731 = vld [vmem:[#allocation11 + $0xa0] sm:$0xff]
    %v1732 = vld [vmem:[#allocation11 + $0xa8] sm:$0xff]
    %v1733 = vld [vmem:[#allocation11 + $0xb0] sm:$0xff]
    %v1734 = vld [vmem:[#allocation11 + $0xb8] sm:$0xff]
    %v1735 = vld [vmem:[#allocation11 + $0xc0] sm:$0xff]
    %v1736 = vld [vmem:[#allocation11 + $0xc8] sm:$0xff]
    %v1737 = vld [vmem:[#allocation11 + $0xd0] sm:$0xff]
    %v1738 = vld [vmem:[#allocation11 + $0xd8] sm:$0xff]
    %v1739 = vld [vmem:[#allocation11 + $0xe0] sm:$0xff]
    %v1740 = vld [vmem:[#allocation11 + $0xe8] sm:$0xff]
    %v1741 = vld [vmem:[#allocation11 + $0xf0] sm:$0xff]
    %v1742 = vld [vmem:[#allocation11 + $0xf8] sm:$0xff]
    %v1743 = vld [vmem:[#allocation11 + $0x100] sm:$0xff]
    %v1744 = vld [vmem:[#allocation11 + $0x108] sm:$0xff]
    %v1745 = vld [vmem:[#allocation11 + $0x110] sm:$0xff]
    %v1746 = vld [vmem:[#allocation11 + $0x118] sm:$0xff]
    %v1747 = vld [vmem:[#allocation11 + $0x120] sm:$0xff]
    %v1748 = vld [vmem:[#allocation11 + $0x128] sm:$0xff]
    %v1749 = vld [vmem:[#allocation11 + $0x130] sm:$0xff]
    %v1750 = vld [vmem:[#allocation11 + $0x138] sm:$0xff]
    %v1751 = vld [vmem:[#allocation11 + $0x140] sm:$0xff]
    %v1752 = vld [vmem:[#allocation11 + $0x148] sm:$0xff]
    %v1753 = vld [vmem:[#allocation11 + $0x150] sm:$0xff]
    %v1754 = vld [vmem:[#allocation11 + $0x158] sm:$0xff]
    %v1755 = vld [vmem:[#allocation11 + $0x160] sm:$0xff]
    %v1756 = vld [vmem:[#allocation11 + $0x168] sm:$0xff]
    %v1757 = vld [vmem:[#allocation11 + $0x170] sm:$0xff]
    %v1758 = vld [vmem:[#allocation11 + $0x178] sm:$0xff]
    %v1759 = vld [vmem:[#allocation11 + $0x180] sm:$0xff]
    %v1760 = vld [vmem:[#allocation11 + $0x188] sm:$0xff]
    %v1761 = vld [vmem:[#allocation11 + $0x190] sm:$0xff]
    %v1762 = vld [vmem:[#allocation11 + $0x198] sm:$0xff]
    %v1763 = vld [vmem:[#allocation11 + $0x1a0] sm:$0xff]
    %v1764 = vld [vmem:[#allocation11 + $0x1a8] sm:$0xff]
    %v1765 = vld [vmem:[#allocation11 + $0x1b0] sm:$0xff]
    %v1766 = vld [vmem:[#allocation11 + $0x1b8] sm:$0xff]
    %v1767 = vld [vmem:[#allocation11 + $0x1c0] sm:$0xff]
    %v1768 = vld [vmem:[#allocation11 + $0x1c8] sm:$0xff]
    %v1769 = vld [vmem:[#allocation11 + $0x1d0] sm:$0xff]
    %v1770 = vld [vmem:[#allocation11 + $0x1d8] sm:$0xff]
    %v1771 = vld [vmem:[#allocation11 + $0x1e0] sm:$0xff]
    %v1772 = vld [vmem:[#allocation11 + $0x1e8] sm:$0xff]
    %v1773 = vld [vmem:[#allocation11 + $0x1f0] sm:$0xff]
    %v1774 = vld [vmem:[#allocation11 + $0x1f8] sm:$0xff]
    %1775 = vmatprep.subr.mxu0 %v1772
    %1776 = vmatpush1.msra.mxu0 %v1771
    %1777 = vmatprep.subr.mxu0 %v1768
    %1778 = vmatpush1.msra.mxu0 %v1767
    %1779 = vmatprep.subr.mxu0 %v1764
    %1780 = vmatpush1.msra.mxu0 %v1763
    %1781 = vmatprep.subr.mxu0 %v1760
    %1782 = vmatpush1.msra.mxu0 %v1759
    %1783 = vmatprep.subr.mxu0 %v1756
    %1784 = vmatpush1.msra.mxu0 %v1755
    %1785 = vmatprep.subr.mxu0 %v1752
    %1786 = vmatpush1.msra.mxu0 %v1751
    %1787 = vmatprep.subr.mxu0 %v1748
    %1788 = vmatpush1.msra.mxu0 %v1747
    %1789 = vmatprep.subr.mxu0 %v1744
    %1790 = vmatpush1.msra.mxu0 %v1743
    %1791 = vmatprep.subr.mxu0 %v1740
    %1792 = vmatpush1.msra.mxu0 %v1739
    %1793 = vmatprep.subr.mxu0 %v1736
    %1794 = vmatpush1.msra.mxu0 %v1735
    %1795 = vmatprep.subr.mxu0 %v1732
    %1796 = vmatpush1.msra.mxu0 %v1731
    %1797 = vmatprep.subr.mxu0 %v1728
    %1798 = vmatpush1.msra.mxu0 %v1727
    %1799 = vmatprep.subr.mxu0 %v1724
    %1800 = vmatpush1.msra.mxu0 %v1723
    %1801 = vmatprep.subr.mxu0 %v1720
    %1802 = vmatpush1.msra.mxu0 %v1719
    %1803 = vmatprep.subr.mxu0 %v1716
    %1804 = vmatpush1.msra.mxu0 %v1715
    %1805 = vmatprep.subr.mxu0 %v1712
    %1806 = vmatpush1.msra.mxu0 %v1711
    %1807 = vmatprep.subr.mxu0 0.0
    %1808 = vmatpush2.msra.mxu0 0.0
    %1809 = vmatprep.subr.mxu0 0.0
    %1810 = vmatpush2.msra.mxu0 0.0
    %1811 = vmatprep.subr.mxu0 0.0
    %1812 = vmatpush2.msra.mxu0 0.0
    %1813 = vmatprep.subr.mxu0 0.0
    %1814 = vmatpush2.msra.mxu0 0.0
    %1815 = vmatprep.subr.mxu0 0.0
    %1816 = vmatpush2.msra.mxu0 0.0
    %1817 = vmatprep.subr.mxu0 0.0
    %1818 = vmatpush2.msra.mxu0 0.0
    %1819 = vmatprep.subr.mxu0 0.0
    %1820 = vmatpush2.msra.mxu0 0.0
    %1821 = vmatprep.subr.mxu0 0.0
    %1822 = vmatpush2.msra.mxu0 0.0
    %1823 = vmatprep.subr.mxu0 0.0
    %1824 = vmatpush2.msra.mxu0 0.0
    %1825 = vmatprep.subr.mxu0 0.0
    %1826 = vmatpush2.msra.mxu0 0.0
    %1827 = vmatprep.subr.mxu0 0.0
    %1828 = vmatpush2.msra.mxu0 0.0
    %1829 = vmatprep.subr.mxu0 0.0
    %1830 = vmatpush2.msra.mxu0 0.0
    %1831 = vmatprep.subr.mxu0 0.0
    %1832 = vmatpush2.msra.mxu0 0.0
    %1833 = vmatprep.subr.mxu0 0.0
    %1834 = vmatpush2.msra.mxu0 0.0
    %1835 = vmatprep.subr.mxu0 0.0
    %1836 = vmatpush2.msra.mxu0 0.0
    %1837 = vmatprep.subr.mxu0 0.0
    %1838 = vmatpush2.msra.mxu0 0.0
    %1839 = vmatprep.mubr.f32.mxu0 0.0
    %1840 = vmatmul.mubr.f32.gmra.mxu0 %v1710
    %v1841 = vpop.f32.mrf.mxu0
    %v1842 = vadd.f32 0.0, %v1841
    %v1843 = vpop.f32.mrf.mxu0
    %v1844 = vadd.f32 0.0, %v1843
    %1845 = vdwg.mxu0
    %1846 = vmatprep.subr.mxu0 %v1774
    %1847 = vmatpush1.msra.mxu0 %v1773
    %1848 = vmatprep.subr.mxu0 %v1770
    %1849 = vmatpush1.msra.mxu0 %v1769
    %1850 = vmatprep.subr.mxu0 %v1766
    %1851 = vmatpush1.msra.mxu0 %v1765
    %1852 = vmatprep.subr.mxu0 %v1762
    %1853 = vmatpush1.msra.mxu0 %v1761
    %1854 = vmatprep.subr.mxu0 %v1758
    %1855 = vmatpush1.msra.mxu0 %v1757
    %1856 = vmatprep.subr.mxu0 %v1754
    %1857 = vmatpush1.msra.mxu0 %v1753
    %1858 = vmatprep.subr.mxu0 %v1750
    %1859 = vmatpush1.msra.mxu0 %v1749
    %1860 = vmatprep.subr.mxu0 %v1746
    %1861 = vmatpush1.msra.mxu0 %v1745
    %1862 = vmatprep.subr.mxu0 %v1742
    %1863 = vmatpush1.msra.mxu0 %v1741
    %1864 = vmatprep.subr.mxu0 %v1738
    %1865 = vmatpush1.msra.mxu0 %v1737
    %1866 = vmatprep.subr.mxu0 %v1734
    %1867 = vmatpush1.msra.mxu0 %v1733
    %1868 = vmatprep.subr.mxu0 %v1730
    %1869 = vmatpush1.msra.mxu0 %v1729
    %1870 = vmatprep.subr.mxu0 %v1726
    %1871 = vmatpush1.msra.mxu0 %v1725
    %1872 = vmatprep.subr.mxu0 %v1722
    %1873 = vmatpush1.msra.mxu0 %v1721
    %1874 = vmatprep.subr.mxu0 %v1718
    %1875 = vmatpush1.msra.mxu0 %v1717
    %1876 = vmatprep.subr.mxu0 %v1714
    %1877 = vmatpush1.msra.mxu0 %v1713
    %1878 = vmatprep.subr.mxu0 0.0
    %1879 = vmatpush2.msra.mxu0 0.0
    %1880 = vmatprep.subr.mxu0 0.0
    %1881 = vmatpush2.msra.mxu0 0.0
    %1882 = vmatprep.subr.mxu0 0.0
    %1883 = vmatpush2.msra.mxu0 0.0
    %1884 = vmatprep.subr.mxu0 0.0
    %1885 = vmatpush2.msra.mxu0 0.0
    %1886 = vmatprep.subr.mxu0 0.0
    %1887 = vmatpush2.msra.mxu0 0.0
    %1888 = vmatprep.subr.mxu0 0.0
    %1889 = vmatpush2.msra.mxu0 0.0
    %1890 = vmatprep.subr.mxu0 0.0
    %1891 = vmatpush2.msra.mxu0 0.0
    %1892 = vmatprep.subr.mxu0 0.0
    %1893 = vmatpush2.msra.mxu0 0.0
    %1894 = vmatprep.subr.mxu0 0.0
    %1895 = vmatpush2.msra.mxu0 0.0
    %1896 = vmatprep.subr.mxu0 0.0
    %1897 = vmatpush2.msra.mxu0 0.0
    %1898 = vmatprep.subr.mxu0 0.0
    %1899 = vmatpush2.msra.mxu0 0.0
    %1900 = vmatprep.subr.mxu0 0.0
    %1901 = vmatpush2.msra.mxu0 0.0
    %1902 = vmatprep.subr.mxu0 0.0
    %1903 = vmatpush2.msra.mxu0 0.0
    %1904 = vmatprep.subr.mxu0 0.0
    %1905 = vmatpush2.msra.mxu0 0.0
    %1906 = vmatprep.subr.mxu0 0.0
    %1907 = vmatpush2.msra.mxu0 0.0
    %1908 = vmatprep.subr.mxu0 0.0
    %1909 = vmatpush2.msra.mxu0 0.0
    %1910 = vmatprep.mubr.f32.mxu0 0.0
    %1911 = vmatmul.mubr.f32.gmra.mxu0 %v1710
    %v1912 = vpop.f32.mrf.mxu0
    %v1913 = vadd.f32 0.0, %v1912
    %v1914 = vpop.f32.mrf.mxu0
    %v1915 = vadd.f32 0.0, %v1914
    %1916 = vdwg.mxu0
    %v1917 = vadd.f32 %v1706, %v1842
    %v1918 = vadd.f32 %v1707, %v1844
    %v1919 = vadd.f32 %v1708, %v1913
    %v1920 = vadd.f32 %v1709, %v1915
    %v1921 = vxor.u32 %v1917, 2147483648
    %v1922 = vxor.u32 %v1918, 2147483648
    %v1923 = vxor.u32 %v1919, 2147483648
    %v1924 = vmul.f32 %v1921, 1.442695
    %v1925 = vpow.pop %v1924
    %v1926 = vmul.f32 %v1922, 1.442695
    %v1927 = vpow.pop %v1926
    %v1928 = vmul.f32 %v1923, 1.442695
    %v1929 = vpow.pop %v1928
    %v1930 = vadd.f32 %v1925, 1.0
    %v1931 = vadd.f32 %v1927, 1.0
    %v1932 = vadd.f32 %v1929, 1.0
    %v1933 = vrcp.pop %v1930
    %v1934 = vmul.f32 1.0, %v1933
    %v1935 = vrcp.pop %v1931
    %v1936 = vmul.f32 1.0, %v1935
    %v1937 = vrcp.pop %v1932
    %v1938 = vmul.f32 1.0, %v1937
    %v1939 = vtanh.pop %v1920
    %v1940 = vld [vmem:[#allocation5] sm:$0xff]
    %v1941 = vmul.f32 %v1936, %v1940
    %v1942 = vmul.f32 %v1934, %v1939
    %v1943 = vadd.f32 %v1941, %v1942
    %v1944 = vtanh.pop %v1943
    %v1945 = vmul.f32 %v1938, %v1944
    %1946 = vst [vmem:[#allocation5] sm:$0xff] %v1943
    %1947 = vst [vmem:[#allocation4] sm:$0xff] %v1945
    %s1948 = scalar_lea.vmem [#allocation3], 40
    %1949 = vst [vmem:[%s1948] sm:$0xff] %v1945
    %s1950 = smul.u32 6, 4
    %s1951 = smul.addr %s1950, 8
    %s1952 = scalar_lea.vmem [#allocation2], %s1951
    %v1953 = vld [vmem:[%s1952] sm:$0xff]
    %v1954 = vld [vmem:[%s1952 + $0x8] sm:$0xff]
    %v1955 = vld [vmem:[%s1952 + $0x10] sm:$0xff]
    %v1956 = vld [vmem:[%s1952 + $0x18] sm:$0xff]
    %v1957 = vld [vmem:[#allocation4] sm:$0xff]
    %v1958 = vld [vmem:[#allocation11] sm:$0xff]
    %v1959 = vld [vmem:[#allocation11 + $0x8] sm:$0xff]
    %v1960 = vld [vmem:[#allocation11 + $0x10] sm:$0xff]
    %v1961 = vld [vmem:[#allocation11 + $0x18] sm:$0xff]
    %v1962 = vld [vmem:[#allocation11 + $0x20] sm:$0xff]
    %v1963 = vld [vmem:[#allocation11 + $0x28] sm:$0xff]
    %v1964 = vld [vmem:[#allocation11 + $0x30] sm:$0xff]
    %v1965 = vld [vmem:[#allocation11 + $0x38] sm:$0xff]
    %v1966 = vld [vmem:[#allocation11 + $0x40] sm:$0xff]
    %v1967 = vld [vmem:[#allocation11 + $0x48] sm:$0xff]
    %v1968 = vld [vmem:[#allocation11 + $0x50] sm:$0xff]
    %v1969 = vld [vmem:[#allocation11 + $0x58] sm:$0xff]
    %v1970 = vld [vmem:[#allocation11 + $0x60] sm:$0xff]
    %v1971 = vld [vmem:[#allocation11 + $0x68] sm:$0xff]
    %v1972 = vld [vmem:[#allocation11 + $0x70] sm:$0xff]
    %v1973 = vld [vmem:[#allocation11 + $0x78] sm:$0xff]
    %v1974 = vld [vmem:[#allocation11 + $0x80] sm:$0xff]
    %v1975 = vld [vmem:[#allocation11 + $0x88] sm:$0xff]
    %v1976 = vld [vmem:[#allocation11 + $0x90] sm:$0xff]
    %v1977 = vld [vmem:[#allocation11 + $0x98] sm:$0xff]
    %v1978 = vld [vmem:[#allocation11 + $0xa0] sm:$0xff]
    %v1979 = vld [vmem:[#allocation11 + $0xa8] sm:$0xff]
    %v1980 = vld [vmem:[#allocation11 + $0xb0] sm:$0xff]
    %v1981 = vld [vmem:[#allocation11 + $0xb8] sm:$0xff]
    %v1982 = vld [vmem:[#allocation11 + $0xc0] sm:$0xff]
    %v1983 = vld [vmem:[#allocation11 + $0xc8] sm:$0xff]
    %v1984 = vld [vmem:[#allocation11 + $0xd0] sm:$0xff]
    %v1985 = vld [vmem:[#allocation11 + $0xd8] sm:$0xff]
    %v1986 = vld [vmem:[#allocation11 + $0xe0] sm:$0xff]
    %v1987 = vld [vmem:[#allocation11 + $0xe8] sm:$0xff]
    %v1988 = vld [vmem:[#allocation11 + $0xf0] sm:$0xff]
    %v1989 = vld [vmem:[#allocation11 + $0xf8] sm:$0xff]
    %v1990 = vld [vmem:[#allocation11 + $0x100] sm:$0xff]
    %v1991 = vld [vmem:[#allocation11 + $0x108] sm:$0xff]
    %v1992 = vld [vmem:[#allocation11 + $0x110] sm:$0xff]
    %v1993 = vld [vmem:[#allocation11 + $0x118] sm:$0xff]
    %v1994 = vld [vmem:[#allocation11 + $0x120] sm:$0xff]
    %v1995 = vld [vmem:[#allocation11 + $0x128] sm:$0xff]
    %v1996 = vld [vmem:[#allocation11 + $0x130] sm:$0xff]
    %v1997 = vld [vmem:[#allocation11 + $0x138] sm:$0xff]
    %v1998 = vld [vmem:[#allocation11 + $0x140] sm:$0xff]
    %v1999 = vld [vmem:[#allocation11 + $0x148] sm:$0xff]
    %v2000 = vld [vmem:[#allocation11 + $0x150] sm:$0xff]
    %v2001 = vld [vmem:[#allocation11 + $0x158] sm:$0xff]
    %v2002 = vld [vmem:[#allocation11 + $0x160] sm:$0xff]
    %v2003 = vld [vmem:[#allocation11 + $0x168] sm:$0xff]
    %v2004 = vld [vmem:[#allocation11 + $0x170] sm:$0xff]
    %v2005 = vld [vmem:[#allocation11 + $0x178] sm:$0xff]
    %v2006 = vld [vmem:[#allocation11 + $0x180] sm:$0xff]
    %v2007 = vld [vmem:[#allocation11 + $0x188] sm:$0xff]
    %v2008 = vld [vmem:[#allocation11 + $0x190] sm:$0xff]
    %v2009 = vld [vmem:[#allocation11 + $0x198] sm:$0xff]
    %v2010 = vld [vmem:[#allocation11 + $0x1a0] sm:$0xff]
    %v2011 = vld [vmem:[#allocation11 + $0x1a8] sm:$0xff]
    %v2012 = vld [vmem:[#allocation11 + $0x1b0] sm:$0xff]
    %v2013 = vld [vmem:[#allocation11 + $0x1b8] sm:$0xff]
    %v2014 = vld [vmem:[#allocation11 + $0x1c0] sm:$0xff]
    %v2015 = vld [vmem:[#allocation11 + $0x1c8] sm:$0xff]
    %v2016 = vld [vmem:[#allocation11 + $0x1d0] sm:$0xff]
    %v2017 = vld [vmem:[#allocation11 + $0x1d8] sm:$0xff]
    %v2018 = vld [vmem:[#allocation11 + $0x1e0] sm:$0xff]
    %v2019 = vld [vmem:[#allocation11 + $0x1e8] sm:$0xff]
    %v2020 = vld [vmem:[#allocation11 + $0x1f0] sm:$0xff]
    %v2021 = vld [vmem:[#allocation11 + $0x1f8] sm:$0xff]
    %2022 = vmatprep.subr.mxu0 %v2019
    %2023 = vmatpush1.msra.mxu0 %v2018
    %2024 = vmatprep.subr.mxu0 %v2015
    %2025 = vmatpush1.msra.mxu0 %v2014
    %2026 = vmatprep.subr.mxu0 %v2011
    %2027 = vmatpush1.msra.mxu0 %v2010
    %2028 = vmatprep.subr.mxu0 %v2007
    %2029 = vmatpush1.msra.mxu0 %v2006
    %2030 = vmatprep.subr.mxu0 %v2003
    %2031 = vmatpush1.msra.mxu0 %v2002
    %2032 = vmatprep.subr.mxu0 %v1999
    %2033 = vmatpush1.msra.mxu0 %v1998
    %2034 = vmatprep.subr.mxu0 %v1995
    %2035 = vmatpush1.msra.mxu0 %v1994
    %2036 = vmatprep.subr.mxu0 %v1991
    %2037 = vmatpush1.msra.mxu0 %v1990
    %2038 = vmatprep.subr.mxu0 %v1987
    %2039 = vmatpush1.msra.mxu0 %v1986
    %2040 = vmatprep.subr.mxu0 %v1983
    %2041 = vmatpush1.msra.mxu0 %v1982
    %2042 = vmatprep.subr.mxu0 %v1979
    %2043 = vmatpush1.msra.mxu0 %v1978
    %2044 = vmatprep.subr.mxu0 %v1975
    %2045 = vmatpush1.msra.mxu0 %v1974
    %2046 = vmatprep.subr.mxu0 %v1971
    %2047 = vmatpush1.msra.mxu0 %v1970
    %2048 = vmatprep.subr.mxu0 %v1967
    %2049 = vmatpush1.msra.mxu0 %v1966
    %2050 = vmatprep.subr.mxu0 %v1963
    %2051 = vmatpush1.msra.mxu0 %v1962
    %2052 = vmatprep.subr.mxu0 %v1959
    %2053 = vmatpush1.msra.mxu0 %v1958
    %2054 = vmatprep.subr.mxu0 0.0
    %2055 = vmatpush2.msra.mxu0 0.0
    %2056 = vmatprep.subr.mxu0 0.0
    %2057 = vmatpush2.msra.mxu0 0.0
    %2058 = vmatprep.subr.mxu0 0.0
    %2059 = vmatpush2.msra.mxu0 0.0
    %2060 = vmatprep.subr.mxu0 0.0
    %2061 = vmatpush2.msra.mxu0 0.0
    %2062 = vmatprep.subr.mxu0 0.0
    %2063 = vmatpush2.msra.mxu0 0.0
    %2064 = vmatprep.subr.mxu0 0.0
    %2065 = vmatpush2.msra.mxu0 0.0
    %2066 = vmatprep.subr.mxu0 0.0
    %2067 = vmatpush2.msra.mxu0 0.0
    %2068 = vmatprep.subr.mxu0 0.0
    %2069 = vmatpush2.msra.mxu0 0.0
    %2070 = vmatprep.subr.mxu0 0.0
    %2071 = vmatpush2.msra.mxu0 0.0
    %2072 = vmatprep.subr.mxu0 0.0
    %2073 = vmatpush2.msra.mxu0 0.0
    %2074 = vmatprep.subr.mxu0 0.0
    %2075 = vmatpush2.msra.mxu0 0.0
    %2076 = vmatprep.subr.mxu0 0.0
    %2077 = vmatpush2.msra.mxu0 0.0
    %2078 = vmatprep.subr.mxu0 0.0
    %2079 = vmatpush2.msra.mxu0 0.0
    %2080 = vmatprep.subr.mxu0 0.0
    %2081 = vmatpush2.msra.mxu0 0.0
    %2082 = vmatprep.subr.mxu0 0.0
    %2083 = vmatpush2.msra.mxu0 0.0
    %2084 = vmatprep.subr.mxu0 0.0
    %2085 = vmatpush2.msra.mxu0 0.0
    %2086 = vmatprep.mubr.f32.mxu0 0.0
    %2087 = vmatmul.mubr.f32.gmra.mxu0 %v1957
    %v2088 = vpop.f32.mrf.mxu0
    %v2089 = vadd.f32 0.0, %v2088
    %v2090 = vpop.f32.mrf.mxu0
    %v2091 = vadd.f32 0.0, %v2090
    %2092 = vdwg.mxu0
    %2093 = vmatprep.subr.mxu0 %v2021
    %2094 = vmatpush1.msra.mxu0 %v2020
    %2095 = vmatprep.subr.mxu0 %v2017
    %2096 = vmatpush1.msra.mxu0 %v2016
    %2097 = vmatprep.subr.mxu0 %v2013
    %2098 = vmatpush1.msra.mxu0 %v2012
    %2099 = vmatprep.subr.mxu0 %v2009
    %2100 = vmatpush1.msra.mxu0 %v2008
    %2101 = vmatprep.subr.mxu0 %v2005
    %2102 = vmatpush1.msra.mxu0 %v2004
    %2103 = vmatprep.subr.mxu0 %v2001
    %2104 = vmatpush1.msra.mxu0 %v2000
    %2105 = vmatprep.subr.mxu0 %v1997
    %2106 = vmatpush1.msra.mxu0 %v1996
    %2107 = vmatprep.subr.mxu0 %v1993
    %2108 = vmatpush1.msra.mxu0 %v1992
    %2109 = vmatprep.subr.mxu0 %v1989
    %2110 = vmatpush1.msra.mxu0 %v1988
    %2111 = vmatprep.subr.mxu0 %v1985
    %2112 = vmatpush1.msra.mxu0 %v1984
    %2113 = vmatprep.subr.mxu0 %v1981
    %2114 = vmatpush1.msra.mxu0 %v1980
    %2115 = vmatprep.subr.mxu0 %v1977
    %2116 = vmatpush1.msra.mxu0 %v1976
    %2117 = vmatprep.subr.mxu0 %v1973
    %2118 = vmatpush1.msra.mxu0 %v1972
    %2119 = vmatprep.subr.mxu0 %v1969
    %2120 = vmatpush1.msra.mxu0 %v1968
    %2121 = vmatprep.subr.mxu0 %v1965
    %2122 = vmatpush1.msra.mxu0 %v1964
    %2123 = vmatprep.subr.mxu0 %v1961
    %2124 = vmatpush1.msra.mxu0 %v1960
    %2125 = vmatprep.subr.mxu0 0.0
    %2126 = vmatpush2.msra.mxu0 0.0
    %2127 = vmatprep.subr.mxu0 0.0
    %2128 = vmatpush2.msra.mxu0 0.0
    %2129 = vmatprep.subr.mxu0 0.0
    %2130 = vmatpush2.msra.mxu0 0.0
    %2131 = vmatprep.subr.mxu0 0.0
    %2132 = vmatpush2.msra.mxu0 0.0
    %2133 = vmatprep.subr.mxu0 0.0
    %2134 = vmatpush2.msra.mxu0 0.0
    %2135 = vmatprep.subr.mxu0 0.0
    %2136 = vmatpush2.msra.mxu0 0.0
    %2137 = vmatprep.subr.mxu0 0.0
    %2138 = vmatpush2.msra.mxu0 0.0
    %2139 = vmatprep.subr.mxu0 0.0
    %2140 = vmatpush2.msra.mxu0 0.0
    %2141 = vmatprep.subr.mxu0 0.0
    %2142 = vmatpush2.msra.mxu0 0.0
    %2143 = vmatprep.subr.mxu0 0.0
    %2144 = vmatpush2.msra.mxu0 0.0
    %2145 = vmatprep.subr.mxu0 0.0
    %2146 = vmatpush2.msra.mxu0 0.0
    %2147 = vmatprep.subr.mxu0 0.0
    %2148 = vmatpush2.msra.mxu0 0.0
    %2149 = vmatprep.subr.mxu0 0.0
    %2150 = vmatpush2.msra.mxu0 0.0
    %2151 = vmatprep.subr.mxu0 0.0
    %2152 = vmatpush2.msra.mxu0 0.0
    %2153 = vmatprep.subr.mxu0 0.0
    %2154 = vmatpush2.msra.mxu0 0.0
    %2155 = vmatprep.subr.mxu0 0.0
    %2156 = vmatpush2.msra.mxu0 0.0
    %2157 = vmatprep.mubr.f32.mxu0 0.0
    %2158 = vmatmul.mubr.f32.gmra.mxu0 %v1957
    %v2159 = vpop.f32.mrf.mxu0
    %v2160 = vadd.f32 0.0, %v2159
    %v2161 = vpop.f32.mrf.mxu0
    %v2162 = vadd.f32 0.0, %v2161
    %2163 = vdwg.mxu0
    %v2164 = vadd.f32 %v1953, %v2089
    %v2165 = vadd.f32 %v1954, %v2091
    %v2166 = vadd.f32 %v1955, %v2160
    %v2167 = vadd.f32 %v1956, %v2162
    %v2168 = vxor.u32 %v2164, 2147483648
    %v2169 = vxor.u32 %v2165, 2147483648
    %v2170 = vxor.u32 %v2166, 2147483648
    %v2171 = vmul.f32 %v2168, 1.442695
    %v2172 = vpow.pop %v2171
    %v2173 = vmul.f32 %v2169, 1.442695
    %v2174 = vpow.pop %v2173
    %v2175 = vmul.f32 %v2170, 1.442695
    %v2176 = vpow.pop %v2175
    %v2177 = vadd.f32 %v2172, 1.0
    %v2178 = vadd.f32 %v2174, 1.0
    %v2179 = vadd.f32 %v2176, 1.0
    %v2180 = vrcp.pop %v2177
    %v2181 = vmul.f32 1.0, %v2180
    %v2182 = vrcp.pop %v2178
    %v2183 = vmul.f32 1.0, %v2182
    %v2184 = vrcp.pop %v2179
    %v2185 = vmul.f32 1.0, %v2184
    %v2186 = vtanh.pop %v2167
    %v2187 = vld [vmem:[#allocation5] sm:$0xff]
    %v2188 = vmul.f32 %v2183, %v2187
    %v2189 = vmul.f32 %v2181, %v2186
    %v2190 = vadd.f32 %v2188, %v2189
    %v2191 = vtanh.pop %v2190
    %v2192 = vmul.f32 %v2185, %v2191
    %2193 = vst [vmem:[#allocation5] sm:$0xff] %v2190
    %2194 = vst [vmem:[#allocation4] sm:$0xff] %v2192
    %s2195 = scalar_lea.vmem [#allocation3], 48
    %2196 = vst [vmem:[%s2195] sm:$0xff] %v2192
    %s2197 = smul.u32 7, 4
    %s2198 = smul.addr %s2197, 8
    %s2199 = scalar_lea.vmem [#allocation2], %s2198
    %v2200 = vld [vmem:[%s2199] sm:$0xff]
    %v2201 = vld [vmem:[%s2199 + $0x8] sm:$0xff]
    %v2202 = vld [vmem:[%s2199 + $0x10] sm:$0xff]
    %v2203 = vld [vmem:[%s2199 + $0x18] sm:$0xff]
    %v2204 = vld [vmem:[#allocation4] sm:$0xff]
    %v2205 = vld [vmem:[#allocation11] sm:$0xff]
    %v2206 = vld [vmem:[#allocation11 + $0x8] sm:$0xff]
    %v2207 = vld [vmem:[#allocation11 + $0x10] sm:$0xff]
    %v2208 = vld [vmem:[#allocation11 + $0x18] sm:$0xff]
    %v2209 = vld [vmem:[#allocation11 + $0x20] sm:$0xff]
    %v2210 = vld [vmem:[#allocation11 + $0x28] sm:$0xff]
    %v2211 = vld [vmem:[#allocation11 + $0x30] sm:$0xff]
    %v2212 = vld [vmem:[#allocation11 + $0x38] sm:$0xff]
    %v2213 = vld [vmem:[#allocation11 + $0x40] sm:$0xff]
    %v2214 = vld [vmem:[#allocation11 + $0x48] sm:$0xff]
    %v2215 = vld [vmem:[#allocation11 + $0x50] sm:$0xff]
    %v2216 = vld [vmem:[#allocation11 + $0x58] sm:$0xff]
    %v2217 = vld [vmem:[#allocation11 + $0x60] sm:$0xff]
    %v2218 = vld [vmem:[#allocation11 + $0x68] sm:$0xff]
    %v2219 = vld [vmem:[#allocation11 + $0x70] sm:$0xff]
    %v2220 = vld [vmem:[#allocation11 + $0x78] sm:$0xff]
    %v2221 = vld [vmem:[#allocation11 + $0x80] sm:$0xff]
    %v2222 = vld [vmem:[#allocation11 + $0x88] sm:$0xff]
    %v2223 = vld [vmem:[#allocation11 + $0x90] sm:$0xff]
    %v2224 = vld [vmem:[#allocation11 + $0x98] sm:$0xff]
    %v2225 = vld [vmem:[#allocation11 + $0xa0] sm:$0xff]
    %v2226 = vld [vmem:[#allocation11 + $0xa8] sm:$0xff]
    %v2227 = vld [vmem:[#allocation11 + $0xb0] sm:$0xff]
    %v2228 = vld [vmem:[#allocation11 + $0xb8] sm:$0xff]
    %v2229 = vld [vmem:[#allocation11 + $0xc0] sm:$0xff]
    %v2230 = vld [vmem:[#allocation11 + $0xc8] sm:$0xff]
    %v2231 = vld [vmem:[#allocation11 + $0xd0] sm:$0xff]
    %v2232 = vld [vmem:[#allocation11 + $0xd8] sm:$0xff]
    %v2233 = vld [vmem:[#allocation11 + $0xe0] sm:$0xff]
    %v2234 = vld [vmem:[#allocation11 + $0xe8] sm:$0xff]
    %v2235 = vld [vmem:[#allocation11 + $0xf0] sm:$0xff]
    %v2236 = vld [vmem:[#allocation11 + $0xf8] sm:$0xff]
    %v2237 = vld [vmem:[#allocation11 + $0x100] sm:$0xff]
    %v2238 = vld [vmem:[#allocation11 + $0x108] sm:$0xff]
    %v2239 = vld [vmem:[#allocation11 + $0x110] sm:$0xff]
    %v2240 = vld [vmem:[#allocation11 + $0x118] sm:$0xff]
    %v2241 = vld [vmem:[#allocation11 + $0x120] sm:$0xff]
    %v2242 = vld [vmem:[#allocation11 + $0x128] sm:$0xff]
    %v2243 = vld [vmem:[#allocation11 + $0x130] sm:$0xff]
    %v2244 = vld [vmem:[#allocation11 + $0x138] sm:$0xff]
    %v2245 = vld [vmem:[#allocation11 + $0x140] sm:$0xff]
    %v2246 = vld [vmem:[#allocation11 + $0x148] sm:$0xff]
    %v2247 = vld [vmem:[#allocation11 + $0x150] sm:$0xff]
    %v2248 = vld [vmem:[#allocation11 + $0x158] sm:$0xff]
    %v2249 = vld [vmem:[#allocation11 + $0x160] sm:$0xff]
    %v2250 = vld [vmem:[#allocation11 + $0x168] sm:$0xff]
    %v2251 = vld [vmem:[#allocation11 + $0x170] sm:$0xff]
    %v2252 = vld [vmem:[#allocation11 + $0x178] sm:$0xff]
    %v2253 = vld [vmem:[#allocation11 + $0x180] sm:$0xff]
    %v2254 = vld [vmem:[#allocation11 + $0x188] sm:$0xff]
    %v2255 = vld [vmem:[#allocation11 + $0x190] sm:$0xff]
    %v2256 = vld [vmem:[#allocation11 + $0x198] sm:$0xff]
    %v2257 = vld [vmem:[#allocation11 + $0x1a0] sm:$0xff]
    %v2258 = vld [vmem:[#allocation11 + $0x1a8] sm:$0xff]
    %v2259 = vld [vmem:[#allocation11 + $0x1b0] sm:$0xff]
    %v2260 = vld [vmem:[#allocation11 + $0x1b8] sm:$0xff]
    %v2261 = vld [vmem:[#allocation11 + $0x1c0] sm:$0xff]
    %v2262 = vld [vmem:[#allocation11 + $0x1c8] sm:$0xff]
    %v2263 = vld [vmem:[#allocation11 + $0x1d0] sm:$0xff]
    %v2264 = vld [vmem:[#allocation11 + $0x1d8] sm:$0xff]
    %v2265 = vld [vmem:[#allocation11 + $0x1e0] sm:$0xff]
    %v2266 = vld [vmem:[#allocation11 + $0x1e8] sm:$0xff]
    %v2267 = vld [vmem:[#allocation11 + $0x1f0] sm:$0xff]
    %v2268 = vld [vmem:[#allocation11 + $0x1f8] sm:$0xff]
    %2269 = vmatprep.subr.mxu0 %v2266
    %2270 = vmatpush1.msra.mxu0 %v2265
    %2271 = vmatprep.subr.mxu0 %v2262
    %2272 = vmatpush1.msra.mxu0 %v2261
    %2273 = vmatprep.subr.mxu0 %v2258
    %2274 = vmatpush1.msra.mxu0 %v2257
    %2275 = vmatprep.subr.mxu0 %v2254
    %2276 = vmatpush1.msra.mxu0 %v2253
    %2277 = vmatprep.subr.mxu0 %v2250
    %2278 = vmatpush1.msra.mxu0 %v2249
    %2279 = vmatprep.subr.mxu0 %v2246
    %2280 = vmatpush1.msra.mxu0 %v2245
    %2281 = vmatprep.subr.mxu0 %v2242
    %2282 = vmatpush1.msra.mxu0 %v2241
    %2283 = vmatprep.subr.mxu0 %v2238
    %2284 = vmatpush1.msra.mxu0 %v2237
    %2285 = vmatprep.subr.mxu0 %v2234
    %2286 = vmatpush1.msra.mxu0 %v2233
    %2287 = vmatprep.subr.mxu0 %v2230
    %2288 = vmatpush1.msra.mxu0 %v2229
    %2289 = vmatprep.subr.mxu0 %v2226
    %2290 = vmatpush1.msra.mxu0 %v2225
    %2291 = vmatprep.subr.mxu0 %v2222
    %2292 = vmatpush1.msra.mxu0 %v2221
    %2293 = vmatprep.subr.mxu0 %v2218
    %2294 = vmatpush1.msra.mxu0 %v2217
    %2295 = vmatprep.subr.mxu0 %v2214
    %2296 = vmatpush1.msra.mxu0 %v2213
    %2297 = vmatprep.subr.mxu0 %v2210
    %2298 = vmatpush1.msra.mxu0 %v2209
    %2299 = vmatprep.subr.mxu0 %v2206
    %2300 = vmatpush1.msra.mxu0 %v2205
    %2301 = vmatprep.subr.mxu0 0.0
    %2302 = vmatpush2.msra.mxu0 0.0
    %2303 = vmatprep.subr.mxu0 0.0
    %2304 = vmatpush2.msra.mxu0 0.0
    %2305 = vmatprep.subr.mxu0 0.0
    %2306 = vmatpush2.msra.mxu0 0.0
    %2307 = vmatprep.subr.mxu0 0.0
    %2308 = vmatpush2.msra.mxu0 0.0
    %2309 = vmatprep.subr.mxu0 0.0
    %2310 = vmatpush2.msra.mxu0 0.0
    %2311 = vmatprep.subr.mxu0 0.0
    %2312 = vmatpush2.msra.mxu0 0.0
    %2313 = vmatprep.subr.mxu0 0.0
    %2314 = vmatpush2.msra.mxu0 0.0
    %2315 = vmatprep.subr.mxu0 0.0
    %2316 = vmatpush2.msra.mxu0 0.0
    %2317 = vmatprep.subr.mxu0 0.0
    %2318 = vmatpush2.msra.mxu0 0.0
    %2319 = vmatprep.subr.mxu0 0.0
    %2320 = vmatpush2.msra.mxu0 0.0
    %2321 = vmatprep.subr.mxu0 0.0
    %2322 = vmatpush2.msra.mxu0 0.0
    %2323 = vmatprep.subr.mxu0 0.0
    %2324 = vmatpush2.msra.mxu0 0.0
    %2325 = vmatprep.subr.mxu0 0.0
    %2326 = vmatpush2.msra.mxu0 0.0
    %2327 = vmatprep.subr.mxu0 0.0
    %2328 = vmatpush2.msra.mxu0 0.0
    %2329 = vmatprep.subr.mxu0 0.0
    %2330 = vmatpush2.msra.mxu0 0.0
    %2331 = vmatprep.subr.mxu0 0.0
    %2332 = vmatpush2.msra.mxu0 0.0
    %2333 = vmatprep.mubr.f32.mxu0 0.0
    %2334 = vmatmul.mubr.f32.gmra.mxu0 %v2204
    %v2335 = vpop.f32.mrf.mxu0
    %v2336 = vadd.f32 0.0, %v2335
    %v2337 = vpop.f32.mrf.mxu0
    %v2338 = vadd.f32 0.0, %v2337
    %2339 = vdwg.mxu0
    %2340 = vmatprep.subr.mxu0 %v2268
    %2341 = vmatpush1.msra.mxu0 %v2267
    %2342 = vmatprep.subr.mxu0 %v2264
    %2343 = vmatpush1.msra.mxu0 %v2263
    %2344 = vmatprep.subr.mxu0 %v2260
    %2345 = vmatpush1.msra.mxu0 %v2259
    %2346 = vmatprep.subr.mxu0 %v2256
    %2347 = vmatpush1.msra.mxu0 %v2255
    %2348 = vmatprep.subr.mxu0 %v2252
    %2349 = vmatpush1.msra.mxu0 %v2251
    %2350 = vmatprep.subr.mxu0 %v2248
    %2351 = vmatpush1.msra.mxu0 %v2247
    %2352 = vmatprep.subr.mxu0 %v2244
    %2353 = vmatpush1.msra.mxu0 %v2243
    %2354 = vmatprep.subr.mxu0 %v2240
    %2355 = vmatpush1.msra.mxu0 %v2239
    %2356 = vmatprep.subr.mxu0 %v2236
    %2357 = vmatpush1.msra.mxu0 %v2235
    %2358 = vmatprep.subr.mxu0 %v2232
    %2359 = vmatpush1.msra.mxu0 %v2231
    %2360 = vmatprep.subr.mxu0 %v2228
    %2361 = vmatpush1.msra.mxu0 %v2227
    %2362 = vmatprep.subr.mxu0 %v2224
    %2363 = vmatpush1.msra.mxu0 %v2223
    %2364 = vmatprep.subr.mxu0 %v2220
    %2365 = vmatpush1.msra.mxu0 %v2219
    %2366 = vmatprep.subr.mxu0 %v2216
    %2367 = vmatpush1.msra.mxu0 %v2215
    %2368 = vmatprep.subr.mxu0 %v2212
    %2369 = vmatpush1.msra.mxu0 %v2211
    %2370 = vmatprep.subr.mxu0 %v2208
    %2371 = vmatpush1.msra.mxu0 %v2207
    %2372 = vmatprep.subr.mxu0 0.0
    %2373 = vmatpush2.msra.mxu0 0.0
    %2374 = vmatprep.subr.mxu0 0.0
    %2375 = vmatpush2.msra.mxu0 0.0
    %2376 = vmatprep.subr.mxu0 0.0
    %2377 = vmatpush2.msra.mxu0 0.0
    %2378 = vmatprep.subr.mxu0 0.0
    %2379 = vmatpush2.msra.mxu0 0.0
    %2380 = vmatprep.subr.mxu0 0.0
    %2381 = vmatpush2.msra.mxu0 0.0
    %2382 = vmatprep.subr.mxu0 0.0
    %2383 = vmatpush2.msra.mxu0 0.0
    %2384 = vmatprep.subr.mxu0 0.0
    %2385 = vmatpush2.msra.mxu0 0.0
    %2386 = vmatprep.subr.mxu0 0.0
    %2387 = vmatpush2.msra.mxu0 0.0
    %2388 = vmatprep.subr.mxu0 0.0
    %2389 = vmatpush2.msra.mxu0 0.0
    %2390 = vmatprep.subr.mxu0 0.0
    %2391 = vmatpush2.msra.mxu0 0.0
    %2392 = vmatprep.subr.mxu0 0.0
    %2393 = vmatpush2.msra.mxu0 0.0
    %2394 = vmatprep.subr.mxu0 0.0
    %2395 = vmatpush2.msra.mxu0 0.0
    %2396 = vmatprep.subr.mxu0 0.0
    %2397 = vmatpush2.msra.mxu0 0.0
    %2398 = vmatprep.subr.mxu0 0.0
    %2399 = vmatpush2.msra.mxu0 0.0
    %2400 = vmatprep.subr.mxu0 0.0
    %2401 = vmatpush2.msra.mxu0 0.0
    %2402 = vmatprep.subr.mxu0 0.0
    %2403 = vmatpush2.msra.mxu0 0.0
    %2404 = vmatprep.mubr.f32.mxu0 0.0
    %2405 = vmatmul.mubr.f32.gmra.mxu0 %v2204
    %v2406 = vpop.f32.mrf.mxu0
    %v2407 = vadd.f32 0.0, %v2406
    %v2408 = vpop.f32.mrf.mxu0
    %v2409 = vadd.f32 0.0, %v2408
    %2410 = vdwg.mxu0
    %v2411 = vadd.f32 %v2200, %v2336
    %v2412 = vadd.f32 %v2201, %v2338
    %v2413 = vadd.f32 %v2202, %v2407
    %v2414 = vadd.f32 %v2203, %v2409
    %v2415 = vxor.u32 %v2411, 2147483648
    %v2416 = vxor.u32 %v2412, 2147483648
    %v2417 = vxor.u32 %v2413, 2147483648
    %v2418 = vmul.f32 %v2415, 1.442695
    %v2419 = vpow.pop %v2418
    %v2420 = vmul.f32 %v2416, 1.442695
    %v2421 = vpow.pop %v2420
    %v2422 = vmul.f32 %v2417, 1.442695
    %v2423 = vpow.pop %v2422
    %v2424 = vadd.f32 %v2419, 1.0
    %v2425 = vadd.f32 %v2421, 1.0
    %v2426 = vadd.f32 %v2423, 1.0
    %v2427 = vrcp.pop %v2424
    %v2428 = vmul.f32 1.0, %v2427
    %v2429 = vrcp.pop %v2425
    %v2430 = vmul.f32 1.0, %v2429
    %v2431 = vrcp.pop %v2426
    %v2432 = vmul.f32 1.0, %v2431
    %v2433 = vtanh.pop %v2414
    %v2434 = vld [vmem:[#allocation5] sm:$0xff]
    %v2435 = vmul.f32 %v2430, %v2434
    %v2436 = vmul.f32 %v2428, %v2433
    %v2437 = vadd.f32 %v2435, %v2436
    %v2438 = vtanh.pop %v2437
    %v2439 = vmul.f32 %v2432, %v2438
    %2440 = vst [vmem:[#allocation5] sm:$0xff] %v2437
    %2441 = vst [vmem:[#allocation4] sm:$0xff] %v2439
    %s2442 = scalar_lea.vmem [#allocation3], 56
    %2443 = vst [vmem:[%s2442] sm:$0xff] %v2439
    %2444 = vst [vmem:[#allocation4] sm:$0xff] 0.0
    %2445 = vst [vmem:[#allocation5] sm:$0xff] 0.0
    %v2446 = vld [vmem:[#allocation3] sm:$0xff]
    %v2447 = vld [vmem:[#allocation3 + $0x8] sm:$0xff]
    %v2448 = vld [vmem:[#allocation3 + $0x10] sm:$0xff]
    %v2449 = vld [vmem:[#allocation3 + $0x18] sm:$0xff]
    %v2450 = vld [vmem:[#allocation3 + $0x20] sm:$0xff]
    %v2451 = vld [vmem:[#allocation3 + $0x28] sm:$0xff]
    %v2452 = vld [vmem:[#allocation3 + $0x30] sm:$0xff]
    %v2453 = vld [vmem:[#allocation3 + $0x38] sm:$0xff]
    %v2454 = vld [vmem:[#allocation12] sm:$0xff]
    %v2455 = vld [vmem:[#allocation12 + $0x8] sm:$0xff]
    %v2456 = vld [vmem:[#allocation12 + $0x10] sm:$0xff]
    %v2457 = vld [vmem:[#allocation12 + $0x18] sm:$0xff]
    %v2458 = vld [vmem:[#allocation12 + $0x20] sm:$0xff]
    %v2459 = vld [vmem:[#allocation12 + $0x28] sm:$0xff]
    %v2460 = vld [vmem:[#allocation12 + $0x30] sm:$0xff]
    %v2461 = vld [vmem:[#allocation12 + $0x38] sm:$0xff]
    %v2462 = vld [vmem:[#allocation12 + $0x40] sm:$0xff]
    %v2463 = vld [vmem:[#allocation12 + $0x48] sm:$0xff]
    %v2464 = vld [vmem:[#allocation12 + $0x50] sm:$0xff]
    %v2465 = vld [vmem:[#allocation12 + $0x58] sm:$0xff]
    %v2466 = vld [vmem:[#allocation12 + $0x60] sm:$0xff]
    %v2467 = vld [vmem:[#allocation12 + $0x68] sm:$0xff]
    %v2468 = vld [vmem:[#allocation12 + $0x70] sm:$0xff]
    %v2469 = vld [vmem:[#allocation12 + $0x78] sm:$0xff]
    %v2470 = vld [vmem:[#allocation12 + $0x80] sm:$0xff]
    %v2471 = vld [vmem:[#allocation12 + $0x88] sm:$0xff]
    %v2472 = vld [vmem:[#allocation12 + $0x90] sm:$0xff]
    %v2473 = vld [vmem:[#allocation12 + $0x98] sm:$0xff]
    %v2474 = vld [vmem:[#allocation12 + $0xa0] sm:$0xff]
    %v2475 = vld [vmem:[#allocation12 + $0xa8] sm:$0xff]
    %v2476 = vld [vmem:[#allocation12 + $0xb0] sm:$0xff]
    %v2477 = vld [vmem:[#allocation12 + $0xb8] sm:$0xff]
    %v2478 = vld [vmem:[#allocation12 + $0xc0] sm:$0xff]
    %v2479 = vld [vmem:[#allocation12 + $0xc8] sm:$0xff]
    %v2480 = vld [vmem:[#allocation12 + $0xd0] sm:$0xff]
    %v2481 = vld [vmem:[#allocation12 + $0xd8] sm:$0xff]
    %v2482 = vld [vmem:[#allocation12 + $0xe0] sm:$0xff]
    %v2483 = vld [vmem:[#allocation12 + $0xe8] sm:$0xff]
    %v2484 = vld [vmem:[#allocation12 + $0xf0] sm:$0xff]
    %v2485 = vld [vmem:[#allocation12 + $0xf8] sm:$0xff]
    %v2486 = vld [vmem:[#allocation12 + $0x100] sm:$0xff]
    %v2487 = vld [vmem:[#allocation12 + $0x108] sm:$0xff]
    %v2488 = vld [vmem:[#allocation12 + $0x110] sm:$0xff]
    %v2489 = vld [vmem:[#allocation12 + $0x118] sm:$0xff]
    %v2490 = vld [vmem:[#allocation12 + $0x120] sm:$0xff]
    %v2491 = vld [vmem:[#allocation12 + $0x128] sm:$0xff]
    %v2492 = vld [vmem:[#allocation12 + $0x130] sm:$0xff]
    %v2493 = vld [vmem:[#allocation12 + $0x138] sm:$0xff]
    %v2494 = vld [vmem:[#allocation12 + $0x140] sm:$0xff]
    %v2495 = vld [vmem:[#allocation12 + $0x148] sm:$0xff]
    %v2496 = vld [vmem:[#allocation12 + $0x150] sm:$0xff]
    %v2497 = vld [vmem:[#allocation12 + $0x158] sm:$0xff]
    %v2498 = vld [vmem:[#allocation12 + $0x160] sm:$0xff]
    %v2499 = vld [vmem:[#allocation12 + $0x168] sm:$0xff]
    %v2500 = vld [vmem:[#allocation12 + $0x170] sm:$0xff]
    %v2501 = vld [vmem:[#allocation12 + $0x178] sm:$0xff]
    %v2502 = vld [vmem:[#allocation12 + $0x180] sm:$0xff]
    %v2503 = vld [vmem:[#allocation12 + $0x188] sm:$0xff]
    %v2504 = vld [vmem:[#allocation12 + $0x190] sm:$0xff]
    %v2505 = vld [vmem:[#allocation12 + $0x198] sm:$0xff]
    %v2506 = vld [vmem:[#allocation12 + $0x1a0] sm:$0xff]
    %v2507 = vld [vmem:[#allocation12 + $0x1a8] sm:$0xff]
    %v2508 = vld [vmem:[#allocation12 + $0x1b0] sm:$0xff]
    %v2509 = vld [vmem:[#allocation12 + $0x1b8] sm:$0xff]
    %v2510 = vld [vmem:[#allocation12 + $0x1c0] sm:$0xff]
    %v2511 = vld [vmem:[#allocation12 + $0x1c8] sm:$0xff]
    %v2512 = vld [vmem:[#allocation12 + $0x1d0] sm:$0xff]
    %v2513 = vld [vmem:[#allocation12 + $0x1d8] sm:$0xff]
    %v2514 = vld [vmem:[#allocation12 + $0x1e0] sm:$0xff]
    %v2515 = vld [vmem:[#allocation12 + $0x1e8] sm:$0xff]
    %v2516 = vld [vmem:[#allocation12 + $0x1f0] sm:$0xff]
    %v2517 = vld [vmem:[#allocation12 + $0x1f8] sm:$0xff]
    %v2518 = vld [vmem:[%s6] sm:$0xf]
    %v2520 = vlaneseq
    %v2521 = vshrl.u32 %v2520, 7
    %v2522 = vsub.s32 0, %v2521
    %v2523 = vrot.slane %v2518, %v2522
    %v2524 = vlaneseq
    %v2525 = vshrl.u32 %v2524, 7
    %v2526 = vsub.s32 1, %v2525
    %v2527 = vrot.slane %v2518, %v2526
    %v2528 = vlaneseq
    %v2529 = vshrl.u32 %v2528, 7
    %v2530 = vsub.s32 2, %v2529
    %v2531 = vrot.slane %v2518, %v2530
    %v2532 = vlaneseq
    %v2533 = vshrl.u32 %v2532, 7
    %v2534 = vsub.s32 3, %v2533
    %v2535 = vrot.slane %v2518, %v2534
    %2540 = vmatprep.subr.mxu0 %v2515
    %2541 = vmatpush1.msra.mxu0 %v2514
    %2542 = vmatprep.subr.mxu0 %v2511
    %2543 = vmatpush1.msra.mxu0 %v2510
    %2544 = vmatprep.subr.mxu0 %v2507
    %2545 = vmatpush1.msra.mxu0 %v2506
    %2546 = vmatprep.subr.mxu0 %v2503
    %2547 = vmatpush1.msra.mxu0 %v2502
    %2548 = vmatprep.subr.mxu0 %v2499
    %2549 = vmatpush1.msra.mxu0 %v2498
    %2550 = vmatprep.subr.mxu0 %v2495
    %2551 = vmatpush1.msra.mxu0 %v2494
    %2552 = vmatprep.subr.mxu0 %v2491
    %2553 = vmatpush1.msra.mxu0 %v2490
    %2554 = vmatprep.subr.mxu0 %v2487
    %2555 = vmatpush1.msra.mxu0 %v2486
    %2556 = vmatprep.subr.mxu0 %v2483
    %2557 = vmatpush1.msra.mxu0 %v2482
    %2558 = vmatprep.subr.mxu0 %v2479
    %2559 = vmatpush1.msra.mxu0 %v2478
    %2560 = vmatprep.subr.mxu0 %v2475
    %2561 = vmatpush1.msra.mxu0 %v2474
    %2562 = vmatprep.subr.mxu0 %v2471
    %2563 = vmatpush1.msra.mxu0 %v2470
    %2564 = vmatprep.subr.mxu0 %v2467
    %2565 = vmatpush1.msra.mxu0 %v2466
    %2566 = vmatprep.subr.mxu0 %v2463
    %2567 = vmatpush1.msra.mxu0 %v2462
    %2568 = vmatprep.subr.mxu0 %v2459
    %2569 = vmatpush1.msra.mxu0 %v2458
    %2570 = vmatprep.subr.mxu0 %v2455
    %2571 = vmatpush1.msra.mxu0 %v2454
    %2572 = vmatprep.subr.mxu0 0.0
    %2573 = vmatpush2.msra.mxu0 0.0
    %2574 = vmatprep.subr.mxu0 0.0
    %2575 = vmatpush2.msra.mxu0 0.0
    %2576 = vmatprep.subr.mxu0 0.0
    %2577 = vmatpush2.msra.mxu0 0.0
    %2578 = vmatprep.subr.mxu0 0.0
    %2579 = vmatpush2.msra.mxu0 0.0
    %2580 = vmatprep.subr.mxu0 0.0
    %2581 = vmatpush2.msra.mxu0 0.0
    %2582 = vmatprep.subr.mxu0 0.0
    %2583 = vmatpush2.msra.mxu0 0.0
    %2584 = vmatprep.subr.mxu0 0.0
    %2585 = vmatpush2.msra.mxu0 0.0
    %2586 = vmatprep.subr.mxu0 0.0
    %2587 = vmatpush2.msra.mxu0 0.0
    %2588 = vmatprep.subr.mxu0 0.0
    %2589 = vmatpush2.msra.mxu0 0.0
    %2590 = vmatprep.subr.mxu0 0.0
    %2591 = vmatpush2.msra.mxu0 0.0
    %2592 = vmatprep.subr.mxu0 0.0
    %2593 = vmatpush2.msra.mxu0 0.0
    %2594 = vmatprep.subr.mxu0 0.0
    %2595 = vmatpush2.msra.mxu0 0.0
    %2596 = vmatprep.subr.mxu0 0.0
    %2597 = vmatpush2.msra.mxu0 0.0
    %2598 = vmatprep.subr.mxu0 0.0
    %2599 = vmatpush2.msra.mxu0 0.0
    %2600 = vmatprep.subr.mxu0 0.0
    %2601 = vmatpush2.msra.mxu0 0.0
    %2602 = vmatprep.subr.mxu0 0.0
    %2603 = vmatpush2.msra.mxu0 0.0
    %2604 = vmatprep.mubr.f32.mxu0 0.0
    %2605 = vmatmul.mubr.f32.gmra.mxu0 %v2446
    %v2606 = vpop.f32.mrf.mxu0
    %v2607 = vadd.f32 %v2523, %v2606
    %v2608 = vpop.f32.mrf.mxu0
    %v2609 = vadd.f32 %v2527, %v2608
    %2610 = vmatprep.mubr.f32.mxu0 0.0
    %2611 = vmatmul.mubr.f32.gmra.mxu0 %v2447
    %v2612 = vpop.f32.mrf.mxu0
    %v2613 = vadd.f32 %v2523, %v2612
    %v2614 = vpop.f32.mrf.mxu0
    %v2615 = vadd.f32 %v2527, %v2614
    %2616 = vmatprep.mubr.f32.mxu0 0.0
    %2617 = vmatmul.mubr.f32.gmra.mxu0 %v2448
    %v2618 = vpop.f32.mrf.mxu0
    %v2619 = vadd.f32 %v2523, %v2618
    %v2620 = vpop.f32.mrf.mxu0
    %v2621 = vadd.f32 %v2527, %v2620
    %2622 = vmatprep.mubr.f32.mxu0 0.0
    %2623 = vmatmul.mubr.f32.gmra.mxu0 %v2449
    %v2624 = vpop.f32.mrf.mxu0
    %v2625 = vadd.f32 %v2523, %v2624
    %v2626 = vpop.f32.mrf.mxu0
    %v2627 = vadd.f32 %v2527, %v2626
    %2628 = vmatprep.mubr.f32.mxu0 0.0
    %2629 = vmatmul.mubr.f32.gmra.mxu0 %v2450
    %v2630 = vpop.f32.mrf.mxu0
    %v2631 = vadd.f32 %v2523, %v2630
    %v2632 = vpop.f32.mrf.mxu0
    %v2633 = vadd.f32 %v2527, %v2632
    %2634 = vmatprep.mubr.f32.mxu0 0.0
    %2635 = vmatmul.mubr.f32.gmra.mxu0 %v2451
    %v2636 = vpop.f32.mrf.mxu0
    %v2637 = vadd.f32 %v2523, %v2636
    %v2638 = vpop.f32.mrf.mxu0
    %v2639 = vadd.f32 %v2527, %v2638
    %2640 = vmatprep.mubr.f32.mxu0 0.0
    %2641 = vmatmul.mubr.f32.gmra.mxu0 %v2452
    %v2642 = vpop.f32.mrf.mxu0
    %v2643 = vadd.f32 %v2523, %v2642
    %v2644 = vpop.f32.mrf.mxu0
    %v2645 = vadd.f32 %v2527, %v2644
    %2646 = vmatprep.mubr.f32.mxu0 0.0
    %2647 = vmatmul.mubr.f32.gmra.mxu0 %v2453
    %v2648 = vpop.f32.mrf.mxu0
    %v2649 = vadd.f32 %v2523, %v2648
    %v2650 = vpop.f32.mrf.mxu0
    %v2651 = vadd.f32 %v2527, %v2650
    %2652 = vdwg.mxu0
    %2653 = vmatprep.subr.mxu0 %v2517
    %2654 = vmatpush1.msra.mxu0 %v2516
    %2655 = vmatprep.subr.mxu0 %v2513
    %2656 = vmatpush1.msra.mxu0 %v2512
    %2657 = vmatprep.subr.mxu0 %v2509
    %2658 = vmatpush1.msra.mxu0 %v2508
    %2659 = vmatprep.subr.mxu0 %v2505
    %2660 = vmatpush1.msra.mxu0 %v2504
    %2661 = vmatprep.subr.mxu0 %v2501
    %2662 = vmatpush1.msra.mxu0 %v2500
    %2663 = vmatprep.subr.mxu0 %v2497
    %2664 = vmatpush1.msra.mxu0 %v2496
    %2665 = vmatprep.subr.mxu0 %v2493
    %2666 = vmatpush1.msra.mxu0 %v2492
    %2667 = vmatprep.subr.mxu0 %v2489
    %2668 = vmatpush1.msra.mxu0 %v2488
    %2669 = vmatprep.subr.mxu0 %v2485
    %2670 = vmatpush1.msra.mxu0 %v2484
    %2671 = vmatprep.subr.mxu0 %v2481
    %2672 = vmatpush1.msra.mxu0 %v2480
    %2673 = vmatprep.subr.mxu0 %v2477
    %2674 = vmatpush1.msra.mxu0 %v2476
    %2675 = vmatprep.subr.mxu0 %v2473
    %2676 = vmatpush1.msra.mxu0 %v2472
    %2677 = vmatprep.subr.mxu0 %v2469
    %2678 = vmatpush1.msra.mxu0 %v2468
    %2679 = vmatprep.subr.mxu0 %v2465
    %2680 = vmatpush1.msra.mxu0 %v2464
    %2681 = vmatprep.subr.mxu0 %v2461
    %2682 = vmatpush1.msra.mxu0 %v2460
    %2683 = vmatprep.subr.mxu0 %v2457
    %2684 = vmatpush1.msra.mxu0 %v2456
    %2685 = vmatprep.subr.mxu0 0.0
    %2686 = vmatpush2.msra.mxu0 0.0
    %2687 = vmatprep.subr.mxu0 0.0
    %2688 = vmatpush2.msra.mxu0 0.0
    %2689 = vmatprep.subr.mxu0 0.0
    %2690 = vmatpush2.msra.mxu0 0.0
    %2691 = vmatprep.subr.mxu0 0.0
    %2692 = vmatpush2.msra.mxu0 0.0
    %2693 = vmatprep.subr.mxu0 0.0
    %2694 = vmatpush2.msra.mxu0 0.0
    %2695 = vmatprep.subr.mxu0 0.0
    %2696 = vmatpush2.msra.mxu0 0.0
    %2697 = vmatprep.subr.mxu0 0.0
    %2698 = vmatpush2.msra.mxu0 0.0
    %2699 = vmatprep.subr.mxu0 0.0
    %2700 = vmatpush2.msra.mxu0 0.0
    %2701 = vmatprep.subr.mxu0 0.0
    %2702 = vmatpush2.msra.mxu0 0.0
    %2703 = vmatprep.subr.mxu0 0.0
    %2704 = vmatpush2.msra.mxu0 0.0
    %2705 = vmatprep.subr.mxu0 0.0
    %2706 = vmatpush2.msra.mxu0 0.0
    %2707 = vmatprep.subr.mxu0 0.0
    %2708 = vmatpush2.msra.mxu0 0.0
    %2709 = vmatprep.subr.mxu0 0.0
    %2710 = vmatpush2.msra.mxu0 0.0
    %2711 = vmatprep.subr.mxu0 0.0
    %2712 = vmatpush2.msra.mxu0 0.0
    %2713 = vmatprep.subr.mxu0 0.0
    %2714 = vmatpush2.msra.mxu0 0.0
    %2715 = vmatprep.subr.mxu0 0.0
    %2716 = vmatpush2.msra.mxu0 0.0
    %2717 = vmatprep.mubr.f32.mxu0 0.0
    %2718 = vmatmul.mubr.f32.gmra.mxu0 %v2446
    %v2719 = vpop.f32.mrf.mxu0
    %v2720 = vadd.f32 %v2531, %v2719
    %v2721 = vpop.f32.mrf.mxu0
    %v2722 = vadd.f32 %v2535, %v2721
    %2723 = vmatprep.mubr.f32.mxu0 0.0
    %2724 = vmatmul.mubr.f32.gmra.mxu0 %v2447
    %v2725 = vpop.f32.mrf.mxu0
    %v2726 = vadd.f32 %v2531, %v2725
    %v2727 = vpop.f32.mrf.mxu0
    %v2728 = vadd.f32 %v2535, %v2727
    %2729 = vmatprep.mubr.f32.mxu0 0.0
    %2730 = vmatmul.mubr.f32.gmra.mxu0 %v2448
    %v2731 = vpop.f32.mrf.mxu0
    %v2732 = vadd.f32 %v2531, %v2731
    %v2733 = vpop.f32.mrf.mxu0
    %v2734 = vadd.f32 %v2535, %v2733
    %2735 = vmatprep.mubr.f32.mxu0 0.0
    %2736 = vmatmul.mubr.f32.gmra.mxu0 %v2449
    %v2737 = vpop.f32.mrf.mxu0
    %v2738 = vadd.f32 %v2531, %v2737
    %v2739 = vpop.f32.mrf.mxu0
    %v2740 = vadd.f32 %v2535, %v2739
    %2741 = vmatprep.mubr.f32.mxu0 0.0
    %2742 = vmatmul.mubr.f32.gmra.mxu0 %v2450
    %v2743 = vpop.f32.mrf.mxu0
    %v2744 = vadd.f32 %v2531, %v2743
    %v2745 = vpop.f32.mrf.mxu0
    %v2746 = vadd.f32 %v2535, %v2745
    %2747 = vmatprep.mubr.f32.mxu0 0.0
    %2748 = vmatmul.mubr.f32.gmra.mxu0 %v2451
    %v2749 = vpop.f32.mrf.mxu0
    %v2750 = vadd.f32 %v2531, %v2749
    %v2751 = vpop.f32.mrf.mxu0
    %v2752 = vadd.f32 %v2535, %v2751
    %2753 = vmatprep.mubr.f32.mxu0 0.0
    %2754 = vmatmul.mubr.f32.gmra.mxu0 %v2452
    %v2755 = vpop.f32.mrf.mxu0
    %v2756 = vadd.f32 %v2531, %v2755
    %v2757 = vpop.f32.mrf.mxu0
    %v2758 = vadd.f32 %v2535, %v2757
    %2759 = vmatprep.mubr.f32.mxu0 0.0
    %2760 = vmatmul.mubr.f32.gmra.mxu0 %v2453
    %v2761 = vpop.f32.mrf.mxu0
    %v2762 = vadd.f32 %v2531, %v2761
    %v2763 = vpop.f32.mrf.mxu0
    %v2764 = vadd.f32 %v2535, %v2763
    %2765 = vdwg.mxu0
    %2766 = vst [vmem:[#allocation2] sm:$0xff] %v2607
    %2767 = vst [vmem:[#allocation2 + $0x8] sm:$0xff] %v2609
    %2768 = vst [vmem:[#allocation2 + $0x10] sm:$0xff] %v2720
    %2769 = vst [vmem:[#allocation2 + $0x18] sm:$0xff] %v2722
    %2770 = vst [vmem:[#allocation2 + $0x20] sm:$0xff] %v2613
    %2771 = vst [vmem:[#allocation2 + $0x28] sm:$0xff] %v2615
    %2772 = vst [vmem:[#allocation2 + $0x30] sm:$0xff] %v2726
    %2773 = vst [vmem:[#allocation2 + $0x38] sm:$0xff] %v2728
    %2774 = vst [vmem:[#allocation2 + $0x40] sm:$0xff] %v2619
    %2775 = vst [vmem:[#allocation2 + $0x48] sm:$0xff] %v2621
    %2776 = vst [vmem:[#allocation2 + $0x50] sm:$0xff] %v2732
    %2777 = vst [vmem:[#allocation2 + $0x58] sm:$0xff] %v2734
    %2778 = vst [vmem:[#allocation2 + $0x60] sm:$0xff] %v2625
    %2779 = vst [vmem:[#allocation2 + $0x68] sm:$0xff] %v2627
    %2780 = vst [vmem:[#allocation2 + $0x70] sm:$0xff] %v2738
    %2781 = vst [vmem:[#allocation2 + $0x78] sm:$0xff] %v2740
    %2782 = vst [vmem:[#allocation2 + $0x80] sm:$0xff] %v2631
    %2783 = vst [vmem:[#allocation2 + $0x88] sm:$0xff] %v2633
    %2784 = vst [vmem:[#allocation2 + $0x90] sm:$0xff] %v2744
    %2785 = vst [vmem:[#allocation2 + $0x98] sm:$0xff] %v2746
    %2786 = vst [vmem:[#allocation2 + $0xa0] sm:$0xff] %v2637
    %2787 = vst [vmem:[#allocation2 + $0xa8] sm:$0xff] %v2639
    %2788 = vst [vmem:[#allocation2 + $0xb0] sm:$0xff] %v2750
    %2789 = vst [vmem:[#allocation2 + $0xb8] sm:$0xff] %v2752
    %2790 = vst [vmem:[#allocation2 + $0xc0] sm:$0xff] %v2643
    %2791 = vst [vmem:[#allocation2 + $0xc8] sm:$0xff] %v2645
    %2792 = vst [vmem:[#allocation2 + $0xd0] sm:$0xff] %v2756
    %2793 = vst [vmem:[#allocation2 + $0xd8] sm:$0xff] %v2758
    %2794 = vst [vmem:[#allocation2 + $0xe0] sm:$0xff] %v2649
    %2795 = vst [vmem:[#allocation2 + $0xe8] sm:$0xff] %v2651
    %2796 = vst [vmem:[#allocation2 + $0xf0] sm:$0xff] %v2762
    %2797 = vst [vmem:[#allocation2 + $0xf8] sm:$0xff] %v2764
    %v2798 = vld [vmem:[%s471] sm:$0xff]
    %v2799 = vld [vmem:[%s471 + $0x8] sm:$0xff]
    %v2800 = vld [vmem:[%s471 + $0x10] sm:$0xff]
    %v2801 = vld [vmem:[%s471 + $0x18] sm:$0xff]
    %v2802 = vld [vmem:[#allocation4] sm:$0xff]
    %v2803 = vld [vmem:[#allocation14] sm:$0xff]
    %v2804 = vld [vmem:[#allocation14 + $0x8] sm:$0xff]
    %v2805 = vld [vmem:[#allocation14 + $0x10] sm:$0xff]
    %v2806 = vld [vmem:[#allocation14 + $0x18] sm:$0xff]
    %v2807 = vld [vmem:[#allocation14 + $0x20] sm:$0xff]
    %v2808 = vld [vmem:[#allocation14 + $0x28] sm:$0xff]
    %v2809 = vld [vmem:[#allocation14 + $0x30] sm:$0xff]
    %v2810 = vld [vmem:[#allocation14 + $0x38] sm:$0xff]
    %v2811 = vld [vmem:[#allocation14 + $0x40] sm:$0xff]
    %v2812 = vld [vmem:[#allocation14 + $0x48] sm:$0xff]
    %v2813 = vld [vmem:[#allocation14 + $0x50] sm:$0xff]
    %v2814 = vld [vmem:[#allocation14 + $0x58] sm:$0xff]
    %v2815 = vld [vmem:[#allocation14 + $0x60] sm:$0xff]
    %v2816 = vld [vmem:[#allocation14 + $0x68] sm:$0xff]
    %v2817 = vld [vmem:[#allocation14 + $0x70] sm:$0xff]
    %v2818 = vld [vmem:[#allocation14 + $0x78] sm:$0xff]
    %v2819 = vld [vmem:[#allocation14 + $0x80] sm:$0xff]
    %v2820 = vld [vmem:[#allocation14 + $0x88] sm:$0xff]
    %v2821 = vld [vmem:[#allocation14 + $0x90] sm:$0xff]
    %v2822 = vld [vmem:[#allocation14 + $0x98] sm:$0xff]
    %v2823 = vld [vmem:[#allocation14 + $0xa0] sm:$0xff]
    %v2824 = vld [vmem:[#allocation14 + $0xa8] sm:$0xff]
    %v2825 = vld [vmem:[#allocation14 + $0xb0] sm:$0xff]
    %v2826 = vld [vmem:[#allocation14 + $0xb8] sm:$0xff]
    %v2827 = vld [vmem:[#allocation14 + $0xc0] sm:$0xff]
    %v2828 = vld [vmem:[#allocation14 + $0xc8] sm:$0xff]
    %v2829 = vld [vmem:[#allocation14 + $0xd0] sm:$0xff]
    %v2830 = vld [vmem:[#allocation14 + $0xd8] sm:$0xff]
    %v2831 = vld [vmem:[#allocation14 + $0xe0] sm:$0xff]
    %v2832 = vld [vmem:[#allocation14 + $0xe8] sm:$0xff]
    %v2833 = vld [vmem:[#allocation14 + $0xf0] sm:$0xff]
    %v2834 = vld [vmem:[#allocation14 + $0xf8] sm:$0xff]
    %v2835 = vld [vmem:[#allocation14 + $0x100] sm:$0xff]
    %v2836 = vld [vmem:[#allocation14 + $0x108] sm:$0xff]
    %v2837 = vld [vmem:[#allocation14 + $0x110] sm:$0xff]
    %v2838 = vld [vmem:[#allocation14 + $0x118] sm:$0xff]
    %v2839 = vld [vmem:[#allocation14 + $0x120] sm:$0xff]
    %v2840 = vld [vmem:[#allocation14 + $0x128] sm:$0xff]
    %v2841 = vld [vmem:[#allocation14 + $0x130] sm:$0xff]
    %v2842 = vld [vmem:[#allocation14 + $0x138] sm:$0xff]
    %v2843 = vld [vmem:[#allocation14 + $0x140] sm:$0xff]
    %v2844 = vld [vmem:[#allocation14 + $0x148] sm:$0xff]
    %v2845 = vld [vmem:[#allocation14 + $0x150] sm:$0xff]
    %v2846 = vld [vmem:[#allocation14 + $0x158] sm:$0xff]
    %v2847 = vld [vmem:[#allocation14 + $0x160] sm:$0xff]
    %v2848 = vld [vmem:[#allocation14 + $0x168] sm:$0xff]
    %v2849 = vld [vmem:[#allocation14 + $0x170] sm:$0xff]
    %v2850 = vld [vmem:[#allocation14 + $0x178] sm:$0xff]
    %v2851 = vld [vmem:[#allocation14 + $0x180] sm:$0xff]
    %v2852 = vld [vmem:[#allocation14 + $0x188] sm:$0xff]
    %v2853 = vld [vmem:[#allocation14 + $0x190] sm:$0xff]
    %v2854 = vld [vmem:[#allocation14 + $0x198] sm:$0xff]
    %v2855 = vld [vmem:[#allocation14 + $0x1a0] sm:$0xff]
    %v2856 = vld [vmem:[#allocation14 + $0x1a8] sm:$0xff]
    %v2857 = vld [vmem:[#allocation14 + $0x1b0] sm:$0xff]
    %v2858 = vld [vmem:[#allocation14 + $0x1b8] sm:$0xff]
    %v2859 = vld [vmem:[#allocation14 + $0x1c0] sm:$0xff]
    %v2860 = vld [vmem:[#allocation14 + $0x1c8] sm:$0xff]
    %v2861 = vld [vmem:[#allocation14 + $0x1d0] sm:$0xff]
    %v2862 = vld [vmem:[#allocation14 + $0x1d8] sm:$0xff]
    %v2863 = vld [vmem:[#allocation14 + $0x1e0] sm:$0xff]
    %v2864 = vld [vmem:[#allocation14 + $0x1e8] sm:$0xff]
    %v2865 = vld [vmem:[#allocation14 + $0x1f0] sm:$0xff]
    %v2866 = vld [vmem:[#allocation14 + $0x1f8] sm:$0xff]
    %2867 = vmatprep.subr.mxu0 %v2864
    %2868 = vmatpush1.msra.mxu0 %v2863
    %2869 = vmatprep.subr.mxu0 %v2860
    %2870 = vmatpush1.msra.mxu0 %v2859
    %2871 = vmatprep.subr.mxu0 %v2856
    %2872 = vmatpush1.msra.mxu0 %v2855
    %2873 = vmatprep.subr.mxu0 %v2852
    %2874 = vmatpush1.msra.mxu0 %v2851
    %2875 = vmatprep.subr.mxu0 %v2848
    %2876 = vmatpush1.msra.mxu0 %v2847
    %2877 = vmatprep.subr.mxu0 %v2844
    %2878 = vmatpush1.msra.mxu0 %v2843
    %2879 = vmatprep.subr.mxu0 %v2840
    %2880 = vmatpush1.msra.mxu0 %v2839
    %2881 = vmatprep.subr.mxu0 %v2836
    %2882 = vmatpush1.msra.mxu0 %v2835
    %2883 = vmatprep.subr.mxu0 %v2832
    %2884 = vmatpush1.msra.mxu0 %v2831
    %2885 = vmatprep.subr.mxu0 %v2828
    %2886 = vmatpush1.msra.mxu0 %v2827
    %2887 = vmatprep.subr.mxu0 %v2824
    %2888 = vmatpush1.msra.mxu0 %v2823
    %2889 = vmatprep.subr.mxu0 %v2820
    %2890 = vmatpush1.msra.mxu0 %v2819
    %2891 = vmatprep.subr.mxu0 %v2816
    %2892 = vmatpush1.msra.mxu0 %v2815
    %2893 = vmatprep.subr.mxu0 %v2812
    %2894 = vmatpush1.msra.mxu0 %v2811
    %2895 = vmatprep.subr.mxu0 %v2808
    %2896 = vmatpush1.msra.mxu0 %v2807
    %2897 = vmatprep.subr.mxu0 %v2804
    %2898 = vmatpush1.msra.mxu0 %v2803
    %2899 = vmatprep.subr.mxu0 0.0
    %2900 = vmatpush2.msra.mxu0 0.0
    %2901 = vmatprep.subr.mxu0 0.0
    %2902 = vmatpush2.msra.mxu0 0.0
    %2903 = vmatprep.subr.mxu0 0.0
    %2904 = vmatpush2.msra.mxu0 0.0
    %2905 = vmatprep.subr.mxu0 0.0
    %2906 = vmatpush2.msra.mxu0 0.0
    %2907 = vmatprep.subr.mxu0 0.0
    %2908 = vmatpush2.msra.mxu0 0.0
    %2909 = vmatprep.subr.mxu0 0.0
    %2910 = vmatpush2.msra.mxu0 0.0
    %2911 = vmatprep.subr.mxu0 0.0
    %2912 = vmatpush2.msra.mxu0 0.0
    %2913 = vmatprep.subr.mxu0 0.0
    %2914 = vmatpush2.msra.mxu0 0.0
    %2915 = vmatprep.subr.mxu0 0.0
    %2916 = vmatpush2.msra.mxu0 0.0
    %2917 = vmatprep.subr.mxu0 0.0
    %2918 = vmatpush2.msra.mxu0 0.0
    %2919 = vmatprep.subr.mxu0 0.0
    %2920 = vmatpush2.msra.mxu0 0.0
    %2921 = vmatprep.subr.mxu0 0.0
    %2922 = vmatpush2.msra.mxu0 0.0
    %2923 = vmatprep.subr.mxu0 0.0
    %2924 = vmatpush2.msra.mxu0 0.0
    %2925 = vmatprep.subr.mxu0 0.0
    %2926 = vmatpush2.msra.mxu0 0.0
    %2927 = vmatprep.subr.mxu0 0.0
    %2928 = vmatpush2.msra.mxu0 0.0
    %2929 = vmatprep.subr.mxu0 0.0
    %2930 = vmatpush2.msra.mxu0 0.0
    %2931 = vmatprep.mubr.f32.mxu0 0.0
    %2932 = vmatmul.mubr.f32.gmra.mxu0 %v2802
    %v2933 = vpop.f32.mrf.mxu0
    %v2934 = vadd.f32 0.0, %v2933
    %v2935 = vpop.f32.mrf.mxu0
    %v2936 = vadd.f32 0.0, %v2935
    %2937 = vdwg.mxu0
    %2938 = vmatprep.subr.mxu0 %v2866
    %2939 = vmatpush1.msra.mxu0 %v2865
    %2940 = vmatprep.subr.mxu0 %v2862
    %2941 = vmatpush1.msra.mxu0 %v2861
    %2942 = vmatprep.subr.mxu0 %v2858
    %2943 = vmatpush1.msra.mxu0 %v2857
    %2944 = vmatprep.subr.mxu0 %v2854
    %2945 = vmatpush1.msra.mxu0 %v2853
    %2946 = vmatprep.subr.mxu0 %v2850
    %2947 = vmatpush1.msra.mxu0 %v2849
    %2948 = vmatprep.subr.mxu0 %v2846
    %2949 = vmatpush1.msra.mxu0 %v2845
    %2950 = vmatprep.subr.mxu0 %v2842
    %2951 = vmatpush1.msra.mxu0 %v2841
    %2952 = vmatprep.subr.mxu0 %v2838
    %2953 = vmatpush1.msra.mxu0 %v2837
    %2954 = vmatprep.subr.mxu0 %v2834
    %2955 = vmatpush1.msra.mxu0 %v2833
    %2956 = vmatprep.subr.mxu0 %v2830
    %2957 = vmatpush1.msra.mxu0 %v2829
    %2958 = vmatprep.subr.mxu0 %v2826
    %2959 = vmatpush1.msra.mxu0 %v2825
    %2960 = vmatprep.subr.mxu0 %v2822
    %2961 = vmatpush1.msra.mxu0 %v2821
    %2962 = vmatprep.subr.mxu0 %v2818
    %2963 = vmatpush1.msra.mxu0 %v2817
    %2964 = vmatprep.subr.mxu0 %v2814
    %2965 = vmatpush1.msra.mxu0 %v2813
    %2966 = vmatprep.subr.mxu0 %v2810
    %2967 = vmatpush1.msra.mxu0 %v2809
    %2968 = vmatprep.subr.mxu0 %v2806
    %2969 = vmatpush1.msra.mxu0 %v2805
    %2970 = vmatprep.subr.mxu0 0.0
    %2971 = vmatpush2.msra.mxu0 0.0
    %2972 = vmatprep.subr.mxu0 0.0
    %2973 = vmatpush2.msra.mxu0 0.0
    %2974 = vmatprep.subr.mxu0 0.0
    %2975 = vmatpush2.msra.mxu0 0.0
    %2976 = vmatprep.subr.mxu0 0.0
    %2977 = vmatpush2.msra.mxu0 0.0
    %2978 = vmatprep.subr.mxu0 0.0
    %2979 = vmatpush2.msra.mxu0 0.0
    %2980 = vmatprep.subr.mxu0 0.0
    %2981 = vmatpush2.msra.mxu0 0.0
    %2982 = vmatprep.subr.mxu0 0.0
    %2983 = vmatpush2.msra.mxu0 0.0
    %2984 = vmatprep.subr.mxu0 0.0
    %2985 = vmatpush2.msra.mxu0 0.0
    %2986 = vmatprep.subr.mxu0 0.0
    %2987 = vmatpush2.msra.mxu0 0.0
    %2988 = vmatprep.subr.mxu0 0.0
    %2989 = vmatpush2.msra.mxu0 0.0
    %2990 = vmatprep.subr.mxu0 0.0
    %2991 = vmatpush2.msra.mxu0 0.0
    %2992 = vmatprep.subr.mxu0 0.0
    %2993 = vmatpush2.msra.mxu0 0.0
    %2994 = vmatprep.subr.mxu0 0.0
    %2995 = vmatpush2.msra.mxu0 0.0
    %2996 = vmatprep.subr.mxu0 0.0
    %2997 = vmatpush2.msra.mxu0 0.0
    %2998 = vmatprep.subr.mxu0 0.0
    %2999 = vmatpush2.msra.mxu0 0.0
    %3000 = vmatprep.subr.mxu0 0.0
    %3001 = vmatpush2.msra.mxu0 0.0
    %3002 = vmatprep.mubr.f32.mxu0 0.0
    %3003 = vmatmul.mubr.f32.gmra.mxu0 %v2802
    %v3004 = vpop.f32.mrf.mxu0
    %v3005 = vadd.f32 0.0, %v3004
    %v3006 = vpop.f32.mrf.mxu0
    %v3007 = vadd.f32 0.0, %v3006
    %3008 = vdwg.mxu0
    %v3009 = vadd.f32 %v2798, %v2934
    %v3010 = vadd.f32 %v2799, %v2936
    %v3011 = vadd.f32 %v2800, %v3005
    %v3012 = vadd.f32 %v2801, %v3007
    %v3013 = vxor.u32 %v3009, 2147483648
    %v3014 = vxor.u32 %v3010, 2147483648
    %v3015 = vxor.u32 %v3011, 2147483648
    %v3016 = vmul.f32 %v3013, 1.442695
    %v3017 = vpow.pop %v3016
    %v3018 = vmul.f32 %v3014, 1.442695
    %v3019 = vpow.pop %v3018
    %v3020 = vmul.f32 %v3015, 1.442695
    %v3021 = vpow.pop %v3020
    %v3022 = vadd.f32 %v3017, 1.0
    %v3023 = vadd.f32 %v3019, 1.0
    %v3024 = vadd.f32 %v3021, 1.0
    %v3025 = vrcp.pop %v3022
    %v3026 = vmul.f32 1.0, %v3025
    %v3027 = vrcp.pop %v3023
    %v3028 = vmul.f32 1.0, %v3027
    %v3029 = vrcp.pop %v3024
    %v3030 = vmul.f32 1.0, %v3029
    %v3031 = vtanh.pop %v3012
    %v3032 = vld [vmem:[#allocation5] sm:$0xff]
    %v3033 = vmul.f32 %v3028, %v3032
    %v3034 = vmul.f32 %v3026, %v3031
    %v3035 = vadd.f32 %v3033, %v3034
    %v3036 = vtanh.pop %v3035
    %v3037 = vmul.f32 %v3030, %v3036
    %3038 = vst [vmem:[#allocation5] sm:$0xff] %v3035
    %3039 = vst [vmem:[#allocation4] sm:$0xff] %v3037
    %v3040 = vld [vmem:[%s717] sm:$0xff]
    %v3041 = vld [vmem:[%s717 + $0x8] sm:$0xff]
    %v3042 = vld [vmem:[%s717 + $0x10] sm:$0xff]
    %v3043 = vld [vmem:[%s717 + $0x18] sm:$0xff]
    %v3044 = vld [vmem:[#allocation4] sm:$0xff]
    %v3045 = vld [vmem:[#allocation14] sm:$0xff]
    %v3046 = vld [vmem:[#allocation14 + $0x8] sm:$0xff]
    %v3047 = vld [vmem:[#allocation14 + $0x10] sm:$0xff]
    %v3048 = vld [vmem:[#allocation14 + $0x18] sm:$0xff]
    %v3049 = vld [vmem:[#allocation14 + $0x20] sm:$0xff]
    %v3050 = vld [vmem:[#allocation14 + $0x28] sm:$0xff]
    %v3051 = vld [vmem:[#allocation14 + $0x30] sm:$0xff]
    %v3052 = vld [vmem:[#allocation14 + $0x38] sm:$0xff]
    %v3053 = vld [vmem:[#allocation14 + $0x40] sm:$0xff]
    %v3054 = vld [vmem:[#allocation14 + $0x48] sm:$0xff]
    %v3055 = vld [vmem:[#allocation14 + $0x50] sm:$0xff]
    %v3056 = vld [vmem:[#allocation14 + $0x58] sm:$0xff]
    %v3057 = vld [vmem:[#allocation14 + $0x60] sm:$0xff]
    %v3058 = vld [vmem:[#allocation14 + $0x68] sm:$0xff]
    %v3059 = vld [vmem:[#allocation14 + $0x70] sm:$0xff]
    %v3060 = vld [vmem:[#allocation14 + $0x78] sm:$0xff]
    %v3061 = vld [vmem:[#allocation14 + $0x80] sm:$0xff]
    %v3062 = vld [vmem:[#allocation14 + $0x88] sm:$0xff]
    %v3063 = vld [vmem:[#allocation14 + $0x90] sm:$0xff]
    %v3064 = vld [vmem:[#allocation14 + $0x98] sm:$0xff]
    %v3065 = vld [vmem:[#allocation14 + $0xa0] sm:$0xff]
    %v3066 = vld [vmem:[#allocation14 + $0xa8] sm:$0xff]
    %v3067 = vld [vmem:[#allocation14 + $0xb0] sm:$0xff]
    %v3068 = vld [vmem:[#allocation14 + $0xb8] sm:$0xff]
    %v3069 = vld [vmem:[#allocation14 + $0xc0] sm:$0xff]
    %v3070 = vld [vmem:[#allocation14 + $0xc8] sm:$0xff]
    %v3071 = vld [vmem:[#allocation14 + $0xd0] sm:$0xff]
    %v3072 = vld [vmem:[#allocation14 + $0xd8] sm:$0xff]
    %v3073 = vld [vmem:[#allocation14 + $0xe0] sm:$0xff]
    %v3074 = vld [vmem:[#allocation14 + $0xe8] sm:$0xff]
    %v3075 = vld [vmem:[#allocation14 + $0xf0] sm:$0xff]
    %v3076 = vld [vmem:[#allocation14 + $0xf8] sm:$0xff]
    %v3077 = vld [vmem:[#allocation14 + $0x100] sm:$0xff]
    %v3078 = vld [vmem:[#allocation14 + $0x108] sm:$0xff]
    %v3079 = vld [vmem:[#allocation14 + $0x110] sm:$0xff]
    %v3080 = vld [vmem:[#allocation14 + $0x118] sm:$0xff]
    %v3081 = vld [vmem:[#allocation14 + $0x120] sm:$0xff]
    %v3082 = vld [vmem:[#allocation14 + $0x128] sm:$0xff]
    %v3083 = vld [vmem:[#allocation14 + $0x130] sm:$0xff]
    %v3084 = vld [vmem:[#allocation14 + $0x138] sm:$0xff]
    %v3085 = vld [vmem:[#allocation14 + $0x140] sm:$0xff]
    %v3086 = vld [vmem:[#allocation14 + $0x148] sm:$0xff]
    %v3087 = vld [vmem:[#allocation14 + $0x150] sm:$0xff]
    %v3088 = vld [vmem:[#allocation14 + $0x158] sm:$0xff]
    %v3089 = vld [vmem:[#allocation14 + $0x160] sm:$0xff]
    %v3090 = vld [vmem:[#allocation14 + $0x168] sm:$0xff]
    %v3091 = vld [vmem:[#allocation14 + $0x170] sm:$0xff]
    %v3092 = vld [vmem:[#allocation14 + $0x178] sm:$0xff]
    %v3093 = vld [vmem:[#allocation14 + $0x180] sm:$0xff]
    %v3094 = vld [vmem:[#allocation14 + $0x188] sm:$0xff]
    %v3095 = vld [vmem:[#allocation14 + $0x190] sm:$0xff]
    %v3096 = vld [vmem:[#allocation14 + $0x198] sm:$0xff]
    %v3097 = vld [vmem:[#allocation14 + $0x1a0] sm:$0xff]
    %v3098 = vld [vmem:[#allocation14 + $0x1a8] sm:$0xff]
    %v3099 = vld [vmem:[#allocation14 + $0x1b0] sm:$0xff]
    %v3100 = vld [vmem:[#allocation14 + $0x1b8] sm:$0xff]
    %v3101 = vld [vmem:[#allocation14 + $0x1c0] sm:$0xff]
    %v3102 = vld [vmem:[#allocation14 + $0x1c8] sm:$0xff]
    %v3103 = vld [vmem:[#allocation14 + $0x1d0] sm:$0xff]
    %v3104 = vld [vmem:[#allocation14 + $0x1d8] sm:$0xff]
    %v3105 = vld [vmem:[#allocation14 + $0x1e0] sm:$0xff]
    %v3106 = vld [vmem:[#allocation14 + $0x1e8] sm:$0xff]
    %v3107 = vld [vmem:[#allocation14 + $0x1f0] sm:$0xff]
    %v3108 = vld [vmem:[#allocation14 + $0x1f8] sm:$0xff]
    %3109 = vmatprep.subr.mxu0 %v3106
    %3110 = vmatpush1.msra.mxu0 %v3105
    %3111 = vmatprep.subr.mxu0 %v3102
    %3112 = vmatpush1.msra.mxu0 %v3101
    %3113 = vmatprep.subr.mxu0 %v3098
    %3114 = vmatpush1.msra.mxu0 %v3097
    %3115 = vmatprep.subr.mxu0 %v3094
    %3116 = vmatpush1.msra.mxu0 %v3093
    %3117 = vmatprep.subr.mxu0 %v3090
    %3118 = vmatpush1.msra.mxu0 %v3089
    %3119 = vmatprep.subr.mxu0 %v3086
    %3120 = vmatpush1.msra.mxu0 %v3085
    %3121 = vmatprep.subr.mxu0 %v3082
    %3122 = vmatpush1.msra.mxu0 %v3081
    %3123 = vmatprep.subr.mxu0 %v3078
    %3124 = vmatpush1.msra.mxu0 %v3077
    %3125 = vmatprep.subr.mxu0 %v3074
    %3126 = vmatpush1.msra.mxu0 %v3073
    %3127 = vmatprep.subr.mxu0 %v3070
    %3128 = vmatpush1.msra.mxu0 %v3069
    %3129 = vmatprep.subr.mxu0 %v3066
    %3130 = vmatpush1.msra.mxu0 %v3065
    %3131 = vmatprep.subr.mxu0 %v3062
    %3132 = vmatpush1.msra.mxu0 %v3061
    %3133 = vmatprep.subr.mxu0 %v3058
    %3134 = vmatpush1.msra.mxu0 %v3057
    %3135 = vmatprep.subr.mxu0 %v3054
    %3136 = vmatpush1.msra.mxu0 %v3053
    %3137 = vmatprep.subr.mxu0 %v3050
    %3138 = vmatpush1.msra.mxu0 %v3049
    %3139 = vmatprep.subr.mxu0 %v3046
    %3140 = vmatpush1.msra.mxu0 %v3045
    %3141 = vmatprep.subr.mxu0 0.0
    %3142 = vmatpush2.msra.mxu0 0.0
    %3143 = vmatprep.subr.mxu0 0.0
    %3144 = vmatpush2.msra.mxu0 0.0
    %3145 = vmatprep.subr.mxu0 0.0
    %3146 = vmatpush2.msra.mxu0 0.0
    %3147 = vmatprep.subr.mxu0 0.0
    %3148 = vmatpush2.msra.mxu0 0.0
    %3149 = vmatprep.subr.mxu0 0.0
    %3150 = vmatpush2.msra.mxu0 0.0
    %3151 = vmatprep.subr.mxu0 0.0
    %3152 = vmatpush2.msra.mxu0 0.0
    %3153 = vmatprep.subr.mxu0 0.0
    %3154 = vmatpush2.msra.mxu0 0.0
    %3155 = vmatprep.subr.mxu0 0.0
    %3156 = vmatpush2.msra.mxu0 0.0
    %3157 = vmatprep.subr.mxu0 0.0
    %3158 = vmatpush2.msra.mxu0 0.0
    %3159 = vmatprep.subr.mxu0 0.0
    %3160 = vmatpush2.msra.mxu0 0.0
    %3161 = vmatprep.subr.mxu0 0.0
    %3162 = vmatpush2.msra.mxu0 0.0
    %3163 = vmatprep.subr.mxu0 0.0
    %3164 = vmatpush2.msra.mxu0 0.0
    %3165 = vmatprep.subr.mxu0 0.0
    %3166 = vmatpush2.msra.mxu0 0.0
    %3167 = vmatprep.subr.mxu0 0.0
    %3168 = vmatpush2.msra.mxu0 0.0
    %3169 = vmatprep.subr.mxu0 0.0
    %3170 = vmatpush2.msra.mxu0 0.0
    %3171 = vmatprep.subr.mxu0 0.0
    %3172 = vmatpush2.msra.mxu0 0.0
    %3173 = vmatprep.mubr.f32.mxu0 0.0
    %3174 = vmatmul.mubr.f32.gmra.mxu0 %v3044
    %v3175 = vpop.f32.mrf.mxu0
    %v3176 = vadd.f32 0.0, %v3175
    %v3177 = vpop.f32.mrf.mxu0
    %v3178 = vadd.f32 0.0, %v3177
    %3179 = vdwg.mxu0
    %3180 = vmatprep.subr.mxu0 %v3108
    %3181 = vmatpush1.msra.mxu0 %v3107
    %3182 = vmatprep.subr.mxu0 %v3104
    %3183 = vmatpush1.msra.mxu0 %v3103
    %3184 = vmatprep.subr.mxu0 %v3100
    %3185 = vmatpush1.msra.mxu0 %v3099
    %3186 = vmatprep.subr.mxu0 %v3096
    %3187 = vmatpush1.msra.mxu0 %v3095
    %3188 = vmatprep.subr.mxu0 %v3092
    %3189 = vmatpush1.msra.mxu0 %v3091
    %3190 = vmatprep.subr.mxu0 %v3088
    %3191 = vmatpush1.msra.mxu0 %v3087
    %3192 = vmatprep.subr.mxu0 %v3084
    %3193 = vmatpush1.msra.mxu0 %v3083
    %3194 = vmatprep.subr.mxu0 %v3080
    %3195 = vmatpush1.msra.mxu0 %v3079
    %3196 = vmatprep.subr.mxu0 %v3076
    %3197 = vmatpush1.msra.mxu0 %v3075
    %3198 = vmatprep.subr.mxu0 %v3072
    %3199 = vmatpush1.msra.mxu0 %v3071
    %3200 = vmatprep.subr.mxu0 %v3068
    %3201 = vmatpush1.msra.mxu0 %v3067
    %3202 = vmatprep.subr.mxu0 %v3064
    %3203 = vmatpush1.msra.mxu0 %v3063
    %3204 = vmatprep.subr.mxu0 %v3060
    %3205 = vmatpush1.msra.mxu0 %v3059
    %3206 = vmatprep.subr.mxu0 %v3056
    %3207 = vmatpush1.msra.mxu0 %v3055
    %3208 = vmatprep.subr.mxu0 %v3052
    %3209 = vmatpush1.msra.mxu0 %v3051
    %3210 = vmatprep.subr.mxu0 %v3048
    %3211 = vmatpush1.msra.mxu0 %v3047
    %3212 = vmatprep.subr.mxu0 0.0
    %3213 = vmatpush2.msra.mxu0 0.0
    %3214 = vmatprep.subr.mxu0 0.0
    %3215 = vmatpush2.msra.mxu0 0.0
    %3216 = vmatprep.subr.mxu0 0.0
    %3217 = vmatpush2.msra.mxu0 0.0
    %3218 = vmatprep.subr.mxu0 0.0
    %3219 = vmatpush2.msra.mxu0 0.0
    %3220 = vmatprep.subr.mxu0 0.0
    %3221 = vmatpush2.msra.mxu0 0.0
    %3222 = vmatprep.subr.mxu0 0.0
    %3223 = vmatpush2.msra.mxu0 0.0
    %3224 = vmatprep.subr.mxu0 0.0
    %3225 = vmatpush2.msra.mxu0 0.0
    %3226 = vmatprep.subr.mxu0 0.0
    %3227 = vmatpush2.msra.mxu0 0.0
    %3228 = vmatprep.subr.mxu0 0.0
    %3229 = vmatpush2.msra.mxu0 0.0
    %3230 = vmatprep.subr.mxu0 0.0
    %3231 = vmatpush2.msra.mxu0 0.0
    %3232 = vmatprep.subr.mxu0 0.0
    %3233 = vmatpush2.msra.mxu0 0.0
    %3234 = vmatprep.subr.mxu0 0.0
    %3235 = vmatpush2.msra.mxu0 0.0
    %3236 = vmatprep.subr.mxu0 0.0
    %3237 = vmatpush2.msra.mxu0 0.0
    %3238 = vmatprep.subr.mxu0 0.0
    %3239 = vmatpush2.msra.mxu0 0.0
    %3240 = vmatprep.subr.mxu0 0.0
    %3241 = vmatpush2.msra.mxu0 0.0
    %3242 = vmatprep.subr.mxu0 0.0
    %3243 = vmatpush2.msra.mxu0 0.0
    %3244 = vmatprep.mubr.f32.mxu0 0.0
    %3245 = vmatmul.mubr.f32.gmra.mxu0 %v3044
    %v3246 = vpop.f32.mrf.mxu0
    %v3247 = vadd.f32 0.0, %v3246
    %v3248 = vpop.f32.mrf.mxu0
    %v3249 = vadd.f32 0.0, %v3248
    %3250 = vdwg.mxu0
    %v3251 = vadd.f32 %v3040, %v3176
    %v3252 = vadd.f32 %v3041, %v3178
    %v3253 = vadd.f32 %v3042, %v3247
    %v3254 = vadd.f32 %v3043, %v3249
    %v3255 = vxor.u32 %v3251, 2147483648
    %v3256 = vxor.u32 %v3252, 2147483648
    %v3257 = vxor.u32 %v3253, 2147483648
    %v3258 = vmul.f32 %v3255, 1.442695
    %v3259 = vpow.pop %v3258
    %v3260 = vmul.f32 %v3256, 1.442695
    %v3261 = vpow.pop %v3260
    %v3262 = vmul.f32 %v3257, 1.442695
    %v3263 = vpow.pop %v3262
    %v3264 = vadd.f32 %v3259, 1.0
    %v3265 = vadd.f32 %v3261, 1.0
    %v3266 = vadd.f32 %v3263, 1.0
    %v3267 = vrcp.pop %v3264
    %v3268 = vmul.f32 1.0, %v3267
    %v3269 = vrcp.pop %v3265
    %v3270 = vmul.f32 1.0, %v3269
    %v3271 = vrcp.pop %v3266
    %v3272 = vmul.f32 1.0, %v3271
    %v3273 = vtanh.pop %v3254
    %v3274 = vld [vmem:[#allocation5] sm:$0xff]
    %v3275 = vmul.f32 %v3270, %v3274
    %v3276 = vmul.f32 %v3268, %v3273
    %v3277 = vadd.f32 %v3275, %v3276
    %v3278 = vtanh.pop %v3277
    %v3279 = vmul.f32 %v3272, %v3278
    %3280 = vst [vmem:[#allocation5] sm:$0xff] %v3277
    %3281 = vst [vmem:[#allocation4] sm:$0xff] %v3279
    %v3282 = vld [vmem:[%s964] sm:$0xff]
    %v3283 = vld [vmem:[%s964 + $0x8] sm:$0xff]
    %v3284 = vld [vmem:[%s964 + $0x10] sm:$0xff]
    %v3285 = vld [vmem:[%s964 + $0x18] sm:$0xff]
    %v3286 = vld [vmem:[#allocation4] sm:$0xff]
    %v3287 = vld [vmem:[#allocation14] sm:$0xff]
    %v3288 = vld [vmem:[#allocation14 + $0x8] sm:$0xff]
    %v3289 = vld [vmem:[#allocation14 + $0x10] sm:$0xff]
    %v3290 = vld [vmem:[#allocation14 + $0x18] sm:$0xff]
    %v3291 = vld [vmem:[#allocation14 + $0x20] sm:$0xff]
    %v3292 = vld [vmem:[#allocation14 + $0x28] sm:$0xff]
    %v3293 = vld [vmem:[#allocation14 + $0x30] sm:$0xff]
    %v3294 = vld [vmem:[#allocation14 + $0x38] sm:$0xff]
    %v3295 = vld [vmem:[#allocation14 + $0x40] sm:$0xff]
    %v3296 = vld [vmem:[#allocation14 + $0x48] sm:$0xff]
    %v3297 = vld [vmem:[#allocation14 + $0x50] sm:$0xff]
    %v3298 = vld [vmem:[#allocation14 + $0x58] sm:$0xff]
    %v3299 = vld [vmem:[#allocation14 + $0x60] sm:$0xff]
    %v3300 = vld [vmem:[#allocation14 + $0x68] sm:$0xff]
    %v3301 = vld [vmem:[#allocation14 + $0x70] sm:$0xff]
    %v3302 = vld [vmem:[#allocation14 + $0x78] sm:$0xff]
    %v3303 = vld [vmem:[#allocation14 + $0x80] sm:$0xff]
    %v3304 = vld [vmem:[#allocation14 + $0x88] sm:$0xff]
    %v3305 = vld [vmem:[#allocation14 + $0x90] sm:$0xff]
    %v3306 = vld [vmem:[#allocation14 + $0x98] sm:$0xff]
    %v3307 = vld [vmem:[#allocation14 + $0xa0] sm:$0xff]
    %v3308 = vld [vmem:[#allocation14 + $0xa8] sm:$0xff]
    %v3309 = vld [vmem:[#allocation14 + $0xb0] sm:$0xff]
    %v3310 = vld [vmem:[#allocation14 + $0xb8] sm:$0xff]
    %v3311 = vld [vmem:[#allocation14 + $0xc0] sm:$0xff]
    %v3312 = vld [vmem:[#allocation14 + $0xc8] sm:$0xff]
    %v3313 = vld [vmem:[#allocation14 + $0xd0] sm:$0xff]
    %v3314 = vld [vmem:[#allocation14 + $0xd8] sm:$0xff]
    %v3315 = vld [vmem:[#allocation14 + $0xe0] sm:$0xff]
    %v3316 = vld [vmem:[#allocation14 + $0xe8] sm:$0xff]
    %v3317 = vld [vmem:[#allocation14 + $0xf0] sm:$0xff]
    %v3318 = vld [vmem:[#allocation14 + $0xf8] sm:$0xff]
    %v3319 = vld [vmem:[#allocation14 + $0x100] sm:$0xff]
    %v3320 = vld [vmem:[#allocation14 + $0x108] sm:$0xff]
    %v3321 = vld [vmem:[#allocation14 + $0x110] sm:$0xff]
    %v3322 = vld [vmem:[#allocation14 + $0x118] sm:$0xff]
    %v3323 = vld [vmem:[#allocation14 + $0x120] sm:$0xff]
    %v3324 = vld [vmem:[#allocation14 + $0x128] sm:$0xff]
    %v3325 = vld [vmem:[#allocation14 + $0x130] sm:$0xff]
    %v3326 = vld [vmem:[#allocation14 + $0x138] sm:$0xff]
    %v3327 = vld [vmem:[#allocation14 + $0x140] sm:$0xff]
    %v3328 = vld [vmem:[#allocation14 + $0x148] sm:$0xff]
    %v3329 = vld [vmem:[#allocation14 + $0x150] sm:$0xff]
    %v3330 = vld [vmem:[#allocation14 + $0x158] sm:$0xff]
    %v3331 = vld [vmem:[#allocation14 + $0x160] sm:$0xff]
    %v3332 = vld [vmem:[#allocation14 + $0x168] sm:$0xff]
    %v3333 = vld [vmem:[#allocation14 + $0x170] sm:$0xff]
    %v3334 = vld [vmem:[#allocation14 + $0x178] sm:$0xff]
    %v3335 = vld [vmem:[#allocation14 + $0x180] sm:$0xff]
    %v3336 = vld [vmem:[#allocation14 + $0x188] sm:$0xff]
    %v3337 = vld [vmem:[#allocation14 + $0x190] sm:$0xff]
    %v3338 = vld [vmem:[#allocation14 + $0x198] sm:$0xff]
    %v3339 = vld [vmem:[#allocation14 + $0x1a0] sm:$0xff]
    %v3340 = vld [vmem:[#allocation14 + $0x1a8] sm:$0xff]
    %v3341 = vld [vmem:[#allocation14 + $0x1b0] sm:$0xff]
    %v3342 = vld [vmem:[#allocation14 + $0x1b8] sm:$0xff]
    %v3343 = vld [vmem:[#allocation14 + $0x1c0] sm:$0xff]
    %v3344 = vld [vmem:[#allocation14 + $0x1c8] sm:$0xff]
    %v3345 = vld [vmem:[#allocation14 + $0x1d0] sm:$0xff]
    %v3346 = vld [vmem:[#allocation14 + $0x1d8] sm:$0xff]
    %v3347 = vld [vmem:[#allocation14 + $0x1e0] sm:$0xff]
    %v3348 = vld [vmem:[#allocation14 + $0x1e8] sm:$0xff]
    %v3349 = vld [vmem:[#allocation14 + $0x1f0] sm:$0xff]
    %v3350 = vld [vmem:[#allocation14 + $0x1f8] sm:$0xff]
    %3351 = vmatprep.subr.mxu0 %v3348
    %3352 = vmatpush1.msra.mxu0 %v3347
    %3353 = vmatprep.subr.mxu0 %v3344
    %3354 = vmatpush1.msra.mxu0 %v3343
    %3355 = vmatprep.subr.mxu0 %v3340
    %3356 = vmatpush1.msra.mxu0 %v3339
    %3357 = vmatprep.subr.mxu0 %v3336
    %3358 = vmatpush1.msra.mxu0 %v3335
    %3359 = vmatprep.subr.mxu0 %v3332
    %3360 = vmatpush1.msra.mxu0 %v3331
    %3361 = vmatprep.subr.mxu0 %v3328
    %3362 = vmatpush1.msra.mxu0 %v3327
    %3363 = vmatprep.subr.mxu0 %v3324
    %3364 = vmatpush1.msra.mxu0 %v3323
    %3365 = vmatprep.subr.mxu0 %v3320
    %3366 = vmatpush1.msra.mxu0 %v3319
    %3367 = vmatprep.subr.mxu0 %v3316
    %3368 = vmatpush1.msra.mxu0 %v3315
    %3369 = vmatprep.subr.mxu0 %v3312
    %3370 = vmatpush1.msra.mxu0 %v3311
    %3371 = vmatprep.subr.mxu0 %v3308
    %3372 = vmatpush1.msra.mxu0 %v3307
    %3373 = vmatprep.subr.mxu0 %v3304
    %3374 = vmatpush1.msra.mxu0 %v3303
    %3375 = vmatprep.subr.mxu0 %v3300
    %3376 = vmatpush1.msra.mxu0 %v3299
    %3377 = vmatprep.subr.mxu0 %v3296
    %3378 = vmatpush1.msra.mxu0 %v3295
    %3379 = vmatprep.subr.mxu0 %v3292
    %3380 = vmatpush1.msra.mxu0 %v3291
    %3381 = vmatprep.subr.mxu0 %v3288
    %3382 = vmatpush1.msra.mxu0 %v3287
    %3383 = vmatprep.subr.mxu0 0.0
    %3384 = vmatpush2.msra.mxu0 0.0
    %3385 = vmatprep.subr.mxu0 0.0
    %3386 = vmatpush2.msra.mxu0 0.0
    %3387 = vmatprep.subr.mxu0 0.0
    %3388 = vmatpush2.msra.mxu0 0.0
    %3389 = vmatprep.subr.mxu0 0.0
    %3390 = vmatpush2.msra.mxu0 0.0
    %3391 = vmatprep.subr.mxu0 0.0
    %3392 = vmatpush2.msra.mxu0 0.0
    %3393 = vmatprep.subr.mxu0 0.0
    %3394 = vmatpush2.msra.mxu0 0.0
    %3395 = vmatprep.subr.mxu0 0.0
    %3396 = vmatpush2.msra.mxu0 0.0
    %3397 = vmatprep.subr.mxu0 0.0
    %3398 = vmatpush2.msra.mxu0 0.0
    %3399 = vmatprep.subr.mxu0 0.0
    %3400 = vmatpush2.msra.mxu0 0.0
    %3401 = vmatprep.subr.mxu0 0.0
    %3402 = vmatpush2.msra.mxu0 0.0
    %3403 = vmatprep.subr.mxu0 0.0
    %3404 = vmatpush2.msra.mxu0 0.0
    %3405 = vmatprep.subr.mxu0 0.0
    %3406 = vmatpush2.msra.mxu0 0.0
    %3407 = vmatprep.subr.mxu0 0.0
    %3408 = vmatpush2.msra.mxu0 0.0
    %3409 = vmatprep.subr.mxu0 0.0
    %3410 = vmatpush2.msra.mxu0 0.0
    %3411 = vmatprep.subr.mxu0 0.0
    %3412 = vmatpush2.msra.mxu0 0.0
    %3413 = vmatprep.subr.mxu0 0.0
    %3414 = vmatpush2.msra.mxu0 0.0
    %3415 = vmatprep.mubr.f32.mxu0 0.0
    %3416 = vmatmul.mubr.f32.gmra.mxu0 %v3286
    %v3417 = vpop.f32.mrf.mxu0
    %v3418 = vadd.f32 0.0, %v3417
    %v3419 = vpop.f32.mrf.mxu0
    %v3420 = vadd.f32 0.0, %v3419
    %3421 = vdwg.mxu0
    %3422 = vmatprep.subr.mxu0 %v3350
    %3423 = vmatpush1.msra.mxu0 %v3349
    %3424 = vmatprep.subr.mxu0 %v3346
    %3425 = vmatpush1.msra.mxu0 %v3345
    %3426 = vmatprep.subr.mxu0 %v3342
    %3427 = vmatpush1.msra.mxu0 %v3341
    %3428 = vmatprep.subr.mxu0 %v3338
    %3429 = vmatpush1.msra.mxu0 %v3337
    %3430 = vmatprep.subr.mxu0 %v3334
    %3431 = vmatpush1.msra.mxu0 %v3333
    %3432 = vmatprep.subr.mxu0 %v3330
    %3433 = vmatpush1.msra.mxu0 %v3329
    %3434 = vmatprep.subr.mxu0 %v3326
    %3435 = vmatpush1.msra.mxu0 %v3325
    %3436 = vmatprep.subr.mxu0 %v3322
    %3437 = vmatpush1.msra.mxu0 %v3321
    %3438 = vmatprep.subr.mxu0 %v3318
    %3439 = vmatpush1.msra.mxu0 %v3317
    %3440 = vmatprep.subr.mxu0 %v3314
    %3441 = vmatpush1.msra.mxu0 %v3313
    %3442 = vmatprep.subr.mxu0 %v3310
    %3443 = vmatpush1.msra.mxu0 %v3309
    %3444 = vmatprep.subr.mxu0 %v3306
    %3445 = vmatpush1.msra.mxu0 %v3305
    %3446 = vmatprep.subr.mxu0 %v3302
    %3447 = vmatpush1.msra.mxu0 %v3301
    %3448 = vmatprep.subr.mxu0 %v3298
    %3449 = vmatpush1.msra.mxu0 %v3297
    %3450 = vmatprep.subr.mxu0 %v3294
    %3451 = vmatpush1.msra.mxu0 %v3293
    %3452 = vmatprep.subr.mxu0 %v3290
    %3453 = vmatpush1.msra.mxu0 %v3289
    %3454 = vmatprep.subr.mxu0 0.0
    %3455 = vmatpush2.msra.mxu0 0.0
    %3456 = vmatprep.subr.mxu0 0.0
    %3457 = vmatpush2.msra.mxu0 0.0
    %3458 = vmatprep.subr.mxu0 0.0
    %3459 = vmatpush2.msra.mxu0 0.0
    %3460 = vmatprep.subr.mxu0 0.0
    %3461 = vmatpush2.msra.mxu0 0.0
    %3462 = vmatprep.subr.mxu0 0.0
    %3463 = vmatpush2.msra.mxu0 0.0
    %3464 = vmatprep.subr.mxu0 0.0
    %3465 = vmatpush2.msra.mxu0 0.0
    %3466 = vmatprep.subr.mxu0 0.0
    %3467 = vmatpush2.msra.mxu0 0.0
    %3468 = vmatprep.subr.mxu0 0.0
    %3469 = vmatpush2.msra.mxu0 0.0
    %3470 = vmatprep.subr.mxu0 0.0
    %3471 = vmatpush2.msra.mxu0 0.0
    %3472 = vmatprep.subr.mxu0 0.0
    %3473 = vmatpush2.msra.mxu0 0.0
    %3474 = vmatprep.subr.mxu0 0.0
    %3475 = vmatpush2.msra.mxu0 0.0
    %3476 = vmatprep.subr.mxu0 0.0
    %3477 = vmatpush2.msra.mxu0 0.0
    %3478 = vmatprep.subr.mxu0 0.0
    %3479 = vmatpush2.msra.mxu0 0.0
    %3480 = vmatprep.subr.mxu0 0.0
    %3481 = vmatpush2.msra.mxu0 0.0
    %3482 = vmatprep.subr.mxu0 0.0
    %3483 = vmatpush2.msra.mxu0 0.0
    %3484 = vmatprep.subr.mxu0 0.0
    %3485 = vmatpush2.msra.mxu0 0.0
    %3486 = vmatprep.mubr.f32.mxu0 0.0
    %3487 = vmatmul.mubr.f32.gmra.mxu0 %v3286
    %v3488 = vpop.f32.mrf.mxu0
    %v3489 = vadd.f32 0.0, %v3488
    %v3490 = vpop.f32.mrf.mxu0
    %v3491 = vadd.f32 0.0, %v3490
    %3492 = vdwg.mxu0
    %v3493 = vadd.f32 %v3282, %v3418
    %v3494 = vadd.f32 %v3283, %v3420
    %v3495 = vadd.f32 %v3284, %v3489
    %v3496 = vadd.f32 %v3285, %v3491
    %v3497 = vxor.u32 %v3493, 2147483648
    %v3498 = vxor.u32 %v3494, 2147483648
    %v3499 = vxor.u32 %v3495, 2147483648
    %v3500 = vmul.f32 %v3497, 1.442695
    %v3501 = vpow.pop %v3500
    %v3502 = vmul.f32 %v3498, 1.442695
    %v3503 = vpow.pop %v3502
    %v3504 = vmul.f32 %v3499, 1.442695
    %v3505 = vpow.pop %v3504
    %v3506 = vadd.f32 %v3501, 1.0
    %v3507 = vadd.f32 %v3503, 1.0
    %v3508 = vadd.f32 %v3505, 1.0
    %v3509 = vrcp.pop %v3506
    %v3510 = vmul.f32 1.0, %v3509
    %v3511 = vrcp.pop %v3507
    %v3512 = vmul.f32 1.0, %v3511
    %v3513 = vrcp.pop %v3508
    %v3514 = vmul.f32 1.0, %v3513
    %v3515 = vtanh.pop %v3496
    %v3516 = vld [vmem:[#allocation5] sm:$0xff]
    %v3517 = vmul.f32 %v3512, %v3516
    %v3518 = vmul.f32 %v3510, %v3515
    %v3519 = vadd.f32 %v3517, %v3518
    %v3520 = vtanh.pop %v3519
    %v3521 = vmul.f32 %v3514, %v3520
    %3522 = vst [vmem:[#allocation5] sm:$0xff] %v3519
    %3523 = vst [vmem:[#allocation4] sm:$0xff] %v3521
    %v3524 = vld [vmem:[%s1211] sm:$0xff]
    %v3525 = vld [vmem:[%s1211 + $0x8] sm:$0xff]
    %v3526 = vld [vmem:[%s1211 + $0x10] sm:$0xff]
    %v3527 = vld [vmem:[%s1211 + $0x18] sm:$0xff]
    %v3528 = vld [vmem:[#allocation4] sm:$0xff]
    %v3529 = vld [vmem:[#allocation14] sm:$0xff]
    %v3530 = vld [vmem:[#allocation14 + $0x8] sm:$0xff]
    %v3531 = vld [vmem:[#allocation14 + $0x10] sm:$0xff]
    %v3532 = vld [vmem:[#allocation14 + $0x18] sm:$0xff]
    %v3533 = vld [vmem:[#allocation14 + $0x20] sm:$0xff]
    %v3534 = vld [vmem:[#allocation14 + $0x28] sm:$0xff]
    %v3535 = vld [vmem:[#allocation14 + $0x30] sm:$0xff]
    %v3536 = vld [vmem:[#allocation14 + $0x38] sm:$0xff]
    %v3537 = vld [vmem:[#allocation14 + $0x40] sm:$0xff]
    %v3538 = vld [vmem:[#allocation14 + $0x48] sm:$0xff]
    %v3539 = vld [vmem:[#allocation14 + $0x50] sm:$0xff]
    %v3540 = vld [vmem:[#allocation14 + $0x58] sm:$0xff]
    %v3541 = vld [vmem:[#allocation14 + $0x60] sm:$0xff]
    %v3542 = vld [vmem:[#allocation14 + $0x68] sm:$0xff]
    %v3543 = vld [vmem:[#allocation14 + $0x70] sm:$0xff]
    %v3544 = vld [vmem:[#allocation14 + $0x78] sm:$0xff]
    %v3545 = vld [vmem:[#allocation14 + $0x80] sm:$0xff]
    %v3546 = vld [vmem:[#allocation14 + $0x88] sm:$0xff]
    %v3547 = vld [vmem:[#allocation14 + $0x90] sm:$0xff]
    %v3548 = vld [vmem:[#allocation14 + $0x98] sm:$0xff]
    %v3549 = vld [vmem:[#allocation14 + $0xa0] sm:$0xff]
    %v3550 = vld [vmem:[#allocation14 + $0xa8] sm:$0xff]
    %v3551 = vld [vmem:[#allocation14 + $0xb0] sm:$0xff]
    %v3552 = vld [vmem:[#allocation14 + $0xb8] sm:$0xff]
    %v3553 = vld [vmem:[#allocation14 + $0xc0] sm:$0xff]
    %v3554 = vld [vmem:[#allocation14 + $0xc8] sm:$0xff]
    %v3555 = vld [vmem:[#allocation14 + $0xd0] sm:$0xff]
    %v3556 = vld [vmem:[#allocation14 + $0xd8] sm:$0xff]
    %v3557 = vld [vmem:[#allocation14 + $0xe0] sm:$0xff]
    %v3558 = vld [vmem:[#allocation14 + $0xe8] sm:$0xff]
    %v3559 = vld [vmem:[#allocation14 + $0xf0] sm:$0xff]
    %v3560 = vld [vmem:[#allocation14 + $0xf8] sm:$0xff]
    %v3561 = vld [vmem:[#allocation14 + $0x100] sm:$0xff]
    %v3562 = vld [vmem:[#allocation14 + $0x108] sm:$0xff]
    %v3563 = vld [vmem:[#allocation14 + $0x110] sm:$0xff]
    %v3564 = vld [vmem:[#allocation14 + $0x118] sm:$0xff]
    %v3565 = vld [vmem:[#allocation14 + $0x120] sm:$0xff]
    %v3566 = vld [vmem:[#allocation14 + $0x128] sm:$0xff]
    %v3567 = vld [vmem:[#allocation14 + $0x130] sm:$0xff]
    %v3568 = vld [vmem:[#allocation14 + $0x138] sm:$0xff]
    %v3569 = vld [vmem:[#allocation14 + $0x140] sm:$0xff]
    %v3570 = vld [vmem:[#allocation14 + $0x148] sm:$0xff]
    %v3571 = vld [vmem:[#allocation14 + $0x150] sm:$0xff]
    %v3572 = vld [vmem:[#allocation14 + $0x158] sm:$0xff]
    %v3573 = vld [vmem:[#allocation14 + $0x160] sm:$0xff]
    %v3574 = vld [vmem:[#allocation14 + $0x168] sm:$0xff]
    %v3575 = vld [vmem:[#allocation14 + $0x170] sm:$0xff]
    %v3576 = vld [vmem:[#allocation14 + $0x178] sm:$0xff]
    %v3577 = vld [vmem:[#allocation14 + $0x180] sm:$0xff]
    %v3578 = vld [vmem:[#allocation14 + $0x188] sm:$0xff]
    %v3579 = vld [vmem:[#allocation14 + $0x190] sm:$0xff]
    %v3580 = vld [vmem:[#allocation14 + $0x198] sm:$0xff]
    %v3581 = vld [vmem:[#allocation14 + $0x1a0] sm:$0xff]
    %v3582 = vld [vmem:[#allocation14 + $0x1a8] sm:$0xff]
    %v3583 = vld [vmem:[#allocation14 + $0x1b0] sm:$0xff]
    %v3584 = vld [vmem:[#allocation14 + $0x1b8] sm:$0xff]
    %v3585 = vld [vmem:[#allocation14 + $0x1c0] sm:$0xff]
    %v3586 = vld [vmem:[#allocation14 + $0x1c8] sm:$0xff]
    %v3587 = vld [vmem:[#allocation14 + $0x1d0] sm:$0xff]
    %v3588 = vld [vmem:[#allocation14 + $0x1d8] sm:$0xff]
    %v3589 = vld [vmem:[#allocation14 + $0x1e0] sm:$0xff]
    %v3590 = vld [vmem:[#allocation14 + $0x1e8] sm:$0xff]
    %v3591 = vld [vmem:[#allocation14 + $0x1f0] sm:$0xff]
    %v3592 = vld [vmem:[#allocation14 + $0x1f8] sm:$0xff]
    %3593 = vmatprep.subr.mxu0 %v3590
    %3594 = vmatpush1.msra.mxu0 %v3589
    %3595 = vmatprep.subr.mxu0 %v3586
    %3596 = vmatpush1.msra.mxu0 %v3585
    %3597 = vmatprep.subr.mxu0 %v3582
    %3598 = vmatpush1.msra.mxu0 %v3581
    %3599 = vmatprep.subr.mxu0 %v3578
    %3600 = vmatpush1.msra.mxu0 %v3577
    %3601 = vmatprep.subr.mxu0 %v3574
    %3602 = vmatpush1.msra.mxu0 %v3573
    %3603 = vmatprep.subr.mxu0 %v3570
    %3604 = vmatpush1.msra.mxu0 %v3569
    %3605 = vmatprep.subr.mxu0 %v3566
    %3606 = vmatpush1.msra.mxu0 %v3565
    %3607 = vmatprep.subr.mxu0 %v3562
    %3608 = vmatpush1.msra.mxu0 %v3561
    %3609 = vmatprep.subr.mxu0 %v3558
    %3610 = vmatpush1.msra.mxu0 %v3557
    %3611 = vmatprep.subr.mxu0 %v3554
    %3612 = vmatpush1.msra.mxu0 %v3553
    %3613 = vmatprep.subr.mxu0 %v3550
    %3614 = vmatpush1.msra.mxu0 %v3549
    %3615 = vmatprep.subr.mxu0 %v3546
    %3616 = vmatpush1.msra.mxu0 %v3545
    %3617 = vmatprep.subr.mxu0 %v3542
    %3618 = vmatpush1.msra.mxu0 %v3541
    %3619 = vmatprep.subr.mxu0 %v3538
    %3620 = vmatpush1.msra.mxu0 %v3537
    %3621 = vmatprep.subr.mxu0 %v3534
    %3622 = vmatpush1.msra.mxu0 %v3533
    %3623 = vmatprep.subr.mxu0 %v3530
    %3624 = vmatpush1.msra.mxu0 %v3529
    %3625 = vmatprep.subr.mxu0 0.0
    %3626 = vmatpush2.msra.mxu0 0.0
    %3627 = vmatprep.subr.mxu0 0.0
    %3628 = vmatpush2.msra.mxu0 0.0
    %3629 = vmatprep.subr.mxu0 0.0
    %3630 = vmatpush2.msra.mxu0 0.0
    %3631 = vmatprep.subr.mxu0 0.0
    %3632 = vmatpush2.msra.mxu0 0.0
    %3633 = vmatprep.subr.mxu0 0.0
    %3634 = vmatpush2.msra.mxu0 0.0
    %3635 = vmatprep.subr.mxu0 0.0
    %3636 = vmatpush2.msra.mxu0 0.0
    %3637 = vmatprep.subr.mxu0 0.0
    %3638 = vmatpush2.msra.mxu0 0.0
    %3639 = vmatprep.subr.mxu0 0.0
    %3640 = vmatpush2.msra.mxu0 0.0
    %3641 = vmatprep.subr.mxu0 0.0
    %3642 = vmatpush2.msra.mxu0 0.0
    %3643 = vmatprep.subr.mxu0 0.0
    %3644 = vmatpush2.msra.mxu0 0.0
    %3645 = vmatprep.subr.mxu0 0.0
    %3646 = vmatpush2.msra.mxu0 0.0
    %3647 = vmatprep.subr.mxu0 0.0
    %3648 = vmatpush2.msra.mxu0 0.0
    %3649 = vmatprep.subr.mxu0 0.0
    %3650 = vmatpush2.msra.mxu0 0.0
    %3651 = vmatprep.subr.mxu0 0.0
    %3652 = vmatpush2.msra.mxu0 0.0
    %3653 = vmatprep.subr.mxu0 0.0
    %3654 = vmatpush2.msra.mxu0 0.0
    %3655 = vmatprep.subr.mxu0 0.0
    %3656 = vmatpush2.msra.mxu0 0.0
    %3657 = vmatprep.mubr.f32.mxu0 0.0
    %3658 = vmatmul.mubr.f32.gmra.mxu0 %v3528
    %v3659 = vpop.f32.mrf.mxu0
    %v3660 = vadd.f32 0.0, %v3659
    %v3661 = vpop.f32.mrf.mxu0
    %v3662 = vadd.f32 0.0, %v3661
    %3663 = vdwg.mxu0
    %3664 = vmatprep.subr.mxu0 %v3592
    %3665 = vmatpush1.msra.mxu0 %v3591
    %3666 = vmatprep.subr.mxu0 %v3588
    %3667 = vmatpush1.msra.mxu0 %v3587
    %3668 = vmatprep.subr.mxu0 %v3584
    %3669 = vmatpush1.msra.mxu0 %v3583
    %3670 = vmatprep.subr.mxu0 %v3580
    %3671 = vmatpush1.msra.mxu0 %v3579
    %3672 = vmatprep.subr.mxu0 %v3576
    %3673 = vmatpush1.msra.mxu0 %v3575
    %3674 = vmatprep.subr.mxu0 %v3572
    %3675 = vmatpush1.msra.mxu0 %v3571
    %3676 = vmatprep.subr.mxu0 %v3568
    %3677 = vmatpush1.msra.mxu0 %v3567
    %3678 = vmatprep.subr.mxu0 %v3564
    %3679 = vmatpush1.msra.mxu0 %v3563
    %3680 = vmatprep.subr.mxu0 %v3560
    %3681 = vmatpush1.msra.mxu0 %v3559
    %3682 = vmatprep.subr.mxu0 %v3556
    %3683 = vmatpush1.msra.mxu0 %v3555
    %3684 = vmatprep.subr.mxu0 %v3552
    %3685 = vmatpush1.msra.mxu0 %v3551
    %3686 = vmatprep.subr.mxu0 %v3548
    %3687 = vmatpush1.msra.mxu0 %v3547
    %3688 = vmatprep.subr.mxu0 %v3544
    %3689 = vmatpush1.msra.mxu0 %v3543
    %3690 = vmatprep.subr.mxu0 %v3540
    %3691 = vmatpush1.msra.mxu0 %v3539
    %3692 = vmatprep.subr.mxu0 %v3536
    %3693 = vmatpush1.msra.mxu0 %v3535
    %3694 = vmatprep.subr.mxu0 %v3532
    %3695 = vmatpush1.msra.mxu0 %v3531
    %3696 = vmatprep.subr.mxu0 0.0
    %3697 = vmatpush2.msra.mxu0 0.0
    %3698 = vmatprep.subr.mxu0 0.0
    %3699 = vmatpush2.msra.mxu0 0.0
    %3700 = vmatprep.subr.mxu0 0.0
    %3701 = vmatpush2.msra.mxu0 0.0
    %3702 = vmatprep.subr.mxu0 0.0
    %3703 = vmatpush2.msra.mxu0 0.0
    %3704 = vmatprep.subr.mxu0 0.0
    %3705 = vmatpush2.msra.mxu0 0.0
    %3706 = vmatprep.subr.mxu0 0.0
    %3707 = vmatpush2.msra.mxu0 0.0
    %3708 = vmatprep.subr.mxu0 0.0
    %3709 = vmatpush2.msra.mxu0 0.0
    %3710 = vmatprep.subr.mxu0 0.0
    %3711 = vmatpush2.msra.mxu0 0.0
    %3712 = vmatprep.subr.mxu0 0.0
    %3713 = vmatpush2.msra.mxu0 0.0
    %3714 = vmatprep.subr.mxu0 0.0
    %3715 = vmatpush2.msra.mxu0 0.0
    %3716 = vmatprep.subr.mxu0 0.0
    %3717 = vmatpush2.msra.mxu0 0.0
    %3718 = vmatprep.subr.mxu0 0.0
    %3719 = vmatpush2.msra.mxu0 0.0
    %3720 = vmatprep.subr.mxu0 0.0
    %3721 = vmatpush2.msra.mxu0 0.0
    %3722 = vmatprep.subr.mxu0 0.0
    %3723 = vmatpush2.msra.mxu0 0.0
    %3724 = vmatprep.subr.mxu0 0.0
    %3725 = vmatpush2.msra.mxu0 0.0
    %3726 = vmatprep.subr.mxu0 0.0
    %3727 = vmatpush2.msra.mxu0 0.0
    %3728 = vmatprep.mubr.f32.mxu0 0.0
    %3729 = vmatmul.mubr.f32.gmra.mxu0 %v3528
    %v3730 = vpop.f32.mrf.mxu0
    %v3731 = vadd.f32 0.0, %v3730
    %v3732 = vpop.f32.mrf.mxu0
    %v3733 = vadd.f32 0.0, %v3732
    %3734 = vdwg.mxu0
    %v3735 = vadd.f32 %v3524, %v3660
    %v3736 = vadd.f32 %v3525, %v3662
    %v3737 = vadd.f32 %v3526, %v3731
    %v3738 = vadd.f32 %v3527, %v3733
    %v3739 = vxor.u32 %v3735, 2147483648
    %v3740 = vxor.u32 %v3736, 2147483648
    %v3741 = vxor.u32 %v3737, 2147483648
    %v3742 = vmul.f32 %v3739, 1.442695
    %v3743 = vpow.pop %v3742
    %v3744 = vmul.f32 %v3740, 1.442695
    %v3745 = vpow.pop %v3744
    %v3746 = vmul.f32 %v3741, 1.442695
    %v3747 = vpow.pop %v3746
    %v3748 = vadd.f32 %v3743, 1.0
    %v3749 = vadd.f32 %v3745, 1.0
    %v3750 = vadd.f32 %v3747, 1.0
    %v3751 = vrcp.pop %v3748
    %v3752 = vmul.f32 1.0, %v3751
    %v3753 = vrcp.pop %v3749
    %v3754 = vmul.f32 1.0, %v3753
    %v3755 = vrcp.pop %v3750
    %v3756 = vmul.f32 1.0, %v3755
    %v3757 = vtanh.pop %v3738
    %v3758 = vld [vmem:[#allocation5] sm:$0xff]
    %v3759 = vmul.f32 %v3754, %v3758
    %v3760 = vmul.f32 %v3752, %v3757
    %v3761 = vadd.f32 %v3759, %v3760
    %v3762 = vtanh.pop %v3761
    %v3763 = vmul.f32 %v3756, %v3762
    %3764 = vst [vmem:[#allocation5] sm:$0xff] %v3761
    %3765 = vst [vmem:[#allocation4] sm:$0xff] %v3763
    %v3766 = vld [vmem:[%s1458] sm:$0xff]
    %v3767 = vld [vmem:[%s1458 + $0x8] sm:$0xff]
    %v3768 = vld [vmem:[%s1458 + $0x10] sm:$0xff]
    %v3769 = vld [vmem:[%s1458 + $0x18] sm:$0xff]
    %v3770 = vld [vmem:[#allocation4] sm:$0xff]
    %v3771 = vld [vmem:[#allocation14] sm:$0xff]
    %v3772 = vld [vmem:[#allocation14 + $0x8] sm:$0xff]
    %v3773 = vld [vmem:[#allocation14 + $0x10] sm:$0xff]
    %v3774 = vld [vmem:[#allocation14 + $0x18] sm:$0xff]
    %v3775 = vld [vmem:[#allocation14 + $0x20] sm:$0xff]
    %v3776 = vld [vmem:[#allocation14 + $0x28] sm:$0xff]
    %v3777 = vld [vmem:[#allocation14 + $0x30] sm:$0xff]
    %v3778 = vld [vmem:[#allocation14 + $0x38] sm:$0xff]
    %v3779 = vld [vmem:[#allocation14 + $0x40] sm:$0xff]
    %v3780 = vld [vmem:[#allocation14 + $0x48] sm:$0xff]
    %v3781 = vld [vmem:[#allocation14 + $0x50] sm:$0xff]
    %v3782 = vld [vmem:[#allocation14 + $0x58] sm:$0xff]
    %v3783 = vld [vmem:[#allocation14 + $0x60] sm:$0xff]
    %v3784 = vld [vmem:[#allocation14 + $0x68] sm:$0xff]
    %v3785 = vld [vmem:[#allocation14 + $0x70] sm:$0xff]
    %v3786 = vld [vmem:[#allocation14 + $0x78] sm:$0xff]
    %v3787 = vld [vmem:[#allocation14 + $0x80] sm:$0xff]
    %v3788 = vld [vmem:[#allocation14 + $0x88] sm:$0xff]
    %v3789 = vld [vmem:[#allocation14 + $0x90] sm:$0xff]
    %v3790 = vld [vmem:[#allocation14 + $0x98] sm:$0xff]
    %v3791 = vld [vmem:[#allocation14 + $0xa0] sm:$0xff]
    %v3792 = vld [vmem:[#allocation14 + $0xa8] sm:$0xff]
    %v3793 = vld [vmem:[#allocation14 + $0xb0] sm:$0xff]
    %v3794 = vld [vmem:[#allocation14 + $0xb8] sm:$0xff]
    %v3795 = vld [vmem:[#allocation14 + $0xc0] sm:$0xff]
    %v3796 = vld [vmem:[#allocation14 + $0xc8] sm:$0xff]
    %v3797 = vld [vmem:[#allocation14 + $0xd0] sm:$0xff]
    %v3798 = vld [vmem:[#allocation14 + $0xd8] sm:$0xff]
    %v3799 = vld [vmem:[#allocation14 + $0xe0] sm:$0xff]
    %v3800 = vld [vmem:[#allocation14 + $0xe8] sm:$0xff]
    %v3801 = vld [vmem:[#allocation14 + $0xf0] sm:$0xff]
    %v3802 = vld [vmem:[#allocation14 + $0xf8] sm:$0xff]
    %v3803 = vld [vmem:[#allocation14 + $0x100] sm:$0xff]
    %v3804 = vld [vmem:[#allocation14 + $0x108] sm:$0xff]
    %v3805 = vld [vmem:[#allocation14 + $0x110] sm:$0xff]
    %v3806 = vld [vmem:[#allocation14 + $0x118] sm:$0xff]
    %v3807 = vld [vmem:[#allocation14 + $0x120] sm:$0xff]
    %v3808 = vld [vmem:[#allocation14 + $0x128] sm:$0xff]
    %v3809 = vld [vmem:[#allocation14 + $0x130] sm:$0xff]
    %v3810 = vld [vmem:[#allocation14 + $0x138] sm:$0xff]
    %v3811 = vld [vmem:[#allocation14 + $0x140] sm:$0xff]
    %v3812 = vld [vmem:[#allocation14 + $0x148] sm:$0xff]
    %v3813 = vld [vmem:[#allocation14 + $0x150] sm:$0xff]
    %v3814 = vld [vmem:[#allocation14 + $0x158] sm:$0xff]
    %v3815 = vld [vmem:[#allocation14 + $0x160] sm:$0xff]
    %v3816 = vld [vmem:[#allocation14 + $0x168] sm:$0xff]
    %v3817 = vld [vmem:[#allocation14 + $0x170] sm:$0xff]
    %v3818 = vld [vmem:[#allocation14 + $0x178] sm:$0xff]
    %v3819 = vld [vmem:[#allocation14 + $0x180] sm:$0xff]
    %v3820 = vld [vmem:[#allocation14 + $0x188] sm:$0xff]
    %v3821 = vld [vmem:[#allocation14 + $0x190] sm:$0xff]
    %v3822 = vld [vmem:[#allocation14 + $0x198] sm:$0xff]
    %v3823 = vld [vmem:[#allocation14 + $0x1a0] sm:$0xff]
    %v3824 = vld [vmem:[#allocation14 + $0x1a8] sm:$0xff]
    %v3825 = vld [vmem:[#allocation14 + $0x1b0] sm:$0xff]
    %v3826 = vld [vmem:[#allocation14 + $0x1b8] sm:$0xff]
    %v3827 = vld [vmem:[#allocation14 + $0x1c0] sm:$0xff]
    %v3828 = vld [vmem:[#allocation14 + $0x1c8] sm:$0xff]
    %v3829 = vld [vmem:[#allocation14 + $0x1d0] sm:$0xff]
    %v3830 = vld [vmem:[#allocation14 + $0x1d8] sm:$0xff]
    %v3831 = vld [vmem:[#allocation14 + $0x1e0] sm:$0xff]
    %v3832 = vld [vmem:[#allocation14 + $0x1e8] sm:$0xff]
    %v3833 = vld [vmem:[#allocation14 + $0x1f0] sm:$0xff]
    %v3834 = vld [vmem:[#allocation14 + $0x1f8] sm:$0xff]
    %3835 = vmatprep.subr.mxu0 %v3832
    %3836 = vmatpush1.msra.mxu0 %v3831
    %3837 = vmatprep.subr.mxu0 %v3828
    %3838 = vmatpush1.msra.mxu0 %v3827
    %3839 = vmatprep.subr.mxu0 %v3824
    %3840 = vmatpush1.msra.mxu0 %v3823
    %3841 = vmatprep.subr.mxu0 %v3820
    %3842 = vmatpush1.msra.mxu0 %v3819
    %3843 = vmatprep.subr.mxu0 %v3816
    %3844 = vmatpush1.msra.mxu0 %v3815
    %3845 = vmatprep.subr.mxu0 %v3812
    %3846 = vmatpush1.msra.mxu0 %v3811
    %3847 = vmatprep.subr.mxu0 %v3808
    %3848 = vmatpush1.msra.mxu0 %v3807
    %3849 = vmatprep.subr.mxu0 %v3804
    %3850 = vmatpush1.msra.mxu0 %v3803
    %3851 = vmatprep.subr.mxu0 %v3800
    %3852 = vmatpush1.msra.mxu0 %v3799
    %3853 = vmatprep.subr.mxu0 %v3796
    %3854 = vmatpush1.msra.mxu0 %v3795
    %3855 = vmatprep.subr.mxu0 %v3792
    %3856 = vmatpush1.msra.mxu0 %v3791
    %3857 = vmatprep.subr.mxu0 %v3788
    %3858 = vmatpush1.msra.mxu0 %v3787
    %3859 = vmatprep.subr.mxu0 %v3784
    %3860 = vmatpush1.msra.mxu0 %v3783
    %3861 = vmatprep.subr.mxu0 %v3780
    %3862 = vmatpush1.msra.mxu0 %v3779
    %3863 = vmatprep.subr.mxu0 %v3776
    %3864 = vmatpush1.msra.mxu0 %v3775
    %3865 = vmatprep.subr.mxu0 %v3772
    %3866 = vmatpush1.msra.mxu0 %v3771
    %3867 = vmatprep.subr.mxu0 0.0
    %3868 = vmatpush2.msra.mxu0 0.0
    %3869 = vmatprep.subr.mxu0 0.0
    %3870 = vmatpush2.msra.mxu0 0.0
    %3871 = vmatprep.subr.mxu0 0.0
    %3872 = vmatpush2.msra.mxu0 0.0
    %3873 = vmatprep.subr.mxu0 0.0
    %3874 = vmatpush2.msra.mxu0 0.0
    %3875 = vmatprep.subr.mxu0 0.0
    %3876 = vmatpush2.msra.mxu0 0.0
    %3877 = vmatprep.subr.mxu0 0.0
    %3878 = vmatpush2.msra.mxu0 0.0
    %3879 = vmatprep.subr.mxu0 0.0
    %3880 = vmatpush2.msra.mxu0 0.0
    %3881 = vmatprep.subr.mxu0 0.0
    %3882 = vmatpush2.msra.mxu0 0.0
    %3883 = vmatprep.subr.mxu0 0.0
    %3884 = vmatpush2.msra.mxu0 0.0
    %3885 = vmatprep.subr.mxu0 0.0
    %3886 = vmatpush2.msra.mxu0 0.0
    %3887 = vmatprep.subr.mxu0 0.0
    %3888 = vmatpush2.msra.mxu0 0.0
    %3889 = vmatprep.subr.mxu0 0.0
    %3890 = vmatpush2.msra.mxu0 0.0
    %3891 = vmatprep.subr.mxu0 0.0
    %3892 = vmatpush2.msra.mxu0 0.0
    %3893 = vmatprep.subr.mxu0 0.0
    %3894 = vmatpush2.msra.mxu0 0.0
    %3895 = vmatprep.subr.mxu0 0.0
    %3896 = vmatpush2.msra.mxu0 0.0
    %3897 = vmatprep.subr.mxu0 0.0
    %3898 = vmatpush2.msra.mxu0 0.0
    %3899 = vmatprep.mubr.f32.mxu0 0.0
    %3900 = vmatmul.mubr.f32.gmra.mxu0 %v3770
    %v3901 = vpop.f32.mrf.mxu0
    %v3902 = vadd.f32 0.0, %v3901
    %v3903 = vpop.f32.mrf.mxu0
    %v3904 = vadd.f32 0.0, %v3903
    %3905 = vdwg.mxu0
    %3906 = vmatprep.subr.mxu0 %v3834
    %3907 = vmatpush1.msra.mxu0 %v3833
    %3908 = vmatprep.subr.mxu0 %v3830
    %3909 = vmatpush1.msra.mxu0 %v3829
    %3910 = vmatprep.subr.mxu0 %v3826
    %3911 = vmatpush1.msra.mxu0 %v3825
    %3912 = vmatprep.subr.mxu0 %v3822
    %3913 = vmatpush1.msra.mxu0 %v3821
    %3914 = vmatprep.subr.mxu0 %v3818
    %3915 = vmatpush1.msra.mxu0 %v3817
    %3916 = vmatprep.subr.mxu0 %v3814
    %3917 = vmatpush1.msra.mxu0 %v3813
    %3918 = vmatprep.subr.mxu0 %v3810
    %3919 = vmatpush1.msra.mxu0 %v3809
    %3920 = vmatprep.subr.mxu0 %v3806
    %3921 = vmatpush1.msra.mxu0 %v3805
    %3922 = vmatprep.subr.mxu0 %v3802
    %3923 = vmatpush1.msra.mxu0 %v3801
    %3924 = vmatprep.subr.mxu0 %v3798
    %3925 = vmatpush1.msra.mxu0 %v3797
    %3926 = vmatprep.subr.mxu0 %v3794
    %3927 = vmatpush1.msra.mxu0 %v3793
    %3928 = vmatprep.subr.mxu0 %v3790
    %3929 = vmatpush1.msra.mxu0 %v3789
    %3930 = vmatprep.subr.mxu0 %v3786
    %3931 = vmatpush1.msra.mxu0 %v3785
    %3932 = vmatprep.subr.mxu0 %v3782
    %3933 = vmatpush1.msra.mxu0 %v3781
    %3934 = vmatprep.subr.mxu0 %v3778
    %3935 = vmatpush1.msra.mxu0 %v3777
    %3936 = vmatprep.subr.mxu0 %v3774
    %3937 = vmatpush1.msra.mxu0 %v3773
    %3938 = vmatprep.subr.mxu0 0.0
    %3939 = vmatpush2.msra.mxu0 0.0
    %3940 = vmatprep.subr.mxu0 0.0
    %3941 = vmatpush2.msra.mxu0 0.0
    %3942 = vmatprep.subr.mxu0 0.0
    %3943 = vmatpush2.msra.mxu0 0.0
    %3944 = vmatprep.subr.mxu0 0.0
    %3945 = vmatpush2.msra.mxu0 0.0
    %3946 = vmatprep.subr.mxu0 0.0
    %3947 = vmatpush2.msra.mxu0 0.0
    %3948 = vmatprep.subr.mxu0 0.0
    %3949 = vmatpush2.msra.mxu0 0.0
    %3950 = vmatprep.subr.mxu0 0.0
    %3951 = vmatpush2.msra.mxu0 0.0
    %3952 = vmatprep.subr.mxu0 0.0
    %3953 = vmatpush2.msra.mxu0 0.0
    %3954 = vmatprep.subr.mxu0 0.0
    %3955 = vmatpush2.msra.mxu0 0.0
    %3956 = vmatprep.subr.mxu0 0.0
    %3957 = vmatpush2.msra.mxu0 0.0
    %3958 = vmatprep.subr.mxu0 0.0
    %3959 = vmatpush2.msra.mxu0 0.0
    %3960 = vmatprep.subr.mxu0 0.0
    %3961 = vmatpush2.msra.mxu0 0.0
    %3962 = vmatprep.subr.mxu0 0.0
    %3963 = vmatpush2.msra.mxu0 0.0
    %3964 = vmatprep.subr.mxu0 0.0
    %3965 = vmatpush2.msra.mxu0 0.0
    %3966 = vmatprep.subr.mxu0 0.0
    %3967 = vmatpush2.msra.mxu0 0.0
    %3968 = vmatprep.subr.mxu0 0.0
    %3969 = vmatpush2.msra.mxu0 0.0
    %3970 = vmatprep.mubr.f32.mxu0 0.0
    %3971 = vmatmul.mubr.f32.gmra.mxu0 %v3770
    %v3972 = vpop.f32.mrf.mxu0
    %v3973 = vadd.f32 0.0, %v3972
    %v3974 = vpop.f32.mrf.mxu0
    %v3975 = vadd.f32 0.0, %v3974
    %3976 = vdwg.mxu0
    %v3977 = vadd.f32 %v3766, %v3902
    %v3978 = vadd.f32 %v3767, %v3904
    %v3979 = vadd.f32 %v3768, %v3973
    %v3980 = vadd.f32 %v3769, %v3975
    %v3981 = vxor.u32 %v3977, 2147483648
    %v3982 = vxor.u32 %v3978, 2147483648
    %v3983 = vxor.u32 %v3979, 2147483648
    %v3984 = vmul.f32 %v3981, 1.442695
    %v3985 = vpow.pop %v3984
    %v3986 = vmul.f32 %v3982, 1.442695
    %v3987 = vpow.pop %v3986
    %v3988 = vmul.f32 %v3983, 1.442695
    %v3989 = vpow.pop %v3988
    %v3990 = vadd.f32 %v3985, 1.0
    %v3991 = vadd.f32 %v3987, 1.0
    %v3992 = vadd.f32 %v3989, 1.0
    %v3993 = vrcp.pop %v3990
    %v3994 = vmul.f32 1.0, %v3993
    %v3995 = vrcp.pop %v3991
    %v3996 = vmul.f32 1.0, %v3995
    %v3997 = vrcp.pop %v3992
    %v3998 = vmul.f32 1.0, %v3997
    %v3999 = vtanh.pop %v3980
    %v4000 = vld [vmem:[#allocation5] sm:$0xff]
    %v4001 = vmul.f32 %v3996, %v4000
    %v4002 = vmul.f32 %v3994, %v3999
    %v4003 = vadd.f32 %v4001, %v4002
    %v4004 = vtanh.pop %v4003
    %v4005 = vmul.f32 %v3998, %v4004
    %4006 = vst [vmem:[#allocation5] sm:$0xff] %v4003
    %4007 = vst [vmem:[#allocation4] sm:$0xff] %v4005
    %v4008 = vld [vmem:[%s1705] sm:$0xff]
    %v4009 = vld [vmem:[%s1705 + $0x8] sm:$0xff]
    %v4010 = vld [vmem:[%s1705 + $0x10] sm:$0xff]
    %v4011 = vld [vmem:[%s1705 + $0x18] sm:$0xff]
    %v4012 = vld [vmem:[#allocation4] sm:$0xff]
    %v4013 = vld [vmem:[#allocation14] sm:$0xff]
    %v4014 = vld [vmem:[#allocation14 + $0x8] sm:$0xff]
    %v4015 = vld [vmem:[#allocation14 + $0x10] sm:$0xff]
    %v4016 = vld [vmem:[#allocation14 + $0x18] sm:$0xff]
    %v4017 = vld [vmem:[#allocation14 + $0x20] sm:$0xff]
    %v4018 = vld [vmem:[#allocation14 + $0x28] sm:$0xff]
    %v4019 = vld [vmem:[#allocation14 + $0x30] sm:$0xff]
    %v4020 = vld [vmem:[#allocation14 + $0x38] sm:$0xff]
    %v4021 = vld [vmem:[#allocation14 + $0x40] sm:$0xff]
    %v4022 = vld [vmem:[#allocation14 + $0x48] sm:$0xff]
    %v4023 = vld [vmem:[#allocation14 + $0x50] sm:$0xff]
    %v4024 = vld [vmem:[#allocation14 + $0x58] sm:$0xff]
    %v4025 = vld [vmem:[#allocation14 + $0x60] sm:$0xff]
    %v4026 = vld [vmem:[#allocation14 + $0x68] sm:$0xff]
    %v4027 = vld [vmem:[#allocation14 + $0x70] sm:$0xff]
    %v4028 = vld [vmem:[#allocation14 + $0x78] sm:$0xff]
    %v4029 = vld [vmem:[#allocation14 + $0x80] sm:$0xff]
    %v4030 = vld [vmem:[#allocation14 + $0x88] sm:$0xff]
    %v4031 = vld [vmem:[#allocation14 + $0x90] sm:$0xff]
    %v4032 = vld [vmem:[#allocation14 + $0x98] sm:$0xff]
    %v4033 = vld [vmem:[#allocation14 + $0xa0] sm:$0xff]
    %v4034 = vld [vmem:[#allocation14 + $0xa8] sm:$0xff]
    %v4035 = vld [vmem:[#allocation14 + $0xb0] sm:$0xff]
    %v4036 = vld [vmem:[#allocation14 + $0xb8] sm:$0xff]
    %v4037 = vld [vmem:[#allocation14 + $0xc0] sm:$0xff]
    %v4038 = vld [vmem:[#allocation14 + $0xc8] sm:$0xff]
    %v4039 = vld [vmem:[#allocation14 + $0xd0] sm:$0xff]
    %v4040 = vld [vmem:[#allocation14 + $0xd8] sm:$0xff]
    %v4041 = vld [vmem:[#allocation14 + $0xe0] sm:$0xff]
    %v4042 = vld [vmem:[#allocation14 + $0xe8] sm:$0xff]
    %v4043 = vld [vmem:[#allocation14 + $0xf0] sm:$0xff]
    %v4044 = vld [vmem:[#allocation14 + $0xf8] sm:$0xff]
    %v4045 = vld [vmem:[#allocation14 + $0x100] sm:$0xff]
    %v4046 = vld [vmem:[#allocation14 + $0x108] sm:$0xff]
    %v4047 = vld [vmem:[#allocation14 + $0x110] sm:$0xff]
    %v4048 = vld [vmem:[#allocation14 + $0x118] sm:$0xff]
    %v4049 = vld [vmem:[#allocation14 + $0x120] sm:$0xff]
    %v4050 = vld [vmem:[#allocation14 + $0x128] sm:$0xff]
    %v4051 = vld [vmem:[#allocation14 + $0x130] sm:$0xff]
    %v4052 = vld [vmem:[#allocation14 + $0x138] sm:$0xff]
    %v4053 = vld [vmem:[#allocation14 + $0x140] sm:$0xff]
    %v4054 = vld [vmem:[#allocation14 + $0x148] sm:$0xff]
    %v4055 = vld [vmem:[#allocation14 + $0x150] sm:$0xff]
    %v4056 = vld [vmem:[#allocation14 + $0x158] sm:$0xff]
    %v4057 = vld [vmem:[#allocation14 + $0x160] sm:$0xff]
    %v4058 = vld [vmem:[#allocation14 + $0x168] sm:$0xff]
    %v4059 = vld [vmem:[#allocation14 + $0x170] sm:$0xff]
    %v4060 = vld [vmem:[#allocation14 + $0x178] sm:$0xff]
    %v4061 = vld [vmem:[#allocation14 + $0x180] sm:$0xff]
    %v4062 = vld [vmem:[#allocation14 + $0x188] sm:$0xff]
    %v4063 = vld [vmem:[#allocation14 + $0x190] sm:$0xff]
    %v4064 = vld [vmem:[#allocation14 + $0x198] sm:$0xff]
    %v4065 = vld [vmem:[#allocation14 + $0x1a0] sm:$0xff]
    %v4066 = vld [vmem:[#allocation14 + $0x1a8] sm:$0xff]
    %v4067 = vld [vmem:[#allocation14 + $0x1b0] sm:$0xff]
    %v4068 = vld [vmem:[#allocation14 + $0x1b8] sm:$0xff]
    %v4069 = vld [vmem:[#allocation14 + $0x1c0] sm:$0xff]
    %v4070 = vld [vmem:[#allocation14 + $0x1c8] sm:$0xff]
    %v4071 = vld [vmem:[#allocation14 + $0x1d0] sm:$0xff]
    %v4072 = vld [vmem:[#allocation14 + $0x1d8] sm:$0xff]
    %v4073 = vld [vmem:[#allocation14 + $0x1e0] sm:$0xff]
    %v4074 = vld [vmem:[#allocation14 + $0x1e8] sm:$0xff]
    %v4075 = vld [vmem:[#allocation14 + $0x1f0] sm:$0xff]
    %v4076 = vld [vmem:[#allocation14 + $0x1f8] sm:$0xff]
    %4077 = vmatprep.subr.mxu0 %v4074
    %4078 = vmatpush1.msra.mxu0 %v4073
    %4079 = vmatprep.subr.mxu0 %v4070
    %4080 = vmatpush1.msra.mxu0 %v4069
    %4081 = vmatprep.subr.mxu0 %v4066
    %4082 = vmatpush1.msra.mxu0 %v4065
    %4083 = vmatprep.subr.mxu0 %v4062
    %4084 = vmatpush1.msra.mxu0 %v4061
    %4085 = vmatprep.subr.mxu0 %v4058
    %4086 = vmatpush1.msra.mxu0 %v4057
    %4087 = vmatprep.subr.mxu0 %v4054
    %4088 = vmatpush1.msra.mxu0 %v4053
    %4089 = vmatprep.subr.mxu0 %v4050
    %4090 = vmatpush1.msra.mxu0 %v4049
    %4091 = vmatprep.subr.mxu0 %v4046
    %4092 = vmatpush1.msra.mxu0 %v4045
    %4093 = vmatprep.subr.mxu0 %v4042
    %4094 = vmatpush1.msra.mxu0 %v4041
    %4095 = vmatprep.subr.mxu0 %v4038
    %4096 = vmatpush1.msra.mxu0 %v4037
    %4097 = vmatprep.subr.mxu0 %v4034
    %4098 = vmatpush1.msra.mxu0 %v4033
    %4099 = vmatprep.subr.mxu0 %v4030
    %4100 = vmatpush1.msra.mxu0 %v4029
    %4101 = vmatprep.subr.mxu0 %v4026
    %4102 = vmatpush1.msra.mxu0 %v4025
    %4103 = vmatprep.subr.mxu0 %v4022
    %4104 = vmatpush1.msra.mxu0 %v4021
    %4105 = vmatprep.subr.mxu0 %v4018
    %4106 = vmatpush1.msra.mxu0 %v4017
    %4107 = vmatprep.subr.mxu0 %v4014
    %4108 = vmatpush1.msra.mxu0 %v4013
    %4109 = vmatprep.subr.mxu0 0.0
    %4110 = vmatpush2.msra.mxu0 0.0
    %4111 = vmatprep.subr.mxu0 0.0
    %4112 = vmatpush2.msra.mxu0 0.0
    %4113 = vmatprep.subr.mxu0 0.0
    %4114 = vmatpush2.msra.mxu0 0.0
    %4115 = vmatprep.subr.mxu0 0.0
    %4116 = vmatpush2.msra.mxu0 0.0
    %4117 = vmatprep.subr.mxu0 0.0
    %4118 = vmatpush2.msra.mxu0 0.0
    %4119 = vmatprep.subr.mxu0 0.0
    %4120 = vmatpush2.msra.mxu0 0.0
    %4121 = vmatprep.subr.mxu0 0.0
    %4122 = vmatpush2.msra.mxu0 0.0
    %4123 = vmatprep.subr.mxu0 0.0
    %4124 = vmatpush2.msra.mxu0 0.0
    %4125 = vmatprep.subr.mxu0 0.0
    %4126 = vmatpush2.msra.mxu0 0.0
    %4127 = vmatprep.subr.mxu0 0.0
    %4128 = vmatpush2.msra.mxu0 0.0
    %4129 = vmatprep.subr.mxu0 0.0
    %4130 = vmatpush2.msra.mxu0 0.0
    %4131 = vmatprep.subr.mxu0 0.0
    %4132 = vmatpush2.msra.mxu0 0.0
    %4133 = vmatprep.subr.mxu0 0.0
    %4134 = vmatpush2.msra.mxu0 0.0
    %4135 = vmatprep.subr.mxu0 0.0
    %4136 = vmatpush2.msra.mxu0 0.0
    %4137 = vmatprep.subr.mxu0 0.0
    %4138 = vmatpush2.msra.mxu0 0.0
    %4139 = vmatprep.subr.mxu0 0.0
    %4140 = vmatpush2.msra.mxu0 0.0
    %4141 = vmatprep.mubr.f32.mxu0 0.0
    %4142 = vmatmul.mubr.f32.gmra.mxu0 %v4012
    %v4143 = vpop.f32.mrf.mxu0
    %v4144 = vadd.f32 0.0, %v4143
    %v4145 = vpop.f32.mrf.mxu0
    %v4146 = vadd.f32 0.0, %v4145
    %4147 = vdwg.mxu0
    %4148 = vmatprep.subr.mxu0 %v4076
    %4149 = vmatpush1.msra.mxu0 %v4075
    %4150 = vmatprep.subr.mxu0 %v4072
    %4151 = vmatpush1.msra.mxu0 %v4071
    %4152 = vmatprep.subr.mxu0 %v4068
    %4153 = vmatpush1.msra.mxu0 %v4067
    %4154 = vmatprep.subr.mxu0 %v4064
    %4155 = vmatpush1.msra.mxu0 %v4063
    %4156 = vmatprep.subr.mxu0 %v4060
    %4157 = vmatpush1.msra.mxu0 %v4059
    %4158 = vmatprep.subr.mxu0 %v4056
    %4159 = vmatpush1.msra.mxu0 %v4055
    %4160 = vmatprep.subr.mxu0 %v4052
    %4161 = vmatpush1.msra.mxu0 %v4051
    %4162 = vmatprep.subr.mxu0 %v4048
    %4163 = vmatpush1.msra.mxu0 %v4047
    %4164 = vmatprep.subr.mxu0 %v4044
    %4165 = vmatpush1.msra.mxu0 %v4043
    %4166 = vmatprep.subr.mxu0 %v4040
    %4167 = vmatpush1.msra.mxu0 %v4039
    %4168 = vmatprep.subr.mxu0 %v4036
    %4169 = vmatpush1.msra.mxu0 %v4035
    %4170 = vmatprep.subr.mxu0 %v4032
    %4171 = vmatpush1.msra.mxu0 %v4031
    %4172 = vmatprep.subr.mxu0 %v4028
    %4173 = vmatpush1.msra.mxu0 %v4027
    %4174 = vmatprep.subr.mxu0 %v4024
    %4175 = vmatpush1.msra.mxu0 %v4023
    %4176 = vmatprep.subr.mxu0 %v4020
    %4177 = vmatpush1.msra.mxu0 %v4019
    %4178 = vmatprep.subr.mxu0 %v4016
    %4179 = vmatpush1.msra.mxu0 %v4015
    %4180 = vmatprep.subr.mxu0 0.0
    %4181 = vmatpush2.msra.mxu0 0.0
    %4182 = vmatprep.subr.mxu0 0.0
    %4183 = vmatpush2.msra.mxu0 0.0
    %4184 = vmatprep.subr.mxu0 0.0
    %4185 = vmatpush2.msra.mxu0 0.0
    %4186 = vmatprep.subr.mxu0 0.0
    %4187 = vmatpush2.msra.mxu0 0.0
    %4188 = vmatprep.subr.mxu0 0.0
    %4189 = vmatpush2.msra.mxu0 0.0
    %4190 = vmatprep.subr.mxu0 0.0
    %4191 = vmatpush2.msra.mxu0 0.0
    %4192 = vmatprep.subr.mxu0 0.0
    %4193 = vmatpush2.msra.mxu0 0.0
    %4194 = vmatprep.subr.mxu0 0.0
    %4195 = vmatpush2.msra.mxu0 0.0
    %4196 = vmatprep.subr.mxu0 0.0
    %4197 = vmatpush2.msra.mxu0 0.0
    %4198 = vmatprep.subr.mxu0 0.0
    %4199 = vmatpush2.msra.mxu0 0.0
    %4200 = vmatprep.subr.mxu0 0.0
    %4201 = vmatpush2.msra.mxu0 0.0
    %4202 = vmatprep.subr.mxu0 0.0
    %4203 = vmatpush2.msra.mxu0 0.0
    %4204 = vmatprep.subr.mxu0 0.0
    %4205 = vmatpush2.msra.mxu0 0.0
    %4206 = vmatprep.subr.mxu0 0.0
    %4207 = vmatpush2.msra.mxu0 0.0
    %4208 = vmatprep.subr.mxu0 0.0
    %4209 = vmatpush2.msra.mxu0 0.0
    %4210 = vmatprep.subr.mxu0 0.0
    %4211 = vmatpush2.msra.mxu0 0.0
    %4212 = vmatprep.mubr.f32.mxu0 0.0
    %4213 = vmatmul.mubr.f32.gmra.mxu0 %v4012
    %v4214 = vpop.f32.mrf.mxu0
    %v4215 = vadd.f32 0.0, %v4214
    %v4216 = vpop.f32.mrf.mxu0
    %v4217 = vadd.f32 0.0, %v4216
    %4218 = vdwg.mxu0
    %v4219 = vadd.f32 %v4008, %v4144
    %v4220 = vadd.f32 %v4009, %v4146
    %v4221 = vadd.f32 %v4010, %v4215
    %v4222 = vadd.f32 %v4011, %v4217
    %v4223 = vxor.u32 %v4219, 2147483648
    %v4224 = vxor.u32 %v4220, 2147483648
    %v4225 = vxor.u32 %v4221, 2147483648
    %v4226 = vmul.f32 %v4223, 1.442695
    %v4227 = vpow.pop %v4226
    %v4228 = vmul.f32 %v4224, 1.442695
    %v4229 = vpow.pop %v4228
    %v4230 = vmul.f32 %v4225, 1.442695
    %v4231 = vpow.pop %v4230
    %v4232 = vadd.f32 %v4227, 1.0
    %v4233 = vadd.f32 %v4229, 1.0
    %v4234 = vadd.f32 %v4231, 1.0
    %v4235 = vrcp.pop %v4232
    %v4236 = vmul.f32 1.0, %v4235
    %v4237 = vrcp.pop %v4233
    %v4238 = vmul.f32 1.0, %v4237
    %v4239 = vrcp.pop %v4234
    %v4240 = vmul.f32 1.0, %v4239
    %v4241 = vtanh.pop %v4222
    %v4242 = vld [vmem:[#allocation5] sm:$0xff]
    %v4243 = vmul.f32 %v4238, %v4242
    %v4244 = vmul.f32 %v4236, %v4241
    %v4245 = vadd.f32 %v4243, %v4244
    %v4246 = vtanh.pop %v4245
    %v4247 = vmul.f32 %v4240, %v4246
    %4248 = vst [vmem:[#allocation5] sm:$0xff] %v4245
    %4249 = vst [vmem:[#allocation4] sm:$0xff] %v4247
    %v4250 = vld [vmem:[%s1952] sm:$0xff]
    %v4251 = vld [vmem:[%s1952 + $0x8] sm:$0xff]
    %v4252 = vld [vmem:[%s1952 + $0x10] sm:$0xff]
    %v4253 = vld [vmem:[%s1952 + $0x18] sm:$0xff]
    %v4254 = vld [vmem:[#allocation4] sm:$0xff]
    %v4255 = vld [vmem:[#allocation14] sm:$0xff]
    %v4256 = vld [vmem:[#allocation14 + $0x8] sm:$0xff]
    %v4257 = vld [vmem:[#allocation14 + $0x10] sm:$0xff]
    %v4258 = vld [vmem:[#allocation14 + $0x18] sm:$0xff]
    %v4259 = vld [vmem:[#allocation14 + $0x20] sm:$0xff]
    %v4260 = vld [vmem:[#allocation14 + $0x28] sm:$0xff]
    %v4261 = vld [vmem:[#allocation14 + $0x30] sm:$0xff]
    %v4262 = vld [vmem:[#allocation14 + $0x38] sm:$0xff]
    %v4263 = vld [vmem:[#allocation14 + $0x40] sm:$0xff]
    %v4264 = vld [vmem:[#allocation14 + $0x48] sm:$0xff]
    %v4265 = vld [vmem:[#allocation14 + $0x50] sm:$0xff]
    %v4266 = vld [vmem:[#allocation14 + $0x58] sm:$0xff]
    %v4267 = vld [vmem:[#allocation14 + $0x60] sm:$0xff]
    %v4268 = vld [vmem:[#allocation14 + $0x68] sm:$0xff]
    %v4269 = vld [vmem:[#allocation14 + $0x70] sm:$0xff]
    %v4270 = vld [vmem:[#allocation14 + $0x78] sm:$0xff]
    %v4271 = vld [vmem:[#allocation14 + $0x80] sm:$0xff]
    %v4272 = vld [vmem:[#allocation14 + $0x88] sm:$0xff]
    %v4273 = vld [vmem:[#allocation14 + $0x90] sm:$0xff]
    %v4274 = vld [vmem:[#allocation14 + $0x98] sm:$0xff]
    %v4275 = vld [vmem:[#allocation14 + $0xa0] sm:$0xff]
    %v4276 = vld [vmem:[#allocation14 + $0xa8] sm:$0xff]
    %v4277 = vld [vmem:[#allocation14 + $0xb0] sm:$0xff]
    %v4278 = vld [vmem:[#allocation14 + $0xb8] sm:$0xff]
    %v4279 = vld [vmem:[#allocation14 + $0xc0] sm:$0xff]
    %v4280 = vld [vmem:[#allocation14 + $0xc8] sm:$0xff]
    %v4281 = vld [vmem:[#allocation14 + $0xd0] sm:$0xff]
    %v4282 = vld [vmem:[#allocation14 + $0xd8] sm:$0xff]
    %v4283 = vld [vmem:[#allocation14 + $0xe0] sm:$0xff]
    %v4284 = vld [vmem:[#allocation14 + $0xe8] sm:$0xff]
    %v4285 = vld [vmem:[#allocation14 + $0xf0] sm:$0xff]
    %v4286 = vld [vmem:[#allocation14 + $0xf8] sm:$0xff]
    %v4287 = vld [vmem:[#allocation14 + $0x100] sm:$0xff]
    %v4288 = vld [vmem:[#allocation14 + $0x108] sm:$0xff]
    %v4289 = vld [vmem:[#allocation14 + $0x110] sm:$0xff]
    %v4290 = vld [vmem:[#allocation14 + $0x118] sm:$0xff]
    %v4291 = vld [vmem:[#allocation14 + $0x120] sm:$0xff]
    %v4292 = vld [vmem:[#allocation14 + $0x128] sm:$0xff]
    %v4293 = vld [vmem:[#allocation14 + $0x130] sm:$0xff]
    %v4294 = vld [vmem:[#allocation14 + $0x138] sm:$0xff]
    %v4295 = vld [vmem:[#allocation14 + $0x140] sm:$0xff]
    %v4296 = vld [vmem:[#allocation14 + $0x148] sm:$0xff]
    %v4297 = vld [vmem:[#allocation14 + $0x150] sm:$0xff]
    %v4298 = vld [vmem:[#allocation14 + $0x158] sm:$0xff]
    %v4299 = vld [vmem:[#allocation14 + $0x160] sm:$0xff]
    %v4300 = vld [vmem:[#allocation14 + $0x168] sm:$0xff]
    %v4301 = vld [vmem:[#allocation14 + $0x170] sm:$0xff]
    %v4302 = vld [vmem:[#allocation14 + $0x178] sm:$0xff]
    %v4303 = vld [vmem:[#allocation14 + $0x180] sm:$0xff]
    %v4304 = vld [vmem:[#allocation14 + $0x188] sm:$0xff]
    %v4305 = vld [vmem:[#allocation14 + $0x190] sm:$0xff]
    %v4306 = vld [vmem:[#allocation14 + $0x198] sm:$0xff]
    %v4307 = vld [vmem:[#allocation14 + $0x1a0] sm:$0xff]
    %v4308 = vld [vmem:[#allocation14 + $0x1a8] sm:$0xff]
    %v4309 = vld [vmem:[#allocation14 + $0x1b0] sm:$0xff]
    %v4310 = vld [vmem:[#allocation14 + $0x1b8] sm:$0xff]
    %v4311 = vld [vmem:[#allocation14 + $0x1c0] sm:$0xff]
    %v4312 = vld [vmem:[#allocation14 + $0x1c8] sm:$0xff]
    %v4313 = vld [vmem:[#allocation14 + $0x1d0] sm:$0xff]
    %v4314 = vld [vmem:[#allocation14 + $0x1d8] sm:$0xff]
    %v4315 = vld [vmem:[#allocation14 + $0x1e0] sm:$0xff]
    %v4316 = vld [vmem:[#allocation14 + $0x1e8] sm:$0xff]
    %v4317 = vld [vmem:[#allocation14 + $0x1f0] sm:$0xff]
    %v4318 = vld [vmem:[#allocation14 + $0x1f8] sm:$0xff]
    %4319 = vmatprep.subr.mxu0 %v4316
    %4320 = vmatpush1.msra.mxu0 %v4315
    %4321 = vmatprep.subr.mxu0 %v4312
    %4322 = vmatpush1.msra.mxu0 %v4311
    %4323 = vmatprep.subr.mxu0 %v4308
    %4324 = vmatpush1.msra.mxu0 %v4307
    %4325 = vmatprep.subr.mxu0 %v4304
    %4326 = vmatpush1.msra.mxu0 %v4303
    %4327 = vmatprep.subr.mxu0 %v4300
    %4328 = vmatpush1.msra.mxu0 %v4299
    %4329 = vmatprep.subr.mxu0 %v4296
    %4330 = vmatpush1.msra.mxu0 %v4295
    %4331 = vmatprep.subr.mxu0 %v4292
    %4332 = vmatpush1.msra.mxu0 %v4291
    %4333 = vmatprep.subr.mxu0 %v4288
    %4334 = vmatpush1.msra.mxu0 %v4287
    %4335 = vmatprep.subr.mxu0 %v4284
    %4336 = vmatpush1.msra.mxu0 %v4283
    %4337 = vmatprep.subr.mxu0 %v4280
    %4338 = vmatpush1.msra.mxu0 %v4279
    %4339 = vmatprep.subr.mxu0 %v4276
    %4340 = vmatpush1.msra.mxu0 %v4275
    %4341 = vmatprep.subr.mxu0 %v4272
    %4342 = vmatpush1.msra.mxu0 %v4271
    %4343 = vmatprep.subr.mxu0 %v4268
    %4344 = vmatpush1.msra.mxu0 %v4267
    %4345 = vmatprep.subr.mxu0 %v4264
    %4346 = vmatpush1.msra.mxu0 %v4263
    %4347 = vmatprep.subr.mxu0 %v4260
    %4348 = vmatpush1.msra.mxu0 %v4259
    %4349 = vmatprep.subr.mxu0 %v4256
    %4350 = vmatpush1.msra.mxu0 %v4255
    %4351 = vmatprep.subr.mxu0 0.0
    %4352 = vmatpush2.msra.mxu0 0.0
    %4353 = vmatprep.subr.mxu0 0.0
    %4354 = vmatpush2.msra.mxu0 0.0
    %4355 = vmatprep.subr.mxu0 0.0
    %4356 = vmatpush2.msra.mxu0 0.0
    %4357 = vmatprep.subr.mxu0 0.0
    %4358 = vmatpush2.msra.mxu0 0.0
    %4359 = vmatprep.subr.mxu0 0.0
    %4360 = vmatpush2.msra.mxu0 0.0
    %4361 = vmatprep.subr.mxu0 0.0
    %4362 = vmatpush2.msra.mxu0 0.0
    %4363 = vmatprep.subr.mxu0 0.0
    %4364 = vmatpush2.msra.mxu0 0.0
    %4365 = vmatprep.subr.mxu0 0.0
    %4366 = vmatpush2.msra.mxu0 0.0
    %4367 = vmatprep.subr.mxu0 0.0
    %4368 = vmatpush2.msra.mxu0 0.0
    %4369 = vmatprep.subr.mxu0 0.0
    %4370 = vmatpush2.msra.mxu0 0.0
    %4371 = vmatprep.subr.mxu0 0.0
    %4372 = vmatpush2.msra.mxu0 0.0
    %4373 = vmatprep.subr.mxu0 0.0
    %4374 = vmatpush2.msra.mxu0 0.0
    %4375 = vmatprep.subr.mxu0 0.0
    %4376 = vmatpush2.msra.mxu0 0.0
    %4377 = vmatprep.subr.mxu0 0.0
    %4378 = vmatpush2.msra.mxu0 0.0
    %4379 = vmatprep.subr.mxu0 0.0
    %4380 = vmatpush2.msra.mxu0 0.0
    %4381 = vmatprep.subr.mxu0 0.0
    %4382 = vmatpush2.msra.mxu0 0.0
    %4383 = vmatprep.mubr.f32.mxu0 0.0
    %4384 = vmatmul.mubr.f32.gmra.mxu0 %v4254
    %v4385 = vpop.f32.mrf.mxu0
    %v4386 = vadd.f32 0.0, %v4385
    %v4387 = vpop.f32.mrf.mxu0
    %v4388 = vadd.f32 0.0, %v4387
    %4389 = vdwg.mxu0
    %4390 = vmatprep.subr.mxu0 %v4318
    %4391 = vmatpush1.msra.mxu0 %v4317
    %4392 = vmatprep.subr.mxu0 %v4314
    %4393 = vmatpush1.msra.mxu0 %v4313
    %4394 = vmatprep.subr.mxu0 %v4310
    %4395 = vmatpush1.msra.mxu0 %v4309
    %4396 = vmatprep.subr.mxu0 %v4306
    %4397 = vmatpush1.msra.mxu0 %v4305
    %4398 = vmatprep.subr.mxu0 %v4302
    %4399 = vmatpush1.msra.mxu0 %v4301
    %4400 = vmatprep.subr.mxu0 %v4298
    %4401 = vmatpush1.msra.mxu0 %v4297
    %4402 = vmatprep.subr.mxu0 %v4294
    %4403 = vmatpush1.msra.mxu0 %v4293
    %4404 = vmatprep.subr.mxu0 %v4290
    %4405 = vmatpush1.msra.mxu0 %v4289
    %4406 = vmatprep.subr.mxu0 %v4286
    %4407 = vmatpush1.msra.mxu0 %v4285
    %4408 = vmatprep.subr.mxu0 %v4282
    %4409 = vmatpush1.msra.mxu0 %v4281
    %4410 = vmatprep.subr.mxu0 %v4278
    %4411 = vmatpush1.msra.mxu0 %v4277
    %4412 = vmatprep.subr.mxu0 %v4274
    %4413 = vmatpush1.msra.mxu0 %v4273
    %4414 = vmatprep.subr.mxu0 %v4270
    %4415 = vmatpush1.msra.mxu0 %v4269
    %4416 = vmatprep.subr.mxu0 %v4266
    %4417 = vmatpush1.msra.mxu0 %v4265
    %4418 = vmatprep.subr.mxu0 %v4262
    %4419 = vmatpush1.msra.mxu0 %v4261
    %4420 = vmatprep.subr.mxu0 %v4258
    %4421 = vmatpush1.msra.mxu0 %v4257
    %4422 = vmatprep.subr.mxu0 0.0
    %4423 = vmatpush2.msra.mxu0 0.0
    %4424 = vmatprep.subr.mxu0 0.0
    %4425 = vmatpush2.msra.mxu0 0.0
    %4426 = vmatprep.subr.mxu0 0.0
    %4427 = vmatpush2.msra.mxu0 0.0
    %4428 = vmatprep.subr.mxu0 0.0
    %4429 = vmatpush2.msra.mxu0 0.0
    %4430 = vmatprep.subr.mxu0 0.0
    %4431 = vmatpush2.msra.mxu0 0.0
    %4432 = vmatprep.subr.mxu0 0.0
    %4433 = vmatpush2.msra.mxu0 0.0
    %4434 = vmatprep.subr.mxu0 0.0
    %4435 = vmatpush2.msra.mxu0 0.0
    %4436 = vmatprep.subr.mxu0 0.0
    %4437 = vmatpush2.msra.mxu0 0.0
    %4438 = vmatprep.subr.mxu0 0.0
    %4439 = vmatpush2.msra.mxu0 0.0
    %4440 = vmatprep.subr.mxu0 0.0
    %4441 = vmatpush2.msra.mxu0 0.0
    %4442 = vmatprep.subr.mxu0 0.0
    %4443 = vmatpush2.msra.mxu0 0.0
    %4444 = vmatprep.subr.mxu0 0.0
    %4445 = vmatpush2.msra.mxu0 0.0
    %4446 = vmatprep.subr.mxu0 0.0
    %4447 = vmatpush2.msra.mxu0 0.0
    %4448 = vmatprep.subr.mxu0 0.0
    %4449 = vmatpush2.msra.mxu0 0.0
    %4450 = vmatprep.subr.mxu0 0.0
    %4451 = vmatpush2.msra.mxu0 0.0
    %4452 = vmatprep.subr.mxu0 0.0
    %4453 = vmatpush2.msra.mxu0 0.0
    %4454 = vmatprep.mubr.f32.mxu0 0.0
    %4455 = vmatmul.mubr.f32.gmra.mxu0 %v4254
    %v4456 = vpop.f32.mrf.mxu0
    %v4457 = vadd.f32 0.0, %v4456
    %v4458 = vpop.f32.mrf.mxu0
    %v4459 = vadd.f32 0.0, %v4458
    %4460 = vdwg.mxu0
    %v4461 = vadd.f32 %v4250, %v4386
    %v4462 = vadd.f32 %v4251, %v4388
    %v4463 = vadd.f32 %v4252, %v4457
    %v4464 = vadd.f32 %v4253, %v4459
    %v4465 = vxor.u32 %v4461, 2147483648
    %v4466 = vxor.u32 %v4462, 2147483648
    %v4467 = vxor.u32 %v4463, 2147483648
    %v4468 = vmul.f32 %v4465, 1.442695
    %v4469 = vpow.pop %v4468
    %v4470 = vmul.f32 %v4466, 1.442695
    %v4471 = vpow.pop %v4470
    %v4472 = vmul.f32 %v4467, 1.442695
    %v4473 = vpow.pop %v4472
    %v4474 = vadd.f32 %v4469, 1.0
    %v4475 = vadd.f32 %v4471, 1.0
    %v4476 = vadd.f32 %v4473, 1.0
    %v4477 = vrcp.pop %v4474
    %v4478 = vmul.f32 1.0, %v4477
    %v4479 = vrcp.pop %v4475
    %v4480 = vmul.f32 1.0, %v4479
    %v4481 = vrcp.pop %v4476
    %v4482 = vmul.f32 1.0, %v4481
    %v4483 = vtanh.pop %v4464
    %v4484 = vld [vmem:[#allocation5] sm:$0xff]
    %v4485 = vmul.f32 %v4480, %v4484
    %v4486 = vmul.f32 %v4478, %v4483
    %v4487 = vadd.f32 %v4485, %v4486
    %v4488 = vtanh.pop %v4487
    %v4489 = vmul.f32 %v4482, %v4488
    %4490 = vst [vmem:[#allocation5] sm:$0xff] %v4487
    %4491 = vst [vmem:[#allocation4] sm:$0xff] %v4489
    %v4492 = vld [vmem:[%s2199] sm:$0xff]
    %v4493 = vld [vmem:[%s2199 + $0x8] sm:$0xff]
    %v4494 = vld [vmem:[%s2199 + $0x10] sm:$0xff]
    %v4495 = vld [vmem:[%s2199 + $0x18] sm:$0xff]
    %v4496 = vld [vmem:[#allocation4] sm:$0xff]
    %v4497 = vld [vmem:[#allocation14] sm:$0xff]
    %v4498 = vld [vmem:[#allocation14 + $0x8] sm:$0xff]
    %v4499 = vld [vmem:[#allocation14 + $0x10] sm:$0xff]
    %v4500 = vld [vmem:[#allocation14 + $0x18] sm:$0xff]
    %v4501 = vld [vmem:[#allocation14 + $0x20] sm:$0xff]
    %v4502 = vld [vmem:[#allocation14 + $0x28] sm:$0xff]
    %v4503 = vld [vmem:[#allocation14 + $0x30] sm:$0xff]
    %v4504 = vld [vmem:[#allocation14 + $0x38] sm:$0xff]
    %v4505 = vld [vmem:[#allocation14 + $0x40] sm:$0xff]
    %v4506 = vld [vmem:[#allocation14 + $0x48] sm:$0xff]
    %v4507 = vld [vmem:[#allocation14 + $0x50] sm:$0xff]
    %v4508 = vld [vmem:[#allocation14 + $0x58] sm:$0xff]
    %v4509 = vld [vmem:[#allocation14 + $0x60] sm:$0xff]
    %v4510 = vld [vmem:[#allocation14 + $0x68] sm:$0xff]
    %v4511 = vld [vmem:[#allocation14 + $0x70] sm:$0xff]
    %v4512 = vld [vmem:[#allocation14 + $0x78] sm:$0xff]
    %v4513 = vld [vmem:[#allocation14 + $0x80] sm:$0xff]
    %v4514 = vld [vmem:[#allocation14 + $0x88] sm:$0xff]
    %v4515 = vld [vmem:[#allocation14 + $0x90] sm:$0xff]
    %v4516 = vld [vmem:[#allocation14 + $0x98] sm:$0xff]
    %v4517 = vld [vmem:[#allocation14 + $0xa0] sm:$0xff]
    %v4518 = vld [vmem:[#allocation14 + $0xa8] sm:$0xff]
    %v4519 = vld [vmem:[#allocation14 + $0xb0] sm:$0xff]
    %v4520 = vld [vmem:[#allocation14 + $0xb8] sm:$0xff]
    %v4521 = vld [vmem:[#allocation14 + $0xc0] sm:$0xff]
    %v4522 = vld [vmem:[#allocation14 + $0xc8] sm:$0xff]
    %v4523 = vld [vmem:[#allocation14 + $0xd0] sm:$0xff]
    %v4524 = vld [vmem:[#allocation14 + $0xd8] sm:$0xff]
    %v4525 = vld [vmem:[#allocation14 + $0xe0] sm:$0xff]
    %v4526 = vld [vmem:[#allocation14 + $0xe8] sm:$0xff]
    %v4527 = vld [vmem:[#allocation14 + $0xf0] sm:$0xff]
    %v4528 = vld [vmem:[#allocation14 + $0xf8] sm:$0xff]
    %v4529 = vld [vmem:[#allocation14 + $0x100] sm:$0xff]
    %v4530 = vld [vmem:[#allocation14 + $0x108] sm:$0xff]
    %v4531 = vld [vmem:[#allocation14 + $0x110] sm:$0xff]
    %v4532 = vld [vmem:[#allocation14 + $0x118] sm:$0xff]
    %v4533 = vld [vmem:[#allocation14 + $0x120] sm:$0xff]
    %v4534 = vld [vmem:[#allocation14 + $0x128] sm:$0xff]
    %v4535 = vld [vmem:[#allocation14 + $0x130] sm:$0xff]
    %v4536 = vld [vmem:[#allocation14 + $0x138] sm:$0xff]
    %v4537 = vld [vmem:[#allocation14 + $0x140] sm:$0xff]
    %v4538 = vld [vmem:[#allocation14 + $0x148] sm:$0xff]
    %v4539 = vld [vmem:[#allocation14 + $0x150] sm:$0xff]
    %v4540 = vld [vmem:[#allocation14 + $0x158] sm:$0xff]
    %v4541 = vld [vmem:[#allocation14 + $0x160] sm:$0xff]
    %v4542 = vld [vmem:[#allocation14 + $0x168] sm:$0xff]
    %v4543 = vld [vmem:[#allocation14 + $0x170] sm:$0xff]
    %v4544 = vld [vmem:[#allocation14 + $0x178] sm:$0xff]
    %v4545 = vld [vmem:[#allocation14 + $0x180] sm:$0xff]
    %v4546 = vld [vmem:[#allocation14 + $0x188] sm:$0xff]
    %v4547 = vld [vmem:[#allocation14 + $0x190] sm:$0xff]
    %v4548 = vld [vmem:[#allocation14 + $0x198] sm:$0xff]
    %v4549 = vld [vmem:[#allocation14 + $0x1a0] sm:$0xff]
    %v4550 = vld [vmem:[#allocation14 + $0x1a8] sm:$0xff]
    %v4551 = vld [vmem:[#allocation14 + $0x1b0] sm:$0xff]
    %v4552 = vld [vmem:[#allocation14 + $0x1b8] sm:$0xff]
    %v4553 = vld [vmem:[#allocation14 + $0x1c0] sm:$0xff]
    %v4554 = vld [vmem:[#allocation14 + $0x1c8] sm:$0xff]
    %v4555 = vld [vmem:[#allocation14 + $0x1d0] sm:$0xff]
    %v4556 = vld [vmem:[#allocation14 + $0x1d8] sm:$0xff]
    %v4557 = vld [vmem:[#allocation14 + $0x1e0] sm:$0xff]
    %v4558 = vld [vmem:[#allocation14 + $0x1e8] sm:$0xff]
    %v4559 = vld [vmem:[#allocation14 + $0x1f0] sm:$0xff]
    %v4560 = vld [vmem:[#allocation14 + $0x1f8] sm:$0xff]
    %4561 = vmatprep.subr.mxu0 %v4558
    %4562 = vmatpush1.msra.mxu0 %v4557
    %4563 = vmatprep.subr.mxu0 %v4554
    %4564 = vmatpush1.msra.mxu0 %v4553
    %4565 = vmatprep.subr.mxu0 %v4550
    %4566 = vmatpush1.msra.mxu0 %v4549
    %4567 = vmatprep.subr.mxu0 %v4546
    %4568 = vmatpush1.msra.mxu0 %v4545
    %4569 = vmatprep.subr.mxu0 %v4542
    %4570 = vmatpush1.msra.mxu0 %v4541
    %4571 = vmatprep.subr.mxu0 %v4538
    %4572 = vmatpush1.msra.mxu0 %v4537
    %4573 = vmatprep.subr.mxu0 %v4534
    %4574 = vmatpush1.msra.mxu0 %v4533
    %4575 = vmatprep.subr.mxu0 %v4530
    %4576 = vmatpush1.msra.mxu0 %v4529
    %4577 = vmatprep.subr.mxu0 %v4526
    %4578 = vmatpush1.msra.mxu0 %v4525
    %4579 = vmatprep.subr.mxu0 %v4522
    %4580 = vmatpush1.msra.mxu0 %v4521
    %4581 = vmatprep.subr.mxu0 %v4518
    %4582 = vmatpush1.msra.mxu0 %v4517
    %4583 = vmatprep.subr.mxu0 %v4514
    %4584 = vmatpush1.msra.mxu0 %v4513
    %4585 = vmatprep.subr.mxu0 %v4510
    %4586 = vmatpush1.msra.mxu0 %v4509
    %4587 = vmatprep.subr.mxu0 %v4506
    %4588 = vmatpush1.msra.mxu0 %v4505
    %4589 = vmatprep.subr.mxu0 %v4502
    %4590 = vmatpush1.msra.mxu0 %v4501
    %4591 = vmatprep.subr.mxu0 %v4498
    %4592 = vmatpush1.msra.mxu0 %v4497
    %4593 = vmatprep.subr.mxu0 0.0
    %4594 = vmatpush2.msra.mxu0 0.0
    %4595 = vmatprep.subr.mxu0 0.0
    %4596 = vmatpush2.msra.mxu0 0.0
    %4597 = vmatprep.subr.mxu0 0.0
    %4598 = vmatpush2.msra.mxu0 0.0
    %4599 = vmatprep.subr.mxu0 0.0
    %4600 = vmatpush2.msra.mxu0 0.0
    %4601 = vmatprep.subr.mxu0 0.0
    %4602 = vmatpush2.msra.mxu0 0.0
    %4603 = vmatprep.subr.mxu0 0.0
    %4604 = vmatpush2.msra.mxu0 0.0
    %4605 = vmatprep.subr.mxu0 0.0
    %4606 = vmatpush2.msra.mxu0 0.0
    %4607 = vmatprep.subr.mxu0 0.0
    %4608 = vmatpush2.msra.mxu0 0.0
    %4609 = vmatprep.subr.mxu0 0.0
    %4610 = vmatpush2.msra.mxu0 0.0
    %4611 = vmatprep.subr.mxu0 0.0
    %4612 = vmatpush2.msra.mxu0 0.0
    %4613 = vmatprep.subr.mxu0 0.0
    %4614 = vmatpush2.msra.mxu0 0.0
    %4615 = vmatprep.subr.mxu0 0.0
    %4616 = vmatpush2.msra.mxu0 0.0
    %4617 = vmatprep.subr.mxu0 0.0
    %4618 = vmatpush2.msra.mxu0 0.0
    %4619 = vmatprep.subr.mxu0 0.0
    %4620 = vmatpush2.msra.mxu0 0.0
    %4621 = vmatprep.subr.mxu0 0.0
    %4622 = vmatpush2.msra.mxu0 0.0
    %4623 = vmatprep.subr.mxu0 0.0
    %4624 = vmatpush2.msra.mxu0 0.0
    %4625 = vmatprep.mubr.f32.mxu0 0.0
    %4626 = vmatmul.mubr.f32.gmra.mxu0 %v4496
    %v4627 = vpop.f32.mrf.mxu0
    %v4628 = vadd.f32 0.0, %v4627
    %v4629 = vpop.f32.mrf.mxu0
    %v4630 = vadd.f32 0.0, %v4629
    %4631 = vdwg.mxu0
    %4632 = vmatprep.subr.mxu0 %v4560
    %4633 = vmatpush1.msra.mxu0 %v4559
    %4634 = vmatprep.subr.mxu0 %v4556
    %4635 = vmatpush1.msra.mxu0 %v4555
    %4636 = vmatprep.subr.mxu0 %v4552
    %4637 = vmatpush1.msra.mxu0 %v4551
    %4638 = vmatprep.subr.mxu0 %v4548
    %4639 = vmatpush1.msra.mxu0 %v4547
    %4640 = vmatprep.subr.mxu0 %v4544
    %4641 = vmatpush1.msra.mxu0 %v4543
    %4642 = vmatprep.subr.mxu0 %v4540
    %4643 = vmatpush1.msra.mxu0 %v4539
    %4644 = vmatprep.subr.mxu0 %v4536
    %4645 = vmatpush1.msra.mxu0 %v4535
    %4646 = vmatprep.subr.mxu0 %v4532
    %4647 = vmatpush1.msra.mxu0 %v4531
    %4648 = vmatprep.subr.mxu0 %v4528
    %4649 = vmatpush1.msra.mxu0 %v4527
    %4650 = vmatprep.subr.mxu0 %v4524
    %4651 = vmatpush1.msra.mxu0 %v4523
    %4652 = vmatprep.subr.mxu0 %v4520
    %4653 = vmatpush1.msra.mxu0 %v4519
    %4654 = vmatprep.subr.mxu0 %v4516
    %4655 = vmatpush1.msra.mxu0 %v4515
    %4656 = vmatprep.subr.mxu0 %v4512
    %4657 = vmatpush1.msra.mxu0 %v4511
    %4658 = vmatprep.subr.mxu0 %v4508
    %4659 = vmatpush1.msra.mxu0 %v4507
    %4660 = vmatprep.subr.mxu0 %v4504
    %4661 = vmatpush1.msra.mxu0 %v4503
    %4662 = vmatprep.subr.mxu0 %v4500
    %4663 = vmatpush1.msra.mxu0 %v4499
    %4664 = vmatprep.subr.mxu0 0.0
    %4665 = vmatpush2.msra.mxu0 0.0
    %4666 = vmatprep.subr.mxu0 0.0
    %4667 = vmatpush2.msra.mxu0 0.0
    %4668 = vmatprep.subr.mxu0 0.0
    %4669 = vmatpush2.msra.mxu0 0.0
    %4670 = vmatprep.subr.mxu0 0.0
    %4671 = vmatpush2.msra.mxu0 0.0
    %4672 = vmatprep.subr.mxu0 0.0
    %4673 = vmatpush2.msra.mxu0 0.0
    %4674 = vmatprep.subr.mxu0 0.0
    %4675 = vmatpush2.msra.mxu0 0.0
    %4676 = vmatprep.subr.mxu0 0.0
    %4677 = vmatpush2.msra.mxu0 0.0
    %4678 = vmatprep.subr.mxu0 0.0
    %4679 = vmatpush2.msra.mxu0 0.0
    %4680 = vmatprep.subr.mxu0 0.0
    %4681 = vmatpush2.msra.mxu0 0.0
    %4682 = vmatprep.subr.mxu0 0.0
    %4683 = vmatpush2.msra.mxu0 0.0
    %4684 = vmatprep.subr.mxu0 0.0
    %4685 = vmatpush2.msra.mxu0 0.0
    %4686 = vmatprep.subr.mxu0 0.0
    %4687 = vmatpush2.msra.mxu0 0.0
    %4688 = vmatprep.subr.mxu0 0.0
    %4689 = vmatpush2.msra.mxu0 0.0
    %4690 = vmatprep.subr.mxu0 0.0
    %4691 = vmatpush2.msra.mxu0 0.0
    %4692 = vmatprep.subr.mxu0 0.0
    %4693 = vmatpush2.msra.mxu0 0.0
    %4694 = vmatprep.subr.mxu0 0.0
    %4695 = vmatpush2.msra.mxu0 0.0
    %4696 = vmatprep.mubr.f32.mxu0 0.0
    %4697 = vmatmul.mubr.f32.gmra.mxu0 %v4496
    %v4698 = vpop.f32.mrf.mxu0
    %v4699 = vadd.f32 0.0, %v4698
    %v4700 = vpop.f32.mrf.mxu0
    %v4701 = vadd.f32 0.0, %v4700
    %4702 = vdwg.mxu0
    %v4703 = vadd.f32 %v4492, %v4628
    %v4704 = vadd.f32 %v4493, %v4630
    %v4705 = vadd.f32 %v4494, %v4699
    %v4706 = vadd.f32 %v4495, %v4701
    %v4707 = vxor.u32 %v4703, 2147483648
    %v4708 = vxor.u32 %v4704, 2147483648
    %v4709 = vxor.u32 %v4705, 2147483648
    %v4710 = vmul.f32 %v4707, 1.442695
    %v4711 = vpow.pop %v4710
    %v4712 = vmul.f32 %v4708, 1.442695
    %v4713 = vpow.pop %v4712
    %v4714 = vmul.f32 %v4709, 1.442695
    %v4715 = vpow.pop %v4714
    %v4716 = vadd.f32 %v4711, 1.0
    %v4717 = vadd.f32 %v4713, 1.0
    %v4718 = vadd.f32 %v4715, 1.0
    %v4719 = vrcp.pop %v4716
    %v4720 = vmul.f32 1.0, %v4719
    %v4721 = vrcp.pop %v4717
    %v4722 = vmul.f32 1.0, %v4721
    %v4723 = vrcp.pop %v4718
    %v4724 = vmul.f32 1.0, %v4723
    %v4725 = vtanh.pop %v4706
    %v4726 = vld [vmem:[#allocation5] sm:$0xff]
    %v4727 = vmul.f32 %v4722, %v4726
    %v4728 = vmul.f32 %v4720, %v4725
    %v4729 = vadd.f32 %v4727, %v4728
    %v4730 = vtanh.pop %v4729
    %v4731 = vmul.f32 %v4724, %v4730
    %4732 = vst [vmem:[#allocation5] sm:$0xff] %v4729
    %4733 = vst [vmem:[#allocation4] sm:$0xff] %v4731
    %v4734 = vld [vmem:[#allocation4] sm:$0xff]
    %v4735 = vld [vmem:[#allocation15] sm:$0xff]
    %v4736 = vld [vmem:[#allocation15 + $0x8] sm:$0xff]
    %v4737 = vld [vmem:[#allocation15 + $0x10] sm:$0xff]
    %v4738 = vld [vmem:[#allocation15 + $0x18] sm:$0xff]
    %v4739 = vld [vmem:[#allocation15 + $0x20] sm:$0xff]
    %v4740 = vld [vmem:[#allocation15 + $0x28] sm:$0xff]
    %v4741 = vld [vmem:[#allocation15 + $0x30] sm:$0xff]
    %v4742 = vld [vmem:[#allocation15 + $0x38] sm:$0xff]
    %v4743 = vld [vmem:[#allocation15 + $0x40] sm:$0xff]
    %v4744 = vld [vmem:[#allocation15 + $0x48] sm:$0xff]
    %v4745 = vld [vmem:[#allocation15 + $0x50] sm:$0xff]
    %v4746 = vld [vmem:[#allocation15 + $0x58] sm:$0xff]
    %v4747 = vld [vmem:[#allocation15 + $0x60] sm:$0xff]
    %v4748 = vld [vmem:[#allocation15 + $0x68] sm:$0xff]
    %v4749 = vld [vmem:[#allocation15 + $0x70] sm:$0xff]
    %v4750 = vld [vmem:[#allocation15 + $0x78] sm:$0xff]
    %v4751 = vld [vmem:[%s8] sm:$0x1]
    %v4753 = vlaneseq
    %v4754 = vshrl.u32 %v4753, 7
    %v4755 = vsub.s32 0, %v4754
    %v4756 = vrot.slane %v4751, %v4755
    %4758 = vmatprep.subr.mxu0 0.0
    %4759 = vmatpush1.msra.mxu0 %v4750
    %4760 = vmatprep.subr.mxu0 0.0
    %4761 = vmatpush1.msra.mxu0 %v4749
    %4762 = vmatprep.subr.mxu0 0.0
    %4763 = vmatpush1.msra.mxu0 %v4748
    %4764 = vmatprep.subr.mxu0 0.0
    %4765 = vmatpush1.msra.mxu0 %v4747
    %4766 = vmatprep.subr.mxu0 0.0
    %4767 = vmatpush1.msra.mxu0 %v4746
    %4768 = vmatprep.subr.mxu0 0.0
    %4769 = vmatpush1.msra.mxu0 %v4745
    %4770 = vmatprep.subr.mxu0 0.0
    %4771 = vmatpush1.msra.mxu0 %v4744
    %4772 = vmatprep.subr.mxu0 0.0
    %4773 = vmatpush1.msra.mxu0 %v4743
    %4774 = vmatprep.subr.mxu0 0.0
    %4775 = vmatpush1.msra.mxu0 %v4742
    %4776 = vmatprep.subr.mxu0 0.0
    %4777 = vmatpush1.msra.mxu0 %v4741
    %4778 = vmatprep.subr.mxu0 0.0
    %4779 = vmatpush1.msra.mxu0 %v4740
    %4780 = vmatprep.subr.mxu0 0.0
    %4781 = vmatpush1.msra.mxu0 %v4739
    %4782 = vmatprep.subr.mxu0 0.0
    %4783 = vmatpush1.msra.mxu0 %v4738
    %4784 = vmatprep.subr.mxu0 0.0
    %4785 = vmatpush1.msra.mxu0 %v4737
    %4786 = vmatprep.subr.mxu0 0.0
    %4787 = vmatpush1.msra.mxu0 %v4736
    %4788 = vmatprep.subr.mxu0 0.0
    %4789 = vmatpush1.msra.mxu0 %v4735
    %4790 = vmatprep.subr.mxu0 0.0
    %4791 = vmatpush2.msra.mxu0 0.0
    %4792 = vmatprep.subr.mxu0 0.0
    %4793 = vmatpush2.msra.mxu0 0.0
    %4794 = vmatprep.subr.mxu0 0.0
    %4795 = vmatpush2.msra.mxu0 0.0
    %4796 = vmatprep.subr.mxu0 0.0
    %4797 = vmatpush2.msra.mxu0 0.0
    %4798 = vmatprep.subr.mxu0 0.0
    %4799 = vmatpush2.msra.mxu0 0.0
    %4800 = vmatprep.subr.mxu0 0.0
    %4801 = vmatpush2.msra.mxu0 0.0
    %4802 = vmatprep.subr.mxu0 0.0
    %4803 = vmatpush2.msra.mxu0 0.0
    %4804 = vmatprep.subr.mxu0 0.0
    %4805 = vmatpush2.msra.mxu0 0.0
    %4806 = vmatprep.subr.mxu0 0.0
    %4807 = vmatpush2.msra.mxu0 0.0
    %4808 = vmatprep.subr.mxu0 0.0
    %4809 = vmatpush2.msra.mxu0 0.0
    %4810 = vmatprep.subr.mxu0 0.0
    %4811 = vmatpush2.msra.mxu0 0.0
    %4812 = vmatprep.subr.mxu0 0.0
    %4813 = vmatpush2.msra.mxu0 0.0
    %4814 = vmatprep.subr.mxu0 0.0
    %4815 = vmatpush2.msra.mxu0 0.0
    %4816 = vmatprep.subr.mxu0 0.0
    %4817 = vmatpush2.msra.mxu0 0.0
    %4818 = vmatprep.subr.mxu0 0.0
    %4819 = vmatpush2.msra.mxu0 0.0
    %4820 = vmatprep.subr.mxu0 0.0
    %4821 = vmatpush2.msra.mxu0 0.0
    %4822 = vmatprep.mubr.f32.mxu0 0.0
    %4823 = vmatmul.mubr.f32.gmra.mxu0 %v4734
    %v4824 = vpop.f32.mrf.mxu0
    %v4825 = vadd.f32 %v4756, %v4824
    %v4826 = vpop.f32.mrf.mxu0
    %4827 = vdwg.mxu0
    %4828 = vst [vmem:[#allocation17] sm:$0xff] %v4825
    // Predicated region
    $region62: #{tpu_custom_call.1} parent=1 // pred_check
      _
    $region63: #{tpu_custom_call.1} parent=1 // pred_check_branch
      %4830 = sbr.rel (0) target = $region65
    $region64: #{tpu_custom_call.1} parent=1 // pred_region
      %s4832 = ssub.s32 128, 128
      %4833 = vsyncadd [#allocation8], %s4832
      %s4835 = sshll.u32 [#allocation17], 4
      %s4836 = int_to_ptr.vmem [resolvable:$true] %s4835
      %4838 = dma.vmem_to_hbm [thread:$0]  %s4836, 128, %s9, [#allocation8]
    $region65: #{tpu_custom_call.1} parent=1 // pred_fallthru
      _
    // Predicated region
    $region66: #{tpu_custom_call.1} parent=1 // pred_check
      _
    $region67: #{tpu_custom_call.1} parent=1 // pred_check_branch
      %4840 = sbr.rel (0) target = $region69
    $region68: #{tpu_custom_call.1} parent=1 // pred_region
      %4841 = dma.done [#allocation8], 128
    $region69: #{tpu_custom_call.1} parent=1 // pred_fallthru
      _
    %4842 = vsyncpa [#allocation7], 1
    %4843 = vsyncpa [#allocation10], 1
    %4844 = vsyncpa [#allocation13], 1
    %4845 = vsyncpa [#allocation16], 1
    %4846 = vsyncpa [#allocation8], 1

</llo_original>
